<compile_context>
chip_gen: v6e
topology: v6e:2x2x1
jax: 0.10.0
libtpu: 0.0.40
codegen_flags: <defaults>
</compile_context>

<pallas_src>
import functools

import jax
import jax.numpy as jnp
import numpy as np
from jax import lax
from jax.experimental import pallas as pl
from jax.experimental.pallas import tpu as pltpu


# ----------------------------------------------------------------------------
# Fused FSRCNN kernel: one group of images per grid step, all layers in VMEM.
# ----------------------------------------------------------------------------
def _fsrcnn_kernel(x_ref, mask_ref, wf_ref, bf_ref, ws_ref, bs_ref,
                   wd_ref, bd_ref, we_ref, be_ref, wu_ref, bu_ref, o_ref,
                   *, Wp, m):
    # x_ref   : (1, C0, L)  bf16   zero-haloed, channel-padded, flattened imgs
    # mask_ref: (1, L)      f32    1.0 on interior pixels, 0.0 on halo/pad
    # w*_ref  : (Cout, K*K*Cin) bf16  im2col-folded weights
    # b*_ref  : (Cout, 1)   f32
    # o_ref   : (1, Cup, L) f32
    mask = mask_ref[...]                                      # (1, L)
    L = mask.shape[1]

    def epilogue(acc, bias, relu, zero_halo):
        out = acc + bias                                      # f32 epilogue
        if relu:
            out = jnp.maximum(out, 0.0)
        if zero_halo:
            out = out * mask          # keep halo exactly zero for the next
        return out                    # spatial conv's implicit zero padding

    def conv_spatial(act, w, bias, K, pad, relu, zero_halo):
        """(Cin, L) f32 -> (Cout, L) f32 via ONE im2col MXU matmul."""
        pieces = []
        for kh in range(K):
            for kw in range(K):
                off = (kh - pad) * Wp + (kw - pad)
                # pieces[t][p] == act[p + off]; interior reads never wrap
                # because margin >= pad and the input halo is zero.
                pieces.append(act if off == 0 else
                              pltpu.roll(act, shift=(-off) % L, axis=1))
        # 8-aligned sublane concat in f32, then a single bf16 cast.
        cols = jnp.concatenate(pieces, axis=0).astype(jnp.bfloat16)
        acc = jnp.dot(w, cols, preferred_element_type=jnp.float32)
        return epilogue(acc, bias, relu, zero_halo)

    def conv_1x1(act, w, bias, relu, zero_halo):
        acc = jnp.dot(w, act.astype(jnp.bfloat16),
                      preferred_element_type=jnp.float32)
        return epilogue(acc, bias, relu, zero_halo)

    act = x_ref[0].astype(jnp.float32)                                 # (C0, L)
    # fea 5x5: consumer (shrink) is 1x1, so its dirty halo is masked by shrink.
    act = conv_spatial(act, wf_ref[...], bf_ref[...], 5, 2, True, False)
    act = conv_1x1(act, ws_ref[...], bs_ref[...], True, True)          # shrink
    for i in range(m):                                                 # deep
        act = conv_spatial(act, wd_ref[i], bd_ref[i], 3, 1, True,
                           zero_halo=(i != m - 1))   # last deep feeds 1x1
    act = conv_1x1(act, we_ref[...], be_ref[...], True, True)          # expand
    act = conv_spatial(act, wu_ref[...], bu_ref[...], 3, 1, False, False)  # up
    o_ref[0] = act


# ----------------------------------------------------------------------------
# Host-side helpers (layout prep, halo geometry, pixel shuffle).
# ----------------------------------------------------------------------------
def _round_up(x, n):
    return (x + n - 1) // n * n


def _pick_group(N, HWp, max_lanes=4096):
    """Images merged per grid step (keeps the lane axis VMEM-friendly)."""
    g = max(1, min(N, max_lanes // max(HWp, 1)))
    while N % g:
        g -= 1
    return g


def _interior_mask(H, W, Hp, Wp, HWp, margin):
    r = jnp.arange(Hp)
    c = jnp.arange(Wp)
    rm = (r >= margin) & (r < margin + H)
    cm = (c >= margin) & (c < margin + W)
    msk = (rm[:, None] & cm[None, :]).astype(jnp.float32).reshape(Hp * Wp)
    return jnp.pad(msk, (0, HWp - Hp * Wp)).reshape(1, HWp)


def _prep_conv(w_oihw, b, cout_pad=None, cin_pad=None):
    """OIHW weights -> im2col-folded (Cout_p, KH*KW*Cin_p) bf16 + f32 bias.

    Folded index: [cout, (kh*KW + kw)*Cin_p + cin] == w[cout, cin, kh, kw],
    matching the kernel's tap-major / channel-minor concatenation order.
    Padded rows/cols (and biases) are zero, so results are unchanged.
    """
    cout, cin, kh, kw = w_oihw.shape
    cop = cout_pad or cout
    cip = cin_pad or cin
    w = jnp.pad(w_oihw, ((0, cop - cout), (0, cip - cin), (0, 0), (0, 0)))
    bp = jnp.pad(b, (0, cop - cout))
    w = jnp.transpose(w, (0, 2, 3, 1)).reshape(cop, kh * kw * cip)
    return w.astype(jnp.bfloat16), bp.reshape(cop, 1).astype(jnp.float32)


def _prepare_kernel_params(params, c0, s_pad):
    wf, bf = _prep_conv(*params["fea"], cin_pad=c0)
    ws, bs = _prep_conv(*params["shrink"], cout_pad=s_pad)
    deep = [_prep_conv(w, b, cout_pad=s_pad, cin_pad=s_pad)
            for (w, b) in params["deep"]]
    wd = jnp.stack([w for w, _ in deep])          # (m, s_pad, 9*s_pad)
    bd = jnp.stack([b for _, b in deep])          # (m, s_pad, 1)
    we, be = _prep_conv(*params["expand"], cin_pad=s_pad)
    wu, bu = _prep_conv(*params["up"])
    return dict(wf=wf, bf=bf, ws=ws, bs=bs, wd=wd, bd=bd,
                we=we, be=be, wu=wu, bu=bu)


def _pixel_shuffle_nchw(x, r, out_channels):
    """PyTorch nn.PixelShuffle on NCHW: input channel = c*r*r + i*r + j."""
    N, _, H, W = x.shape
    x = x.reshape(N, out_channels, r, r, H, W)           # (n, c, i, j, h, w)
    x = jnp.transpose(x, (0, 1, 4, 2, 5, 3))             # (n, c, h, i, w, j)
    return x.reshape(N, out_channels, H * r, W * r)


# ----------------------------------------------------------------------------
# Forward pass (single fused pallas_call) and params.
# ----------------------------------------------------------------------------
def fsrcnn_forward(params, x_nchw, *, upscale_factor=2, out_channels=3, m=4):
    x = x_nchw.astype(jnp.float32)
    N, Cin, H, W = x.shape
    Cup = params["up"][0].shape[0]
    s = params["shrink"][0].shape[0]
    assert Cup == out_channels * upscale_factor ** 2

    margin = 2                 # == fea's pad (5x5, pad 2), the largest in the net
    assert margin >= 2, "roll wraparound safety requires margin >= max conv pad"

    Hp, Wp = H + 2 * margin, W + 2 * margin
    HWp = _round_up(Hp * Wp, 128)      # pad the FLATTENED axis, not the width
    C0 = _round_up(Cin, 8)             # sublane-aligned im2col pieces
    S_pad = _round_up(s, 8)

    # One-time zero-halo embed + channel pad + flatten + trailing lane pad.
    xp = jnp.pad(x, ((0, 0), (0, C0 - Cin), (margin, margin), (margin, margin)))
    xp = xp.reshape(N, C0, Hp * Wp)
    xp = jnp.pad(xp, ((0, 0), (0, 0), (0, HWp - Hp * Wp))).astype(jnp.bfloat16)

    # Merge g images along the lane axis per grid step.
    g = _pick_group(N, HWp)
    G = N // g
    L = g * HWp
    xg = xp.reshape(G, g, C0, HWp).transpose(0, 2, 1, 3).reshape(G, C0, L)

    mask = jnp.tile(_interior_mask(H, W, Hp, Wp, HWp, margin), (1, g))
    kp = _prepare_kernel_params(params, C0, S_pad)

    consts = [mask, kp["wf"], kp["bf"], kp["ws"], kp["bs"], kp["wd"],
              kp["bd"], kp["we"], kp["be"], kp["wu"], kp["bu"]]

    def _const_spec(arr):
        if arr.ndim == 2:
            return pl.BlockSpec(arr.shape, lambda n: (0, 0))
        return pl.BlockSpec(arr.shape, lambda n: (0, 0, 0))

    kernel = functools.partial(_fsrcnn_kernel, Wp=Wp, m=m)

    out = pl.pallas_call(
        kernel,
        out_shape=jax.ShapeDtypeStruct((G, Cup, L), jnp.float32),
        grid=(G,),
        in_specs=[pl.BlockSpec((1, C0, L), lambda n: (n, 0, 0))]
                 + [_const_spec(a) for a in consts],
        out_specs=pl.BlockSpec((1, Cup, L), lambda n: (n, 0, 0)),
        compiler_params=pltpu.CompilerParams(
            dimension_semantics=("parallel",)),
    )(xg, *consts)

    # Un-merge images, drop the halo, PixelShuffle (tiny plain-JAX reshapes).
    out = out.reshape(G, Cup, g, HWp).transpose(0, 2, 1, 3).reshape(N, Cup, HWp)
    out = out[:, :, :Hp * Wp].reshape(N, Cup, Hp, Wp)
    out = out[:, :, margin:margin + H, margin:margin + W]
    return _pixel_shuffle_nchw(out, upscale_factor, out_channels)


def init_fsrcnn_params(key, upscale_factor=2, in_channels=3, out_channels=3,
                       d=56, s=12, m=4):
    """Deterministic synthetic init; weights stored PyTorch-style OIHW."""
    def conv_param(key, cout, cin, k):
        wkey, bkey = jax.random.split(key)
        w = jax.random.normal(wkey, (cout, cin, k, k), jnp.float32)
        w = w * np.sqrt(2.0 / (cin * k * k))
        b = jax.random.normal(bkey, (cout,), jnp.float32) * 0.01
        return w, b

    keys = jax.random.split(key, m + 4)
    return {
        "fea": conv_param(keys[0], d, in_channels, 5),
        "shrink": conv_param(keys[1], s, d, 1),
        "deep": [conv_param(keys[2 + i], s, s, 3) for i in range(m)],
        "expand": conv_param(keys[2 + m], d, s, 1),
        "up": conv_param(keys[3 + m], out_channels * upscale_factor ** 2, d, 3),
    }


# ----------------------------------------------------------------------------
# Pure-JAX reference (f32, HIGHEST precision) for numerical verification.
# ----------------------------------------------------------------------------
def _ref_conv(x, w, b, pad, relu):
    out = lax.conv_general_dilated(
        x, w, window_strides=(1, 1), padding=((pad, pad), (pad, pad)),
        dimension_numbers=("NCHW", "OIHW", "NCHW"),
        precision=lax.Precision.HIGHEST)
    out = out + b[None, :, None, None]
    return jnp.maximum(out, 0.0) if relu else out


def fsrcnn_reference(params, x_nchw, *, upscale_factor=2, out_channels=3, m=4):
    x = x_nchw.astype(jnp.float32)
    w, b = params["fea"]; out = _ref_conv(x, w, b, 2, True)
    w, b = params["shrink"]; out = _ref_conv(out, w, b, 0, True)
    for i in range(m):
        w, b = params["deep"][i]; out = _ref_conv(out, w, b, 1, True)
    w, b = params["expand"]; out = _ref_conv(out, w, b, 0, True)
    w, b = params["up"]; out = _ref_conv(out, w, b, 1, False)
    return _pixel_shuffle_nchw(out, upscale_factor, out_channels)


if __name__ == "__main__":
    key = jax.random.PRNGKey(0)
    pkey, xkey = jax.random.split(key)

    upscale, in_ch, out_ch, d, s, m = 2, 3, 3, 56, 12, 4
    params = init_fsrcnn_params(pkey, upscale, in_ch, out_ch, d, s, m)

    # Small NCHW input consistent with the module: (N=2, C=3, H=16, W=16).
    x = jax.random.normal(xkey, (2, in_ch, 16, 16), jnp.float32)

    fwd = jax.jit(functools.partial(fsrcnn_forward, upscale_factor=upscale,
                                    out_channels=out_ch, m=m))
    y = jax.block_until_ready(fwd(params, x))
    assert y.shape == (2, out_ch, 32, 32), y.shape

    y_ref = jax.block_until_ready(
        fsrcnn_reference(params, x, upscale_factor=upscale,
                         out_channels=out_ch, m=m))
    # bf16 inputs/weights with f32 accumulation across 8 chained convs, versus
    # an f32 HIGHEST-precision reference -> relaxed tolerance.
    np.testing.assert_allclose(np.asarray(y), np.asarray(y_ref),
                               rtol=3e-2, atol=3e-2)

    print("KERNEL_OK")
</pallas_src>

<mosaic_0001>
module attributes {stable_mosaic.version = 11 : i64} {
  func.func @_fsrcnn_kernel(%arg0: i32, %arg1: memref<1x8x1024xbf16, #tpu.memory_space<vmem>>, %arg2: memref<1x1024xf32, #tpu.memory_space<vmem>>, %arg3: memref<56x200xbf16, #tpu.memory_space<vmem>>, %arg4: memref<56x1xf32, #tpu.memory_space<vmem>>, %arg5: memref<16x56xbf16, #tpu.memory_space<vmem>>, %arg6: memref<16x1xf32, #tpu.memory_space<vmem>>, %arg7: memref<4x16x144xbf16, #tpu.memory_space<vmem>>, %arg8: memref<4x16x1xf32, #tpu.memory_space<vmem>>, %arg9: memref<56x16xbf16, #tpu.memory_space<vmem>>, %arg10: memref<56x1xf32, #tpu.memory_space<vmem>>, %arg11: memref<12x504xbf16, #tpu.memory_space<vmem>>, %arg12: memref<12x1xf32, #tpu.memory_space<vmem>>, %arg13: memref<1x12x1024xf32, #tpu.memory_space<vmem>>) attributes {dimension_semantics = [#tpu.dimension_semantics<parallel>], iteration_bounds = array<i64: 1>, scalar_prefetch = 0 : i64, scratch_operands = 0 : i64, tpu.core_type = #tpu.core_type<tc>, window_params = [{transform_indices = @transform_0, window_bounds = array<i64: 1, 8, 1024>}, {pipeline_mode = #tpu.pipeline_mode<synchronous>, transform_indices = @transform_1, window_bounds = array<i64: 1, 1024>}, {pipeline_mode = #tpu.pipeline_mode<synchronous>, transform_indices = @transform_2, window_bounds = array<i64: 56, 200>}, {pipeline_mode = #tpu.pipeline_mode<synchronous>, transform_indices = @transform_3, window_bounds = array<i64: 56, 1>}, {pipeline_mode = #tpu.pipeline_mode<synchronous>, transform_indices = @transform_4, window_bounds = array<i64: 16, 56>}, {pipeline_mode = #tpu.pipeline_mode<synchronous>, transform_indices = @transform_5, window_bounds = array<i64: 16, 1>}, {pipeline_mode = #tpu.pipeline_mode<synchronous>, transform_indices = @transform_6, window_bounds = array<i64: 4, 16, 144>}, {pipeline_mode = #tpu.pipeline_mode<synchronous>, transform_indices = @transform_7, window_bounds = array<i64: 4, 16, 1>}, {pipeline_mode = #tpu.pipeline_mode<synchronous>, transform_indices = @transform_8, window_bounds = array<i64: 56, 16>}, {pipeline_mode = #tpu.pipeline_mode<synchronous>, transform_indices = @transform_9, window_bounds = array<i64: 56, 1>}, {pipeline_mode = #tpu.pipeline_mode<synchronous>, transform_indices = @transform_10, window_bounds = array<i64: 12, 504>}, {pipeline_mode = #tpu.pipeline_mode<synchronous>, transform_indices = @transform_11, window_bounds = array<i64: 12, 1>}, {transform_indices = @transform_12, window_bounds = array<i64: 1, 12, 1024>}]} {
    %c0 = arith.constant 0 : index
    %c0_0 = arith.constant 0 : index
    %0 = vector.load %arg2[%c0, %c0_0] : memref<1x1024xf32, #tpu.memory_space<vmem>>, vector<1x1024xf32>
    %c0_1 = arith.constant 0 : index
    %c0_2 = arith.constant 0 : index
    %c0_3 = arith.constant 0 : index
    %1 = vector.load %arg1[%c0_1, %c0_2, %c0_3] : memref<1x8x1024xbf16, #tpu.memory_space<vmem>>, vector<1x8x1024xbf16>
    %2 = vector.shape_cast %1 : vector<1x8x1024xbf16> to vector<8x1024xbf16>
    %3 = arith.extf %2 : vector<8x1024xbf16> to vector<8x1024xf32>
    %c0_4 = arith.constant 0 : index
    %c0_5 = arith.constant 0 : index
    %4 = vector.load %arg3[%c0_4, %c0_5] : memref<56x200xbf16, #tpu.memory_space<vmem>>, vector<56x200xbf16>
    %c0_6 = arith.constant 0 : index
    %c0_7 = arith.constant 0 : index
    %5 = vector.load %arg4[%c0_6, %c0_7] : memref<56x1xf32, #tpu.memory_space<vmem>>, vector<56x1xf32>
    %c42_i32 = arith.constant 42 : i32
    %6 = tpu.dynamic_rotate %3 by %c42_i32 dim 1 : vector<8x1024xf32>, i32 -> vector<8x1024xf32>
    %c41_i32 = arith.constant 41 : i32
    %7 = tpu.dynamic_rotate %3 by %c41_i32 dim 1 : vector<8x1024xf32>, i32 -> vector<8x1024xf32>
    %c40_i32 = arith.constant 40 : i32
    %8 = tpu.dynamic_rotate %3 by %c40_i32 dim 1 : vector<8x1024xf32>, i32 -> vector<8x1024xf32>
    %c39_i32 = arith.constant 39 : i32
    %9 = tpu.dynamic_rotate %3 by %c39_i32 dim 1 : vector<8x1024xf32>, i32 -> vector<8x1024xf32>
    %c38_i32 = arith.constant 38 : i32
    %10 = tpu.dynamic_rotate %3 by %c38_i32 dim 1 : vector<8x1024xf32>, i32 -> vector<8x1024xf32>
    %c22_i32 = arith.constant 22 : i32
    %11 = tpu.dynamic_rotate %3 by %c22_i32 dim 1 : vector<8x1024xf32>, i32 -> vector<8x1024xf32>
    %c21_i32 = arith.constant 21 : i32
    %12 = tpu.dynamic_rotate %3 by %c21_i32 dim 1 : vector<8x1024xf32>, i32 -> vector<8x1024xf32>
    %c20_i32 = arith.constant 20 : i32
    %13 = tpu.dynamic_rotate %3 by %c20_i32 dim 1 : vector<8x1024xf32>, i32 -> vector<8x1024xf32>
    %c19_i32 = arith.constant 19 : i32
    %14 = tpu.dynamic_rotate %3 by %c19_i32 dim 1 : vector<8x1024xf32>, i32 -> vector<8x1024xf32>
    %c18_i32 = arith.constant 18 : i32
    %15 = tpu.dynamic_rotate %3 by %c18_i32 dim 1 : vector<8x1024xf32>, i32 -> vector<8x1024xf32>
    %c2_i32 = arith.constant 2 : i32
    %16 = tpu.dynamic_rotate %3 by %c2_i32 dim 1 : vector<8x1024xf32>, i32 -> vector<8x1024xf32>
    %c1_i32 = arith.constant 1 : i32
    %17 = tpu.dynamic_rotate %3 by %c1_i32 dim 1 : vector<8x1024xf32>, i32 -> vector<8x1024xf32>
    %c1023_i32 = arith.constant 1023 : i32
    %18 = tpu.dynamic_rotate %3 by %c1023_i32 dim 1 : vector<8x1024xf32>, i32 -> vector<8x1024xf32>
    %c1022_i32 = arith.constant 1022 : i32
    %19 = tpu.dynamic_rotate %3 by %c1022_i32 dim 1 : vector<8x1024xf32>, i32 -> vector<8x1024xf32>
    %c1006_i32 = arith.constant 1006 : i32
    %20 = tpu.dynamic_rotate %3 by %c1006_i32 dim 1 : vector<8x1024xf32>, i32 -> vector<8x1024xf32>
    %c1005_i32 = arith.constant 1005 : i32
    %21 = tpu.dynamic_rotate %3 by %c1005_i32 dim 1 : vector<8x1024xf32>, i32 -> vector<8x1024xf32>
    %c1004_i32 = arith.constant 1004 : i32
    %22 = tpu.dynamic_rotate %3 by %c1004_i32 dim 1 : vector<8x1024xf32>, i32 -> vector<8x1024xf32>
    %c1003_i32 = arith.constant 1003 : i32
    %23 = tpu.dynamic_rotate %3 by %c1003_i32 dim 1 : vector<8x1024xf32>, i32 -> vector<8x1024xf32>
    %c1002_i32 = arith.constant 1002 : i32
    %24 = tpu.dynamic_rotate %3 by %c1002_i32 dim 1 : vector<8x1024xf32>, i32 -> vector<8x1024xf32>
    %c986_i32 = arith.constant 986 : i32
    %25 = tpu.dynamic_rotate %3 by %c986_i32 dim 1 : vector<8x1024xf32>, i32 -> vector<8x1024xf32>
    %c985_i32 = arith.constant 985 : i32
    %26 = tpu.dynamic_rotate %3 by %c985_i32 dim 1 : vector<8x1024xf32>, i32 -> vector<8x1024xf32>
    %c984_i32 = arith.constant 984 : i32
    %27 = tpu.dynamic_rotate %3 by %c984_i32 dim 1 : vector<8x1024xf32>, i32 -> vector<8x1024xf32>
    %c983_i32 = arith.constant 983 : i32
    %28 = tpu.dynamic_rotate %3 by %c983_i32 dim 1 : vector<8x1024xf32>, i32 -> vector<8x1024xf32>
    %c982_i32 = arith.constant 982 : i32
    %29 = tpu.dynamic_rotate %3 by %c982_i32 dim 1 : vector<8x1024xf32>, i32 -> vector<8x1024xf32>
    %30 = tpu.concatenate %6, %7, %8, %9, %10, %11, %12, %13, %14, %15, %16, %17, %3, %18, %19, %20 in 0 : vector<8x1024xf32>, vector<8x1024xf32>, vector<8x1024xf32>, vector<8x1024xf32>, vector<8x1024xf32>, vector<8x1024xf32>, vector<8x1024xf32>, vector<8x1024xf32>, vector<8x1024xf32>, vector<8x1024xf32>, vector<8x1024xf32>, vector<8x1024xf32>, vector<8x1024xf32>, vector<8x1024xf32>, vector<8x1024xf32>, vector<8x1024xf32> -> vector<128x1024xf32>
    %31 = tpu.concatenate %21, %22, %23, %24, %25, %26, %27, %28, %29 in 0 : vector<8x1024xf32>, vector<8x1024xf32>, vector<8x1024xf32>, vector<8x1024xf32>, vector<8x1024xf32>, vector<8x1024xf32>, vector<8x1024xf32>, vector<8x1024xf32>, vector<8x1024xf32> -> vector<72x1024xf32>
    %32 = tpu.concatenate %30, %31 in 0 : vector<128x1024xf32>, vector<72x1024xf32> -> vector<200x1024xf32>
    %33 = arith.truncf %32 : vector<200x1024xf32> to vector<200x1024xbf16>
    %cst = arith.constant dense<0.000000e+00> : vector<56x1024xf32>
    %34 = tpu.matmul %4, %33, %cst {dimension_numbers = #tpu.dot_dimension_numbers<[1], [0], [0], [1], [0, 0, 1, 1], [], []>} : vector<56x200xbf16>, vector<200x1024xbf16>, vector<56x1024xf32> -> vector<56x1024xf32>
    %35 = vector.broadcast %5 : vector<56x1xf32> to vector<56x1024xf32>
    %36 = arith.addf %34, %35 : vector<56x1024xf32>
    %cst_8 = arith.constant 0.000000e+00 : f32
    %37 = vector.broadcast %cst_8 : f32 to vector<56x1024xf32>
    %38 = arith.maximumf %36, %37 : vector<56x1024xf32>
    %c0_9 = arith.constant 0 : index
    %c0_10 = arith.constant 0 : index
    %39 = vector.load %arg5[%c0_9, %c0_10] : memref<16x56xbf16, #tpu.memory_space<vmem>>, vector<16x56xbf16>
    %c0_11 = arith.constant 0 : index
    %c0_12 = arith.constant 0 : index
    %40 = vector.load %arg6[%c0_11, %c0_12] : memref<16x1xf32, #tpu.memory_space<vmem>>, vector<16x1xf32>
    %41 = arith.truncf %38 : vector<56x1024xf32> to vector<56x1024xbf16>
    %cst_13 = arith.constant dense<0.000000e+00> : vector<16x1024xf32>
    %42 = tpu.matmul %39, %41, %cst_13 {dimension_numbers = #tpu.dot_dimension_numbers<[1], [0], [0], [1], [0, 0, 1, 1], [], []>} : vector<16x56xbf16>, vector<56x1024xbf16>, vector<16x1024xf32> -> vector<16x1024xf32>
    %43 = vector.broadcast %40 : vector<16x1xf32> to vector<16x1024xf32>
    %44 = arith.addf %42, %43 : vector<16x1024xf32>
    %cst_14 = arith.constant 0.000000e+00 : f32
    %45 = vector.broadcast %cst_14 : f32 to vector<16x1024xf32>
    %46 = arith.maximumf %44, %45 : vector<16x1024xf32>
    %47 = vector.broadcast %0 : vector<1x1024xf32> to vector<16x1024xf32>
    %48 = arith.mulf %46, %47 : vector<16x1024xf32>
    %c0_15 = arith.constant 0 : index
    %c0_16 = arith.constant 0 : index
    %c0_17 = arith.constant 0 : index
    %49 = vector.load %arg7[%c0_15, %c0_16, %c0_17] : memref<4x16x144xbf16, #tpu.memory_space<vmem>>, vector<1x16x144xbf16>
    %50 = vector.shape_cast %49 : vector<1x16x144xbf16> to vector<16x144xbf16>
    %c0_18 = arith.constant 0 : index
    %c0_19 = arith.constant 0 : index
    %c0_20 = arith.constant 0 : index
    %51 = vector.load %arg8[%c0_18, %c0_19, %c0_20] : memref<4x16x1xf32, #tpu.memory_space<vmem>>, vector<1x16x1xf32>
    %52 = vector.shape_cast %51 : vector<1x16x1xf32> to vector<16x1xf32>
    %c21_i32_21 = arith.constant 21 : i32
    %53 = tpu.dynamic_rotate %48 by %c21_i32_21 dim 1 : vector<16x1024xf32>, i32 -> vector<16x1024xf32>
    %c20_i32_22 = arith.constant 20 : i32
    %54 = tpu.dynamic_rotate %48 by %c20_i32_22 dim 1 : vector<16x1024xf32>, i32 -> vector<16x1024xf32>
    %c19_i32_23 = arith.constant 19 : i32
    %55 = tpu.dynamic_rotate %48 by %c19_i32_23 dim 1 : vector<16x1024xf32>, i32 -> vector<16x1024xf32>
    %c1_i32_24 = arith.constant 1 : i32
    %56 = tpu.dynamic_rotate %48 by %c1_i32_24 dim 1 : vector<16x1024xf32>, i32 -> vector<16x1024xf32>
    %c1023_i32_25 = arith.constant 1023 : i32
    %57 = tpu.dynamic_rotate %48 by %c1023_i32_25 dim 1 : vector<16x1024xf32>, i32 -> vector<16x1024xf32>
    %c1005_i32_26 = arith.constant 1005 : i32
    %58 = tpu.dynamic_rotate %48 by %c1005_i32_26 dim 1 : vector<16x1024xf32>, i32 -> vector<16x1024xf32>
    %c1004_i32_27 = arith.constant 1004 : i32
    %59 = tpu.dynamic_rotate %48 by %c1004_i32_27 dim 1 : vector<16x1024xf32>, i32 -> vector<16x1024xf32>
    %c1003_i32_28 = arith.constant 1003 : i32
    %60 = tpu.dynamic_rotate %48 by %c1003_i32_28 dim 1 : vector<16x1024xf32>, i32 -> vector<16x1024xf32>
    %61 = tpu.concatenate %53, %54, %55, %56, %48, %57, %58, %59, %60 in 0 : vector<16x1024xf32>, vector<16x1024xf32>, vector<16x1024xf32>, vector<16x1024xf32>, vector<16x1024xf32>, vector<16x1024xf32>, vector<16x1024xf32>, vector<16x1024xf32>, vector<16x1024xf32> -> vector<144x1024xf32>
    %62 = arith.truncf %61 : vector<144x1024xf32> to vector<144x1024xbf16>
    %cst_29 = arith.constant dense<0.000000e+00> : vector<16x1024xf32>
    %63 = tpu.matmul %50, %62, %cst_29 {dimension_numbers = #tpu.dot_dimension_numbers<[1], [0], [0], [1], [0, 0, 1, 1], [], []>} : vector<16x144xbf16>, vector<144x1024xbf16>, vector<16x1024xf32> -> vector<16x1024xf32>
    %64 = vector.broadcast %52 : vector<16x1xf32> to vector<16x1024xf32>
    %65 = arith.addf %63, %64 : vector<16x1024xf32>
    %cst_30 = arith.constant 0.000000e+00 : f32
    %66 = vector.broadcast %cst_30 : f32 to vector<16x1024xf32>
    %67 = arith.maximumf %65, %66 : vector<16x1024xf32>
    %68 = vector.broadcast %0 : vector<1x1024xf32> to vector<16x1024xf32>
    %69 = arith.mulf %67, %68 : vector<16x1024xf32>
    %c1 = arith.constant 1 : index
    %c0_31 = arith.constant 0 : index
    %c0_32 = arith.constant 0 : index
    %70 = vector.load %arg7[%c1, %c0_31, %c0_32] : memref<4x16x144xbf16, #tpu.memory_space<vmem>>, vector<1x16x144xbf16>
    %71 = vector.shape_cast %70 : vector<1x16x144xbf16> to vector<16x144xbf16>
    %c1_33 = arith.constant 1 : index
    %c0_34 = arith.constant 0 : index
    %c0_35 = arith.constant 0 : index
    %72 = vector.load %arg8[%c1_33, %c0_34, %c0_35] : memref<4x16x1xf32, #tpu.memory_space<vmem>>, vector<1x16x1xf32>
    %73 = vector.shape_cast %72 : vector<1x16x1xf32> to vector<16x1xf32>
    %c21_i32_36 = arith.constant 21 : i32
    %74 = tpu.dynamic_rotate %69 by %c21_i32_36 dim 1 : vector<16x1024xf32>, i32 -> vector<16x1024xf32>
    %c20_i32_37 = arith.constant 20 : i32
    %75 = tpu.dynamic_rotate %69 by %c20_i32_37 dim 1 : vector<16x1024xf32>, i32 -> vector<16x1024xf32>
    %c19_i32_38 = arith.constant 19 : i32
    %76 = tpu.dynamic_rotate %69 by %c19_i32_38 dim 1 : vector<16x1024xf32>, i32 -> vector<16x1024xf32>
    %c1_i32_39 = arith.constant 1 : i32
    %77 = tpu.dynamic_rotate %69 by %c1_i32_39 dim 1 : vector<16x1024xf32>, i32 -> vector<16x1024xf32>
    %c1023_i32_40 = arith.constant 1023 : i32
    %78 = tpu.dynamic_rotate %69 by %c1023_i32_40 dim 1 : vector<16x1024xf32>, i32 -> vector<16x1024xf32>
    %c1005_i32_41 = arith.constant 1005 : i32
    %79 = tpu.dynamic_rotate %69 by %c1005_i32_41 dim 1 : vector<16x1024xf32>, i32 -> vector<16x1024xf32>
    %c1004_i32_42 = arith.constant 1004 : i32
    %80 = tpu.dynamic_rotate %69 by %c1004_i32_42 dim 1 : vector<16x1024xf32>, i32 -> vector<16x1024xf32>
    %c1003_i32_43 = arith.constant 1003 : i32
    %81 = tpu.dynamic_rotate %69 by %c1003_i32_43 dim 1 : vector<16x1024xf32>, i32 -> vector<16x1024xf32>
    %82 = tpu.concatenate %74, %75, %76, %77, %69, %78, %79, %80, %81 in 0 : vector<16x1024xf32>, vector<16x1024xf32>, vector<16x1024xf32>, vector<16x1024xf32>, vector<16x1024xf32>, vector<16x1024xf32>, vector<16x1024xf32>, vector<16x1024xf32>, vector<16x1024xf32> -> vector<144x1024xf32>
    %83 = arith.truncf %82 : vector<144x1024xf32> to vector<144x1024xbf16>
    %cst_44 = arith.constant dense<0.000000e+00> : vector<16x1024xf32>
    %84 = tpu.matmul %71, %83, %cst_44 {dimension_numbers = #tpu.dot_dimension_numbers<[1], [0], [0], [1], [0, 0, 1, 1], [], []>} : vector<16x144xbf16>, vector<144x1024xbf16>, vector<16x1024xf32> -> vector<16x1024xf32>
    %85 = vector.broadcast %73 : vector<16x1xf32> to vector<16x1024xf32>
    %86 = arith.addf %84, %85 : vector<16x1024xf32>
    %cst_45 = arith.constant 0.000000e+00 : f32
    %87 = vector.broadcast %cst_45 : f32 to vector<16x1024xf32>
    %88 = arith.maximumf %86, %87 : vector<16x1024xf32>
    %89 = vector.broadcast %0 : vector<1x1024xf32> to vector<16x1024xf32>
    %90 = arith.mulf %88, %89 : vector<16x1024xf32>
    %c2 = arith.constant 2 : index
    %c0_46 = arith.constant 0 : index
    %c0_47 = arith.constant 0 : index
    %91 = vector.load %arg7[%c2, %c0_46, %c0_47] : memref<4x16x144xbf16, #tpu.memory_space<vmem>>, vector<1x16x144xbf16>
    %92 = vector.shape_cast %91 : vector<1x16x144xbf16> to vector<16x144xbf16>
    %c2_48 = arith.constant 2 : index
    %c0_49 = arith.constant 0 : index
    %c0_50 = arith.constant 0 : index
    %93 = vector.load %arg8[%c2_48, %c0_49, %c0_50] : memref<4x16x1xf32, #tpu.memory_space<vmem>>, vector<1x16x1xf32>
    %94 = vector.shape_cast %93 : vector<1x16x1xf32> to vector<16x1xf32>
    %c21_i32_51 = arith.constant 21 : i32
    %95 = tpu.dynamic_rotate %90 by %c21_i32_51 dim 1 : vector<16x1024xf32>, i32 -> vector<16x1024xf32>
    %c20_i32_52 = arith.constant 20 : i32
    %96 = tpu.dynamic_rotate %90 by %c20_i32_52 dim 1 : vector<16x1024xf32>, i32 -> vector<16x1024xf32>
    %c19_i32_53 = arith.constant 19 : i32
    %97 = tpu.dynamic_rotate %90 by %c19_i32_53 dim 1 : vector<16x1024xf32>, i32 -> vector<16x1024xf32>
    %c1_i32_54 = arith.constant 1 : i32
    %98 = tpu.dynamic_rotate %90 by %c1_i32_54 dim 1 : vector<16x1024xf32>, i32 -> vector<16x1024xf32>
    %c1023_i32_55 = arith.constant 1023 : i32
    %99 = tpu.dynamic_rotate %90 by %c1023_i32_55 dim 1 : vector<16x1024xf32>, i32 -> vector<16x1024xf32>
    %c1005_i32_56 = arith.constant 1005 : i32
    %100 = tpu.dynamic_rotate %90 by %c1005_i32_56 dim 1 : vector<16x1024xf32>, i32 -> vector<16x1024xf32>
    %c1004_i32_57 = arith.constant 1004 : i32
    %101 = tpu.dynamic_rotate %90 by %c1004_i32_57 dim 1 : vector<16x1024xf32>, i32 -> vector<16x1024xf32>
    %c1003_i32_58 = arith.constant 1003 : i32
    %102 = tpu.dynamic_rotate %90 by %c1003_i32_58 dim 1 : vector<16x1024xf32>, i32 -> vector<16x1024xf32>
    %103 = tpu.concatenate %95, %96, %97, %98, %90, %99, %100, %101, %102 in 0 : vector<16x1024xf32>, vector<16x1024xf32>, vector<16x1024xf32>, vector<16x1024xf32>, vector<16x1024xf32>, vector<16x1024xf32>, vector<16x1024xf32>, vector<16x1024xf32>, vector<16x1024xf32> -> vector<144x1024xf32>
    %104 = arith.truncf %103 : vector<144x1024xf32> to vector<144x1024xbf16>
    %cst_59 = arith.constant dense<0.000000e+00> : vector<16x1024xf32>
    %105 = tpu.matmul %92, %104, %cst_59 {dimension_numbers = #tpu.dot_dimension_numbers<[1], [0], [0], [1], [0, 0, 1, 1], [], []>} : vector<16x144xbf16>, vector<144x1024xbf16>, vector<16x1024xf32> -> vector<16x1024xf32>
    %106 = vector.broadcast %94 : vector<16x1xf32> to vector<16x1024xf32>
    %107 = arith.addf %105, %106 : vector<16x1024xf32>
    %cst_60 = arith.constant 0.000000e+00 : f32
    %108 = vector.broadcast %cst_60 : f32 to vector<16x1024xf32>
    %109 = arith.maximumf %107, %108 : vector<16x1024xf32>
    %110 = vector.broadcast %0 : vector<1x1024xf32> to vector<16x1024xf32>
    %111 = arith.mulf %109, %110 : vector<16x1024xf32>
    %c3 = arith.constant 3 : index
    %c0_61 = arith.constant 0 : index
    %c0_62 = arith.constant 0 : index
    %112 = vector.load %arg7[%c3, %c0_61, %c0_62] : memref<4x16x144xbf16, #tpu.memory_space<vmem>>, vector<1x16x144xbf16>
    %113 = vector.shape_cast %112 : vector<1x16x144xbf16> to vector<16x144xbf16>
    %c3_63 = arith.constant 3 : index
    %c0_64 = arith.constant 0 : index
    %c0_65 = arith.constant 0 : index
    %114 = vector.load %arg8[%c3_63, %c0_64, %c0_65] : memref<4x16x1xf32, #tpu.memory_space<vmem>>, vector<1x16x1xf32>
    %115 = vector.shape_cast %114 : vector<1x16x1xf32> to vector<16x1xf32>
    %c21_i32_66 = arith.constant 21 : i32
    %116 = tpu.dynamic_rotate %111 by %c21_i32_66 dim 1 : vector<16x1024xf32>, i32 -> vector<16x1024xf32>
    %c20_i32_67 = arith.constant 20 : i32
    %117 = tpu.dynamic_rotate %111 by %c20_i32_67 dim 1 : vector<16x1024xf32>, i32 -> vector<16x1024xf32>
    %c19_i32_68 = arith.constant 19 : i32
    %118 = tpu.dynamic_rotate %111 by %c19_i32_68 dim 1 : vector<16x1024xf32>, i32 -> vector<16x1024xf32>
    %c1_i32_69 = arith.constant 1 : i32
    %119 = tpu.dynamic_rotate %111 by %c1_i32_69 dim 1 : vector<16x1024xf32>, i32 -> vector<16x1024xf32>
    %c1023_i32_70 = arith.constant 1023 : i32
    %120 = tpu.dynamic_rotate %111 by %c1023_i32_70 dim 1 : vector<16x1024xf32>, i32 -> vector<16x1024xf32>
    %c1005_i32_71 = arith.constant 1005 : i32
    %121 = tpu.dynamic_rotate %111 by %c1005_i32_71 dim 1 : vector<16x1024xf32>, i32 -> vector<16x1024xf32>
    %c1004_i32_72 = arith.constant 1004 : i32
    %122 = tpu.dynamic_rotate %111 by %c1004_i32_72 dim 1 : vector<16x1024xf32>, i32 -> vector<16x1024xf32>
    %c1003_i32_73 = arith.constant 1003 : i32
    %123 = tpu.dynamic_rotate %111 by %c1003_i32_73 dim 1 : vector<16x1024xf32>, i32 -> vector<16x1024xf32>
    %124 = tpu.concatenate %116, %117, %118, %119, %111, %120, %121, %122, %123 in 0 : vector<16x1024xf32>, vector<16x1024xf32>, vector<16x1024xf32>, vector<16x1024xf32>, vector<16x1024xf32>, vector<16x1024xf32>, vector<16x1024xf32>, vector<16x1024xf32>, vector<16x1024xf32> -> vector<144x1024xf32>
    %125 = arith.truncf %124 : vector<144x1024xf32> to vector<144x1024xbf16>
    %cst_74 = arith.constant dense<0.000000e+00> : vector<16x1024xf32>
    %126 = tpu.matmul %113, %125, %cst_74 {dimension_numbers = #tpu.dot_dimension_numbers<[1], [0], [0], [1], [0, 0, 1, 1], [], []>} : vector<16x144xbf16>, vector<144x1024xbf16>, vector<16x1024xf32> -> vector<16x1024xf32>
    %127 = vector.broadcast %115 : vector<16x1xf32> to vector<16x1024xf32>
    %128 = arith.addf %126, %127 : vector<16x1024xf32>
    %cst_75 = arith.constant 0.000000e+00 : f32
    %129 = vector.broadcast %cst_75 : f32 to vector<16x1024xf32>
    %130 = arith.maximumf %128, %129 : vector<16x1024xf32>
    %c0_76 = arith.constant 0 : index
    %c0_77 = arith.constant 0 : index
    %131 = vector.load %arg9[%c0_76, %c0_77] : memref<56x16xbf16, #tpu.memory_space<vmem>>, vector<56x16xbf16>
    %c0_78 = arith.constant 0 : index
    %c0_79 = arith.constant 0 : index
    %132 = vector.load %arg10[%c0_78, %c0_79] : memref<56x1xf32, #tpu.memory_space<vmem>>, vector<56x1xf32>
    %133 = arith.truncf %130 : vector<16x1024xf32> to vector<16x1024xbf16>
    %cst_80 = arith.constant dense<0.000000e+00> : vector<56x1024xf32>
    %134 = tpu.matmul %131, %133, %cst_80 {dimension_numbers = #tpu.dot_dimension_numbers<[1], [0], [0], [1], [0, 0, 1, 1], [], []>} : vector<56x16xbf16>, vector<16x1024xbf16>, vector<56x1024xf32> -> vector<56x1024xf32>
    %135 = vector.broadcast %132 : vector<56x1xf32> to vector<56x1024xf32>
    %136 = arith.addf %134, %135 : vector<56x1024xf32>
    %cst_81 = arith.constant 0.000000e+00 : f32
    %137 = vector.broadcast %cst_81 : f32 to vector<56x1024xf32>
    %138 = arith.maximumf %136, %137 : vector<56x1024xf32>
    %139 = vector.broadcast %0 : vector<1x1024xf32> to vector<56x1024xf32>
    %140 = arith.mulf %138, %139 : vector<56x1024xf32>
    %c0_82 = arith.constant 0 : index
    %c0_83 = arith.constant 0 : index
    %141 = vector.load %arg11[%c0_82, %c0_83] : memref<12x504xbf16, #tpu.memory_space<vmem>>, vector<12x504xbf16>
    %c0_84 = arith.constant 0 : index
    %c0_85 = arith.constant 0 : index
    %142 = vector.load %arg12[%c0_84, %c0_85] : memref<12x1xf32, #tpu.memory_space<vmem>>, vector<12x1xf32>
    %c21_i32_86 = arith.constant 21 : i32
    %143 = tpu.dynamic_rotate %140 by %c21_i32_86 dim 1 : vector<56x1024xf32>, i32 -> vector<56x1024xf32>
    %c20_i32_87 = arith.constant 20 : i32
    %144 = tpu.dynamic_rotate %140 by %c20_i32_87 dim 1 : vector<56x1024xf32>, i32 -> vector<56x1024xf32>
    %c19_i32_88 = arith.constant 19 : i32
    %145 = tpu.dynamic_rotate %140 by %c19_i32_88 dim 1 : vector<56x1024xf32>, i32 -> vector<56x1024xf32>
    %c1_i32_89 = arith.constant 1 : i32
    %146 = tpu.dynamic_rotate %140 by %c1_i32_89 dim 1 : vector<56x1024xf32>, i32 -> vector<56x1024xf32>
    %c1023_i32_90 = arith.constant 1023 : i32
    %147 = tpu.dynamic_rotate %140 by %c1023_i32_90 dim 1 : vector<56x1024xf32>, i32 -> vector<56x1024xf32>
    %c1005_i32_91 = arith.constant 1005 : i32
    %148 = tpu.dynamic_rotate %140 by %c1005_i32_91 dim 1 : vector<56x1024xf32>, i32 -> vector<56x1024xf32>
    %c1004_i32_92 = arith.constant 1004 : i32
    %149 = tpu.dynamic_rotate %140 by %c1004_i32_92 dim 1 : vector<56x1024xf32>, i32 -> vector<56x1024xf32>
    %c1003_i32_93 = arith.constant 1003 : i32
    %150 = tpu.dynamic_rotate %140 by %c1003_i32_93 dim 1 : vector<56x1024xf32>, i32 -> vector<56x1024xf32>
    %151 = tpu.concatenate %143, %144, %145, %146, %140, %147, %148, %149, %150 in 0 : vector<56x1024xf32>, vector<56x1024xf32>, vector<56x1024xf32>, vector<56x1024xf32>, vector<56x1024xf32>, vector<56x1024xf32>, vector<56x1024xf32>, vector<56x1024xf32>, vector<56x1024xf32> -> vector<504x1024xf32>
    %152 = arith.truncf %151 : vector<504x1024xf32> to vector<504x1024xbf16>
    %cst_94 = arith.constant dense<0.000000e+00> : vector<12x1024xf32>
    %153 = tpu.matmul %141, %152, %cst_94 {dimension_numbers = #tpu.dot_dimension_numbers<[1], [0], [0], [1], [0, 0, 1, 1], [], []>} : vector<12x504xbf16>, vector<504x1024xbf16>, vector<12x1024xf32> -> vector<12x1024xf32>
    %154 = vector.broadcast %142 : vector<12x1xf32> to vector<12x1024xf32>
    %155 = arith.addf %153, %154 : vector<12x1024xf32>
    %c0_95 = arith.constant 0 : index
    %c0_96 = arith.constant 0 : index
    %c0_97 = arith.constant 0 : index
    %156 = vector.load %arg13[%c0_95, %c0_96, %c0_97] : memref<1x12x1024xf32, #tpu.memory_space<vmem>>, vector<1x12x1024xf32>
    %157 = vector.shape_cast %156 : vector<1x12x1024xf32> to vector<12x1024xf32>
    %158 = vector.shape_cast %155 : vector<12x1024xf32> to vector<1x12x1024xf32>
    tpu.vector_store %arg13[%c0_95, %c0_96, %c0_97], %158 {strides = array<i32>} : memref<1x12x1024xf32, #tpu.memory_space<vmem>>, vector<1x12x1024xf32>,
    return
  }
  func.func @transform_0(%arg0: i32) -> (i32, i32, i32) {
    %c0_i32 = arith.constant 0 : i32
    %c0_i32_0 = arith.constant 0 : i32
    %c0_i32_1 = arith.constant 0 : i32
    return %arg0, %c0_i32, %c0_i32_0 : i32, i32, i32
  }
  func.func @transform_1(%arg0: i32) -> (i32, i32) {
    %c0_i32 = arith.constant 0 : i32
    %c0_i32_0 = arith.constant 0 : i32
    %c0_i32_1 = arith.constant 0 : i32
    return %c0_i32, %c0_i32_0 : i32, i32
  }
  func.func @transform_2(%arg0: i32) -> (i32, i32) {
    %c0_i32 = arith.constant 0 : i32
    %c0_i32_0 = arith.constant 0 : i32
    %c0_i32_1 = arith.constant 0 : i32
    return %c0_i32, %c0_i32_0 : i32, i32
  }
  func.func @transform_3(%arg0: i32) -> (i32, i32) {
    %c0_i32 = arith.constant 0 : i32
    %c0_i32_0 = arith.constant 0 : i32
    %c0_i32_1 = arith.constant 0 : i32
    return %c0_i32, %c0_i32_0 : i32, i32
  }
  func.func @transform_4(%arg0: i32) -> (i32, i32) {
    %c0_i32 = arith.constant 0 : i32
    %c0_i32_0 = arith.constant 0 : i32
    %c0_i32_1 = arith.constant 0 : i32
    return %c0_i32, %c0_i32_0 : i32, i32
  }
  func.func @transform_5(%arg0: i32) -> (i32, i32) {
    %c0_i32 = arith.constant 0 : i32
    %c0_i32_0 = arith.constant 0 : i32
    %c0_i32_1 = arith.constant 0 : i32
    return %c0_i32, %c0_i32_0 : i32, i32
  }
  func.func @transform_6(%arg0: i32) -> (i32, i32, i32) {
    %c0_i32 = arith.constant 0 : i32
    %c0_i32_0 = arith.constant 0 : i32
    %c0_i32_1 = arith.constant 0 : i32
    %c0_i32_2 = arith.constant 0 : i32
    return %c0_i32, %c0_i32_0, %c0_i32_1 : i32, i32, i32
  }
  func.func @transform_7(%arg0: i32) -> (i32, i32, i32) {
    %c0_i32 = arith.constant 0 : i32
    %c0_i32_0 = arith.constant 0 : i32
    %c0_i32_1 = arith.constant 0 : i32
    %c0_i32_2 = arith.constant 0 : i32
    return %c0_i32, %c0_i32_0, %c0_i32_1 : i32, i32, i32
  }
  func.func @transform_8(%arg0: i32) -> (i32, i32) {
    %c0_i32 = arith.constant 0 : i32
    %c0_i32_0 = arith.constant 0 : i32
    %c0_i32_1 = arith.constant 0 : i32
    return %c0_i32, %c0_i32_0 : i32, i32
  }
  func.func @transform_9(%arg0: i32) -> (i32, i32) {
    %c0_i32 = arith.constant 0 : i32
    %c0_i32_0 = arith.constant 0 : i32
    %c0_i32_1 = arith.constant 0 : i32
    return %c0_i32, %c0_i32_0 : i32, i32
  }
  func.func @transform_10(%arg0: i32) -> (i32, i32) {
    %c0_i32 = arith.constant 0 : i32
    %c0_i32_0 = arith.constant 0 : i32
    %c0_i32_1 = arith.constant 0 : i32
    return %c0_i32, %c0_i32_0 : i32, i32
  }
  func.func @transform_11(%arg0: i32) -> (i32, i32) {
    %c0_i32 = arith.constant 0 : i32
    %c0_i32_0 = arith.constant 0 : i32
    %c0_i32_1 = arith.constant 0 : i32
    return %c0_i32, %c0_i32_0 : i32, i32
  }
  func.func @transform_12(%arg0: i32) -> (i32, i32, i32) {
    %c0_i32 = arith.constant 0 : i32
    %c0_i32_0 = arith.constant 0 : i32
    %c0_i32_1 = arith.constant 0 : i32
    return %arg0, %c0_i32, %c0_i32_0 : i32, i32, i32
  }
}

</mosaic_0001>

<llo_original>
// kernel: fsrcnn_forward.1
$region0: #{fsrcnn_forward.1}
  #allocation0 [shape = 'u32[]', space=smem, size = 0x4, offset = 0x4, fixed_abs, tag = 'smem constant byte address 0x4 - core index']
  #allocation1 [shape = 'u32[144,128]{1,0:T(1,128)}', space=vmem, size = 0x12000, scoped, tag = 'internal scratch']
  %s0 = inlined_call_operand.vmem [shape: bf16[1,8,1024], index: 0, kind: input, shape index: {}]
  %s1 = inlined_call_operand.vmem [shape: f32[1,1024], index: 1, kind: input, shape index: {}]
  %s2 = inlined_call_operand.vmem [shape: bf16[56,200], index: 2, kind: input, shape index: {}]
  %s3 = inlined_call_operand.vmem [shape: f32[56,1], index: 3, kind: input, shape index: {}]
  %s4 = inlined_call_operand.vmem [shape: bf16[16,56], index: 4, kind: input, shape index: {}]
  %s5 = inlined_call_operand.vmem [shape: f32[16,1], index: 5, kind: input, shape index: {}]
  %s6 = inlined_call_operand.vmem [shape: bf16[4,16,144], index: 6, kind: input, shape index: {}]
  %s7 = inlined_call_operand.vmem [shape: f32[4,16,1], index: 7, kind: input, shape index: {}]
  %s8 = inlined_call_operand.vmem [shape: bf16[56,16], index: 8, kind: input, shape index: {}]
  %s9 = inlined_call_operand.vmem [shape: f32[56,1], index: 9, kind: input, shape index: {}]
  %s10 = inlined_call_operand.vmem [shape: bf16[12,504], index: 10, kind: input, shape index: {}]
  %s11 = inlined_call_operand.vmem [shape: f32[12,1], index: 11, kind: input, shape index: {}]
  %s12 = inlined_call_operand.vmem [shape: f32[1,12,1024], index: 12, kind: output, shape index: {}]
  %s13 = sld [smem:[#allocation0]]
  $region58: #{fsrcnn_forward.1} parent=0
    _
  %s15 = ssub.s32 1, %s13
  %s16 = scalar_select 0, %s15, %s13
  // Predicated region
  $region2: #{fsrcnn_forward.1} parent=0 // pred_check
    _
  $region3: #{fsrcnn_forward.1} parent=0 // pred_check_branch
    %18 = sbr.rel (0) target = $region5
  $region4: #{fsrcnn_forward.1} parent=0 // pred_region
    _
  $region5: #{fsrcnn_forward.1} parent=0 // pred_fallthru
    _
  // Predicated region
  $region6: #{fsrcnn_forward.1} parent=0 // pred_check
    _
  $region7: #{fsrcnn_forward.1} parent=0 // pred_check_branch
    %20 = sbr.rel (0) target = $region9
  $region8: #{fsrcnn_forward.1} parent=0 // pred_region
    _
  $region9: #{fsrcnn_forward.1} parent=0 // pred_fallthru
    _
  // Predicated region
  $region10: #{fsrcnn_forward.1} parent=0 // pred_check
    _
  $region11: #{fsrcnn_forward.1} parent=0 // pred_check_branch
    %22 = sbr.rel (0) target = $region13
  $region12: #{fsrcnn_forward.1} parent=0 // pred_region
    _
  $region13: #{fsrcnn_forward.1} parent=0 // pred_fallthru
    _
  // Predicated region
  $region14: #{fsrcnn_forward.1} parent=0 // pred_check
    _
  $region15: #{fsrcnn_forward.1} parent=0 // pred_check_branch
    %24 = sbr.rel (0) target = $region17
  $region16: #{fsrcnn_forward.1} parent=0 // pred_region
    _
  $region17: #{fsrcnn_forward.1} parent=0 // pred_fallthru
    _
  // Predicated region
  $region18: #{fsrcnn_forward.1} parent=0 // pred_check
    _
  $region19: #{fsrcnn_forward.1} parent=0 // pred_check_branch
    %26 = sbr.rel (0) target = $region21
  $region20: #{fsrcnn_forward.1} parent=0 // pred_region
    _
  $region21: #{fsrcnn_forward.1} parent=0 // pred_fallthru
    _
  // Predicated region
  $region22: #{fsrcnn_forward.1} parent=0 // pred_check
    _
  $region23: #{fsrcnn_forward.1} parent=0 // pred_check_branch
    %28 = sbr.rel (0) target = $region25
  $region24: #{fsrcnn_forward.1} parent=0 // pred_region
    _
  $region25: #{fsrcnn_forward.1} parent=0 // pred_fallthru
    _
  // Predicated region
  $region26: #{fsrcnn_forward.1} parent=0 // pred_check
    _
  $region27: #{fsrcnn_forward.1} parent=0 // pred_check_branch
    %30 = sbr.rel (0) target = $region29
  $region28: #{fsrcnn_forward.1} parent=0 // pred_region
    _
  $region29: #{fsrcnn_forward.1} parent=0 // pred_fallthru
    _
  // Predicated region
  $region30: #{fsrcnn_forward.1} parent=0 // pred_check
    _
  $region31: #{fsrcnn_forward.1} parent=0 // pred_check_branch
    %32 = sbr.rel (0) target = $region33
  $region32: #{fsrcnn_forward.1} parent=0 // pred_region
    _
  $region33: #{fsrcnn_forward.1} parent=0 // pred_fallthru
    _
  // Predicated region
  $region34: #{fsrcnn_forward.1} parent=0 // pred_check
    _
  $region35: #{fsrcnn_forward.1} parent=0 // pred_check_branch
    %34 = sbr.rel (0) target = $region37
  $region36: #{fsrcnn_forward.1} parent=0 // pred_region
    _
  $region37: #{fsrcnn_forward.1} parent=0 // pred_fallthru
    _
  // Predicated region
  $region38: #{fsrcnn_forward.1} parent=0 // pred_check
    _
  $region39: #{fsrcnn_forward.1} parent=0 // pred_check_branch
    %36 = sbr.rel (0) target = $region41
  $region40: #{fsrcnn_forward.1} parent=0 // pred_region
    _
  $region41: #{fsrcnn_forward.1} parent=0 // pred_fallthru
    _
  // Predicated region
  $region42: #{fsrcnn_forward.1} parent=0 // pred_check
    _
  $region43: #{fsrcnn_forward.1} parent=0 // pred_check_branch
    %38 = sbr.rel (0) target = $region45
  $region44: #{fsrcnn_forward.1} parent=0 // pred_region
    _
  $region45: #{fsrcnn_forward.1} parent=0 // pred_fallthru
    _
  // Predicated region
  $region46: #{fsrcnn_forward.1} parent=0 // pred_check
    _
  $region47: #{fsrcnn_forward.1} parent=0 // pred_check_branch
    %40 = sbr.rel (0) target = $region49
  $region48: #{fsrcnn_forward.1} parent=0 // pred_region
    _
  $region49: #{fsrcnn_forward.1} parent=0 // pred_fallthru
    _
  %v42 = vld [vmem:[%s1] sm:$0xff]
  %v43 = vld [vmem:[%s0] sm:$0xff]
  %v44 = vld [vmem:[%s0 + $0x8] sm:$0xff]
  %v45 = vld [vmem:[%s0 + $0x10] sm:$0xff]
  %v46 = vld [vmem:[%s0 + $0x18] sm:$0xff]
  %v47 = vunpack.c.l.bf16 %v43
  %v48 = vunpack.c.h.bf16 %v43
  %v49 = vunpack.c.l.bf16 %v44
  %v50 = vunpack.c.h.bf16 %v44
  %v51 = vunpack.c.l.bf16 %v45
  %v52 = vunpack.c.h.bf16 %v45
  %v53 = vunpack.c.l.bf16 %v46
  %v54 = vunpack.c.h.bf16 %v46
  %v55 = vld [vmem:[%s2] sm:$0xff]
  %v56 = vld [vmem:[%s2 + $0x8] sm:$0xff]
  %v57 = vld [vmem:[%s2 + $0x10] sm:$0xff]
  %v58 = vld [vmem:[%s2 + $0x18] sm:$0xff]
  %v59 = vld [vmem:[%s2 + $0x20] sm:$0xff]
  %v60 = vld [vmem:[%s2 + $0x28] sm:$0xff]
  %v61 = vld [vmem:[%s2 + $0x30] sm:$0xff]
  %v62 = vld [vmem:[%s3] sm:$0xff]
  %v63 = vld [vmem:[%s3 + $0x8] sm:$0xff]
  %v64 = vld [vmem:[%s3 + $0x10] sm:$0xff]
  %v65 = vld [vmem:[%s3 + $0x18] sm:$0xff]
  %v66 = vld [vmem:[%s3 + $0x20] sm:$0xff]
  %v67 = vld [vmem:[%s3 + $0x28] sm:$0xff]
  %v68 = vld [vmem:[%s3 + $0x30] sm:$0xff]
  %69 = vrot.lane.b32.xlu0 %v47, 42
  %v70 = vpop.permute.xlu0 %69
  %71 = vrot.lane.b32.xlu0 %v48, 42
  %v72 = vpop.permute.xlu0 %71
  %73 = vrot.lane.b32.xlu0 %v49, 42
  %v74 = vpop.permute.xlu0 %73
  %75 = vrot.lane.b32.xlu0 %v50, 42
  %v76 = vpop.permute.xlu0 %75
  %77 = vrot.lane.b32.xlu0 %v51, 42
  %v78 = vpop.permute.xlu0 %77
  %79 = vrot.lane.b32.xlu0 %v52, 42
  %v80 = vpop.permute.xlu0 %79
  %81 = vrot.lane.b32.xlu0 %v53, 42
  %v82 = vpop.permute.xlu0 %81
  %83 = vrot.lane.b32.xlu0 %v54, 42
  %v84 = vpop.permute.xlu0 %83
  %v85 = vlaneseq
  %v86 = vand.u32 %v85, 127
  %vm87 = vcmp.lt.s32.totalorder %v86, 42
  %v88 = vsel %vm87, %v82, %v84
  %v89 = vsel %vm87, %v80, %v82
  %v90 = vsel %vm87, %v78, %v80
  %v91 = vsel %vm87, %v76, %v78
  %v92 = vsel %vm87, %v74, %v76
  %v93 = vsel %vm87, %v72, %v74
  %v94 = vsel %vm87, %v70, %v72
  %v95 = vsel %vm87, %v84, %v70
  %96 = vrot.lane.b32.xlu0 %v47, 41
  %v97 = vpop.permute.xlu0 %96
  %98 = vrot.lane.b32.xlu0 %v48, 41
  %v99 = vpop.permute.xlu0 %98
  %100 = vrot.lane.b32.xlu0 %v49, 41
  %v101 = vpop.permute.xlu0 %100
  %102 = vrot.lane.b32.xlu0 %v50, 41
  %v103 = vpop.permute.xlu0 %102
  %104 = vrot.lane.b32.xlu0 %v51, 41
  %v105 = vpop.permute.xlu0 %104
  %106 = vrot.lane.b32.xlu0 %v52, 41
  %v107 = vpop.permute.xlu0 %106
  %108 = vrot.lane.b32.xlu0 %v53, 41
  %v109 = vpop.permute.xlu0 %108
  %110 = vrot.lane.b32.xlu0 %v54, 41
  %v111 = vpop.permute.xlu0 %110
  %vm112 = vcmp.lt.s32.totalorder %v86, 41
  %v113 = vsel %vm112, %v109, %v111
  %v114 = vsel %vm112, %v107, %v109
  %v115 = vsel %vm112, %v105, %v107
  %v116 = vsel %vm112, %v103, %v105
  %v117 = vsel %vm112, %v101, %v103
  %v118 = vsel %vm112, %v99, %v101
  %v119 = vsel %vm112, %v97, %v99
  %v120 = vsel %vm112, %v111, %v97
  %121 = vrot.lane.b32.xlu0 %v47, 40
  %v122 = vpop.permute.xlu0 %121
  %123 = vrot.lane.b32.xlu0 %v48, 40
  %v124 = vpop.permute.xlu0 %123
  %125 = vrot.lane.b32.xlu0 %v49, 40
  %v126 = vpop.permute.xlu0 %125
  %127 = vrot.lane.b32.xlu0 %v50, 40
  %v128 = vpop.permute.xlu0 %127
  %129 = vrot.lane.b32.xlu0 %v51, 40
  %v130 = vpop.permute.xlu0 %129
  %131 = vrot.lane.b32.xlu0 %v52, 40
  %v132 = vpop.permute.xlu0 %131
  %133 = vrot.lane.b32.xlu0 %v53, 40
  %v134 = vpop.permute.xlu0 %133
  %135 = vrot.lane.b32.xlu0 %v54, 40
  %v136 = vpop.permute.xlu0 %135
  %vm137 = vcmp.lt.s32.totalorder %v86, 40
  %v138 = vsel %vm137, %v134, %v136
  %v139 = vsel %vm137, %v132, %v134
  %v140 = vsel %vm137, %v130, %v132
  %v141 = vsel %vm137, %v128, %v130
  %v142 = vsel %vm137, %v126, %v128
  %v143 = vsel %vm137, %v124, %v126
  %v144 = vsel %vm137, %v122, %v124
  %v145 = vsel %vm137, %v136, %v122
  %146 = vrot.lane.b32.xlu0 %v47, 39
  %v147 = vpop.permute.xlu0 %146
  %148 = vrot.lane.b32.xlu0 %v48, 39
  %v149 = vpop.permute.xlu0 %148
  %150 = vrot.lane.b32.xlu0 %v49, 39
  %v151 = vpop.permute.xlu0 %150
  %152 = vrot.lane.b32.xlu0 %v50, 39
  %v153 = vpop.permute.xlu0 %152
  %154 = vrot.lane.b32.xlu0 %v51, 39
  %v155 = vpop.permute.xlu0 %154
  %156 = vrot.lane.b32.xlu0 %v52, 39
  %v157 = vpop.permute.xlu0 %156
  %158 = vrot.lane.b32.xlu0 %v53, 39
  %v159 = vpop.permute.xlu0 %158
  %160 = vrot.lane.b32.xlu0 %v54, 39
  %v161 = vpop.permute.xlu0 %160
  %vm162 = vcmp.lt.s32.totalorder %v86, 39
  %v163 = vsel %vm162, %v159, %v161
  %v164 = vsel %vm162, %v157, %v159
  %v165 = vsel %vm162, %v155, %v157
  %v166 = vsel %vm162, %v153, %v155
  %v167 = vsel %vm162, %v151, %v153
  %v168 = vsel %vm162, %v149, %v151
  %v169 = vsel %vm162, %v147, %v149
  %v170 = vsel %vm162, %v161, %v147
  %171 = vrot.lane.b32.xlu0 %v47, 38
  %v172 = vpop.permute.xlu0 %171
  %173 = vrot.lane.b32.xlu0 %v48, 38
  %v174 = vpop.permute.xlu0 %173
  %175 = vrot.lane.b32.xlu0 %v49, 38
  %v176 = vpop.permute.xlu0 %175
  %177 = vrot.lane.b32.xlu0 %v50, 38
  %v178 = vpop.permute.xlu0 %177
  %179 = vrot.lane.b32.xlu0 %v51, 38
  %v180 = vpop.permute.xlu0 %179
  %181 = vrot.lane.b32.xlu0 %v52, 38
  %v182 = vpop.permute.xlu0 %181
  %183 = vrot.lane.b32.xlu0 %v53, 38
  %v184 = vpop.permute.xlu0 %183
  %185 = vrot.lane.b32.xlu0 %v54, 38
  %v186 = vpop.permute.xlu0 %185
  %vm187 = vcmp.lt.s32.totalorder %v86, 38
  %v188 = vsel %vm187, %v184, %v186
  %v189 = vsel %vm187, %v182, %v184
  %v190 = vsel %vm187, %v180, %v182
  %v191 = vsel %vm187, %v178, %v180
  %v192 = vsel %vm187, %v176, %v178
  %v193 = vsel %vm187, %v174, %v176
  %v194 = vsel %vm187, %v172, %v174
  %v195 = vsel %vm187, %v186, %v172
  %196 = vrot.lane.b32.xlu0 %v47, 22
  %v197 = vpop.permute.xlu0 %196
  %198 = vrot.lane.b32.xlu0 %v48, 22
  %v199 = vpop.permute.xlu0 %198
  %200 = vrot.lane.b32.xlu0 %v49, 22
  %v201 = vpop.permute.xlu0 %200
  %202 = vrot.lane.b32.xlu0 %v50, 22
  %v203 = vpop.permute.xlu0 %202
  %204 = vrot.lane.b32.xlu0 %v51, 22
  %v205 = vpop.permute.xlu0 %204
  %206 = vrot.lane.b32.xlu0 %v52, 22
  %v207 = vpop.permute.xlu0 %206
  %208 = vrot.lane.b32.xlu0 %v53, 22
  %v209 = vpop.permute.xlu0 %208
  %210 = vrot.lane.b32.xlu0 %v54, 22
  %v211 = vpop.permute.xlu0 %210
  %vm212 = vcmp.lt.s32.totalorder %v86, 22
  %v213 = vsel %vm212, %v209, %v211
  %v214 = vsel %vm212, %v207, %v209
  %v215 = vsel %vm212, %v205, %v207
  %v216 = vsel %vm212, %v203, %v205
  %v217 = vsel %vm212, %v201, %v203
  %v218 = vsel %vm212, %v199, %v201
  %v219 = vsel %vm212, %v197, %v199
  %v220 = vsel %vm212, %v211, %v197
  %221 = vrot.lane.b32.xlu0 %v47, 21
  %v222 = vpop.permute.xlu0 %221
  %223 = vrot.lane.b32.xlu0 %v48, 21
  %v224 = vpop.permute.xlu0 %223
  %225 = vrot.lane.b32.xlu0 %v49, 21
  %v226 = vpop.permute.xlu0 %225
  %227 = vrot.lane.b32.xlu0 %v50, 21
  %v228 = vpop.permute.xlu0 %227
  %229 = vrot.lane.b32.xlu0 %v51, 21
  %v230 = vpop.permute.xlu0 %229
  %231 = vrot.lane.b32.xlu0 %v52, 21
  %v232 = vpop.permute.xlu0 %231
  %233 = vrot.lane.b32.xlu0 %v53, 21
  %v234 = vpop.permute.xlu0 %233
  %235 = vrot.lane.b32.xlu0 %v54, 21
  %v236 = vpop.permute.xlu0 %235
  %vm237 = vcmp.lt.s32.totalorder %v86, 21
  %v238 = vsel %vm237, %v234, %v236
  %v239 = vsel %vm237, %v232, %v234
  %v240 = vsel %vm237, %v230, %v232
  %v241 = vsel %vm237, %v228, %v230
  %v242 = vsel %vm237, %v226, %v228
  %v243 = vsel %vm237, %v224, %v226
  %v244 = vsel %vm237, %v222, %v224
  %v245 = vsel %vm237, %v236, %v222
  %246 = vrot.lane.b32.xlu0 %v47, 20
  %v247 = vpop.permute.xlu0 %246
  %248 = vrot.lane.b32.xlu0 %v48, 20
  %v249 = vpop.permute.xlu0 %248
  %250 = vrot.lane.b32.xlu0 %v49, 20
  %v251 = vpop.permute.xlu0 %250
  %252 = vrot.lane.b32.xlu0 %v50, 20
  %v253 = vpop.permute.xlu0 %252
  %254 = vrot.lane.b32.xlu0 %v51, 20
  %v255 = vpop.permute.xlu0 %254
  %256 = vrot.lane.b32.xlu0 %v52, 20
  %v257 = vpop.permute.xlu0 %256
  %258 = vrot.lane.b32.xlu0 %v53, 20
  %v259 = vpop.permute.xlu0 %258
  %260 = vrot.lane.b32.xlu0 %v54, 20
  %v261 = vpop.permute.xlu0 %260
  %vm262 = vcmp.lt.s32.totalorder %v86, 20
  %v263 = vsel %vm262, %v259, %v261
  %v264 = vsel %vm262, %v257, %v259
  %v265 = vsel %vm262, %v255, %v257
  %v266 = vsel %vm262, %v253, %v255
  %v267 = vsel %vm262, %v251, %v253
  %v268 = vsel %vm262, %v249, %v251
  %v269 = vsel %vm262, %v247, %v249
  %v270 = vsel %vm262, %v261, %v247
  %271 = vrot.lane.b32.xlu0 %v47, 19
  %v272 = vpop.permute.xlu0 %271
  %273 = vrot.lane.b32.xlu0 %v48, 19
  %v274 = vpop.permute.xlu0 %273
  %275 = vrot.lane.b32.xlu0 %v49, 19
  %v276 = vpop.permute.xlu0 %275
  %277 = vrot.lane.b32.xlu0 %v50, 19
  %v278 = vpop.permute.xlu0 %277
  %279 = vrot.lane.b32.xlu0 %v51, 19
  %v280 = vpop.permute.xlu0 %279
  %281 = vrot.lane.b32.xlu0 %v52, 19
  %v282 = vpop.permute.xlu0 %281
  %283 = vrot.lane.b32.xlu0 %v53, 19
  %v284 = vpop.permute.xlu0 %283
  %285 = vrot.lane.b32.xlu0 %v54, 19
  %v286 = vpop.permute.xlu0 %285
  %vm287 = vcmp.lt.s32.totalorder %v86, 19
  %v288 = vsel %vm287, %v284, %v286
  %v289 = vsel %vm287, %v282, %v284
  %v290 = vsel %vm287, %v280, %v282
  %v291 = vsel %vm287, %v278, %v280
  %v292 = vsel %vm287, %v276, %v278
  %v293 = vsel %vm287, %v274, %v276
  %v294 = vsel %vm287, %v272, %v274
  %v295 = vsel %vm287, %v286, %v272
  %296 = vrot.lane.b32.xlu0 %v47, 18
  %v297 = vpop.permute.xlu0 %296
  %298 = vrot.lane.b32.xlu0 %v48, 18
  %v299 = vpop.permute.xlu0 %298
  %300 = vrot.lane.b32.xlu0 %v49, 18
  %v301 = vpop.permute.xlu0 %300
  %302 = vrot.lane.b32.xlu0 %v50, 18
  %v303 = vpop.permute.xlu0 %302
  %304 = vrot.lane.b32.xlu0 %v51, 18
  %v305 = vpop.permute.xlu0 %304
  %306 = vrot.lane.b32.xlu0 %v52, 18
  %v307 = vpop.permute.xlu0 %306
  %308 = vrot.lane.b32.xlu0 %v53, 18
  %v309 = vpop.permute.xlu0 %308
  %310 = vrot.lane.b32.xlu0 %v54, 18
  %v311 = vpop.permute.xlu0 %310
  %vm312 = vcmp.lt.s32.totalorder %v86, 18
  %v313 = vsel %vm312, %v309, %v311
  %v314 = vsel %vm312, %v307, %v309
  %v315 = vsel %vm312, %v305, %v307
  %v316 = vsel %vm312, %v303, %v305
  %v317 = vsel %vm312, %v301, %v303
  %v318 = vsel %vm312, %v299, %v301
  %v319 = vsel %vm312, %v297, %v299
  %v320 = vsel %vm312, %v311, %v297
  %321 = vrot.lane.b32.xlu0 %v47, 2
  %v322 = vpop.permute.xlu0 %321
  %323 = vrot.lane.b32.xlu0 %v48, 2
  %v324 = vpop.permute.xlu0 %323
  %325 = vrot.lane.b32.xlu0 %v49, 2
  %v326 = vpop.permute.xlu0 %325
  %327 = vrot.lane.b32.xlu0 %v50, 2
  %v328 = vpop.permute.xlu0 %327
  %329 = vrot.lane.b32.xlu0 %v51, 2
  %v330 = vpop.permute.xlu0 %329
  %331 = vrot.lane.b32.xlu0 %v52, 2
  %v332 = vpop.permute.xlu0 %331
  %333 = vrot.lane.b32.xlu0 %v53, 2
  %v334 = vpop.permute.xlu0 %333
  %335 = vrot.lane.b32.xlu0 %v54, 2
  %v336 = vpop.permute.xlu0 %335
  %vm337 = vcmp.lt.s32.totalorder %v86, 2
  %v338 = vsel %vm337, %v334, %v336
  %v339 = vsel %vm337, %v332, %v334
  %v340 = vsel %vm337, %v330, %v332
  %v341 = vsel %vm337, %v328, %v330
  %v342 = vsel %vm337, %v326, %v328
  %v343 = vsel %vm337, %v324, %v326
  %v344 = vsel %vm337, %v322, %v324
  %v345 = vsel %vm337, %v336, %v322
  %346 = vrot.lane.b32.xlu0 %v47, 1
  %v347 = vpop.permute.xlu0 %346
  %348 = vrot.lane.b32.xlu0 %v48, 1
  %v349 = vpop.permute.xlu0 %348
  %350 = vrot.lane.b32.xlu0 %v49, 1
  %v351 = vpop.permute.xlu0 %350
  %352 = vrot.lane.b32.xlu0 %v50, 1
  %v353 = vpop.permute.xlu0 %352
  %354 = vrot.lane.b32.xlu0 %v51, 1
  %v355 = vpop.permute.xlu0 %354
  %356 = vrot.lane.b32.xlu0 %v52, 1
  %v357 = vpop.permute.xlu0 %356
  %358 = vrot.lane.b32.xlu0 %v53, 1
  %v359 = vpop.permute.xlu0 %358
  %360 = vrot.lane.b32.xlu0 %v54, 1
  %v361 = vpop.permute.xlu0 %360
  %vm362 = vcmp.lt.s32.totalorder %v86, 1
  %v363 = vsel %vm362, %v359, %v361
  %v364 = vsel %vm362, %v357, %v359
  %v365 = vsel %vm362, %v355, %v357
  %v366 = vsel %vm362, %v353, %v355
  %v367 = vsel %vm362, %v351, %v353
  %v368 = vsel %vm362, %v349, %v351
  %v369 = vsel %vm362, %v347, %v349
  %v370 = vsel %vm362, %v361, %v347
  %371 = vrot.lane.b32.xlu0 %v47, 127
  %v372 = vpop.permute.xlu0 %371
  %373 = vrot.lane.b32.xlu0 %v48, 127
  %v374 = vpop.permute.xlu0 %373
  %375 = vrot.lane.b32.xlu0 %v49, 127
  %v376 = vpop.permute.xlu0 %375
  %377 = vrot.lane.b32.xlu0 %v50, 127
  %v378 = vpop.permute.xlu0 %377
  %379 = vrot.lane.b32.xlu0 %v51, 127
  %v380 = vpop.permute.xlu0 %379
  %381 = vrot.lane.b32.xlu0 %v52, 127
  %v382 = vpop.permute.xlu0 %381
  %383 = vrot.lane.b32.xlu0 %v53, 127
  %v384 = vpop.permute.xlu0 %383
  %385 = vrot.lane.b32.xlu0 %v54, 127
  %v386 = vpop.permute.xlu0 %385
  %vm387 = vcmp.lt.s32.totalorder %v86, 127
  %v388 = vsel %vm387, %v384, %v386
  %v389 = vsel %vm387, %v382, %v384
  %v390 = vsel %vm387, %v380, %v382
  %v391 = vsel %vm387, %v378, %v380
  %v392 = vsel %vm387, %v376, %v378
  %v393 = vsel %vm387, %v374, %v376
  %v394 = vsel %vm387, %v372, %v374
  %v395 = vsel %vm387, %v386, %v372
  %396 = vrot.lane.b32.xlu0 %v47, 126
  %v397 = vpop.permute.xlu0 %396
  %398 = vrot.lane.b32.xlu0 %v48, 126
  %v399 = vpop.permute.xlu0 %398
  %400 = vrot.lane.b32.xlu0 %v49, 126
  %v401 = vpop.permute.xlu0 %400
  %402 = vrot.lane.b32.xlu0 %v50, 126
  %v403 = vpop.permute.xlu0 %402
  %404 = vrot.lane.b32.xlu0 %v51, 126
  %v405 = vpop.permute.xlu0 %404
  %406 = vrot.lane.b32.xlu0 %v52, 126
  %v407 = vpop.permute.xlu0 %406
  %408 = vrot.lane.b32.xlu0 %v53, 126
  %v409 = vpop.permute.xlu0 %408
  %410 = vrot.lane.b32.xlu0 %v54, 126
  %v411 = vpop.permute.xlu0 %410
  %vm412 = vcmp.lt.s32.totalorder %v86, 126
  %v413 = vsel %vm412, %v409, %v411
  %v414 = vsel %vm412, %v407, %v409
  %v415 = vsel %vm412, %v405, %v407
  %v416 = vsel %vm412, %v403, %v405
  %v417 = vsel %vm412, %v401, %v403
  %v418 = vsel %vm412, %v399, %v401
  %v419 = vsel %vm412, %v397, %v399
  %v420 = vsel %vm412, %v411, %v397
  %421 = vrot.lane.b32.xlu0 %v47, 110
  %v422 = vpop.permute.xlu0 %421
  %423 = vrot.lane.b32.xlu0 %v48, 110
  %v424 = vpop.permute.xlu0 %423
  %425 = vrot.lane.b32.xlu0 %v49, 110
  %v426 = vpop.permute.xlu0 %425
  %427 = vrot.lane.b32.xlu0 %v50, 110
  %v428 = vpop.permute.xlu0 %427
  %429 = vrot.lane.b32.xlu0 %v51, 110
  %v430 = vpop.permute.xlu0 %429
  %431 = vrot.lane.b32.xlu0 %v52, 110
  %v432 = vpop.permute.xlu0 %431
  %433 = vrot.lane.b32.xlu0 %v53, 110
  %v434 = vpop.permute.xlu0 %433
  %435 = vrot.lane.b32.xlu0 %v54, 110
  %v436 = vpop.permute.xlu0 %435
  %vm437 = vcmp.lt.s32.totalorder %v86, 110
  %v438 = vsel %vm437, %v434, %v436
  %v439 = vsel %vm437, %v432, %v434
  %v440 = vsel %vm437, %v430, %v432
  %v441 = vsel %vm437, %v428, %v430
  %v442 = vsel %vm437, %v426, %v428
  %v443 = vsel %vm437, %v424, %v426
  %v444 = vsel %vm437, %v422, %v424
  %v445 = vsel %vm437, %v436, %v422
  %446 = vrot.lane.b32.xlu0 %v47, 109
  %v447 = vpop.permute.xlu0 %446
  %448 = vrot.lane.b32.xlu0 %v48, 109
  %v449 = vpop.permute.xlu0 %448
  %450 = vrot.lane.b32.xlu0 %v49, 109
  %v451 = vpop.permute.xlu0 %450
  %452 = vrot.lane.b32.xlu0 %v50, 109
  %v453 = vpop.permute.xlu0 %452
  %454 = vrot.lane.b32.xlu0 %v51, 109
  %v455 = vpop.permute.xlu0 %454
  %456 = vrot.lane.b32.xlu0 %v52, 109
  %v457 = vpop.permute.xlu0 %456
  %458 = vrot.lane.b32.xlu0 %v53, 109
  %v459 = vpop.permute.xlu0 %458
  %460 = vrot.lane.b32.xlu0 %v54, 109
  %v461 = vpop.permute.xlu0 %460
  %vm462 = vcmp.lt.s32.totalorder %v86, 109
  %v463 = vsel %vm462, %v459, %v461
  %v464 = vsel %vm462, %v457, %v459
  %v465 = vsel %vm462, %v455, %v457
  %v466 = vsel %vm462, %v453, %v455
  %v467 = vsel %vm462, %v451, %v453
  %v468 = vsel %vm462, %v449, %v451
  %v469 = vsel %vm462, %v447, %v449
  %v470 = vsel %vm462, %v461, %v447
  %471 = vrot.lane.b32.xlu0 %v47, 108
  %v472 = vpop.permute.xlu0 %471
  %473 = vrot.lane.b32.xlu0 %v48, 108
  %v474 = vpop.permute.xlu0 %473
  %475 = vrot.lane.b32.xlu0 %v49, 108
  %v476 = vpop.permute.xlu0 %475
  %477 = vrot.lane.b32.xlu0 %v50, 108
  %v478 = vpop.permute.xlu0 %477
  %479 = vrot.lane.b32.xlu0 %v51, 108
  %v480 = vpop.permute.xlu0 %479
  %481 = vrot.lane.b32.xlu0 %v52, 108
  %v482 = vpop.permute.xlu0 %481
  %483 = vrot.lane.b32.xlu0 %v53, 108
  %v484 = vpop.permute.xlu0 %483
  %485 = vrot.lane.b32.xlu0 %v54, 108
  %v486 = vpop.permute.xlu0 %485
  %vm487 = vcmp.lt.s32.totalorder %v86, 108
  %v488 = vsel %vm487, %v484, %v486
  %v489 = vsel %vm487, %v482, %v484
  %v490 = vsel %vm487, %v480, %v482
  %v491 = vsel %vm487, %v478, %v480
  %v492 = vsel %vm487, %v476, %v478
  %v493 = vsel %vm487, %v474, %v476
  %v494 = vsel %vm487, %v472, %v474
  %v495 = vsel %vm487, %v486, %v472
  %496 = vrot.lane.b32.xlu0 %v47, 107
  %v497 = vpop.permute.xlu0 %496
  %498 = vrot.lane.b32.xlu0 %v48, 107
  %v499 = vpop.permute.xlu0 %498
  %500 = vrot.lane.b32.xlu0 %v49, 107
  %v501 = vpop.permute.xlu0 %500
  %502 = vrot.lane.b32.xlu0 %v50, 107
  %v503 = vpop.permute.xlu0 %502
  %504 = vrot.lane.b32.xlu0 %v51, 107
  %v505 = vpop.permute.xlu0 %504
  %506 = vrot.lane.b32.xlu0 %v52, 107
  %v507 = vpop.permute.xlu0 %506
  %508 = vrot.lane.b32.xlu0 %v53, 107
  %v509 = vpop.permute.xlu0 %508
  %510 = vrot.lane.b32.xlu0 %v54, 107
  %v511 = vpop.permute.xlu0 %510
  %vm512 = vcmp.lt.s32.totalorder %v86, 107
  %v513 = vsel %vm512, %v509, %v511
  %v514 = vsel %vm512, %v507, %v509
  %v515 = vsel %vm512, %v505, %v507
  %v516 = vsel %vm512, %v503, %v505
  %v517 = vsel %vm512, %v501, %v503
  %v518 = vsel %vm512, %v499, %v501
  %v519 = vsel %vm512, %v497, %v499
  %v520 = vsel %vm512, %v511, %v497
  %521 = vrot.lane.b32.xlu0 %v47, 106
  %v522 = vpop.permute.xlu0 %521
  %523 = vrot.lane.b32.xlu0 %v48, 106
  %v524 = vpop.permute.xlu0 %523
  %525 = vrot.lane.b32.xlu0 %v49, 106
  %v526 = vpop.permute.xlu0 %525
  %527 = vrot.lane.b32.xlu0 %v50, 106
  %v528 = vpop.permute.xlu0 %527
  %529 = vrot.lane.b32.xlu0 %v51, 106
  %v530 = vpop.permute.xlu0 %529
  %531 = vrot.lane.b32.xlu0 %v52, 106
  %v532 = vpop.permute.xlu0 %531
  %533 = vrot.lane.b32.xlu0 %v53, 106
  %v534 = vpop.permute.xlu0 %533
  %535 = vrot.lane.b32.xlu0 %v54, 106
  %v536 = vpop.permute.xlu0 %535
  %vm537 = vcmp.lt.s32.totalorder %v86, 106
  %v538 = vsel %vm537, %v534, %v536
  %v539 = vsel %vm537, %v532, %v534
  %v540 = vsel %vm537, %v530, %v532
  %v541 = vsel %vm537, %v528, %v530
  %v542 = vsel %vm537, %v526, %v528
  %v543 = vsel %vm537, %v524, %v526
  %v544 = vsel %vm537, %v522, %v524
  %v545 = vsel %vm537, %v536, %v522
  %546 = vrot.lane.b32.xlu0 %v47, 90
  %v547 = vpop.permute.xlu0 %546
  %548 = vrot.lane.b32.xlu0 %v48, 90
  %v549 = vpop.permute.xlu0 %548
  %550 = vrot.lane.b32.xlu0 %v49, 90
  %v551 = vpop.permute.xlu0 %550
  %552 = vrot.lane.b32.xlu0 %v50, 90
  %v553 = vpop.permute.xlu0 %552
  %554 = vrot.lane.b32.xlu0 %v51, 90
  %v555 = vpop.permute.xlu0 %554
  %556 = vrot.lane.b32.xlu0 %v52, 90
  %v557 = vpop.permute.xlu0 %556
  %558 = vrot.lane.b32.xlu0 %v53, 90
  %v559 = vpop.permute.xlu0 %558
  %560 = vrot.lane.b32.xlu0 %v54, 90
  %v561 = vpop.permute.xlu0 %560
  %vm562 = vcmp.lt.s32.totalorder %v86, 90
  %v563 = vsel %vm562, %v559, %v561
  %v564 = vsel %vm562, %v557, %v559
  %v565 = vsel %vm562, %v555, %v557
  %v566 = vsel %vm562, %v553, %v555
  %v567 = vsel %vm562, %v551, %v553
  %v568 = vsel %vm562, %v549, %v551
  %v569 = vsel %vm562, %v547, %v549
  %v570 = vsel %vm562, %v561, %v547
  %571 = vrot.lane.b32.xlu0 %v47, 89
  %v572 = vpop.permute.xlu0 %571
  %573 = vrot.lane.b32.xlu0 %v48, 89
  %v574 = vpop.permute.xlu0 %573
  %575 = vrot.lane.b32.xlu0 %v49, 89
  %v576 = vpop.permute.xlu0 %575
  %577 = vrot.lane.b32.xlu0 %v50, 89
  %v578 = vpop.permute.xlu0 %577
  %579 = vrot.lane.b32.xlu0 %v51, 89
  %v580 = vpop.permute.xlu0 %579
  %581 = vrot.lane.b32.xlu0 %v52, 89
  %v582 = vpop.permute.xlu0 %581
  %583 = vrot.lane.b32.xlu0 %v53, 89
  %v584 = vpop.permute.xlu0 %583
  %585 = vrot.lane.b32.xlu0 %v54, 89
  %v586 = vpop.permute.xlu0 %585
  %vm587 = vcmp.lt.s32.totalorder %v86, 89
  %v588 = vsel %vm587, %v584, %v586
  %v589 = vsel %vm587, %v582, %v584
  %v590 = vsel %vm587, %v580, %v582
  %v591 = vsel %vm587, %v578, %v580
  %v592 = vsel %vm587, %v576, %v578
  %v593 = vsel %vm587, %v574, %v576
  %v594 = vsel %vm587, %v572, %v574
  %v595 = vsel %vm587, %v586, %v572
  %596 = vrot.lane.b32.xlu0 %v47, 88
  %v597 = vpop.permute.xlu0 %596
  %598 = vrot.lane.b32.xlu0 %v48, 88
  %v599 = vpop.permute.xlu0 %598
  %600 = vrot.lane.b32.xlu0 %v49, 88
  %v601 = vpop.permute.xlu0 %600
  %602 = vrot.lane.b32.xlu0 %v50, 88
  %v603 = vpop.permute.xlu0 %602
  %604 = vrot.lane.b32.xlu0 %v51, 88
  %v605 = vpop.permute.xlu0 %604
  %606 = vrot.lane.b32.xlu0 %v52, 88
  %v607 = vpop.permute.xlu0 %606
  %608 = vrot.lane.b32.xlu0 %v53, 88
  %v609 = vpop.permute.xlu0 %608
  %610 = vrot.lane.b32.xlu0 %v54, 88
  %v611 = vpop.permute.xlu0 %610
  %vm612 = vcmp.lt.s32.totalorder %v86, 88
  %v613 = vsel %vm612, %v609, %v611
  %v614 = vsel %vm612, %v607, %v609
  %v615 = vsel %vm612, %v605, %v607
  %v616 = vsel %vm612, %v603, %v605
  %v617 = vsel %vm612, %v601, %v603
  %v618 = vsel %vm612, %v599, %v601
  %v619 = vsel %vm612, %v597, %v599
  %v620 = vsel %vm612, %v611, %v597
  %621 = vrot.lane.b32.xlu0 %v47, 87
  %v622 = vpop.permute.xlu0 %621
  %623 = vrot.lane.b32.xlu0 %v48, 87
  %v624 = vpop.permute.xlu0 %623
  %625 = vrot.lane.b32.xlu0 %v49, 87
  %v626 = vpop.permute.xlu0 %625
  %627 = vrot.lane.b32.xlu0 %v50, 87
  %v628 = vpop.permute.xlu0 %627
  %629 = vrot.lane.b32.xlu0 %v51, 87
  %v630 = vpop.permute.xlu0 %629
  %631 = vrot.lane.b32.xlu0 %v52, 87
  %v632 = vpop.permute.xlu0 %631
  %633 = vrot.lane.b32.xlu0 %v53, 87
  %v634 = vpop.permute.xlu0 %633
  %635 = vrot.lane.b32.xlu0 %v54, 87
  %v636 = vpop.permute.xlu0 %635
  %vm637 = vcmp.lt.s32.totalorder %v86, 87
  %v638 = vsel %vm637, %v634, %v636
  %v639 = vsel %vm637, %v632, %v634
  %v640 = vsel %vm637, %v630, %v632
  %v641 = vsel %vm637, %v628, %v630
  %v642 = vsel %vm637, %v626, %v628
  %v643 = vsel %vm637, %v624, %v626
  %v644 = vsel %vm637, %v622, %v624
  %v645 = vsel %vm637, %v636, %v622
  %646 = vrot.lane.b32.xlu0 %v47, 86
  %v647 = vpop.permute.xlu0 %646
  %648 = vrot.lane.b32.xlu0 %v48, 86
  %v649 = vpop.permute.xlu0 %648
  %650 = vrot.lane.b32.xlu0 %v49, 86
  %v651 = vpop.permute.xlu0 %650
  %652 = vrot.lane.b32.xlu0 %v50, 86
  %v653 = vpop.permute.xlu0 %652
  %654 = vrot.lane.b32.xlu0 %v51, 86
  %v655 = vpop.permute.xlu0 %654
  %656 = vrot.lane.b32.xlu0 %v52, 86
  %v657 = vpop.permute.xlu0 %656
  %658 = vrot.lane.b32.xlu0 %v53, 86
  %v659 = vpop.permute.xlu0 %658
  %660 = vrot.lane.b32.xlu0 %v54, 86
  %v661 = vpop.permute.xlu0 %660
  %vm662 = vcmp.lt.s32.totalorder %v86, 86
  %v663 = vsel %vm662, %v659, %v661
  %v664 = vsel %vm662, %v657, %v659
  %v665 = vsel %vm662, %v655, %v657
  %v666 = vsel %vm662, %v653, %v655
  %v667 = vsel %vm662, %v651, %v653
  %v668 = vsel %vm662, %v649, %v651
  %v669 = vsel %vm662, %v647, %v649
  %v670 = vsel %vm662, %v661, %v647
  %v671 = vpack.c.bf16 %v120, %v95
  %v672 = vpack.c.bf16 %v119, %v94
  %v673 = vpack.c.bf16 %v118, %v93
  %v674 = vpack.c.bf16 %v117, %v92
  %v675 = vpack.c.bf16 %v116, %v91
  %v676 = vpack.c.bf16 %v115, %v90
  %v677 = vpack.c.bf16 %v114, %v89
  %v678 = vpack.c.bf16 %v113, %v88
  %v679 = vpack.c.bf16 %v170, %v145
  %v680 = vpack.c.bf16 %v169, %v144
  %v681 = vpack.c.bf16 %v168, %v143
  %v682 = vpack.c.bf16 %v167, %v142
  %v683 = vpack.c.bf16 %v166, %v141
  %v684 = vpack.c.bf16 %v165, %v140
  %v685 = vpack.c.bf16 %v164, %v139
  %v686 = vpack.c.bf16 %v163, %v138
  %v687 = vpack.c.bf16 %v220, %v195
  %v688 = vpack.c.bf16 %v219, %v194
  %v689 = vpack.c.bf16 %v218, %v193
  %v690 = vpack.c.bf16 %v217, %v192
  %v691 = vpack.c.bf16 %v216, %v191
  %v692 = vpack.c.bf16 %v215, %v190
  %v693 = vpack.c.bf16 %v214, %v189
  %v694 = vpack.c.bf16 %v213, %v188
  %v695 = vpack.c.bf16 %v270, %v245
  %v696 = vpack.c.bf16 %v269, %v244
  %v697 = vpack.c.bf16 %v268, %v243
  %v698 = vpack.c.bf16 %v267, %v242
  %v699 = vpack.c.bf16 %v266, %v241
  %v700 = vpack.c.bf16 %v265, %v240
  %v701 = vpack.c.bf16 %v264, %v239
  %v702 = vpack.c.bf16 %v263, %v238
  %v703 = vpack.c.bf16 %v320, %v295
  %v704 = vpack.c.bf16 %v319, %v294
  %v705 = vpack.c.bf16 %v318, %v293
  %v706 = vpack.c.bf16 %v317, %v292
  %v707 = vpack.c.bf16 %v316, %v291
  %v708 = vpack.c.bf16 %v315, %v290
  %v709 = vpack.c.bf16 %v314, %v289
  %v710 = vpack.c.bf16 %v313, %v288
  %v711 = vpack.c.bf16 %v370, %v345
  %v712 = vpack.c.bf16 %v369, %v344
  %v713 = vpack.c.bf16 %v368, %v343
  %v714 = vpack.c.bf16 %v367, %v342
  %v715 = vpack.c.bf16 %v366, %v341
  %v716 = vpack.c.bf16 %v365, %v340
  %v717 = vpack.c.bf16 %v364, %v339
  %v718 = vpack.c.bf16 %v363, %v338
  %v719 = vpack.c.bf16 %v394, %v47
  %v720 = vpack.c.bf16 %v393, %v48
  %v721 = vpack.c.bf16 %v392, %v49
  %v722 = vpack.c.bf16 %v391, %v50
  %v723 = vpack.c.bf16 %v390, %v51
  %v724 = vpack.c.bf16 %v389, %v52
  %v725 = vpack.c.bf16 %v388, %v53
  %v726 = vpack.c.bf16 %v395, %v54
  %v727 = vpack.c.bf16 %v444, %v419
  %v728 = vpack.c.bf16 %v443, %v418
  %v729 = vpack.c.bf16 %v442, %v417
  %v730 = vpack.c.bf16 %v441, %v416
  %v731 = vpack.c.bf16 %v440, %v415
  %v732 = vpack.c.bf16 %v439, %v414
  %v733 = vpack.c.bf16 %v438, %v413
  %v734 = vpack.c.bf16 %v445, %v420
  %v735 = vpack.c.bf16 %v494, %v469
  %v736 = vpack.c.bf16 %v493, %v468
  %v737 = vpack.c.bf16 %v492, %v467
  %v738 = vpack.c.bf16 %v491, %v466
  %v739 = vpack.c.bf16 %v490, %v465
  %v740 = vpack.c.bf16 %v489, %v464
  %v741 = vpack.c.bf16 %v488, %v463
  %v742 = vpack.c.bf16 %v495, %v470
  %v743 = vpack.c.bf16 %v544, %v519
  %v744 = vpack.c.bf16 %v543, %v518
  %v745 = vpack.c.bf16 %v542, %v517
  %v746 = vpack.c.bf16 %v541, %v516
  %v747 = vpack.c.bf16 %v540, %v515
  %v748 = vpack.c.bf16 %v539, %v514
  %v749 = vpack.c.bf16 %v538, %v513
  %v750 = vpack.c.bf16 %v545, %v520
  %v751 = vpack.c.bf16 %v594, %v569
  %v752 = vpack.c.bf16 %v593, %v568
  %v753 = vpack.c.bf16 %v592, %v567
  %v754 = vpack.c.bf16 %v591, %v566
  %v755 = vpack.c.bf16 %v590, %v565
  %v756 = vpack.c.bf16 %v589, %v564
  %v757 = vpack.c.bf16 %v588, %v563
  %v758 = vpack.c.bf16 %v595, %v570
  %v759 = vpack.c.bf16 %v644, %v619
  %v760 = vpack.c.bf16 %v643, %v618
  %v761 = vpack.c.bf16 %v642, %v617
  %v762 = vpack.c.bf16 %v641, %v616
  %v763 = vpack.c.bf16 %v640, %v615
  %v764 = vpack.c.bf16 %v639, %v614
  %v765 = vpack.c.bf16 %v638, %v613
  %v766 = vpack.c.bf16 %v645, %v620
  %v767 = vpack.c.bf16 %v669, %v669
  %v768 = vpack.c.bf16 %v668, %v668
  %v769 = vpack.c.bf16 %v667, %v667
  %v770 = vpack.c.bf16 %v666, %v666
  %v771 = vpack.c.bf16 %v665, %v665
  %v772 = vpack.c.bf16 %v664, %v664
  %v773 = vpack.c.bf16 %v663, %v663
  %v774 = vpack.c.bf16 %v670, %v670
  %776 = vset.pattern.permute.xlu0 0
  %777 = vperm.xlu0 %776, %v62
  %v778 = vpop.permute.xlu0 %777
  %781 = vset.pattern.permute.xlu0 0
  %782 = vperm.xlu0 %781, %v63
  %v783 = vpop.permute.xlu0 %782
  %786 = vset.pattern.permute.xlu0 0
  %787 = vperm.xlu0 %786, %v64
  %v788 = vpop.permute.xlu0 %787
  %791 = vset.pattern.permute.xlu0 0
  %792 = vperm.xlu0 %791, %v65
  %v793 = vpop.permute.xlu0 %792
  %796 = vset.pattern.permute.xlu0 0
  %797 = vperm.xlu0 %796, %v66
  %v798 = vpop.permute.xlu0 %797
  %801 = vset.pattern.permute.xlu0 0
  %802 = vperm.xlu0 %801, %v67
  %v803 = vpop.permute.xlu0 %802
  %806 = vset.pattern.permute.xlu0 0
  %807 = vperm.xlu0 %806, %v68
  %v808 = vpop.permute.xlu0 %807
  %v817 = vunpack.c.l.b16 %v55
  %v818 = vunpack.c.h.b16 %v55
  %v819 = vunpack.c.l.b16 %v56
  %v820 = vunpack.c.h.b16 %v56
  %v821 = vunpack.c.l.b16 %v57
  %v822 = vunpack.c.h.b16 %v57
  %v823 = vunpack.c.l.b16 %v58
  %v824 = vunpack.c.h.b16 %v58
  %v825 = vunpack.c.l.b16 %v59
  %v826 = vunpack.c.h.b16 %v59
  %v827 = vunpack.c.l.b16 %v60
  %v828 = vunpack.c.h.b16 %v60
  %v829 = vunpack.c.l.b16 %v61
  %v830 = vunpack.c.h.b16 %v61
  %v831 = vpack.c.b16 %v819, %v817
  %v832 = vpack.c.b16 %v820, %v818
  %v833 = vpack.c.b16 %v823, %v821
  %v834 = vpack.c.b16 %v824, %v822
  %v835 = vpack.c.b16 %v827, %v825
  %v836 = vpack.c.b16 %v828, %v826
  %v837 = vpack.c.b16 %v829, %v829
  %v838 = vpack.c.b16 %v830, %v830
  %vm843 = vcmask 588800
  %v845 = vsel %vm843, %v832, 0
  %v848 = vsel %vm843, %v834, 0
  %v851 = vsel %vm843, %v836, 0
  %v854 = vsel %vm843, %v838, 0
  %vm856 = vcmask 1043456
  %v858 = vsel %vm856, %v767, 0
  %v861 = vsel %vm856, %v768, 0
  %v864 = vsel %vm856, %v769, 0
  %v867 = vsel %vm856, %v770, 0
  %v870 = vsel %vm856, %v771, 0
  %v873 = vsel %vm856, %v772, 0
  %v876 = vsel %vm856, %v773, 0
  %v879 = vsel %vm856, %v774, 0
  %881 = vmatprep.subr.bf16.mxu0 %v728
  %882 = vmatpush1.bf16.msra.mxu0 %v727
  %883 = vmatprep.subr.bf16.mxu0 %v720
  %884 = vmatpush1.bf16.msra.mxu0 %v719
  %885 = vmatprep.subr.bf16.mxu0 %v712
  %886 = vmatpush1.bf16.msra.mxu0 %v711
  %887 = vmatprep.subr.bf16.mxu0 %v704
  %888 = vmatpush1.bf16.msra.mxu0 %v703
  %889 = vmatprep.subr.bf16.mxu0 %v696
  %890 = vmatpush1.bf16.msra.mxu0 %v695
  %891 = vmatprep.subr.bf16.mxu0 %v688
  %892 = vmatpush1.bf16.msra.mxu0 %v687
  %893 = vmatprep.subr.bf16.mxu0 %v680
  %894 = vmatpush1.bf16.msra.mxu0 %v679
  %895 = vmatprep.subr.bf16.mxu0 %v672
  %896 = vmatpush1.bf16.msra.mxu0 %v671
  %897 = vmatprep.subr.bf16.mxu0 0
  %898 = vmatpush2.bf16.msra.mxu0 0
  %899 = vmatprep.subr.bf16.mxu0 0
  %900 = vmatpush2.bf16.msra.mxu0 0
  %901 = vmatprep.subr.bf16.mxu0 0
  %902 = vmatpush2.bf16.msra.mxu0 0
  %903 = vmatprep.subr.bf16.mxu0 %v861
  %904 = vmatpush2.bf16.msra.mxu0 %v858
  %905 = vmatprep.subr.bf16.mxu0 %v760
  %906 = vmatpush2.bf16.msra.mxu0 %v759
  %907 = vmatprep.subr.bf16.mxu0 %v752
  %908 = vmatpush2.bf16.msra.mxu0 %v751
  %909 = vmatprep.subr.bf16.mxu0 %v744
  %910 = vmatpush2.bf16.msra.mxu0 %v743
  %911 = vmatprep.subr.bf16.mxu0 %v736
  %912 = vmatpush2.bf16.msra.mxu0 %v735
  %913 = vmatprep.mubr.bf16.mxu0 %v845
  %914 = vmatmul.mubr.bf16.gmra.mxu0 %v831
  %v915 = vpop.f32.mrf.mxu0
  %v916 = vadd.f32 %v778, %v915
  %v917 = vpop.f32.mrf.mxu0
  %v918 = vadd.f32 %v778, %v917
  %v919 = vpop.f32.mrf.mxu0
  %v920 = vadd.f32 %v783, %v919
  %v921 = vpop.f32.mrf.mxu0
  %v922 = vadd.f32 %v783, %v921
  %923 = vmatprep.mubr.bf16.mxu0 %v848
  %924 = vmatmul.mubr.bf16.gmra.mxu0 %v833
  %v925 = vpop.f32.mrf.mxu0
  %v926 = vadd.f32 %v788, %v925
  %v927 = vpop.f32.mrf.mxu0
  %v928 = vadd.f32 %v788, %v927
  %v929 = vpop.f32.mrf.mxu0
  %v930 = vadd.f32 %v793, %v929
  %v931 = vpop.f32.mrf.mxu0
  %v932 = vadd.f32 %v793, %v931
  %933 = vmatprep.mubr.bf16.mxu0 %v851
  %934 = vmatmul.mubr.bf16.gmra.mxu0 %v835
  %v935 = vpop.f32.mrf.mxu0
  %v936 = vadd.f32 %v798, %v935
  %v937 = vpop.f32.mrf.mxu0
  %v938 = vadd.f32 %v798, %v937
  %v939 = vpop.f32.mrf.mxu0
  %v940 = vadd.f32 %v803, %v939
  %v941 = vpop.f32.mrf.mxu0
  %v942 = vadd.f32 %v803, %v941
  %943 = vmatprep.mubr.bf16.mxu0 %v854
  %944 = vmatmul.mubr.bf16.gmra.mxu0 %v837
  %v945 = vpop.f32.mrf.mxu0
  %v946 = vadd.f32 %v808, %v945
  %v947 = vpop.f32.mrf.mxu0
  %v948 = vadd.f32 %v808, %v947
  %v949 = vpop.f32.mrf.mxu0
  %v950 = vpop.f32.mrf.mxu0
  %951 = vdwg.mxu0
  %952 = vmatprep.subr.bf16.mxu0 %v730
  %953 = vmatpush1.bf16.msra.mxu0 %v729
  %954 = vmatprep.subr.bf16.mxu0 %v722
  %955 = vmatpush1.bf16.msra.mxu0 %v721
  %956 = vmatprep.subr.bf16.mxu0 %v714
  %957 = vmatpush1.bf16.msra.mxu0 %v713
  %958 = vmatprep.subr.bf16.mxu0 %v706
  %959 = vmatpush1.bf16.msra.mxu0 %v705
  %960 = vmatprep.subr.bf16.mxu0 %v698
  %961 = vmatpush1.bf16.msra.mxu0 %v697
  %962 = vmatprep.subr.bf16.mxu0 %v690
  %963 = vmatpush1.bf16.msra.mxu0 %v689
  %964 = vmatprep.subr.bf16.mxu0 %v682
  %965 = vmatpush1.bf16.msra.mxu0 %v681
  %966 = vmatprep.subr.bf16.mxu0 %v674
  %967 = vmatpush1.bf16.msra.mxu0 %v673
  %968 = vmatprep.subr.bf16.mxu0 0
  %969 = vmatpush2.bf16.msra.mxu0 0
  %970 = vmatprep.subr.bf16.mxu0 0
  %971 = vmatpush2.bf16.msra.mxu0 0
  %972 = vmatprep.subr.bf16.mxu0 0
  %973 = vmatpush2.bf16.msra.mxu0 0
  %974 = vmatprep.subr.bf16.mxu0 %v867
  %975 = vmatpush2.bf16.msra.mxu0 %v864
  %976 = vmatprep.subr.bf16.mxu0 %v762
  %977 = vmatpush2.bf16.msra.mxu0 %v761
  %978 = vmatprep.subr.bf16.mxu0 %v754
  %979 = vmatpush2.bf16.msra.mxu0 %v753
  %980 = vmatprep.subr.bf16.mxu0 %v746
  %981 = vmatpush2.bf16.msra.mxu0 %v745
  %982 = vmatprep.subr.bf16.mxu0 %v738
  %983 = vmatpush2.bf16.msra.mxu0 %v737
  %984 = vmatprep.mubr.bf16.mxu0 %v845
  %985 = vmatmul.mubr.bf16.gmra.mxu0 %v831
  %v986 = vpop.f32.mrf.mxu0
  %v987 = vadd.f32 %v778, %v986
  %v988 = vpop.f32.mrf.mxu0
  %v989 = vadd.f32 %v778, %v988
  %v990 = vpop.f32.mrf.mxu0
  %v991 = vadd.f32 %v783, %v990
  %v992 = vpop.f32.mrf.mxu0
  %v993 = vadd.f32 %v783, %v992
  %994 = vmatprep.mubr.bf16.mxu0 %v848
  %995 = vmatmul.mubr.bf16.gmra.mxu0 %v833
  %v996 = vpop.f32.mrf.mxu0
  %v997 = vadd.f32 %v788, %v996
  %v998 = vpop.f32.mrf.mxu0
  %v999 = vadd.f32 %v788, %v998
  %v1000 = vpop.f32.mrf.mxu0
  %v1001 = vadd.f32 %v793, %v1000
  %v1002 = vpop.f32.mrf.mxu0
  %v1003 = vadd.f32 %v793, %v1002
  %1004 = vmatprep.mubr.bf16.mxu0 %v851
  %1005 = vmatmul.mubr.bf16.gmra.mxu0 %v835
  %v1006 = vpop.f32.mrf.mxu0
  %v1007 = vadd.f32 %v798, %v1006
  %v1008 = vpop.f32.mrf.mxu0
  %v1009 = vadd.f32 %v798, %v1008
  %v1010 = vpop.f32.mrf.mxu0
  %v1011 = vadd.f32 %v803, %v1010
  %v1012 = vpop.f32.mrf.mxu0
  %v1013 = vadd.f32 %v803, %v1012
  %1014 = vmatprep.mubr.bf16.mxu0 %v854
  %1015 = vmatmul.mubr.bf16.gmra.mxu0 %v837
  %v1016 = vpop.f32.mrf.mxu0
  %v1017 = vadd.f32 %v808, %v1016
  %v1018 = vpop.f32.mrf.mxu0
  %v1019 = vadd.f32 %v808, %v1018
  %v1020 = vpop.f32.mrf.mxu0
  %v1021 = vpop.f32.mrf.mxu0
  %1022 = vdwg.mxu0
  %1023 = vmatprep.subr.bf16.mxu0 %v732
  %1024 = vmatpush1.bf16.msra.mxu0 %v731
  %1025 = vmatprep.subr.bf16.mxu0 %v724
  %1026 = vmatpush1.bf16.msra.mxu0 %v723
  %1027 = vmatprep.subr.bf16.mxu0 %v716
  %1028 = vmatpush1.bf16.msra.mxu0 %v715
  %1029 = vmatprep.subr.bf16.mxu0 %v708
  %1030 = vmatpush1.bf16.msra.mxu0 %v707
  %1031 = vmatprep.subr.bf16.mxu0 %v700
  %1032 = vmatpush1.bf16.msra.mxu0 %v699
  %1033 = vmatprep.subr.bf16.mxu0 %v692
  %1034 = vmatpush1.bf16.msra.mxu0 %v691
  %1035 = vmatprep.subr.bf16.mxu0 %v684
  %1036 = vmatpush1.bf16.msra.mxu0 %v683
  %1037 = vmatprep.subr.bf16.mxu0 %v676
  %1038 = vmatpush1.bf16.msra.mxu0 %v675
  %1039 = vmatprep.subr.bf16.mxu0 0
  %1040 = vmatpush2.bf16.msra.mxu0 0
  %1041 = vmatprep.subr.bf16.mxu0 0
  %1042 = vmatpush2.bf16.msra.mxu0 0
  %1043 = vmatprep.subr.bf16.mxu0 0
  %1044 = vmatpush2.bf16.msra.mxu0 0
  %1045 = vmatprep.subr.bf16.mxu0 %v873
  %1046 = vmatpush2.bf16.msra.mxu0 %v870
  %1047 = vmatprep.subr.bf16.mxu0 %v764
  %1048 = vmatpush2.bf16.msra.mxu0 %v763
  %1049 = vmatprep.subr.bf16.mxu0 %v756
  %1050 = vmatpush2.bf16.msra.mxu0 %v755
  %1051 = vmatprep.subr.bf16.mxu0 %v748
  %1052 = vmatpush2.bf16.msra.mxu0 %v747
  %1053 = vmatprep.subr.bf16.mxu0 %v740
  %1054 = vmatpush2.bf16.msra.mxu0 %v739
  %1055 = vmatprep.mubr.bf16.mxu0 %v845
  %1056 = vmatmul.mubr.bf16.gmra.mxu0 %v831
  %v1057 = vpop.f32.mrf.mxu0
  %v1058 = vadd.f32 %v778, %v1057
  %v1059 = vpop.f32.mrf.mxu0
  %v1060 = vadd.f32 %v778, %v1059
  %v1061 = vpop.f32.mrf.mxu0
  %v1062 = vadd.f32 %v783, %v1061
  %v1063 = vpop.f32.mrf.mxu0
  %v1064 = vadd.f32 %v783, %v1063
  %1065 = vmatprep.mubr.bf16.mxu0 %v848
  %1066 = vmatmul.mubr.bf16.gmra.mxu0 %v833
  %v1067 = vpop.f32.mrf.mxu0
  %v1068 = vadd.f32 %v788, %v1067
  %v1069 = vpop.f32.mrf.mxu0
  %v1070 = vadd.f32 %v788, %v1069
  %v1071 = vpop.f32.mrf.mxu0
  %v1072 = vadd.f32 %v793, %v1071
  %v1073 = vpop.f32.mrf.mxu0
  %v1074 = vadd.f32 %v793, %v1073
  %1075 = vmatprep.mubr.bf16.mxu0 %v851
  %1076 = vmatmul.mubr.bf16.gmra.mxu0 %v835
  %v1077 = vpop.f32.mrf.mxu0
  %v1078 = vadd.f32 %v798, %v1077
  %v1079 = vpop.f32.mrf.mxu0
  %v1080 = vadd.f32 %v798, %v1079
  %v1081 = vpop.f32.mrf.mxu0
  %v1082 = vadd.f32 %v803, %v1081
  %v1083 = vpop.f32.mrf.mxu0
  %v1084 = vadd.f32 %v803, %v1083
  %1085 = vmatprep.mubr.bf16.mxu0 %v854
  %1086 = vmatmul.mubr.bf16.gmra.mxu0 %v837
  %v1087 = vpop.f32.mrf.mxu0
  %v1088 = vadd.f32 %v808, %v1087
  %v1089 = vpop.f32.mrf.mxu0
  %v1090 = vadd.f32 %v808, %v1089
  %v1091 = vpop.f32.mrf.mxu0
  %v1092 = vpop.f32.mrf.mxu0
  %1093 = vdwg.mxu0
  %1094 = vmatprep.subr.bf16.mxu0 %v734
  %1095 = vmatpush1.bf16.msra.mxu0 %v733
  %1096 = vmatprep.subr.bf16.mxu0 %v726
  %1097 = vmatpush1.bf16.msra.mxu0 %v725
  %1098 = vmatprep.subr.bf16.mxu0 %v718
  %1099 = vmatpush1.bf16.msra.mxu0 %v717
  %1100 = vmatprep.subr.bf16.mxu0 %v710
  %1101 = vmatpush1.bf16.msra.mxu0 %v709
  %1102 = vmatprep.subr.bf16.mxu0 %v702
  %1103 = vmatpush1.bf16.msra.mxu0 %v701
  %1104 = vmatprep.subr.bf16.mxu0 %v694
  %1105 = vmatpush1.bf16.msra.mxu0 %v693
  %1106 = vmatprep.subr.bf16.mxu0 %v686
  %1107 = vmatpush1.bf16.msra.mxu0 %v685
  %1108 = vmatprep.subr.bf16.mxu0 %v678
  %1109 = vmatpush1.bf16.msra.mxu0 %v677
  %1110 = vmatprep.subr.bf16.mxu0 0
  %1111 = vmatpush2.bf16.msra.mxu0 0
  %1112 = vmatprep.subr.bf16.mxu0 0
  %1113 = vmatpush2.bf16.msra.mxu0 0
  %1114 = vmatprep.subr.bf16.mxu0 0
  %1115 = vmatpush2.bf16.msra.mxu0 0
  %1116 = vmatprep.subr.bf16.mxu0 %v879
  %1117 = vmatpush2.bf16.msra.mxu0 %v876
  %1118 = vmatprep.subr.bf16.mxu0 %v766
  %1119 = vmatpush2.bf16.msra.mxu0 %v765
  %1120 = vmatprep.subr.bf16.mxu0 %v758
  %1121 = vmatpush2.bf16.msra.mxu0 %v757
  %1122 = vmatprep.subr.bf16.mxu0 %v750
  %1123 = vmatpush2.bf16.msra.mxu0 %v749
  %1124 = vmatprep.subr.bf16.mxu0 %v742
  %1125 = vmatpush2.bf16.msra.mxu0 %v741
  %1126 = vmatprep.mubr.bf16.mxu0 %v845
  %1127 = vmatmul.mubr.bf16.gmra.mxu0 %v831
  %v1128 = vpop.f32.mrf.mxu0
  %v1129 = vadd.f32 %v778, %v1128
  %v1130 = vpop.f32.mrf.mxu0
  %v1131 = vadd.f32 %v778, %v1130
  %v1132 = vpop.f32.mrf.mxu0
  %v1133 = vadd.f32 %v783, %v1132
  %v1134 = vpop.f32.mrf.mxu0
  %v1135 = vadd.f32 %v783, %v1134
  %1136 = vmatprep.mubr.bf16.mxu0 %v848
  %1137 = vmatmul.mubr.bf16.gmra.mxu0 %v833
  %v1138 = vpop.f32.mrf.mxu0
  %v1139 = vadd.f32 %v788, %v1138
  %v1140 = vpop.f32.mrf.mxu0
  %v1141 = vadd.f32 %v788, %v1140
  %v1142 = vpop.f32.mrf.mxu0
  %v1143 = vadd.f32 %v793, %v1142
  %v1144 = vpop.f32.mrf.mxu0
  %v1145 = vadd.f32 %v793, %v1144
  %1146 = vmatprep.mubr.bf16.mxu0 %v851
  %1147 = vmatmul.mubr.bf16.gmra.mxu0 %v835
  %v1148 = vpop.f32.mrf.mxu0
  %v1149 = vadd.f32 %v798, %v1148
  %v1150 = vpop.f32.mrf.mxu0
  %v1151 = vadd.f32 %v798, %v1150
  %v1152 = vpop.f32.mrf.mxu0
  %v1153 = vadd.f32 %v803, %v1152
  %v1154 = vpop.f32.mrf.mxu0
  %v1155 = vadd.f32 %v803, %v1154
  %1156 = vmatprep.mubr.bf16.mxu0 %v854
  %1157 = vmatmul.mubr.bf16.gmra.mxu0 %v837
  %v1158 = vpop.f32.mrf.mxu0
  %v1159 = vadd.f32 %v808, %v1158
  %v1160 = vpop.f32.mrf.mxu0
  %v1161 = vadd.f32 %v808, %v1160
  %v1162 = vpop.f32.mrf.mxu0
  %v1163 = vpop.f32.mrf.mxu0
  %1164 = vdwg.mxu0
  %v1165 = vmax.f32 %v916, 0.0
  %v1166 = vmax.f32 %v918, 0.0
  %v1167 = vmax.f32 %v987, 0.0
  %v1168 = vmax.f32 %v989, 0.0
  %v1169 = vmax.f32 %v1058, 0.0
  %v1170 = vmax.f32 %v1060, 0.0
  %v1171 = vmax.f32 %v1129, 0.0
  %v1172 = vmax.f32 %v1131, 0.0
  %v1173 = vmax.f32 %v920, 0.0
  %v1174 = vmax.f32 %v922, 0.0
  %v1175 = vmax.f32 %v991, 0.0
  %v1176 = vmax.f32 %v993, 0.0
  %v1177 = vmax.f32 %v1062, 0.0
  %v1178 = vmax.f32 %v1064, 0.0
  %v1179 = vmax.f32 %v1133, 0.0
  %v1180 = vmax.f32 %v1135, 0.0
  %v1181 = vmax.f32 %v926, 0.0
  %v1182 = vmax.f32 %v928, 0.0
  %v1183 = vmax.f32 %v997, 0.0
  %v1184 = vmax.f32 %v999, 0.0
  %v1185 = vmax.f32 %v1068, 0.0
  %v1186 = vmax.f32 %v1070, 0.0
  %v1187 = vmax.f32 %v1139, 0.0
  %v1188 = vmax.f32 %v1141, 0.0
  %v1189 = vmax.f32 %v930, 0.0
  %v1190 = vmax.f32 %v932, 0.0
  %v1191 = vmax.f32 %v1001, 0.0
  %v1192 = vmax.f32 %v1003, 0.0
  %v1193 = vmax.f32 %v1072, 0.0
  %v1194 = vmax.f32 %v1074, 0.0
  %v1195 = vmax.f32 %v1143, 0.0
  %v1196 = vmax.f32 %v1145, 0.0
  %v1197 = vmax.f32 %v936, 0.0
  %v1198 = vmax.f32 %v938, 0.0
  %v1199 = vmax.f32 %v1007, 0.0
  %v1200 = vmax.f32 %v1009, 0.0
  %v1201 = vmax.f32 %v1078, 0.0
  %v1202 = vmax.f32 %v1080, 0.0
  %v1203 = vmax.f32 %v1149, 0.0
  %v1204 = vmax.f32 %v1151, 0.0
  %v1205 = vmax.f32 %v940, 0.0
  %v1206 = vmax.f32 %v942, 0.0
  %v1207 = vmax.f32 %v1011, 0.0
  %v1208 = vmax.f32 %v1013, 0.0
  %v1209 = vmax.f32 %v1082, 0.0
  %v1210 = vmax.f32 %v1084, 0.0
  %v1211 = vmax.f32 %v1153, 0.0
  %v1212 = vmax.f32 %v1155, 0.0
  %v1213 = vmax.f32 %v946, 0.0
  %v1214 = vmax.f32 %v948, 0.0
  %v1215 = vmax.f32 %v1017, 0.0
  %v1216 = vmax.f32 %v1019, 0.0
  %v1217 = vmax.f32 %v1088, 0.0
  %v1218 = vmax.f32 %v1090, 0.0
  %v1219 = vmax.f32 %v1159, 0.0
  %v1220 = vmax.f32 %v1161, 0.0
  %v1221 = vld [vmem:[%s4] sm:$0xf]
  %v1222 = vld [vmem:[%s4 + $0x4] sm:$0xf]
  %v1223 = vld [vmem:[%s5] sm:$0xff]
  %v1224 = vld [vmem:[%s5 + $0x8] sm:$0xff]
  %v1225 = vpack.c.bf16 %v1173, %v1165
  %v1226 = vpack.c.bf16 %v1174, %v1166
  %v1227 = vpack.c.bf16 %v1175, %v1167
  %v1228 = vpack.c.bf16 %v1176, %v1168
  %v1229 = vpack.c.bf16 %v1177, %v1169
  %v1230 = vpack.c.bf16 %v1178, %v1170
  %v1231 = vpack.c.bf16 %v1179, %v1171
  %v1232 = vpack.c.bf16 %v1180, %v1172
  %v1233 = vpack.c.bf16 %v1189, %v1181
  %v1234 = vpack.c.bf16 %v1190, %v1182
  %v1235 = vpack.c.bf16 %v1191, %v1183
  %v1236 = vpack.c.bf16 %v1192, %v1184
  %v1237 = vpack.c.bf16 %v1193, %v1185
  %v1238 = vpack.c.bf16 %v1194, %v1186
  %v1239 = vpack.c.bf16 %v1195, %v1187
  %v1240 = vpack.c.bf16 %v1196, %v1188
  %v1241 = vpack.c.bf16 %v1205, %v1197
  %v1242 = vpack.c.bf16 %v1206, %v1198
  %v1243 = vpack.c.bf16 %v1207, %v1199
  %v1244 = vpack.c.bf16 %v1208, %v1200
  %v1245 = vpack.c.bf16 %v1209, %v1201
  %v1246 = vpack.c.bf16 %v1210, %v1202
  %v1247 = vpack.c.bf16 %v1211, %v1203
  %v1248 = vpack.c.bf16 %v1212, %v1204
  %v1249 = vpack.c.bf16 %v1213, %v1213
  %v1250 = vpack.c.bf16 %v1214, %v1214
  %v1251 = vpack.c.bf16 %v1215, %v1215
  %v1252 = vpack.c.bf16 %v1216, %v1216
  %v1253 = vpack.c.bf16 %v1217, %v1217
  %v1254 = vpack.c.bf16 %v1218, %v1218
  %v1255 = vpack.c.bf16 %v1219, %v1219
  %v1256 = vpack.c.bf16 %v1220, %v1220
  %1258 = vset.pattern.permute.xlu0 0
  %1259 = vperm.xlu0 %1258, %v1223
  %v1260 = vpop.permute.xlu0 %1259
  %1263 = vset.pattern.permute.xlu0 0
  %1264 = vperm.xlu0 %1263, %v1224
  %v1265 = vpop.permute.xlu0 %1264
  %v1269 = vunpack.c.l.b16 %v1221
  %v1270 = vunpack.c.l.b16 %v1222
  %v1271 = vpack.c.b16 %v1270, %v1269
  %vm1272 = vcmask 457728
  %v1274 = vsel %vm1272, %v1271, 0
  %v1277 = vsel %vm856, %v1249, 0
  %v1280 = vsel %vm856, %v1250, 0
  %v1283 = vsel %vm856, %v1251, 0
  %v1286 = vsel %vm856, %v1252, 0
  %v1289 = vsel %vm856, %v1253, 0
  %v1292 = vsel %vm856, %v1254, 0
  %v1295 = vsel %vm856, %v1255, 0
  %v1298 = vsel %vm856, %v1256, 0
  %1300 = vmatprep.subr.bf16.mxu0 0
  %1301 = vmatpush1.bf16.msra.mxu0 0
  %1302 = vmatprep.subr.bf16.mxu0 0
  %1303 = vmatpush1.bf16.msra.mxu0 0
  %1304 = vmatprep.subr.bf16.mxu0 0
  %1305 = vmatpush1.bf16.msra.mxu0 0
  %1306 = vmatprep.subr.bf16.mxu0 0
  %1307 = vmatpush1.bf16.msra.mxu0 0
  %1308 = vmatprep.subr.bf16.mxu0 %v1280
  %1309 = vmatpush1.bf16.msra.mxu0 %v1277
  %1310 = vmatprep.subr.bf16.mxu0 %v1242
  %1311 = vmatpush1.bf16.msra.mxu0 %v1241
  %1312 = vmatprep.subr.bf16.mxu0 %v1234
  %1313 = vmatpush1.bf16.msra.mxu0 %v1233
  %1314 = vmatprep.subr.bf16.mxu0 %v1226
  %1315 = vmatpush1.bf16.msra.mxu0 %v1225
  %1316 = vmatprep.subr.bf16.mxu0 0
  %1317 = vmatpush2.bf16.msra.mxu0 0
  %1318 = vmatprep.subr.bf16.mxu0 0
  %1319 = vmatpush2.bf16.msra.mxu0 0
  %1320 = vmatprep.subr.bf16.mxu0 0
  %1321 = vmatpush2.bf16.msra.mxu0 0
  %1322 = vmatprep.subr.bf16.mxu0 0
  %1323 = vmatpush2.bf16.msra.mxu0 0
  %1324 = vmatprep.subr.bf16.mxu0 0
  %1325 = vmatpush2.bf16.msra.mxu0 0
  %1326 = vmatprep.subr.bf16.mxu0 0
  %1327 = vmatpush2.bf16.msra.mxu0 0
  %1328 = vmatprep.subr.bf16.mxu0 0
  %1329 = vmatpush2.bf16.msra.mxu0 0
  %1330 = vmatprep.subr.bf16.mxu0 0
  %1331 = vmatpush2.bf16.msra.mxu0 0
  %1332 = vmatprep.mubr.bf16.mxu0 0
  %1333 = vmatmul.mubr.bf16.gmra.mxu0 %v1274
  %v1334 = vpop.f32.mrf.mxu0
  %v1335 = vadd.f32 %v1260, %v1334
  %v1336 = vpop.f32.mrf.mxu0
  %v1337 = vadd.f32 %v1260, %v1336
  %v1338 = vpop.f32.mrf.mxu0
  %v1339 = vadd.f32 %v1265, %v1338
  %v1340 = vpop.f32.mrf.mxu0
  %v1341 = vadd.f32 %v1265, %v1340
  %1342 = vdwg.mxu0
  %1343 = vmatprep.subr.bf16.mxu0 0
  %1344 = vmatpush1.bf16.msra.mxu0 0
  %1345 = vmatprep.subr.bf16.mxu0 0
  %1346 = vmatpush1.bf16.msra.mxu0 0
  %1347 = vmatprep.subr.bf16.mxu0 0
  %1348 = vmatpush1.bf16.msra.mxu0 0
  %1349 = vmatprep.subr.bf16.mxu0 0
  %1350 = vmatpush1.bf16.msra.mxu0 0
  %1351 = vmatprep.subr.bf16.mxu0 %v1286
  %1352 = vmatpush1.bf16.msra.mxu0 %v1283
  %1353 = vmatprep.subr.bf16.mxu0 %v1244
  %1354 = vmatpush1.bf16.msra.mxu0 %v1243
  %1355 = vmatprep.subr.bf16.mxu0 %v1236
  %1356 = vmatpush1.bf16.msra.mxu0 %v1235
  %1357 = vmatprep.subr.bf16.mxu0 %v1228
  %1358 = vmatpush1.bf16.msra.mxu0 %v1227
  %1359 = vmatprep.subr.bf16.mxu0 0
  %1360 = vmatpush2.bf16.msra.mxu0 0
  %1361 = vmatprep.subr.bf16.mxu0 0
  %1362 = vmatpush2.bf16.msra.mxu0 0
  %1363 = vmatprep.subr.bf16.mxu0 0
  %1364 = vmatpush2.bf16.msra.mxu0 0
  %1365 = vmatprep.subr.bf16.mxu0 0
  %1366 = vmatpush2.bf16.msra.mxu0 0
  %1367 = vmatprep.subr.bf16.mxu0 0
  %1368 = vmatpush2.bf16.msra.mxu0 0
  %1369 = vmatprep.subr.bf16.mxu0 0
  %1370 = vmatpush2.bf16.msra.mxu0 0
  %1371 = vmatprep.subr.bf16.mxu0 0
  %1372 = vmatpush2.bf16.msra.mxu0 0
  %1373 = vmatprep.subr.bf16.mxu0 0
  %1374 = vmatpush2.bf16.msra.mxu0 0
  %1375 = vmatprep.mubr.bf16.mxu0 0
  %1376 = vmatmul.mubr.bf16.gmra.mxu0 %v1274
  %v1377 = vpop.f32.mrf.mxu0
  %v1378 = vadd.f32 %v1260, %v1377
  %v1379 = vpop.f32.mrf.mxu0
  %v1380 = vadd.f32 %v1260, %v1379
  %v1381 = vpop.f32.mrf.mxu0
  %v1382 = vadd.f32 %v1265, %v1381
  %v1383 = vpop.f32.mrf.mxu0
  %v1384 = vadd.f32 %v1265, %v1383
  %1385 = vdwg.mxu0
  %1386 = vmatprep.subr.bf16.mxu0 0
  %1387 = vmatpush1.bf16.msra.mxu0 0
  %1388 = vmatprep.subr.bf16.mxu0 0
  %1389 = vmatpush1.bf16.msra.mxu0 0
  %1390 = vmatprep.subr.bf16.mxu0 0
  %1391 = vmatpush1.bf16.msra.mxu0 0
  %1392 = vmatprep.subr.bf16.mxu0 0
  %1393 = vmatpush1.bf16.msra.mxu0 0
  %1394 = vmatprep.subr.bf16.mxu0 %v1292
  %1395 = vmatpush1.bf16.msra.mxu0 %v1289
  %1396 = vmatprep.subr.bf16.mxu0 %v1246
  %1397 = vmatpush1.bf16.msra.mxu0 %v1245
  %1398 = vmatprep.subr.bf16.mxu0 %v1238
  %1399 = vmatpush1.bf16.msra.mxu0 %v1237
  %1400 = vmatprep.subr.bf16.mxu0 %v1230
  %1401 = vmatpush1.bf16.msra.mxu0 %v1229
  %1402 = vmatprep.subr.bf16.mxu0 0
  %1403 = vmatpush2.bf16.msra.mxu0 0
  %1404 = vmatprep.subr.bf16.mxu0 0
  %1405 = vmatpush2.bf16.msra.mxu0 0
  %1406 = vmatprep.subr.bf16.mxu0 0
  %1407 = vmatpush2.bf16.msra.mxu0 0
  %1408 = vmatprep.subr.bf16.mxu0 0
  %1409 = vmatpush2.bf16.msra.mxu0 0
  %1410 = vmatprep.subr.bf16.mxu0 0
  %1411 = vmatpush2.bf16.msra.mxu0 0
  %1412 = vmatprep.subr.bf16.mxu0 0
  %1413 = vmatpush2.bf16.msra.mxu0 0
  %1414 = vmatprep.subr.bf16.mxu0 0
  %1415 = vmatpush2.bf16.msra.mxu0 0
  %1416 = vmatprep.subr.bf16.mxu0 0
  %1417 = vmatpush2.bf16.msra.mxu0 0
  %1418 = vmatprep.mubr.bf16.mxu0 0
  %1419 = vmatmul.mubr.bf16.gmra.mxu0 %v1274
  %v1420 = vpop.f32.mrf.mxu0
  %v1421 = vadd.f32 %v1260, %v1420
  %v1422 = vpop.f32.mrf.mxu0
  %v1423 = vadd.f32 %v1260, %v1422
  %v1424 = vpop.f32.mrf.mxu0
  %v1425 = vadd.f32 %v1265, %v1424
  %v1426 = vpop.f32.mrf.mxu0
  %v1427 = vadd.f32 %v1265, %v1426
  %1428 = vdwg.mxu0
  %1429 = vmatprep.subr.bf16.mxu0 0
  %1430 = vmatpush1.bf16.msra.mxu0 0
  %1431 = vmatprep.subr.bf16.mxu0 0
  %1432 = vmatpush1.bf16.msra.mxu0 0
  %1433 = vmatprep.subr.bf16.mxu0 0
  %1434 = vmatpush1.bf16.msra.mxu0 0
  %1435 = vmatprep.subr.bf16.mxu0 0
  %1436 = vmatpush1.bf16.msra.mxu0 0
  %1437 = vmatprep.subr.bf16.mxu0 %v1298
  %1438 = vmatpush1.bf16.msra.mxu0 %v1295
  %1439 = vmatprep.subr.bf16.mxu0 %v1248
  %1440 = vmatpush1.bf16.msra.mxu0 %v1247
  %1441 = vmatprep.subr.bf16.mxu0 %v1240
  %1442 = vmatpush1.bf16.msra.mxu0 %v1239
  %1443 = vmatprep.subr.bf16.mxu0 %v1232
  %1444 = vmatpush1.bf16.msra.mxu0 %v1231
  %1445 = vmatprep.subr.bf16.mxu0 0
  %1446 = vmatpush2.bf16.msra.mxu0 0
  %1447 = vmatprep.subr.bf16.mxu0 0
  %1448 = vmatpush2.bf16.msra.mxu0 0
  %1449 = vmatprep.subr.bf16.mxu0 0
  %1450 = vmatpush2.bf16.msra.mxu0 0
  %1451 = vmatprep.subr.bf16.mxu0 0
  %1452 = vmatpush2.bf16.msra.mxu0 0
  %1453 = vmatprep.subr.bf16.mxu0 0
  %1454 = vmatpush2.bf16.msra.mxu0 0
  %1455 = vmatprep.subr.bf16.mxu0 0
  %1456 = vmatpush2.bf16.msra.mxu0 0
  %1457 = vmatprep.subr.bf16.mxu0 0
  %1458 = vmatpush2.bf16.msra.mxu0 0
  %1459 = vmatprep.subr.bf16.mxu0 0
  %1460 = vmatpush2.bf16.msra.mxu0 0
  %1461 = vmatprep.mubr.bf16.mxu0 0
  %1462 = vmatmul.mubr.bf16.gmra.mxu0 %v1274
  %v1463 = vpop.f32.mrf.mxu0
  %v1464 = vadd.f32 %v1260, %v1463
  %v1465 = vpop.f32.mrf.mxu0
  %v1466 = vadd.f32 %v1260, %v1465
  %v1467 = vpop.f32.mrf.mxu0
  %v1468 = vadd.f32 %v1265, %v1467
  %v1469 = vpop.f32.mrf.mxu0
  %v1470 = vadd.f32 %v1265, %v1469
  %1471 = vdwg.mxu0
  %v1472 = vmax.f32 %v1335, 0.0
  %v1473 = vmax.f32 %v1337, 0.0
  %v1474 = vmax.f32 %v1378, 0.0
  %v1475 = vmax.f32 %v1380, 0.0
  %v1476 = vmax.f32 %v1421, 0.0
  %v1477 = vmax.f32 %v1423, 0.0
  %v1478 = vmax.f32 %v1464, 0.0
  %v1479 = vmax.f32 %v1466, 0.0
  %v1480 = vmax.f32 %v1339, 0.0
  %v1481 = vmax.f32 %v1341, 0.0
  %v1482 = vmax.f32 %v1382, 0.0
  %v1483 = vmax.f32 %v1384, 0.0
  %v1484 = vmax.f32 %v1425, 0.0
  %v1485 = vmax.f32 %v1427, 0.0
  %v1486 = vmax.f32 %v1468, 0.0
  %v1487 = vmax.f32 %v1470, 0.0
  %v1489 = vlaneseq
  %v1490 = vshrl.u32 %v1489, 7
  %v1491 = vsub.s32 0, %v1490
  %v1492 = vrot.slane %v42, %v1491
  %v1493 = vlaneseq
  %v1494 = vshrl.u32 %v1493, 7
  %v1495 = vsub.s32 1, %v1494
  %v1496 = vrot.slane %v42, %v1495
  %v1497 = vlaneseq
  %v1498 = vshrl.u32 %v1497, 7
  %v1499 = vsub.s32 2, %v1498
  %v1500 = vrot.slane %v42, %v1499
  %v1501 = vlaneseq
  %v1502 = vshrl.u32 %v1501, 7
  %v1503 = vsub.s32 3, %v1502
  %v1504 = vrot.slane %v42, %v1503
  %v1505 = vlaneseq
  %v1506 = vshrl.u32 %v1505, 7
  %v1507 = vsub.s32 4, %v1506
  %v1508 = vrot.slane %v42, %v1507
  %v1509 = vlaneseq
  %v1510 = vshrl.u32 %v1509, 7
  %v1511 = vsub.s32 5, %v1510
  %v1512 = vrot.slane %v42, %v1511
  %v1513 = vlaneseq
  %v1514 = vshrl.u32 %v1513, 7
  %v1515 = vsub.s32 6, %v1514
  %v1516 = vrot.slane %v42, %v1515
  %v1517 = vlaneseq
  %v1518 = vshrl.u32 %v1517, 7
  %v1519 = vsub.s32 7, %v1518
  %v1520 = vrot.slane %v42, %v1519
  %v1529 = vmul.f32 %v1472, %v1492
  %v1530 = vmul.f32 %v1473, %v1496
  %v1531 = vmul.f32 %v1474, %v1500
  %v1532 = vmul.f32 %v1475, %v1504
  %v1533 = vmul.f32 %v1476, %v1508
  %v1534 = vmul.f32 %v1477, %v1512
  %v1535 = vmul.f32 %v1478, %v1516
  %v1536 = vmul.f32 %v1479, %v1520
  %v1537 = vmul.f32 %v1480, %v1492
  %v1538 = vmul.f32 %v1481, %v1496
  %v1539 = vmul.f32 %v1482, %v1500
  %v1540 = vmul.f32 %v1483, %v1504
  %v1541 = vmul.f32 %v1484, %v1508
  %v1542 = vmul.f32 %v1485, %v1512
  %v1543 = vmul.f32 %v1486, %v1516
  %v1544 = vmul.f32 %v1487, %v1520
  %v1545 = vld [vmem:[%s6] sm:$0xff]
  %v1546 = vld [vmem:[%s6 + $0x8] sm:$0xff]
  %v1547 = vld [vmem:[%s7] sm:$0xff]
  %v1548 = vld [vmem:[%s7 + $0x8] sm:$0xff]
  %1549 = vrot.lane.b32.xlu0 %v1529, 21
  %v1550 = vpop.permute.xlu0 %1549
  %1551 = vrot.lane.b32.xlu0 %v1537, 21
  %v1552 = vpop.permute.xlu0 %1551
  %1553 = vrot.lane.b32.xlu0 %v1530, 21
  %v1554 = vpop.permute.xlu0 %1553
  %1555 = vrot.lane.b32.xlu0 %v1538, 21
  %v1556 = vpop.permute.xlu0 %1555
  %1557 = vrot.lane.b32.xlu0 %v1531, 21
  %v1558 = vpop.permute.xlu0 %1557
  %1559 = vrot.lane.b32.xlu0 %v1539, 21
  %v1560 = vpop.permute.xlu0 %1559
  %1561 = vrot.lane.b32.xlu0 %v1532, 21
  %v1562 = vpop.permute.xlu0 %1561
  %1563 = vrot.lane.b32.xlu0 %v1540, 21
  %v1564 = vpop.permute.xlu0 %1563
  %1565 = vrot.lane.b32.xlu0 %v1533, 21
  %v1566 = vpop.permute.xlu0 %1565
  %1567 = vrot.lane.b32.xlu0 %v1541, 21
  %v1568 = vpop.permute.xlu0 %1567
  %1569 = vrot.lane.b32.xlu0 %v1534, 21
  %v1570 = vpop.permute.xlu0 %1569
  %1571 = vrot.lane.b32.xlu0 %v1542, 21
  %v1572 = vpop.permute.xlu0 %1571
  %1573 = vrot.lane.b32.xlu0 %v1535, 21
  %v1574 = vpop.permute.xlu0 %1573
  %1575 = vrot.lane.b32.xlu0 %v1543, 21
  %v1576 = vpop.permute.xlu0 %1575
  %1577 = vrot.lane.b32.xlu0 %v1536, 21
  %v1578 = vpop.permute.xlu0 %1577
  %1579 = vrot.lane.b32.xlu0 %v1544, 21
  %v1580 = vpop.permute.xlu0 %1579
  %v1581 = vsel %vm237, %v1574, %v1578
  %v1582 = vsel %vm237, %v1576, %v1580
  %v1583 = vsel %vm237, %v1570, %v1574
  %v1584 = vsel %vm237, %v1572, %v1576
  %v1585 = vsel %vm237, %v1566, %v1570
  %v1586 = vsel %vm237, %v1568, %v1572
  %v1587 = vsel %vm237, %v1562, %v1566
  %v1588 = vsel %vm237, %v1564, %v1568
  %v1589 = vsel %vm237, %v1558, %v1562
  %v1590 = vsel %vm237, %v1560, %v1564
  %v1591 = vsel %vm237, %v1554, %v1558
  %v1592 = vsel %vm237, %v1556, %v1560
  %v1593 = vsel %vm237, %v1550, %v1554
  %v1594 = vsel %vm237, %v1552, %v1556
  %v1595 = vsel %vm237, %v1578, %v1550
  %v1596 = vsel %vm237, %v1580, %v1552
  %1597 = vrot.lane.b32.xlu0 %v1529, 20
  %v1598 = vpop.permute.xlu0 %1597
  %1599 = vrot.lane.b32.xlu0 %v1537, 20
  %v1600 = vpop.permute.xlu0 %1599
  %1601 = vrot.lane.b32.xlu0 %v1530, 20
  %v1602 = vpop.permute.xlu0 %1601
  %1603 = vrot.lane.b32.xlu0 %v1538, 20
  %v1604 = vpop.permute.xlu0 %1603
  %1605 = vrot.lane.b32.xlu0 %v1531, 20
  %v1606 = vpop.permute.xlu0 %1605
  %1607 = vrot.lane.b32.xlu0 %v1539, 20
  %v1608 = vpop.permute.xlu0 %1607
  %1609 = vrot.lane.b32.xlu0 %v1532, 20
  %v1610 = vpop.permute.xlu0 %1609
  %1611 = vrot.lane.b32.xlu0 %v1540, 20
  %v1612 = vpop.permute.xlu0 %1611
  %1613 = vrot.lane.b32.xlu0 %v1533, 20
  %v1614 = vpop.permute.xlu0 %1613
  %1615 = vrot.lane.b32.xlu0 %v1541, 20
  %v1616 = vpop.permute.xlu0 %1615
  %1617 = vrot.lane.b32.xlu0 %v1534, 20
  %v1618 = vpop.permute.xlu0 %1617
  %1619 = vrot.lane.b32.xlu0 %v1542, 20
  %v1620 = vpop.permute.xlu0 %1619
  %1621 = vrot.lane.b32.xlu0 %v1535, 20
  %v1622 = vpop.permute.xlu0 %1621
  %1623 = vrot.lane.b32.xlu0 %v1543, 20
  %v1624 = vpop.permute.xlu0 %1623
  %1625 = vrot.lane.b32.xlu0 %v1536, 20
  %v1626 = vpop.permute.xlu0 %1625
  %1627 = vrot.lane.b32.xlu0 %v1544, 20
  %v1628 = vpop.permute.xlu0 %1627
  %v1629 = vsel %vm262, %v1622, %v1626
  %v1630 = vsel %vm262, %v1624, %v1628
  %v1631 = vsel %vm262, %v1618, %v1622
  %v1632 = vsel %vm262, %v1620, %v1624
  %v1633 = vsel %vm262, %v1614, %v1618
  %v1634 = vsel %vm262, %v1616, %v1620
  %v1635 = vsel %vm262, %v1610, %v1614
  %v1636 = vsel %vm262, %v1612, %v1616
  %v1637 = vsel %vm262, %v1606, %v1610
  %v1638 = vsel %vm262, %v1608, %v1612
  %v1639 = vsel %vm262, %v1602, %v1606
  %v1640 = vsel %vm262, %v1604, %v1608
  %v1641 = vsel %vm262, %v1598, %v1602
  %v1642 = vsel %vm262, %v1600, %v1604
  %v1643 = vsel %vm262, %v1626, %v1598
  %v1644 = vsel %vm262, %v1628, %v1600
  %1645 = vrot.lane.b32.xlu0 %v1529, 19
  %v1646 = vpop.permute.xlu0 %1645
  %1647 = vrot.lane.b32.xlu0 %v1537, 19
  %v1648 = vpop.permute.xlu0 %1647
  %1649 = vrot.lane.b32.xlu0 %v1530, 19
  %v1650 = vpop.permute.xlu0 %1649
  %1651 = vrot.lane.b32.xlu0 %v1538, 19
  %v1652 = vpop.permute.xlu0 %1651
  %1653 = vrot.lane.b32.xlu0 %v1531, 19
  %v1654 = vpop.permute.xlu0 %1653
  %1655 = vrot.lane.b32.xlu0 %v1539, 19
  %v1656 = vpop.permute.xlu0 %1655
  %1657 = vrot.lane.b32.xlu0 %v1532, 19
  %v1658 = vpop.permute.xlu0 %1657
  %1659 = vrot.lane.b32.xlu0 %v1540, 19
  %v1660 = vpop.permute.xlu0 %1659
  %1661 = vrot.lane.b32.xlu0 %v1533, 19
  %v1662 = vpop.permute.xlu0 %1661
  %1663 = vrot.lane.b32.xlu0 %v1541, 19
  %v1664 = vpop.permute.xlu0 %1663
  %1665 = vrot.lane.b32.xlu0 %v1534, 19
  %v1666 = vpop.permute.xlu0 %1665
  %1667 = vrot.lane.b32.xlu0 %v1542, 19
  %v1668 = vpop.permute.xlu0 %1667
  %1669 = vrot.lane.b32.xlu0 %v1535, 19
  %v1670 = vpop.permute.xlu0 %1669
  %1671 = vrot.lane.b32.xlu0 %v1543, 19
  %v1672 = vpop.permute.xlu0 %1671
  %1673 = vrot.lane.b32.xlu0 %v1536, 19
  %v1674 = vpop.permute.xlu0 %1673
  %1675 = vrot.lane.b32.xlu0 %v1544, 19
  %v1676 = vpop.permute.xlu0 %1675
  %v1677 = vsel %vm287, %v1670, %v1674
  %v1678 = vsel %vm287, %v1672, %v1676
  %v1679 = vsel %vm287, %v1666, %v1670
  %v1680 = vsel %vm287, %v1668, %v1672
  %v1681 = vsel %vm287, %v1662, %v1666
  %v1682 = vsel %vm287, %v1664, %v1668
  %v1683 = vsel %vm287, %v1658, %v1662
  %v1684 = vsel %vm287, %v1660, %v1664
  %v1685 = vsel %vm287, %v1654, %v1658
  %v1686 = vsel %vm287, %v1656, %v1660
  %v1687 = vsel %vm287, %v1650, %v1654
  %v1688 = vsel %vm287, %v1652, %v1656
  %v1689 = vsel %vm287, %v1646, %v1650
  %v1690 = vsel %vm287, %v1648, %v1652
  %v1691 = vsel %vm287, %v1674, %v1646
  %v1692 = vsel %vm287, %v1676, %v1648
  %1693 = vrot.lane.b32.xlu0 %v1529, 1
  %v1694 = vpop.permute.xlu0 %1693
  %1695 = vrot.lane.b32.xlu0 %v1537, 1
  %v1696 = vpop.permute.xlu0 %1695
  %1697 = vrot.lane.b32.xlu0 %v1530, 1
  %v1698 = vpop.permute.xlu0 %1697
  %1699 = vrot.lane.b32.xlu0 %v1538, 1
  %v1700 = vpop.permute.xlu0 %1699
  %1701 = vrot.lane.b32.xlu0 %v1531, 1
  %v1702 = vpop.permute.xlu0 %1701
  %1703 = vrot.lane.b32.xlu0 %v1539, 1
  %v1704 = vpop.permute.xlu0 %1703
  %1705 = vrot.lane.b32.xlu0 %v1532, 1
  %v1706 = vpop.permute.xlu0 %1705
  %1707 = vrot.lane.b32.xlu0 %v1540, 1
  %v1708 = vpop.permute.xlu0 %1707
  %1709 = vrot.lane.b32.xlu0 %v1533, 1
  %v1710 = vpop.permute.xlu0 %1709
  %1711 = vrot.lane.b32.xlu0 %v1541, 1
  %v1712 = vpop.permute.xlu0 %1711
  %1713 = vrot.lane.b32.xlu0 %v1534, 1
  %v1714 = vpop.permute.xlu0 %1713
  %1715 = vrot.lane.b32.xlu0 %v1542, 1
  %v1716 = vpop.permute.xlu0 %1715
  %1717 = vrot.lane.b32.xlu0 %v1535, 1
  %v1718 = vpop.permute.xlu0 %1717
  %1719 = vrot.lane.b32.xlu0 %v1543, 1
  %v1720 = vpop.permute.xlu0 %1719
  %1721 = vrot.lane.b32.xlu0 %v1536, 1
  %v1722 = vpop.permute.xlu0 %1721
  %1723 = vrot.lane.b32.xlu0 %v1544, 1
  %v1724 = vpop.permute.xlu0 %1723
  %v1725 = vsel %vm362, %v1718, %v1722
  %v1726 = vsel %vm362, %v1720, %v1724
  %v1727 = vsel %vm362, %v1714, %v1718
  %v1728 = vsel %vm362, %v1716, %v1720
  %v1729 = vsel %vm362, %v1710, %v1714
  %v1730 = vsel %vm362, %v1712, %v1716
  %v1731 = vsel %vm362, %v1706, %v1710
  %v1732 = vsel %vm362, %v1708, %v1712
  %v1733 = vsel %vm362, %v1702, %v1706
  %v1734 = vsel %vm362, %v1704, %v1708
  %v1735 = vsel %vm362, %v1698, %v1702
  %v1736 = vsel %vm362, %v1700, %v1704
  %v1737 = vsel %vm362, %v1694, %v1698
  %v1738 = vsel %vm362, %v1696, %v1700
  %v1739 = vsel %vm362, %v1722, %v1694
  %v1740 = vsel %vm362, %v1724, %v1696
  %1741 = vrot.lane.b32.xlu0 %v1529, 127
  %v1742 = vpop.permute.xlu0 %1741
  %1743 = vrot.lane.b32.xlu0 %v1537, 127
  %v1744 = vpop.permute.xlu0 %1743
  %1745 = vrot.lane.b32.xlu0 %v1530, 127
  %v1746 = vpop.permute.xlu0 %1745
  %1747 = vrot.lane.b32.xlu0 %v1538, 127
  %v1748 = vpop.permute.xlu0 %1747
  %1749 = vrot.lane.b32.xlu0 %v1531, 127
  %v1750 = vpop.permute.xlu0 %1749
  %1751 = vrot.lane.b32.xlu0 %v1539, 127
  %v1752 = vpop.permute.xlu0 %1751
  %1753 = vrot.lane.b32.xlu0 %v1532, 127
  %v1754 = vpop.permute.xlu0 %1753
  %1755 = vrot.lane.b32.xlu0 %v1540, 127
  %v1756 = vpop.permute.xlu0 %1755
  %1757 = vrot.lane.b32.xlu0 %v1533, 127
  %v1758 = vpop.permute.xlu0 %1757
  %1759 = vrot.lane.b32.xlu0 %v1541, 127
  %v1760 = vpop.permute.xlu0 %1759
  %1761 = vrot.lane.b32.xlu0 %v1534, 127
  %v1762 = vpop.permute.xlu0 %1761
  %1763 = vrot.lane.b32.xlu0 %v1542, 127
  %v1764 = vpop.permute.xlu0 %1763
  %1765 = vrot.lane.b32.xlu0 %v1535, 127
  %v1766 = vpop.permute.xlu0 %1765
  %1767 = vrot.lane.b32.xlu0 %v1543, 127
  %v1768 = vpop.permute.xlu0 %1767
  %1769 = vrot.lane.b32.xlu0 %v1536, 127
  %v1770 = vpop.permute.xlu0 %1769
  %1771 = vrot.lane.b32.xlu0 %v1544, 127
  %v1772 = vpop.permute.xlu0 %1771
  %v1773 = vsel %vm387, %v1766, %v1770
  %v1774 = vsel %vm387, %v1768, %v1772
  %v1775 = vsel %vm387, %v1762, %v1766
  %v1776 = vsel %vm387, %v1764, %v1768
  %v1777 = vsel %vm387, %v1758, %v1762
  %v1778 = vsel %vm387, %v1760, %v1764
  %v1779 = vsel %vm387, %v1754, %v1758
  %v1780 = vsel %vm387, %v1756, %v1760
  %v1781 = vsel %vm387, %v1750, %v1754
  %v1782 = vsel %vm387, %v1752, %v1756
  %v1783 = vsel %vm387, %v1746, %v1750
  %v1784 = vsel %vm387, %v1748, %v1752
  %v1785 = vsel %vm387, %v1742, %v1746
  %v1786 = vsel %vm387, %v1744, %v1748
  %v1787 = vsel %vm387, %v1770, %v1742
  %v1788 = vsel %vm387, %v1772, %v1744
  %1789 = vrot.lane.b32.xlu0 %v1529, 109
  %v1790 = vpop.permute.xlu0 %1789
  %1791 = vrot.lane.b32.xlu0 %v1537, 109
  %v1792 = vpop.permute.xlu0 %1791
  %1793 = vrot.lane.b32.xlu0 %v1530, 109
  %v1794 = vpop.permute.xlu0 %1793
  %1795 = vrot.lane.b32.xlu0 %v1538, 109
  %v1796 = vpop.permute.xlu0 %1795
  %1797 = vrot.lane.b32.xlu0 %v1531, 109
  %v1798 = vpop.permute.xlu0 %1797
  %1799 = vrot.lane.b32.xlu0 %v1539, 109
  %v1800 = vpop.permute.xlu0 %1799
  %1801 = vrot.lane.b32.xlu0 %v1532, 109
  %v1802 = vpop.permute.xlu0 %1801
  %1803 = vrot.lane.b32.xlu0 %v1540, 109
  %v1804 = vpop.permute.xlu0 %1803
  %1805 = vrot.lane.b32.xlu0 %v1533, 109
  %v1806 = vpop.permute.xlu0 %1805
  %1807 = vrot.lane.b32.xlu0 %v1541, 109
  %v1808 = vpop.permute.xlu0 %1807
  %1809 = vrot.lane.b32.xlu0 %v1534, 109
  %v1810 = vpop.permute.xlu0 %1809
  %1811 = vrot.lane.b32.xlu0 %v1542, 109
  %v1812 = vpop.permute.xlu0 %1811
  %1813 = vrot.lane.b32.xlu0 %v1535, 109
  %v1814 = vpop.permute.xlu0 %1813
  %1815 = vrot.lane.b32.xlu0 %v1543, 109
  %v1816 = vpop.permute.xlu0 %1815
  %1817 = vrot.lane.b32.xlu0 %v1536, 109
  %v1818 = vpop.permute.xlu0 %1817
  %1819 = vrot.lane.b32.xlu0 %v1544, 109
  %v1820 = vpop.permute.xlu0 %1819
  %v1821 = vsel %vm462, %v1814, %v1818
  %v1822 = vsel %vm462, %v1816, %v1820
  %v1823 = vsel %vm462, %v1810, %v1814
  %v1824 = vsel %vm462, %v1812, %v1816
  %v1825 = vsel %vm462, %v1806, %v1810
  %v1826 = vsel %vm462, %v1808, %v1812
  %v1827 = vsel %vm462, %v1802, %v1806
  %v1828 = vsel %vm462, %v1804, %v1808
  %v1829 = vsel %vm462, %v1798, %v1802
  %v1830 = vsel %vm462, %v1800, %v1804
  %v1831 = vsel %vm462, %v1794, %v1798
  %v1832 = vsel %vm462, %v1796, %v1800
  %v1833 = vsel %vm462, %v1790, %v1794
  %v1834 = vsel %vm462, %v1792, %v1796
  %v1835 = vsel %vm462, %v1818, %v1790
  %v1836 = vsel %vm462, %v1820, %v1792
  %1837 = vrot.lane.b32.xlu0 %v1529, 108
  %v1838 = vpop.permute.xlu0 %1837
  %1839 = vrot.lane.b32.xlu0 %v1537, 108
  %v1840 = vpop.permute.xlu0 %1839
  %1841 = vrot.lane.b32.xlu0 %v1530, 108
  %v1842 = vpop.permute.xlu0 %1841
  %1843 = vrot.lane.b32.xlu0 %v1538, 108
  %v1844 = vpop.permute.xlu0 %1843
  %1845 = vrot.lane.b32.xlu0 %v1531, 108
  %v1846 = vpop.permute.xlu0 %1845
  %1847 = vrot.lane.b32.xlu0 %v1539, 108
  %v1848 = vpop.permute.xlu0 %1847
  %1849 = vrot.lane.b32.xlu0 %v1532, 108
  %v1850 = vpop.permute.xlu0 %1849
  %1851 = vrot.lane.b32.xlu0 %v1540, 108
  %v1852 = vpop.permute.xlu0 %1851
  %1853 = vrot.lane.b32.xlu0 %v1533, 108
  %v1854 = vpop.permute.xlu0 %1853
  %1855 = vrot.lane.b32.xlu0 %v1541, 108
  %v1856 = vpop.permute.xlu0 %1855
  %1857 = vrot.lane.b32.xlu0 %v1534, 108
  %v1858 = vpop.permute.xlu0 %1857
  %1859 = vrot.lane.b32.xlu0 %v1542, 108
  %v1860 = vpop.permute.xlu0 %1859
  %1861 = vrot.lane.b32.xlu0 %v1535, 108
  %v1862 = vpop.permute.xlu0 %1861
  %1863 = vrot.lane.b32.xlu0 %v1543, 108
  %v1864 = vpop.permute.xlu0 %1863
  %1865 = vrot.lane.b32.xlu0 %v1536, 108
  %v1866 = vpop.permute.xlu0 %1865
  %1867 = vrot.lane.b32.xlu0 %v1544, 108
  %v1868 = vpop.permute.xlu0 %1867
  %v1869 = vsel %vm487, %v1862, %v1866
  %v1870 = vsel %vm487, %v1864, %v1868
  %v1871 = vsel %vm487, %v1858, %v1862
  %v1872 = vsel %vm487, %v1860, %v1864
  %v1873 = vsel %vm487, %v1854, %v1858
  %v1874 = vsel %vm487, %v1856, %v1860
  %v1875 = vsel %vm487, %v1850, %v1854
  %v1876 = vsel %vm487, %v1852, %v1856
  %v1877 = vsel %vm487, %v1846, %v1850
  %v1878 = vsel %vm487, %v1848, %v1852
  %v1879 = vsel %vm487, %v1842, %v1846
  %v1880 = vsel %vm487, %v1844, %v1848
  %v1881 = vsel %vm487, %v1838, %v1842
  %v1882 = vsel %vm487, %v1840, %v1844
  %v1883 = vsel %vm487, %v1866, %v1838
  %v1884 = vsel %vm487, %v1868, %v1840
  %1885 = vrot.lane.b32.xlu0 %v1529, 107
  %v1886 = vpop.permute.xlu0 %1885
  %1887 = vrot.lane.b32.xlu0 %v1537, 107
  %v1888 = vpop.permute.xlu0 %1887
  %1889 = vrot.lane.b32.xlu0 %v1530, 107
  %v1890 = vpop.permute.xlu0 %1889
  %1891 = vrot.lane.b32.xlu0 %v1538, 107
  %v1892 = vpop.permute.xlu0 %1891
  %1893 = vrot.lane.b32.xlu0 %v1531, 107
  %v1894 = vpop.permute.xlu0 %1893
  %1895 = vrot.lane.b32.xlu0 %v1539, 107
  %v1896 = vpop.permute.xlu0 %1895
  %1897 = vrot.lane.b32.xlu0 %v1532, 107
  %v1898 = vpop.permute.xlu0 %1897
  %1899 = vrot.lane.b32.xlu0 %v1540, 107
  %v1900 = vpop.permute.xlu0 %1899
  %1901 = vrot.lane.b32.xlu0 %v1533, 107
  %v1902 = vpop.permute.xlu0 %1901
  %1903 = vrot.lane.b32.xlu0 %v1541, 107
  %v1904 = vpop.permute.xlu0 %1903
  %1905 = vrot.lane.b32.xlu0 %v1534, 107
  %v1906 = vpop.permute.xlu0 %1905
  %1907 = vrot.lane.b32.xlu0 %v1542, 107
  %v1908 = vpop.permute.xlu0 %1907
  %1909 = vrot.lane.b32.xlu0 %v1535, 107
  %v1910 = vpop.permute.xlu0 %1909
  %1911 = vrot.lane.b32.xlu0 %v1543, 107
  %v1912 = vpop.permute.xlu0 %1911
  %1913 = vrot.lane.b32.xlu0 %v1536, 107
  %v1914 = vpop.permute.xlu0 %1913
  %1915 = vrot.lane.b32.xlu0 %v1544, 107
  %v1916 = vpop.permute.xlu0 %1915
  %v1917 = vsel %vm512, %v1910, %v1914
  %v1918 = vsel %vm512, %v1912, %v1916
  %v1919 = vsel %vm512, %v1906, %v1910
  %v1920 = vsel %vm512, %v1908, %v1912
  %v1921 = vsel %vm512, %v1902, %v1906
  %v1922 = vsel %vm512, %v1904, %v1908
  %v1923 = vsel %vm512, %v1898, %v1902
  %v1924 = vsel %vm512, %v1900, %v1904
  %v1925 = vsel %vm512, %v1894, %v1898
  %v1926 = vsel %vm512, %v1896, %v1900
  %v1927 = vsel %vm512, %v1890, %v1894
  %v1928 = vsel %vm512, %v1892, %v1896
  %v1929 = vsel %vm512, %v1886, %v1890
  %v1930 = vsel %vm512, %v1888, %v1892
  %v1931 = vsel %vm512, %v1914, %v1886
  %v1932 = vsel %vm512, %v1916, %v1888
  %v1933 = vpack.c.bf16 %v1596, %v1595
  %v1934 = vpack.c.bf16 %v1594, %v1593
  %v1935 = vpack.c.bf16 %v1592, %v1591
  %v1936 = vpack.c.bf16 %v1590, %v1589
  %v1937 = vpack.c.bf16 %v1588, %v1587
  %v1938 = vpack.c.bf16 %v1586, %v1585
  %v1939 = vpack.c.bf16 %v1584, %v1583
  %v1940 = vpack.c.bf16 %v1582, %v1581
  %v1941 = vpack.c.bf16 %v1644, %v1643
  %v1942 = vpack.c.bf16 %v1642, %v1641
  %v1943 = vpack.c.bf16 %v1640, %v1639
  %v1944 = vpack.c.bf16 %v1638, %v1637
  %v1945 = vpack.c.bf16 %v1636, %v1635
  %v1946 = vpack.c.bf16 %v1634, %v1633
  %v1947 = vpack.c.bf16 %v1632, %v1631
  %v1948 = vpack.c.bf16 %v1630, %v1629
  %v1949 = vpack.c.bf16 %v1692, %v1691
  %v1950 = vpack.c.bf16 %v1690, %v1689
  %v1951 = vpack.c.bf16 %v1688, %v1687
  %v1952 = vpack.c.bf16 %v1686, %v1685
  %v1953 = vpack.c.bf16 %v1684, %v1683
  %v1954 = vpack.c.bf16 %v1682, %v1681
  %v1955 = vpack.c.bf16 %v1680, %v1679
  %v1956 = vpack.c.bf16 %v1678, %v1677
  %v1957 = vpack.c.bf16 %v1740, %v1739
  %v1958 = vpack.c.bf16 %v1738, %v1737
  %v1959 = vpack.c.bf16 %v1736, %v1735
  %v1960 = vpack.c.bf16 %v1734, %v1733
  %v1961 = vpack.c.bf16 %v1732, %v1731
  %v1962 = vpack.c.bf16 %v1730, %v1729
  %v1963 = vpack.c.bf16 %v1728, %v1727
  %v1964 = vpack.c.bf16 %v1726, %v1725
  %v1965 = vpack.c.bf16 %v1537, %v1529
  %v1966 = vpack.c.bf16 %v1538, %v1530
  %v1967 = vpack.c.bf16 %v1539, %v1531
  %v1968 = vpack.c.bf16 %v1540, %v1532
  %v1969 = vpack.c.bf16 %v1541, %v1533
  %v1970 = vpack.c.bf16 %v1542, %v1534
  %v1971 = vpack.c.bf16 %v1543, %v1535
  %v1972 = vpack.c.bf16 %v1544, %v1536
  %v1973 = vpack.c.bf16 %v1786, %v1785
  %v1974 = vpack.c.bf16 %v1784, %v1783
  %v1975 = vpack.c.bf16 %v1782, %v1781
  %v1976 = vpack.c.bf16 %v1780, %v1779
  %v1977 = vpack.c.bf16 %v1778, %v1777
  %v1978 = vpack.c.bf16 %v1776, %v1775
  %v1979 = vpack.c.bf16 %v1774, %v1773
  %v1980 = vpack.c.bf16 %v1788, %v1787
  %v1981 = vpack.c.bf16 %v1834, %v1833
  %v1982 = vpack.c.bf16 %v1832, %v1831
  %v1983 = vpack.c.bf16 %v1830, %v1829
  %v1984 = vpack.c.bf16 %v1828, %v1827
  %v1985 = vpack.c.bf16 %v1826, %v1825
  %v1986 = vpack.c.bf16 %v1824, %v1823
  %v1987 = vpack.c.bf16 %v1822, %v1821
  %v1988 = vpack.c.bf16 %v1836, %v1835
  %v1989 = vpack.c.bf16 %v1882, %v1881
  %v1990 = vpack.c.bf16 %v1880, %v1879
  %v1991 = vpack.c.bf16 %v1878, %v1877
  %v1992 = vpack.c.bf16 %v1876, %v1875
  %v1993 = vpack.c.bf16 %v1874, %v1873
  %v1994 = vpack.c.bf16 %v1872, %v1871
  %v1995 = vpack.c.bf16 %v1870, %v1869
  %v1996 = vpack.c.bf16 %v1884, %v1883
  %v1997 = vpack.c.bf16 %v1930, %v1929
  %v1998 = vpack.c.bf16 %v1928, %v1927
  %v1999 = vpack.c.bf16 %v1926, %v1925
  %v2000 = vpack.c.bf16 %v1924, %v1923
  %v2001 = vpack.c.bf16 %v1922, %v1921
  %v2002 = vpack.c.bf16 %v1920, %v1919
  %v2003 = vpack.c.bf16 %v1918, %v1917
  %v2004 = vpack.c.bf16 %v1932, %v1931
  %2006 = vset.pattern.permute.xlu0 0
  %2007 = vperm.xlu0 %2006, %v1547
  %v2008 = vpop.permute.xlu0 %2007
  %2011 = vset.pattern.permute.xlu0 0
  %2012 = vperm.xlu0 %2011, %v1548
  %v2013 = vpop.permute.xlu0 %2012
  %v2017 = vunpack.c.l.b16 %v1545
  %v2018 = vunpack.c.h.b16 %v1545
  %v2019 = vunpack.c.l.b16 %v1546
  %v2020 = vunpack.c.h.b16 %v1546
  %v2021 = vpack.c.b16 %v2019, %v2017
  %v2022 = vpack.c.b16 %v2020, %v2018
  %vm2024 = vcmask 130048
  %v2026 = vsel %vm2024, %v2022, 0
  %2028 = vmatprep.subr.bf16.mxu0 %v1990
  %2029 = vmatpush1.bf16.msra.mxu0 %v1989
  %2030 = vmatprep.subr.bf16.mxu0 %v1982
  %2031 = vmatpush1.bf16.msra.mxu0 %v1981
  %2032 = vmatprep.subr.bf16.mxu0 %v1974
  %2033 = vmatpush1.bf16.msra.mxu0 %v1973
  %2034 = vmatprep.subr.bf16.mxu0 %v1966
  %2035 = vmatpush1.bf16.msra.mxu0 %v1965
  %2036 = vmatprep.subr.bf16.mxu0 %v1958
  %2037 = vmatpush1.bf16.msra.mxu0 %v1957
  %2038 = vmatprep.subr.bf16.mxu0 %v1950
  %2039 = vmatpush1.bf16.msra.mxu0 %v1949
  %2040 = vmatprep.subr.bf16.mxu0 %v1942
  %2041 = vmatpush1.bf16.msra.mxu0 %v1941
  %2042 = vmatprep.subr.bf16.mxu0 %v1934
  %2043 = vmatpush1.bf16.msra.mxu0 %v1933
  %2044 = vmatprep.subr.bf16.mxu0 0
  %2045 = vmatpush2.bf16.msra.mxu0 0
  %2046 = vmatprep.subr.bf16.mxu0 0
  %2047 = vmatpush2.bf16.msra.mxu0 0
  %2048 = vmatprep.subr.bf16.mxu0 0
  %2049 = vmatpush2.bf16.msra.mxu0 0
  %2050 = vmatprep.subr.bf16.mxu0 0
  %2051 = vmatpush2.bf16.msra.mxu0 0
  %2052 = vmatprep.subr.bf16.mxu0 0
  %2053 = vmatpush2.bf16.msra.mxu0 0
  %2054 = vmatprep.subr.bf16.mxu0 0
  %2055 = vmatpush2.bf16.msra.mxu0 0
  %2056 = vmatprep.subr.bf16.mxu0 0
  %2057 = vmatpush2.bf16.msra.mxu0 0
  %2058 = vmatprep.subr.bf16.mxu0 %v1998
  %2059 = vmatpush2.bf16.msra.mxu0 %v1997
  %2060 = vmatprep.mubr.bf16.mxu0 %v2026
  %2061 = vmatmul.mubr.bf16.gmra.mxu0 %v2021
  %v2062 = vpop.f32.mrf.mxu0
  %v2063 = vadd.f32 %v2008, %v2062
  %v2064 = vpop.f32.mrf.mxu0
  %v2065 = vadd.f32 %v2008, %v2064
  %v2066 = vpop.f32.mrf.mxu0
  %v2067 = vadd.f32 %v2013, %v2066
  %v2068 = vpop.f32.mrf.mxu0
  %v2069 = vadd.f32 %v2013, %v2068
  %2070 = vdwg.mxu0
  %2071 = vmatprep.subr.bf16.mxu0 %v1992
  %2072 = vmatpush1.bf16.msra.mxu0 %v1991
  %2073 = vmatprep.subr.bf16.mxu0 %v1984
  %2074 = vmatpush1.bf16.msra.mxu0 %v1983
  %2075 = vmatprep.subr.bf16.mxu0 %v1976
  %2076 = vmatpush1.bf16.msra.mxu0 %v1975
  %2077 = vmatprep.subr.bf16.mxu0 %v1968
  %2078 = vmatpush1.bf16.msra.mxu0 %v1967
  %2079 = vmatprep.subr.bf16.mxu0 %v1960
  %2080 = vmatpush1.bf16.msra.mxu0 %v1959
  %2081 = vmatprep.subr.bf16.mxu0 %v1952
  %2082 = vmatpush1.bf16.msra.mxu0 %v1951
  %2083 = vmatprep.subr.bf16.mxu0 %v1944
  %2084 = vmatpush1.bf16.msra.mxu0 %v1943
  %2085 = vmatprep.subr.bf16.mxu0 %v1936
  %2086 = vmatpush1.bf16.msra.mxu0 %v1935
  %2087 = vmatprep.subr.bf16.mxu0 0
  %2088 = vmatpush2.bf16.msra.mxu0 0
  %2089 = vmatprep.subr.bf16.mxu0 0
  %2090 = vmatpush2.bf16.msra.mxu0 0
  %2091 = vmatprep.subr.bf16.mxu0 0
  %2092 = vmatpush2.bf16.msra.mxu0 0
  %2093 = vmatprep.subr.bf16.mxu0 0
  %2094 = vmatpush2.bf16.msra.mxu0 0
  %2095 = vmatprep.subr.bf16.mxu0 0
  %2096 = vmatpush2.bf16.msra.mxu0 0
  %2097 = vmatprep.subr.bf16.mxu0 0
  %2098 = vmatpush2.bf16.msra.mxu0 0
  %2099 = vmatprep.subr.bf16.mxu0 0
  %2100 = vmatpush2.bf16.msra.mxu0 0
  %2101 = vmatprep.subr.bf16.mxu0 %v2000
  %2102 = vmatpush2.bf16.msra.mxu0 %v1999
  %2103 = vmatprep.mubr.bf16.mxu0 %v2026
  %2104 = vmatmul.mubr.bf16.gmra.mxu0 %v2021
  %v2105 = vpop.f32.mrf.mxu0
  %v2106 = vadd.f32 %v2008, %v2105
  %v2107 = vpop.f32.mrf.mxu0
  %v2108 = vadd.f32 %v2008, %v2107
  %v2109 = vpop.f32.mrf.mxu0
  %v2110 = vadd.f32 %v2013, %v2109
  %v2111 = vpop.f32.mrf.mxu0
  %v2112 = vadd.f32 %v2013, %v2111
  %2113 = vdwg.mxu0
  %2114 = vmatprep.subr.bf16.mxu0 %v1994
  %2115 = vmatpush1.bf16.msra.mxu0 %v1993
  %2116 = vmatprep.subr.bf16.mxu0 %v1986
  %2117 = vmatpush1.bf16.msra.mxu0 %v1985
  %2118 = vmatprep.subr.bf16.mxu0 %v1978
  %2119 = vmatpush1.bf16.msra.mxu0 %v1977
  %2120 = vmatprep.subr.bf16.mxu0 %v1970
  %2121 = vmatpush1.bf16.msra.mxu0 %v1969
  %2122 = vmatprep.subr.bf16.mxu0 %v1962
  %2123 = vmatpush1.bf16.msra.mxu0 %v1961
  %2124 = vmatprep.subr.bf16.mxu0 %v1954
  %2125 = vmatpush1.bf16.msra.mxu0 %v1953
  %2126 = vmatprep.subr.bf16.mxu0 %v1946
  %2127 = vmatpush1.bf16.msra.mxu0 %v1945
  %2128 = vmatprep.subr.bf16.mxu0 %v1938
  %2129 = vmatpush1.bf16.msra.mxu0 %v1937
  %2130 = vmatprep.subr.bf16.mxu0 0
  %2131 = vmatpush2.bf16.msra.mxu0 0
  %2132 = vmatprep.subr.bf16.mxu0 0
  %2133 = vmatpush2.bf16.msra.mxu0 0
  %2134 = vmatprep.subr.bf16.mxu0 0
  %2135 = vmatpush2.bf16.msra.mxu0 0
  %2136 = vmatprep.subr.bf16.mxu0 0
  %2137 = vmatpush2.bf16.msra.mxu0 0
  %2138 = vmatprep.subr.bf16.mxu0 0
  %2139 = vmatpush2.bf16.msra.mxu0 0
  %2140 = vmatprep.subr.bf16.mxu0 0
  %2141 = vmatpush2.bf16.msra.mxu0 0
  %2142 = vmatprep.subr.bf16.mxu0 0
  %2143 = vmatpush2.bf16.msra.mxu0 0
  %2144 = vmatprep.subr.bf16.mxu0 %v2002
  %2145 = vmatpush2.bf16.msra.mxu0 %v2001
  %2146 = vmatprep.mubr.bf16.mxu0 %v2026
  %2147 = vmatmul.mubr.bf16.gmra.mxu0 %v2021
  %v2148 = vpop.f32.mrf.mxu0
  %v2149 = vadd.f32 %v2008, %v2148
  %v2150 = vpop.f32.mrf.mxu0
  %v2151 = vadd.f32 %v2008, %v2150
  %v2152 = vpop.f32.mrf.mxu0
  %v2153 = vadd.f32 %v2013, %v2152
  %v2154 = vpop.f32.mrf.mxu0
  %v2155 = vadd.f32 %v2013, %v2154
  %2156 = vdwg.mxu0
  %2157 = vmatprep.subr.bf16.mxu0 %v1996
  %2158 = vmatpush1.bf16.msra.mxu0 %v1995
  %2159 = vmatprep.subr.bf16.mxu0 %v1988
  %2160 = vmatpush1.bf16.msra.mxu0 %v1987
  %2161 = vmatprep.subr.bf16.mxu0 %v1980
  %2162 = vmatpush1.bf16.msra.mxu0 %v1979
  %2163 = vmatprep.subr.bf16.mxu0 %v1972
  %2164 = vmatpush1.bf16.msra.mxu0 %v1971
  %2165 = vmatprep.subr.bf16.mxu0 %v1964
  %2166 = vmatpush1.bf16.msra.mxu0 %v1963
  %2167 = vmatprep.subr.bf16.mxu0 %v1956
  %2168 = vmatpush1.bf16.msra.mxu0 %v1955
  %2169 = vmatprep.subr.bf16.mxu0 %v1948
  %2170 = vmatpush1.bf16.msra.mxu0 %v1947
  %2171 = vmatprep.subr.bf16.mxu0 %v1940
  %2172 = vmatpush1.bf16.msra.mxu0 %v1939
  %2173 = vmatprep.subr.bf16.mxu0 0
  %2174 = vmatpush2.bf16.msra.mxu0 0
  %2175 = vmatprep.subr.bf16.mxu0 0
  %2176 = vmatpush2.bf16.msra.mxu0 0
  %2177 = vmatprep.subr.bf16.mxu0 0
  %2178 = vmatpush2.bf16.msra.mxu0 0
  %2179 = vmatprep.subr.bf16.mxu0 0
  %2180 = vmatpush2.bf16.msra.mxu0 0
  %2181 = vmatprep.subr.bf16.mxu0 0
  %2182 = vmatpush2.bf16.msra.mxu0 0
  %2183 = vmatprep.subr.bf16.mxu0 0
  %2184 = vmatpush2.bf16.msra.mxu0 0
  %2185 = vmatprep.subr.bf16.mxu0 0
  %2186 = vmatpush2.bf16.msra.mxu0 0
  %2187 = vmatprep.subr.bf16.mxu0 %v2004
  %2188 = vmatpush2.bf16.msra.mxu0 %v2003
  %2189 = vmatprep.mubr.bf16.mxu0 %v2026
  %2190 = vmatmul.mubr.bf16.gmra.mxu0 %v2021
  %v2191 = vpop.f32.mrf.mxu0
  %v2192 = vadd.f32 %v2008, %v2191
  %v2193 = vpop.f32.mrf.mxu0
  %v2194 = vadd.f32 %v2008, %v2193
  %v2195 = vpop.f32.mrf.mxu0
  %v2196 = vadd.f32 %v2013, %v2195
  %v2197 = vpop.f32.mrf.mxu0
  %v2198 = vadd.f32 %v2013, %v2197
  %2199 = vdwg.mxu0
  %v2200 = vmax.f32 %v2063, 0.0
  %v2201 = vmax.f32 %v2065, 0.0
  %v2202 = vmax.f32 %v2106, 0.0
  %v2203 = vmax.f32 %v2108, 0.0
  %v2204 = vmax.f32 %v2149, 0.0
  %v2205 = vmax.f32 %v2151, 0.0
  %v2206 = vmax.f32 %v2192, 0.0
  %v2207 = vmax.f32 %v2194, 0.0
  %v2208 = vmax.f32 %v2067, 0.0
  %v2209 = vmax.f32 %v2069, 0.0
  %v2210 = vmax.f32 %v2110, 0.0
  %v2211 = vmax.f32 %v2112, 0.0
  %v2212 = vmax.f32 %v2153, 0.0
  %v2213 = vmax.f32 %v2155, 0.0
  %v2214 = vmax.f32 %v2196, 0.0
  %v2215 = vmax.f32 %v2198, 0.0
  %v2216 = vmul.f32 %v2200, %v1492
  %v2217 = vmul.f32 %v2201, %v1496
  %v2218 = vmul.f32 %v2202, %v1500
  %v2219 = vmul.f32 %v2203, %v1504
  %v2220 = vmul.f32 %v2204, %v1508
  %v2221 = vmul.f32 %v2205, %v1512
  %v2222 = vmul.f32 %v2206, %v1516
  %v2223 = vmul.f32 %v2207, %v1520
  %v2224 = vmul.f32 %v2208, %v1492
  %v2225 = vmul.f32 %v2209, %v1496
  %v2226 = vmul.f32 %v2210, %v1500
  %v2227 = vmul.f32 %v2211, %v1504
  %v2228 = vmul.f32 %v2212, %v1508
  %v2229 = vmul.f32 %v2213, %v1512
  %v2230 = vmul.f32 %v2214, %v1516
  %v2231 = vmul.f32 %v2215, %v1520
  %s2232 = scalar_lea.vmem %s6, 16
  %v2233 = vld [vmem:[%s2232] sm:$0xff]
  %v2234 = vld [vmem:[%s2232 + $0x8] sm:$0xff]
  %s2235 = scalar_lea.vmem %s7, 16
  %v2236 = vld [vmem:[%s2235] sm:$0xff]
  %v2237 = vld [vmem:[%s2235 + $0x8] sm:$0xff]
  %2238 = vrot.lane.b32.xlu0 %v2216, 21
  %v2239 = vpop.permute.xlu0 %2238
  %2240 = vrot.lane.b32.xlu0 %v2224, 21
  %v2241 = vpop.permute.xlu0 %2240
  %2242 = vrot.lane.b32.xlu0 %v2217, 21
  %v2243 = vpop.permute.xlu0 %2242
  %2244 = vrot.lane.b32.xlu0 %v2225, 21
  %v2245 = vpop.permute.xlu0 %2244
  %2246 = vrot.lane.b32.xlu0 %v2218, 21
  %v2247 = vpop.permute.xlu0 %2246
  %2248 = vrot.lane.b32.xlu0 %v2226, 21
  %v2249 = vpop.permute.xlu0 %2248
  %2250 = vrot.lane.b32.xlu0 %v2219, 21
  %v2251 = vpop.permute.xlu0 %2250
  %2252 = vrot.lane.b32.xlu0 %v2227, 21
  %v2253 = vpop.permute.xlu0 %2252
  %2254 = vrot.lane.b32.xlu0 %v2220, 21
  %v2255 = vpop.permute.xlu0 %2254
  %2256 = vrot.lane.b32.xlu0 %v2228, 21
  %v2257 = vpop.permute.xlu0 %2256
  %2258 = vrot.lane.b32.xlu0 %v2221, 21
  %v2259 = vpop.permute.xlu0 %2258
  %2260 = vrot.lane.b32.xlu0 %v2229, 21
  %v2261 = vpop.permute.xlu0 %2260
  %2262 = vrot.lane.b32.xlu0 %v2222, 21
  %v2263 = vpop.permute.xlu0 %2262
  %2264 = vrot.lane.b32.xlu0 %v2230, 21
  %v2265 = vpop.permute.xlu0 %2264
  %2266 = vrot.lane.b32.xlu0 %v2223, 21
  %v2267 = vpop.permute.xlu0 %2266
  %2268 = vrot.lane.b32.xlu0 %v2231, 21
  %v2269 = vpop.permute.xlu0 %2268
  %v2270 = vsel %vm237, %v2263, %v2267
  %v2271 = vsel %vm237, %v2265, %v2269
  %v2272 = vsel %vm237, %v2259, %v2263
  %v2273 = vsel %vm237, %v2261, %v2265
  %v2274 = vsel %vm237, %v2255, %v2259
  %v2275 = vsel %vm237, %v2257, %v2261
  %v2276 = vsel %vm237, %v2251, %v2255
  %v2277 = vsel %vm237, %v2253, %v2257
  %v2278 = vsel %vm237, %v2247, %v2251
  %v2279 = vsel %vm237, %v2249, %v2253
  %v2280 = vsel %vm237, %v2243, %v2247
  %v2281 = vsel %vm237, %v2245, %v2249
  %v2282 = vsel %vm237, %v2239, %v2243
  %v2283 = vsel %vm237, %v2241, %v2245
  %v2284 = vsel %vm237, %v2267, %v2239
  %v2285 = vsel %vm237, %v2269, %v2241
  %2286 = vrot.lane.b32.xlu0 %v2216, 20
  %v2287 = vpop.permute.xlu0 %2286
  %2288 = vrot.lane.b32.xlu0 %v2224, 20
  %v2289 = vpop.permute.xlu0 %2288
  %2290 = vrot.lane.b32.xlu0 %v2217, 20
  %v2291 = vpop.permute.xlu0 %2290
  %2292 = vrot.lane.b32.xlu0 %v2225, 20
  %v2293 = vpop.permute.xlu0 %2292
  %2294 = vrot.lane.b32.xlu0 %v2218, 20
  %v2295 = vpop.permute.xlu0 %2294
  %2296 = vrot.lane.b32.xlu0 %v2226, 20
  %v2297 = vpop.permute.xlu0 %2296
  %2298 = vrot.lane.b32.xlu0 %v2219, 20
  %v2299 = vpop.permute.xlu0 %2298
  %2300 = vrot.lane.b32.xlu0 %v2227, 20
  %v2301 = vpop.permute.xlu0 %2300
  %2302 = vrot.lane.b32.xlu0 %v2220, 20
  %v2303 = vpop.permute.xlu0 %2302
  %2304 = vrot.lane.b32.xlu0 %v2228, 20
  %v2305 = vpop.permute.xlu0 %2304
  %2306 = vrot.lane.b32.xlu0 %v2221, 20
  %v2307 = vpop.permute.xlu0 %2306
  %2308 = vrot.lane.b32.xlu0 %v2229, 20
  %v2309 = vpop.permute.xlu0 %2308
  %2310 = vrot.lane.b32.xlu0 %v2222, 20
  %v2311 = vpop.permute.xlu0 %2310
  %2312 = vrot.lane.b32.xlu0 %v2230, 20
  %v2313 = vpop.permute.xlu0 %2312
  %2314 = vrot.lane.b32.xlu0 %v2223, 20
  %v2315 = vpop.permute.xlu0 %2314
  %2316 = vrot.lane.b32.xlu0 %v2231, 20
  %v2317 = vpop.permute.xlu0 %2316
  %v2318 = vsel %vm262, %v2311, %v2315
  %v2319 = vsel %vm262, %v2313, %v2317
  %v2320 = vsel %vm262, %v2307, %v2311
  %v2321 = vsel %vm262, %v2309, %v2313
  %v2322 = vsel %vm262, %v2303, %v2307
  %v2323 = vsel %vm262, %v2305, %v2309
  %v2324 = vsel %vm262, %v2299, %v2303
  %v2325 = vsel %vm262, %v2301, %v2305
  %v2326 = vsel %vm262, %v2295, %v2299
  %v2327 = vsel %vm262, %v2297, %v2301
  %v2328 = vsel %vm262, %v2291, %v2295
  %v2329 = vsel %vm262, %v2293, %v2297
  %v2330 = vsel %vm262, %v2287, %v2291
  %v2331 = vsel %vm262, %v2289, %v2293
  %v2332 = vsel %vm262, %v2315, %v2287
  %v2333 = vsel %vm262, %v2317, %v2289
  %2334 = vrot.lane.b32.xlu0 %v2216, 19
  %v2335 = vpop.permute.xlu0 %2334
  %2336 = vrot.lane.b32.xlu0 %v2224, 19
  %v2337 = vpop.permute.xlu0 %2336
  %2338 = vrot.lane.b32.xlu0 %v2217, 19
  %v2339 = vpop.permute.xlu0 %2338
  %2340 = vrot.lane.b32.xlu0 %v2225, 19
  %v2341 = vpop.permute.xlu0 %2340
  %2342 = vrot.lane.b32.xlu0 %v2218, 19
  %v2343 = vpop.permute.xlu0 %2342
  %2344 = vrot.lane.b32.xlu0 %v2226, 19
  %v2345 = vpop.permute.xlu0 %2344
  %2346 = vrot.lane.b32.xlu0 %v2219, 19
  %v2347 = vpop.permute.xlu0 %2346
  %2348 = vrot.lane.b32.xlu0 %v2227, 19
  %v2349 = vpop.permute.xlu0 %2348
  %2350 = vrot.lane.b32.xlu0 %v2220, 19
  %v2351 = vpop.permute.xlu0 %2350
  %2352 = vrot.lane.b32.xlu0 %v2228, 19
  %v2353 = vpop.permute.xlu0 %2352
  %2354 = vrot.lane.b32.xlu0 %v2221, 19
  %v2355 = vpop.permute.xlu0 %2354
  %2356 = vrot.lane.b32.xlu0 %v2229, 19
  %v2357 = vpop.permute.xlu0 %2356
  %2358 = vrot.lane.b32.xlu0 %v2222, 19
  %v2359 = vpop.permute.xlu0 %2358
  %2360 = vrot.lane.b32.xlu0 %v2230, 19
  %v2361 = vpop.permute.xlu0 %2360
  %2362 = vrot.lane.b32.xlu0 %v2223, 19
  %v2363 = vpop.permute.xlu0 %2362
  %2364 = vrot.lane.b32.xlu0 %v2231, 19
  %v2365 = vpop.permute.xlu0 %2364
  %v2366 = vsel %vm287, %v2359, %v2363
  %v2367 = vsel %vm287, %v2361, %v2365
  %v2368 = vsel %vm287, %v2355, %v2359
  %v2369 = vsel %vm287, %v2357, %v2361
  %v2370 = vsel %vm287, %v2351, %v2355
  %v2371 = vsel %vm287, %v2353, %v2357
  %v2372 = vsel %vm287, %v2347, %v2351
  %v2373 = vsel %vm287, %v2349, %v2353
  %v2374 = vsel %vm287, %v2343, %v2347
  %v2375 = vsel %vm287, %v2345, %v2349
  %v2376 = vsel %vm287, %v2339, %v2343
  %v2377 = vsel %vm287, %v2341, %v2345
  %v2378 = vsel %vm287, %v2335, %v2339
  %v2379 = vsel %vm287, %v2337, %v2341
  %v2380 = vsel %vm287, %v2363, %v2335
  %v2381 = vsel %vm287, %v2365, %v2337
  %2382 = vrot.lane.b32.xlu0 %v2216, 1
  %v2383 = vpop.permute.xlu0 %2382
  %2384 = vrot.lane.b32.xlu0 %v2224, 1
  %v2385 = vpop.permute.xlu0 %2384
  %2386 = vrot.lane.b32.xlu0 %v2217, 1
  %v2387 = vpop.permute.xlu0 %2386
  %2388 = vrot.lane.b32.xlu0 %v2225, 1
  %v2389 = vpop.permute.xlu0 %2388
  %2390 = vrot.lane.b32.xlu0 %v2218, 1
  %v2391 = vpop.permute.xlu0 %2390
  %2392 = vrot.lane.b32.xlu0 %v2226, 1
  %v2393 = vpop.permute.xlu0 %2392
  %2394 = vrot.lane.b32.xlu0 %v2219, 1
  %v2395 = vpop.permute.xlu0 %2394
  %2396 = vrot.lane.b32.xlu0 %v2227, 1
  %v2397 = vpop.permute.xlu0 %2396
  %2398 = vrot.lane.b32.xlu0 %v2220, 1
  %v2399 = vpop.permute.xlu0 %2398
  %2400 = vrot.lane.b32.xlu0 %v2228, 1
  %v2401 = vpop.permute.xlu0 %2400
  %2402 = vrot.lane.b32.xlu0 %v2221, 1
  %v2403 = vpop.permute.xlu0 %2402
  %2404 = vrot.lane.b32.xlu0 %v2229, 1
  %v2405 = vpop.permute.xlu0 %2404
  %2406 = vrot.lane.b32.xlu0 %v2222, 1
  %v2407 = vpop.permute.xlu0 %2406
  %2408 = vrot.lane.b32.xlu0 %v2230, 1
  %v2409 = vpop.permute.xlu0 %2408
  %2410 = vrot.lane.b32.xlu0 %v2223, 1
  %v2411 = vpop.permute.xlu0 %2410
  %2412 = vrot.lane.b32.xlu0 %v2231, 1
  %v2413 = vpop.permute.xlu0 %2412
  %v2414 = vsel %vm362, %v2407, %v2411
  %v2415 = vsel %vm362, %v2409, %v2413
  %v2416 = vsel %vm362, %v2403, %v2407
  %v2417 = vsel %vm362, %v2405, %v2409
  %v2418 = vsel %vm362, %v2399, %v2403
  %v2419 = vsel %vm362, %v2401, %v2405
  %v2420 = vsel %vm362, %v2395, %v2399
  %v2421 = vsel %vm362, %v2397, %v2401
  %v2422 = vsel %vm362, %v2391, %v2395
  %v2423 = vsel %vm362, %v2393, %v2397
  %v2424 = vsel %vm362, %v2387, %v2391
  %v2425 = vsel %vm362, %v2389, %v2393
  %v2426 = vsel %vm362, %v2383, %v2387
  %v2427 = vsel %vm362, %v2385, %v2389
  %v2428 = vsel %vm362, %v2411, %v2383
  %v2429 = vsel %vm362, %v2413, %v2385
  %2430 = vrot.lane.b32.xlu0 %v2216, 127
  %v2431 = vpop.permute.xlu0 %2430
  %2432 = vrot.lane.b32.xlu0 %v2224, 127
  %v2433 = vpop.permute.xlu0 %2432
  %2434 = vrot.lane.b32.xlu0 %v2217, 127
  %v2435 = vpop.permute.xlu0 %2434
  %2436 = vrot.lane.b32.xlu0 %v2225, 127
  %v2437 = vpop.permute.xlu0 %2436
  %2438 = vrot.lane.b32.xlu0 %v2218, 127
  %v2439 = vpop.permute.xlu0 %2438
  %2440 = vrot.lane.b32.xlu0 %v2226, 127
  %v2441 = vpop.permute.xlu0 %2440
  %2442 = vrot.lane.b32.xlu0 %v2219, 127
  %v2443 = vpop.permute.xlu0 %2442
  %2444 = vrot.lane.b32.xlu0 %v2227, 127
  %v2445 = vpop.permute.xlu0 %2444
  %2446 = vrot.lane.b32.xlu0 %v2220, 127
  %v2447 = vpop.permute.xlu0 %2446
  %2448 = vrot.lane.b32.xlu0 %v2228, 127
  %v2449 = vpop.permute.xlu0 %2448
  %2450 = vrot.lane.b32.xlu0 %v2221, 127
  %v2451 = vpop.permute.xlu0 %2450
  %2452 = vrot.lane.b32.xlu0 %v2229, 127
  %v2453 = vpop.permute.xlu0 %2452
  %2454 = vrot.lane.b32.xlu0 %v2222, 127
  %v2455 = vpop.permute.xlu0 %2454
  %2456 = vrot.lane.b32.xlu0 %v2230, 127
  %v2457 = vpop.permute.xlu0 %2456
  %2458 = vrot.lane.b32.xlu0 %v2223, 127
  %v2459 = vpop.permute.xlu0 %2458
  %2460 = vrot.lane.b32.xlu0 %v2231, 127
  %v2461 = vpop.permute.xlu0 %2460
  %v2462 = vsel %vm387, %v2455, %v2459
  %v2463 = vsel %vm387, %v2457, %v2461
  %v2464 = vsel %vm387, %v2451, %v2455
  %v2465 = vsel %vm387, %v2453, %v2457
  %v2466 = vsel %vm387, %v2447, %v2451
  %v2467 = vsel %vm387, %v2449, %v2453
  %v2468 = vsel %vm387, %v2443, %v2447
  %v2469 = vsel %vm387, %v2445, %v2449
  %v2470 = vsel %vm387, %v2439, %v2443
  %v2471 = vsel %vm387, %v2441, %v2445
  %v2472 = vsel %vm387, %v2435, %v2439
  %v2473 = vsel %vm387, %v2437, %v2441
  %v2474 = vsel %vm387, %v2431, %v2435
  %v2475 = vsel %vm387, %v2433, %v2437
  %v2476 = vsel %vm387, %v2459, %v2431
  %v2477 = vsel %vm387, %v2461, %v2433
  %2478 = vrot.lane.b32.xlu0 %v2216, 109
  %v2479 = vpop.permute.xlu0 %2478
  %2480 = vrot.lane.b32.xlu0 %v2224, 109
  %v2481 = vpop.permute.xlu0 %2480
  %2482 = vrot.lane.b32.xlu0 %v2217, 109
  %v2483 = vpop.permute.xlu0 %2482
  %2484 = vrot.lane.b32.xlu0 %v2225, 109
  %v2485 = vpop.permute.xlu0 %2484
  %2486 = vrot.lane.b32.xlu0 %v2218, 109
  %v2487 = vpop.permute.xlu0 %2486
  %2488 = vrot.lane.b32.xlu0 %v2226, 109
  %v2489 = vpop.permute.xlu0 %2488
  %2490 = vrot.lane.b32.xlu0 %v2219, 109
  %v2491 = vpop.permute.xlu0 %2490
  %2492 = vrot.lane.b32.xlu0 %v2227, 109
  %v2493 = vpop.permute.xlu0 %2492
  %2494 = vrot.lane.b32.xlu0 %v2220, 109
  %v2495 = vpop.permute.xlu0 %2494
  %2496 = vrot.lane.b32.xlu0 %v2228, 109
  %v2497 = vpop.permute.xlu0 %2496
  %2498 = vrot.lane.b32.xlu0 %v2221, 109
  %v2499 = vpop.permute.xlu0 %2498
  %2500 = vrot.lane.b32.xlu0 %v2229, 109
  %v2501 = vpop.permute.xlu0 %2500
  %2502 = vrot.lane.b32.xlu0 %v2222, 109
  %v2503 = vpop.permute.xlu0 %2502
  %2504 = vrot.lane.b32.xlu0 %v2230, 109
  %v2505 = vpop.permute.xlu0 %2504
  %2506 = vrot.lane.b32.xlu0 %v2223, 109
  %v2507 = vpop.permute.xlu0 %2506
  %2508 = vrot.lane.b32.xlu0 %v2231, 109
  %v2509 = vpop.permute.xlu0 %2508
  %v2510 = vsel %vm462, %v2503, %v2507
  %v2511 = vsel %vm462, %v2505, %v2509
  %v2512 = vsel %vm462, %v2499, %v2503
  %v2513 = vsel %vm462, %v2501, %v2505
  %v2514 = vsel %vm462, %v2495, %v2499
  %v2515 = vsel %vm462, %v2497, %v2501
  %v2516 = vsel %vm462, %v2491, %v2495
  %v2517 = vsel %vm462, %v2493, %v2497
  %v2518 = vsel %vm462, %v2487, %v2491
  %v2519 = vsel %vm462, %v2489, %v2493
  %v2520 = vsel %vm462, %v2483, %v2487
  %v2521 = vsel %vm462, %v2485, %v2489
  %v2522 = vsel %vm462, %v2479, %v2483
  %v2523 = vsel %vm462, %v2481, %v2485
  %v2524 = vsel %vm462, %v2507, %v2479
  %v2525 = vsel %vm462, %v2509, %v2481
  %2526 = vrot.lane.b32.xlu0 %v2216, 108
  %v2527 = vpop.permute.xlu0 %2526
  %2528 = vrot.lane.b32.xlu0 %v2224, 108
  %v2529 = vpop.permute.xlu0 %2528
  %2530 = vrot.lane.b32.xlu0 %v2217, 108
  %v2531 = vpop.permute.xlu0 %2530
  %2532 = vrot.lane.b32.xlu0 %v2225, 108
  %v2533 = vpop.permute.xlu0 %2532
  %2534 = vrot.lane.b32.xlu0 %v2218, 108
  %v2535 = vpop.permute.xlu0 %2534
  %2536 = vrot.lane.b32.xlu0 %v2226, 108
  %v2537 = vpop.permute.xlu0 %2536
  %2538 = vrot.lane.b32.xlu0 %v2219, 108
  %v2539 = vpop.permute.xlu0 %2538
  %2540 = vrot.lane.b32.xlu0 %v2227, 108
  %v2541 = vpop.permute.xlu0 %2540
  %2542 = vrot.lane.b32.xlu0 %v2220, 108
  %v2543 = vpop.permute.xlu0 %2542
  %2544 = vrot.lane.b32.xlu0 %v2228, 108
  %v2545 = vpop.permute.xlu0 %2544
  %2546 = vrot.lane.b32.xlu0 %v2221, 108
  %v2547 = vpop.permute.xlu0 %2546
  %2548 = vrot.lane.b32.xlu0 %v2229, 108
  %v2549 = vpop.permute.xlu0 %2548
  %2550 = vrot.lane.b32.xlu0 %v2222, 108
  %v2551 = vpop.permute.xlu0 %2550
  %2552 = vrot.lane.b32.xlu0 %v2230, 108
  %v2553 = vpop.permute.xlu0 %2552
  %2554 = vrot.lane.b32.xlu0 %v2223, 108
  %v2555 = vpop.permute.xlu0 %2554
  %2556 = vrot.lane.b32.xlu0 %v2231, 108
  %v2557 = vpop.permute.xlu0 %2556
  %v2558 = vsel %vm487, %v2551, %v2555
  %v2559 = vsel %vm487, %v2553, %v2557
  %v2560 = vsel %vm487, %v2547, %v2551
  %v2561 = vsel %vm487, %v2549, %v2553
  %v2562 = vsel %vm487, %v2543, %v2547
  %v2563 = vsel %vm487, %v2545, %v2549
  %v2564 = vsel %vm487, %v2539, %v2543
  %v2565 = vsel %vm487, %v2541, %v2545
  %v2566 = vsel %vm487, %v2535, %v2539
  %v2567 = vsel %vm487, %v2537, %v2541
  %v2568 = vsel %vm487, %v2531, %v2535
  %v2569 = vsel %vm487, %v2533, %v2537
  %v2570 = vsel %vm487, %v2527, %v2531
  %v2571 = vsel %vm487, %v2529, %v2533
  %v2572 = vsel %vm487, %v2555, %v2527
  %v2573 = vsel %vm487, %v2557, %v2529
  %2574 = vrot.lane.b32.xlu0 %v2216, 107
  %v2575 = vpop.permute.xlu0 %2574
  %2576 = vrot.lane.b32.xlu0 %v2224, 107
  %v2577 = vpop.permute.xlu0 %2576
  %2578 = vrot.lane.b32.xlu0 %v2217, 107
  %v2579 = vpop.permute.xlu0 %2578
  %2580 = vrot.lane.b32.xlu0 %v2225, 107
  %v2581 = vpop.permute.xlu0 %2580
  %2582 = vrot.lane.b32.xlu0 %v2218, 107
  %v2583 = vpop.permute.xlu0 %2582
  %2584 = vrot.lane.b32.xlu0 %v2226, 107
  %v2585 = vpop.permute.xlu0 %2584
  %2586 = vrot.lane.b32.xlu0 %v2219, 107
  %v2587 = vpop.permute.xlu0 %2586
  %2588 = vrot.lane.b32.xlu0 %v2227, 107
  %v2589 = vpop.permute.xlu0 %2588
  %2590 = vrot.lane.b32.xlu0 %v2220, 107
  %v2591 = vpop.permute.xlu0 %2590
  %2592 = vrot.lane.b32.xlu0 %v2228, 107
  %v2593 = vpop.permute.xlu0 %2592
  %2594 = vrot.lane.b32.xlu0 %v2221, 107
  %v2595 = vpop.permute.xlu0 %2594
  %2596 = vrot.lane.b32.xlu0 %v2229, 107
  %v2597 = vpop.permute.xlu0 %2596
  %2598 = vrot.lane.b32.xlu0 %v2222, 107
  %v2599 = vpop.permute.xlu0 %2598
  %2600 = vrot.lane.b32.xlu0 %v2230, 107
  %v2601 = vpop.permute.xlu0 %2600
  %2602 = vrot.lane.b32.xlu0 %v2223, 107
  %v2603 = vpop.permute.xlu0 %2602
  %2604 = vrot.lane.b32.xlu0 %v2231, 107
  %v2605 = vpop.permute.xlu0 %2604
  %v2606 = vsel %vm512, %v2599, %v2603
  %v2607 = vsel %vm512, %v2601, %v2605
  %v2608 = vsel %vm512, %v2595, %v2599
  %v2609 = vsel %vm512, %v2597, %v2601
  %v2610 = vsel %vm512, %v2591, %v2595
  %v2611 = vsel %vm512, %v2593, %v2597
  %v2612 = vsel %vm512, %v2587, %v2591
  %v2613 = vsel %vm512, %v2589, %v2593
  %v2614 = vsel %vm512, %v2583, %v2587
  %v2615 = vsel %vm512, %v2585, %v2589
  %v2616 = vsel %vm512, %v2579, %v2583
  %v2617 = vsel %vm512, %v2581, %v2585
  %v2618 = vsel %vm512, %v2575, %v2579
  %v2619 = vsel %vm512, %v2577, %v2581
  %v2620 = vsel %vm512, %v2603, %v2575
  %v2621 = vsel %vm512, %v2605, %v2577
  %v2622 = vpack.c.bf16 %v2285, %v2284
  %v2623 = vpack.c.bf16 %v2283, %v2282
  %v2624 = vpack.c.bf16 %v2281, %v2280
  %v2625 = vpack.c.bf16 %v2279, %v2278
  %v2626 = vpack.c.bf16 %v2277, %v2276
  %v2627 = vpack.c.bf16 %v2275, %v2274
  %v2628 = vpack.c.bf16 %v2273, %v2272
  %v2629 = vpack.c.bf16 %v2271, %v2270
  %v2630 = vpack.c.bf16 %v2333, %v2332
  %v2631 = vpack.c.bf16 %v2331, %v2330
  %v2632 = vpack.c.bf16 %v2329, %v2328
  %v2633 = vpack.c.bf16 %v2327, %v2326
  %v2634 = vpack.c.bf16 %v2325, %v2324
  %v2635 = vpack.c.bf16 %v2323, %v2322
  %v2636 = vpack.c.bf16 %v2321, %v2320
  %v2637 = vpack.c.bf16 %v2319, %v2318
  %v2638 = vpack.c.bf16 %v2381, %v2380
  %v2639 = vpack.c.bf16 %v2379, %v2378
  %v2640 = vpack.c.bf16 %v2377, %v2376
  %v2641 = vpack.c.bf16 %v2375, %v2374
  %v2642 = vpack.c.bf16 %v2373, %v2372
  %v2643 = vpack.c.bf16 %v2371, %v2370
  %v2644 = vpack.c.bf16 %v2369, %v2368
  %v2645 = vpack.c.bf16 %v2367, %v2366
  %v2646 = vpack.c.bf16 %v2429, %v2428
  %v2647 = vpack.c.bf16 %v2427, %v2426
  %v2648 = vpack.c.bf16 %v2425, %v2424
  %v2649 = vpack.c.bf16 %v2423, %v2422
  %v2650 = vpack.c.bf16 %v2421, %v2420
  %v2651 = vpack.c.bf16 %v2419, %v2418
  %v2652 = vpack.c.bf16 %v2417, %v2416
  %v2653 = vpack.c.bf16 %v2415, %v2414
  %v2654 = vpack.c.bf16 %v2224, %v2216
  %v2655 = vpack.c.bf16 %v2225, %v2217
  %v2656 = vpack.c.bf16 %v2226, %v2218
  %v2657 = vpack.c.bf16 %v2227, %v2219
  %v2658 = vpack.c.bf16 %v2228, %v2220
  %v2659 = vpack.c.bf16 %v2229, %v2221
  %v2660 = vpack.c.bf16 %v2230, %v2222
  %v2661 = vpack.c.bf16 %v2231, %v2223
  %v2662 = vpack.c.bf16 %v2475, %v2474
  %v2663 = vpack.c.bf16 %v2473, %v2472
  %v2664 = vpack.c.bf16 %v2471, %v2470
  %v2665 = vpack.c.bf16 %v2469, %v2468
  %v2666 = vpack.c.bf16 %v2467, %v2466
  %v2667 = vpack.c.bf16 %v2465, %v2464
  %v2668 = vpack.c.bf16 %v2463, %v2462
  %v2669 = vpack.c.bf16 %v2477, %v2476
  %v2670 = vpack.c.bf16 %v2523, %v2522
  %v2671 = vpack.c.bf16 %v2521, %v2520
  %v2672 = vpack.c.bf16 %v2519, %v2518
  %v2673 = vpack.c.bf16 %v2517, %v2516
  %v2674 = vpack.c.bf16 %v2515, %v2514
  %v2675 = vpack.c.bf16 %v2513, %v2512
  %v2676 = vpack.c.bf16 %v2511, %v2510
  %v2677 = vpack.c.bf16 %v2525, %v2524
  %v2678 = vpack.c.bf16 %v2571, %v2570
  %v2679 = vpack.c.bf16 %v2569, %v2568
  %v2680 = vpack.c.bf16 %v2567, %v2566
  %v2681 = vpack.c.bf16 %v2565, %v2564
  %v2682 = vpack.c.bf16 %v2563, %v2562
  %v2683 = vpack.c.bf16 %v2561, %v2560
  %v2684 = vpack.c.bf16 %v2559, %v2558
  %v2685 = vpack.c.bf16 %v2573, %v2572
  %v2686 = vpack.c.bf16 %v2619, %v2618
  %v2687 = vpack.c.bf16 %v2617, %v2616
  %v2688 = vpack.c.bf16 %v2615, %v2614
  %v2689 = vpack.c.bf16 %v2613, %v2612
  %v2690 = vpack.c.bf16 %v2611, %v2610
  %v2691 = vpack.c.bf16 %v2609, %v2608
  %v2692 = vpack.c.bf16 %v2607, %v2606
  %v2693 = vpack.c.bf16 %v2621, %v2620
  %2695 = vset.pattern.permute.xlu0 0
  %2696 = vperm.xlu0 %2695, %v2236
  %v2697 = vpop.permute.xlu0 %2696
  %2700 = vset.pattern.permute.xlu0 0
  %2701 = vperm.xlu0 %2700, %v2237
  %v2702 = vpop.permute.xlu0 %2701
  %v2706 = vunpack.c.l.b16 %v2233
  %v2707 = vunpack.c.h.b16 %v2233
  %v2708 = vunpack.c.l.b16 %v2234
  %v2709 = vunpack.c.h.b16 %v2234
  %v2710 = vpack.c.b16 %v2708, %v2706
  %v2711 = vpack.c.b16 %v2709, %v2707
  %v2714 = vsel %vm2024, %v2711, 0
  %2716 = vmatprep.subr.bf16.mxu0 %v2679
  %2717 = vmatpush1.bf16.msra.mxu0 %v2678
  %2718 = vmatprep.subr.bf16.mxu0 %v2671
  %2719 = vmatpush1.bf16.msra.mxu0 %v2670
  %2720 = vmatprep.subr.bf16.mxu0 %v2663
  %2721 = vmatpush1.bf16.msra.mxu0 %v2662
  %2722 = vmatprep.subr.bf16.mxu0 %v2655
  %2723 = vmatpush1.bf16.msra.mxu0 %v2654
  %2724 = vmatprep.subr.bf16.mxu0 %v2647
  %2725 = vmatpush1.bf16.msra.mxu0 %v2646
  %2726 = vmatprep.subr.bf16.mxu0 %v2639
  %2727 = vmatpush1.bf16.msra.mxu0 %v2638
  %2728 = vmatprep.subr.bf16.mxu0 %v2631
  %2729 = vmatpush1.bf16.msra.mxu0 %v2630
  %2730 = vmatprep.subr.bf16.mxu0 %v2623
  %2731 = vmatpush1.bf16.msra.mxu0 %v2622
  %2732 = vmatprep.subr.bf16.mxu0 0
  %2733 = vmatpush2.bf16.msra.mxu0 0
  %2734 = vmatprep.subr.bf16.mxu0 0
  %2735 = vmatpush2.bf16.msra.mxu0 0
  %2736 = vmatprep.subr.bf16.mxu0 0
  %2737 = vmatpush2.bf16.msra.mxu0 0
  %2738 = vmatprep.subr.bf16.mxu0 0
  %2739 = vmatpush2.bf16.msra.mxu0 0
  %2740 = vmatprep.subr.bf16.mxu0 0
  %2741 = vmatpush2.bf16.msra.mxu0 0
  %2742 = vmatprep.subr.bf16.mxu0 0
  %2743 = vmatpush2.bf16.msra.mxu0 0
  %2744 = vmatprep.subr.bf16.mxu0 0
  %2745 = vmatpush2.bf16.msra.mxu0 0
  %2746 = vmatprep.subr.bf16.mxu0 %v2687
  %2747 = vmatpush2.bf16.msra.mxu0 %v2686
  %2748 = vmatprep.mubr.bf16.mxu0 %v2714
  %2749 = vmatmul.mubr.bf16.gmra.mxu0 %v2710
  %v2750 = vpop.f32.mrf.mxu0
  %v2751 = vadd.f32 %v2697, %v2750
  %v2752 = vpop.f32.mrf.mxu0
  %v2753 = vadd.f32 %v2697, %v2752
  %v2754 = vpop.f32.mrf.mxu0
  %v2755 = vadd.f32 %v2702, %v2754
  %v2756 = vpop.f32.mrf.mxu0
  %v2757 = vadd.f32 %v2702, %v2756
  %2758 = vdwg.mxu0
  %2759 = vmatprep.subr.bf16.mxu0 %v2681
  %2760 = vmatpush1.bf16.msra.mxu0 %v2680
  %2761 = vmatprep.subr.bf16.mxu0 %v2673
  %2762 = vmatpush1.bf16.msra.mxu0 %v2672
  %2763 = vmatprep.subr.bf16.mxu0 %v2665
  %2764 = vmatpush1.bf16.msra.mxu0 %v2664
  %2765 = vmatprep.subr.bf16.mxu0 %v2657
  %2766 = vmatpush1.bf16.msra.mxu0 %v2656
  %2767 = vmatprep.subr.bf16.mxu0 %v2649
  %2768 = vmatpush1.bf16.msra.mxu0 %v2648
  %2769 = vmatprep.subr.bf16.mxu0 %v2641
  %2770 = vmatpush1.bf16.msra.mxu0 %v2640
  %2771 = vmatprep.subr.bf16.mxu0 %v2633
  %2772 = vmatpush1.bf16.msra.mxu0 %v2632
  %2773 = vmatprep.subr.bf16.mxu0 %v2625
  %2774 = vmatpush1.bf16.msra.mxu0 %v2624
  %2775 = vmatprep.subr.bf16.mxu0 0
  %2776 = vmatpush2.bf16.msra.mxu0 0
  %2777 = vmatprep.subr.bf16.mxu0 0
  %2778 = vmatpush2.bf16.msra.mxu0 0
  %2779 = vmatprep.subr.bf16.mxu0 0
  %2780 = vmatpush2.bf16.msra.mxu0 0
  %2781 = vmatprep.subr.bf16.mxu0 0
  %2782 = vmatpush2.bf16.msra.mxu0 0
  %2783 = vmatprep.subr.bf16.mxu0 0
  %2784 = vmatpush2.bf16.msra.mxu0 0
  %2785 = vmatprep.subr.bf16.mxu0 0
  %2786 = vmatpush2.bf16.msra.mxu0 0
  %2787 = vmatprep.subr.bf16.mxu0 0
  %2788 = vmatpush2.bf16.msra.mxu0 0
  %2789 = vmatprep.subr.bf16.mxu0 %v2689
  %2790 = vmatpush2.bf16.msra.mxu0 %v2688
  %2791 = vmatprep.mubr.bf16.mxu0 %v2714
  %2792 = vmatmul.mubr.bf16.gmra.mxu0 %v2710
  %v2793 = vpop.f32.mrf.mxu0
  %v2794 = vadd.f32 %v2697, %v2793
  %v2795 = vpop.f32.mrf.mxu0
  %v2796 = vadd.f32 %v2697, %v2795
  %v2797 = vpop.f32.mrf.mxu0
  %v2798 = vadd.f32 %v2702, %v2797
  %v2799 = vpop.f32.mrf.mxu0
  %v2800 = vadd.f32 %v2702, %v2799
  %2801 = vdwg.mxu0
  %2802 = vmatprep.subr.bf16.mxu0 %v2683
  %2803 = vmatpush1.bf16.msra.mxu0 %v2682
  %2804 = vmatprep.subr.bf16.mxu0 %v2675
  %2805 = vmatpush1.bf16.msra.mxu0 %v2674
  %2806 = vmatprep.subr.bf16.mxu0 %v2667
  %2807 = vmatpush1.bf16.msra.mxu0 %v2666
  %2808 = vmatprep.subr.bf16.mxu0 %v2659
  %2809 = vmatpush1.bf16.msra.mxu0 %v2658
  %2810 = vmatprep.subr.bf16.mxu0 %v2651
  %2811 = vmatpush1.bf16.msra.mxu0 %v2650
  %2812 = vmatprep.subr.bf16.mxu0 %v2643
  %2813 = vmatpush1.bf16.msra.mxu0 %v2642
  %2814 = vmatprep.subr.bf16.mxu0 %v2635
  %2815 = vmatpush1.bf16.msra.mxu0 %v2634
  %2816 = vmatprep.subr.bf16.mxu0 %v2627
  %2817 = vmatpush1.bf16.msra.mxu0 %v2626
  %2818 = vmatprep.subr.bf16.mxu0 0
  %2819 = vmatpush2.bf16.msra.mxu0 0
  %2820 = vmatprep.subr.bf16.mxu0 0
  %2821 = vmatpush2.bf16.msra.mxu0 0
  %2822 = vmatprep.subr.bf16.mxu0 0
  %2823 = vmatpush2.bf16.msra.mxu0 0
  %2824 = vmatprep.subr.bf16.mxu0 0
  %2825 = vmatpush2.bf16.msra.mxu0 0
  %2826 = vmatprep.subr.bf16.mxu0 0
  %2827 = vmatpush2.bf16.msra.mxu0 0
  %2828 = vmatprep.subr.bf16.mxu0 0
  %2829 = vmatpush2.bf16.msra.mxu0 0
  %2830 = vmatprep.subr.bf16.mxu0 0
  %2831 = vmatpush2.bf16.msra.mxu0 0
  %2832 = vmatprep.subr.bf16.mxu0 %v2691
  %2833 = vmatpush2.bf16.msra.mxu0 %v2690
  %2834 = vmatprep.mubr.bf16.mxu0 %v2714
  %2835 = vmatmul.mubr.bf16.gmra.mxu0 %v2710
  %v2836 = vpop.f32.mrf.mxu0
  %v2837 = vadd.f32 %v2697, %v2836
  %v2838 = vpop.f32.mrf.mxu0
  %v2839 = vadd.f32 %v2697, %v2838
  %v2840 = vpop.f32.mrf.mxu0
  %v2841 = vadd.f32 %v2702, %v2840
  %v2842 = vpop.f32.mrf.mxu0
  %v2843 = vadd.f32 %v2702, %v2842
  %2844 = vdwg.mxu0
  %2845 = vmatprep.subr.bf16.mxu0 %v2685
  %2846 = vmatpush1.bf16.msra.mxu0 %v2684
  %2847 = vmatprep.subr.bf16.mxu0 %v2677
  %2848 = vmatpush1.bf16.msra.mxu0 %v2676
  %2849 = vmatprep.subr.bf16.mxu0 %v2669
  %2850 = vmatpush1.bf16.msra.mxu0 %v2668
  %2851 = vmatprep.subr.bf16.mxu0 %v2661
  %2852 = vmatpush1.bf16.msra.mxu0 %v2660
  %2853 = vmatprep.subr.bf16.mxu0 %v2653
  %2854 = vmatpush1.bf16.msra.mxu0 %v2652
  %2855 = vmatprep.subr.bf16.mxu0 %v2645
  %2856 = vmatpush1.bf16.msra.mxu0 %v2644
  %2857 = vmatprep.subr.bf16.mxu0 %v2637
  %2858 = vmatpush1.bf16.msra.mxu0 %v2636
  %2859 = vmatprep.subr.bf16.mxu0 %v2629
  %2860 = vmatpush1.bf16.msra.mxu0 %v2628
  %2861 = vmatprep.subr.bf16.mxu0 0
  %2862 = vmatpush2.bf16.msra.mxu0 0
  %2863 = vmatprep.subr.bf16.mxu0 0
  %2864 = vmatpush2.bf16.msra.mxu0 0
  %2865 = vmatprep.subr.bf16.mxu0 0
  %2866 = vmatpush2.bf16.msra.mxu0 0
  %2867 = vmatprep.subr.bf16.mxu0 0
  %2868 = vmatpush2.bf16.msra.mxu0 0
  %2869 = vmatprep.subr.bf16.mxu0 0
  %2870 = vmatpush2.bf16.msra.mxu0 0
  %2871 = vmatprep.subr.bf16.mxu0 0
  %2872 = vmatpush2.bf16.msra.mxu0 0
  %2873 = vmatprep.subr.bf16.mxu0 0
  %2874 = vmatpush2.bf16.msra.mxu0 0
  %2875 = vmatprep.subr.bf16.mxu0 %v2693
  %2876 = vmatpush2.bf16.msra.mxu0 %v2692
  %2877 = vmatprep.mubr.bf16.mxu0 %v2714
  %2878 = vmatmul.mubr.bf16.gmra.mxu0 %v2710
  %v2879 = vpop.f32.mrf.mxu0
  %v2880 = vadd.f32 %v2697, %v2879
  %v2881 = vpop.f32.mrf.mxu0
  %v2882 = vadd.f32 %v2697, %v2881
  %v2883 = vpop.f32.mrf.mxu0
  %v2884 = vadd.f32 %v2702, %v2883
  %v2885 = vpop.f32.mrf.mxu0
  %v2886 = vadd.f32 %v2702, %v2885
  %2887 = vdwg.mxu0
  %v2888 = vmax.f32 %v2751, 0.0
  %v2889 = vmax.f32 %v2753, 0.0
  %v2890 = vmax.f32 %v2794, 0.0
  %v2891 = vmax.f32 %v2796, 0.0
  %v2892 = vmax.f32 %v2837, 0.0
  %v2893 = vmax.f32 %v2839, 0.0
  %v2894 = vmax.f32 %v2880, 0.0
  %v2895 = vmax.f32 %v2882, 0.0
  %v2896 = vmax.f32 %v2755, 0.0
  %v2897 = vmax.f32 %v2757, 0.0
  %v2898 = vmax.f32 %v2798, 0.0
  %v2899 = vmax.f32 %v2800, 0.0
  %v2900 = vmax.f32 %v2841, 0.0
  %v2901 = vmax.f32 %v2843, 0.0
  %v2902 = vmax.f32 %v2884, 0.0
  %v2903 = vmax.f32 %v2886, 0.0
  %v2904 = vmul.f32 %v2888, %v1492
  %v2905 = vmul.f32 %v2889, %v1496
  %v2906 = vmul.f32 %v2890, %v1500
  %v2907 = vmul.f32 %v2891, %v1504
  %v2908 = vmul.f32 %v2892, %v1508
  %v2909 = vmul.f32 %v2893, %v1512
  %v2910 = vmul.f32 %v2894, %v1516
  %v2911 = vmul.f32 %v2895, %v1520
  %v2912 = vmul.f32 %v2896, %v1492
  %v2913 = vmul.f32 %v2897, %v1496
  %v2914 = vmul.f32 %v2898, %v1500
  %v2915 = vmul.f32 %v2899, %v1504
  %v2916 = vmul.f32 %v2900, %v1508
  %v2917 = vmul.f32 %v2901, %v1512
  %v2918 = vmul.f32 %v2902, %v1516
  %v2919 = vmul.f32 %v2903, %v1520
  %s2920 = scalar_lea.vmem %s6, 32
  %v2921 = vld [vmem:[%s2920] sm:$0xff]
  %v2922 = vld [vmem:[%s2920 + $0x8] sm:$0xff]
  %s2923 = scalar_lea.vmem %s7, 32
  %v2924 = vld [vmem:[%s2923] sm:$0xff]
  %v2925 = vld [vmem:[%s2923 + $0x8] sm:$0xff]
  %2926 = vrot.lane.b32.xlu0 %v2904, 21
  %v2927 = vpop.permute.xlu0 %2926
  %2928 = vrot.lane.b32.xlu0 %v2912, 21
  %v2929 = vpop.permute.xlu0 %2928
  %2930 = vrot.lane.b32.xlu0 %v2905, 21
  %v2931 = vpop.permute.xlu0 %2930
  %2932 = vrot.lane.b32.xlu0 %v2913, 21
  %v2933 = vpop.permute.xlu0 %2932
  %2934 = vrot.lane.b32.xlu0 %v2906, 21
  %v2935 = vpop.permute.xlu0 %2934
  %2936 = vrot.lane.b32.xlu0 %v2914, 21
  %v2937 = vpop.permute.xlu0 %2936
  %2938 = vrot.lane.b32.xlu0 %v2907, 21
  %v2939 = vpop.permute.xlu0 %2938
  %2940 = vrot.lane.b32.xlu0 %v2915, 21
  %v2941 = vpop.permute.xlu0 %2940
  %2942 = vrot.lane.b32.xlu0 %v2908, 21
  %v2943 = vpop.permute.xlu0 %2942
  %2944 = vrot.lane.b32.xlu0 %v2916, 21
  %v2945 = vpop.permute.xlu0 %2944
  %2946 = vrot.lane.b32.xlu0 %v2909, 21
  %v2947 = vpop.permute.xlu0 %2946
  %2948 = vrot.lane.b32.xlu0 %v2917, 21
  %v2949 = vpop.permute.xlu0 %2948
  %2950 = vrot.lane.b32.xlu0 %v2910, 21
  %v2951 = vpop.permute.xlu0 %2950
  %2952 = vrot.lane.b32.xlu0 %v2918, 21
  %v2953 = vpop.permute.xlu0 %2952
  %2954 = vrot.lane.b32.xlu0 %v2911, 21
  %v2955 = vpop.permute.xlu0 %2954
  %2956 = vrot.lane.b32.xlu0 %v2919, 21
  %v2957 = vpop.permute.xlu0 %2956
  %v2958 = vsel %vm237, %v2951, %v2955
  %v2959 = vsel %vm237, %v2953, %v2957
  %v2960 = vsel %vm237, %v2947, %v2951
  %v2961 = vsel %vm237, %v2949, %v2953
  %v2962 = vsel %vm237, %v2943, %v2947
  %v2963 = vsel %vm237, %v2945, %v2949
  %v2964 = vsel %vm237, %v2939, %v2943
  %v2965 = vsel %vm237, %v2941, %v2945
  %v2966 = vsel %vm237, %v2935, %v2939
  %v2967 = vsel %vm237, %v2937, %v2941
  %v2968 = vsel %vm237, %v2931, %v2935
  %v2969 = vsel %vm237, %v2933, %v2937
  %v2970 = vsel %vm237, %v2927, %v2931
  %v2971 = vsel %vm237, %v2929, %v2933
  %v2972 = vsel %vm237, %v2955, %v2927
  %v2973 = vsel %vm237, %v2957, %v2929
  %2974 = vrot.lane.b32.xlu0 %v2904, 20
  %v2975 = vpop.permute.xlu0 %2974
  %2976 = vrot.lane.b32.xlu0 %v2912, 20
  %v2977 = vpop.permute.xlu0 %2976
  %2978 = vrot.lane.b32.xlu0 %v2905, 20
  %v2979 = vpop.permute.xlu0 %2978
  %2980 = vrot.lane.b32.xlu0 %v2913, 20
  %v2981 = vpop.permute.xlu0 %2980
  %2982 = vrot.lane.b32.xlu0 %v2906, 20
  %v2983 = vpop.permute.xlu0 %2982
  %2984 = vrot.lane.b32.xlu0 %v2914, 20
  %v2985 = vpop.permute.xlu0 %2984
  %2986 = vrot.lane.b32.xlu0 %v2907, 20
  %v2987 = vpop.permute.xlu0 %2986
  %2988 = vrot.lane.b32.xlu0 %v2915, 20
  %v2989 = vpop.permute.xlu0 %2988
  %2990 = vrot.lane.b32.xlu0 %v2908, 20
  %v2991 = vpop.permute.xlu0 %2990
  %2992 = vrot.lane.b32.xlu0 %v2916, 20
  %v2993 = vpop.permute.xlu0 %2992
  %2994 = vrot.lane.b32.xlu0 %v2909, 20
  %v2995 = vpop.permute.xlu0 %2994
  %2996 = vrot.lane.b32.xlu0 %v2917, 20
  %v2997 = vpop.permute.xlu0 %2996
  %2998 = vrot.lane.b32.xlu0 %v2910, 20
  %v2999 = vpop.permute.xlu0 %2998
  %3000 = vrot.lane.b32.xlu0 %v2918, 20
  %v3001 = vpop.permute.xlu0 %3000
  %3002 = vrot.lane.b32.xlu0 %v2911, 20
  %v3003 = vpop.permute.xlu0 %3002
  %3004 = vrot.lane.b32.xlu0 %v2919, 20
  %v3005 = vpop.permute.xlu0 %3004
  %v3006 = vsel %vm262, %v2999, %v3003
  %v3007 = vsel %vm262, %v3001, %v3005
  %v3008 = vsel %vm262, %v2995, %v2999
  %v3009 = vsel %vm262, %v2997, %v3001
  %v3010 = vsel %vm262, %v2991, %v2995
  %v3011 = vsel %vm262, %v2993, %v2997
  %v3012 = vsel %vm262, %v2987, %v2991
  %v3013 = vsel %vm262, %v2989, %v2993
  %v3014 = vsel %vm262, %v2983, %v2987
  %v3015 = vsel %vm262, %v2985, %v2989
  %v3016 = vsel %vm262, %v2979, %v2983
  %v3017 = vsel %vm262, %v2981, %v2985
  %v3018 = vsel %vm262, %v2975, %v2979
  %v3019 = vsel %vm262, %v2977, %v2981
  %v3020 = vsel %vm262, %v3003, %v2975
  %v3021 = vsel %vm262, %v3005, %v2977
  %3022 = vrot.lane.b32.xlu0 %v2904, 19
  %v3023 = vpop.permute.xlu0 %3022
  %3024 = vrot.lane.b32.xlu0 %v2912, 19
  %v3025 = vpop.permute.xlu0 %3024
  %3026 = vrot.lane.b32.xlu0 %v2905, 19
  %v3027 = vpop.permute.xlu0 %3026
  %3028 = vrot.lane.b32.xlu0 %v2913, 19
  %v3029 = vpop.permute.xlu0 %3028
  %3030 = vrot.lane.b32.xlu0 %v2906, 19
  %v3031 = vpop.permute.xlu0 %3030
  %3032 = vrot.lane.b32.xlu0 %v2914, 19
  %v3033 = vpop.permute.xlu0 %3032
  %3034 = vrot.lane.b32.xlu0 %v2907, 19
  %v3035 = vpop.permute.xlu0 %3034
  %3036 = vrot.lane.b32.xlu0 %v2915, 19
  %v3037 = vpop.permute.xlu0 %3036
  %3038 = vrot.lane.b32.xlu0 %v2908, 19
  %v3039 = vpop.permute.xlu0 %3038
  %3040 = vrot.lane.b32.xlu0 %v2916, 19
  %v3041 = vpop.permute.xlu0 %3040
  %3042 = vrot.lane.b32.xlu0 %v2909, 19
  %v3043 = vpop.permute.xlu0 %3042
  %3044 = vrot.lane.b32.xlu0 %v2917, 19
  %v3045 = vpop.permute.xlu0 %3044
  %3046 = vrot.lane.b32.xlu0 %v2910, 19
  %v3047 = vpop.permute.xlu0 %3046
  %3048 = vrot.lane.b32.xlu0 %v2918, 19
  %v3049 = vpop.permute.xlu0 %3048
  %3050 = vrot.lane.b32.xlu0 %v2911, 19
  %v3051 = vpop.permute.xlu0 %3050
  %3052 = vrot.lane.b32.xlu0 %v2919, 19
  %v3053 = vpop.permute.xlu0 %3052
  %v3054 = vsel %vm287, %v3047, %v3051
  %v3055 = vsel %vm287, %v3049, %v3053
  %v3056 = vsel %vm287, %v3043, %v3047
  %v3057 = vsel %vm287, %v3045, %v3049
  %v3058 = vsel %vm287, %v3039, %v3043
  %v3059 = vsel %vm287, %v3041, %v3045
  %v3060 = vsel %vm287, %v3035, %v3039
  %v3061 = vsel %vm287, %v3037, %v3041
  %v3062 = vsel %vm287, %v3031, %v3035
  %v3063 = vsel %vm287, %v3033, %v3037
  %v3064 = vsel %vm287, %v3027, %v3031
  %v3065 = vsel %vm287, %v3029, %v3033
  %v3066 = vsel %vm287, %v3023, %v3027
  %v3067 = vsel %vm287, %v3025, %v3029
  %v3068 = vsel %vm287, %v3051, %v3023
  %v3069 = vsel %vm287, %v3053, %v3025
  %3070 = vrot.lane.b32.xlu0 %v2904, 1
  %v3071 = vpop.permute.xlu0 %3070
  %3072 = vrot.lane.b32.xlu0 %v2912, 1
  %v3073 = vpop.permute.xlu0 %3072
  %3074 = vrot.lane.b32.xlu0 %v2905, 1
  %v3075 = vpop.permute.xlu0 %3074
  %3076 = vrot.lane.b32.xlu0 %v2913, 1
  %v3077 = vpop.permute.xlu0 %3076
  %3078 = vrot.lane.b32.xlu0 %v2906, 1
  %v3079 = vpop.permute.xlu0 %3078
  %3080 = vrot.lane.b32.xlu0 %v2914, 1
  %v3081 = vpop.permute.xlu0 %3080
  %3082 = vrot.lane.b32.xlu0 %v2907, 1
  %v3083 = vpop.permute.xlu0 %3082
  %3084 = vrot.lane.b32.xlu0 %v2915, 1
  %v3085 = vpop.permute.xlu0 %3084
  %3086 = vrot.lane.b32.xlu0 %v2908, 1
  %v3087 = vpop.permute.xlu0 %3086
  %3088 = vrot.lane.b32.xlu0 %v2916, 1
  %v3089 = vpop.permute.xlu0 %3088
  %3090 = vrot.lane.b32.xlu0 %v2909, 1
  %v3091 = vpop.permute.xlu0 %3090
  %3092 = vrot.lane.b32.xlu0 %v2917, 1
  %v3093 = vpop.permute.xlu0 %3092
  %3094 = vrot.lane.b32.xlu0 %v2910, 1
  %v3095 = vpop.permute.xlu0 %3094
  %3096 = vrot.lane.b32.xlu0 %v2918, 1
  %v3097 = vpop.permute.xlu0 %3096
  %3098 = vrot.lane.b32.xlu0 %v2911, 1
  %v3099 = vpop.permute.xlu0 %3098
  %3100 = vrot.lane.b32.xlu0 %v2919, 1
  %v3101 = vpop.permute.xlu0 %3100
  %v3102 = vsel %vm362, %v3095, %v3099
  %v3103 = vsel %vm362, %v3097, %v3101
  %v3104 = vsel %vm362, %v3091, %v3095
  %v3105 = vsel %vm362, %v3093, %v3097
  %v3106 = vsel %vm362, %v3087, %v3091
  %v3107 = vsel %vm362, %v3089, %v3093
  %v3108 = vsel %vm362, %v3083, %v3087
  %v3109 = vsel %vm362, %v3085, %v3089
  %v3110 = vsel %vm362, %v3079, %v3083
  %v3111 = vsel %vm362, %v3081, %v3085
  %v3112 = vsel %vm362, %v3075, %v3079
  %v3113 = vsel %vm362, %v3077, %v3081
  %v3114 = vsel %vm362, %v3071, %v3075
  %v3115 = vsel %vm362, %v3073, %v3077
  %v3116 = vsel %vm362, %v3099, %v3071
  %v3117 = vsel %vm362, %v3101, %v3073
  %3118 = vrot.lane.b32.xlu0 %v2904, 127
  %v3119 = vpop.permute.xlu0 %3118
  %3120 = vrot.lane.b32.xlu0 %v2912, 127
  %v3121 = vpop.permute.xlu0 %3120
  %3122 = vrot.lane.b32.xlu0 %v2905, 127
  %v3123 = vpop.permute.xlu0 %3122
  %3124 = vrot.lane.b32.xlu0 %v2913, 127
  %v3125 = vpop.permute.xlu0 %3124
  %3126 = vrot.lane.b32.xlu0 %v2906, 127
  %v3127 = vpop.permute.xlu0 %3126
  %3128 = vrot.lane.b32.xlu0 %v2914, 127
  %v3129 = vpop.permute.xlu0 %3128
  %3130 = vrot.lane.b32.xlu0 %v2907, 127
  %v3131 = vpop.permute.xlu0 %3130
  %3132 = vrot.lane.b32.xlu0 %v2915, 127
  %v3133 = vpop.permute.xlu0 %3132
  %3134 = vrot.lane.b32.xlu0 %v2908, 127
  %v3135 = vpop.permute.xlu0 %3134
  %3136 = vrot.lane.b32.xlu0 %v2916, 127
  %v3137 = vpop.permute.xlu0 %3136
  %3138 = vrot.lane.b32.xlu0 %v2909, 127
  %v3139 = vpop.permute.xlu0 %3138
  %3140 = vrot.lane.b32.xlu0 %v2917, 127
  %v3141 = vpop.permute.xlu0 %3140
  %3142 = vrot.lane.b32.xlu0 %v2910, 127
  %v3143 = vpop.permute.xlu0 %3142
  %3144 = vrot.lane.b32.xlu0 %v2918, 127
  %v3145 = vpop.permute.xlu0 %3144
  %3146 = vrot.lane.b32.xlu0 %v2911, 127
  %v3147 = vpop.permute.xlu0 %3146
  %3148 = vrot.lane.b32.xlu0 %v2919, 127
  %v3149 = vpop.permute.xlu0 %3148
  %v3150 = vsel %vm387, %v3143, %v3147
  %v3151 = vsel %vm387, %v3145, %v3149
  %v3152 = vsel %vm387, %v3139, %v3143
  %v3153 = vsel %vm387, %v3141, %v3145
  %v3154 = vsel %vm387, %v3135, %v3139
  %v3155 = vsel %vm387, %v3137, %v3141
  %v3156 = vsel %vm387, %v3131, %v3135
  %v3157 = vsel %vm387, %v3133, %v3137
  %v3158 = vsel %vm387, %v3127, %v3131
  %v3159 = vsel %vm387, %v3129, %v3133
  %v3160 = vsel %vm387, %v3123, %v3127
  %v3161 = vsel %vm387, %v3125, %v3129
  %v3162 = vsel %vm387, %v3119, %v3123
  %v3163 = vsel %vm387, %v3121, %v3125
  %v3164 = vsel %vm387, %v3147, %v3119
  %v3165 = vsel %vm387, %v3149, %v3121
  %3166 = vrot.lane.b32.xlu0 %v2904, 109
  %v3167 = vpop.permute.xlu0 %3166
  %3168 = vrot.lane.b32.xlu0 %v2912, 109
  %v3169 = vpop.permute.xlu0 %3168
  %3170 = vrot.lane.b32.xlu0 %v2905, 109
  %v3171 = vpop.permute.xlu0 %3170
  %3172 = vrot.lane.b32.xlu0 %v2913, 109
  %v3173 = vpop.permute.xlu0 %3172
  %3174 = vrot.lane.b32.xlu0 %v2906, 109
  %v3175 = vpop.permute.xlu0 %3174
  %3176 = vrot.lane.b32.xlu0 %v2914, 109
  %v3177 = vpop.permute.xlu0 %3176
  %3178 = vrot.lane.b32.xlu0 %v2907, 109
  %v3179 = vpop.permute.xlu0 %3178
  %3180 = vrot.lane.b32.xlu0 %v2915, 109
  %v3181 = vpop.permute.xlu0 %3180
  %3182 = vrot.lane.b32.xlu0 %v2908, 109
  %v3183 = vpop.permute.xlu0 %3182
  %3184 = vrot.lane.b32.xlu0 %v2916, 109
  %v3185 = vpop.permute.xlu0 %3184
  %3186 = vrot.lane.b32.xlu0 %v2909, 109
  %v3187 = vpop.permute.xlu0 %3186
  %3188 = vrot.lane.b32.xlu0 %v2917, 109
  %v3189 = vpop.permute.xlu0 %3188
  %3190 = vrot.lane.b32.xlu0 %v2910, 109
  %v3191 = vpop.permute.xlu0 %3190
  %3192 = vrot.lane.b32.xlu0 %v2918, 109
  %v3193 = vpop.permute.xlu0 %3192
  %3194 = vrot.lane.b32.xlu0 %v2911, 109
  %v3195 = vpop.permute.xlu0 %3194
  %3196 = vrot.lane.b32.xlu0 %v2919, 109
  %v3197 = vpop.permute.xlu0 %3196
  %v3198 = vsel %vm462, %v3191, %v3195
  %v3199 = vsel %vm462, %v3193, %v3197
  %v3200 = vsel %vm462, %v3187, %v3191
  %v3201 = vsel %vm462, %v3189, %v3193
  %v3202 = vsel %vm462, %v3183, %v3187
  %v3203 = vsel %vm462, %v3185, %v3189
  %v3204 = vsel %vm462, %v3179, %v3183
  %v3205 = vsel %vm462, %v3181, %v3185
  %v3206 = vsel %vm462, %v3175, %v3179
  %v3207 = vsel %vm462, %v3177, %v3181
  %v3208 = vsel %vm462, %v3171, %v3175
  %v3209 = vsel %vm462, %v3173, %v3177
  %v3210 = vsel %vm462, %v3167, %v3171
  %v3211 = vsel %vm462, %v3169, %v3173
  %v3212 = vsel %vm462, %v3195, %v3167
  %v3213 = vsel %vm462, %v3197, %v3169
  %3214 = vrot.lane.b32.xlu0 %v2904, 108
  %v3215 = vpop.permute.xlu0 %3214
  %3216 = vrot.lane.b32.xlu0 %v2912, 108
  %v3217 = vpop.permute.xlu0 %3216
  %3218 = vrot.lane.b32.xlu0 %v2905, 108
  %v3219 = vpop.permute.xlu0 %3218
  %3220 = vrot.lane.b32.xlu0 %v2913, 108
  %v3221 = vpop.permute.xlu0 %3220
  %3222 = vrot.lane.b32.xlu0 %v2906, 108
  %v3223 = vpop.permute.xlu0 %3222
  %3224 = vrot.lane.b32.xlu0 %v2914, 108
  %v3225 = vpop.permute.xlu0 %3224
  %3226 = vrot.lane.b32.xlu0 %v2907, 108
  %v3227 = vpop.permute.xlu0 %3226
  %3228 = vrot.lane.b32.xlu0 %v2915, 108
  %v3229 = vpop.permute.xlu0 %3228
  %3230 = vrot.lane.b32.xlu0 %v2908, 108
  %v3231 = vpop.permute.xlu0 %3230
  %3232 = vrot.lane.b32.xlu0 %v2916, 108
  %v3233 = vpop.permute.xlu0 %3232
  %3234 = vrot.lane.b32.xlu0 %v2909, 108
  %v3235 = vpop.permute.xlu0 %3234
  %3236 = vrot.lane.b32.xlu0 %v2917, 108
  %v3237 = vpop.permute.xlu0 %3236
  %3238 = vrot.lane.b32.xlu0 %v2910, 108
  %v3239 = vpop.permute.xlu0 %3238
  %3240 = vrot.lane.b32.xlu0 %v2918, 108
  %v3241 = vpop.permute.xlu0 %3240
  %3242 = vrot.lane.b32.xlu0 %v2911, 108
  %v3243 = vpop.permute.xlu0 %3242
  %3244 = vrot.lane.b32.xlu0 %v2919, 108
  %v3245 = vpop.permute.xlu0 %3244
  %v3246 = vsel %vm487, %v3239, %v3243
  %v3247 = vsel %vm487, %v3241, %v3245
  %v3248 = vsel %vm487, %v3235, %v3239
  %v3249 = vsel %vm487, %v3237, %v3241
  %v3250 = vsel %vm487, %v3231, %v3235
  %v3251 = vsel %vm487, %v3233, %v3237
  %v3252 = vsel %vm487, %v3227, %v3231
  %v3253 = vsel %vm487, %v3229, %v3233
  %v3254 = vsel %vm487, %v3223, %v3227
  %v3255 = vsel %vm487, %v3225, %v3229
  %v3256 = vsel %vm487, %v3219, %v3223
  %v3257 = vsel %vm487, %v3221, %v3225
  %v3258 = vsel %vm487, %v3215, %v3219
  %v3259 = vsel %vm487, %v3217, %v3221
  %v3260 = vsel %vm487, %v3243, %v3215
  %v3261 = vsel %vm487, %v3245, %v3217
  %3262 = vrot.lane.b32.xlu0 %v2904, 107
  %v3263 = vpop.permute.xlu0 %3262
  %3264 = vrot.lane.b32.xlu0 %v2912, 107
  %v3265 = vpop.permute.xlu0 %3264
  %3266 = vrot.lane.b32.xlu0 %v2905, 107
  %v3267 = vpop.permute.xlu0 %3266
  %3268 = vrot.lane.b32.xlu0 %v2913, 107
  %v3269 = vpop.permute.xlu0 %3268
  %3270 = vrot.lane.b32.xlu0 %v2906, 107
  %v3271 = vpop.permute.xlu0 %3270
  %3272 = vrot.lane.b32.xlu0 %v2914, 107
  %v3273 = vpop.permute.xlu0 %3272
  %3274 = vrot.lane.b32.xlu0 %v2907, 107
  %v3275 = vpop.permute.xlu0 %3274
  %3276 = vrot.lane.b32.xlu0 %v2915, 107
  %v3277 = vpop.permute.xlu0 %3276
  %3278 = vrot.lane.b32.xlu0 %v2908, 107
  %v3279 = vpop.permute.xlu0 %3278
  %3280 = vrot.lane.b32.xlu0 %v2916, 107
  %v3281 = vpop.permute.xlu0 %3280
  %3282 = vrot.lane.b32.xlu0 %v2909, 107
  %v3283 = vpop.permute.xlu0 %3282
  %3284 = vrot.lane.b32.xlu0 %v2917, 107
  %v3285 = vpop.permute.xlu0 %3284
  %3286 = vrot.lane.b32.xlu0 %v2910, 107
  %v3287 = vpop.permute.xlu0 %3286
  %3288 = vrot.lane.b32.xlu0 %v2918, 107
  %v3289 = vpop.permute.xlu0 %3288
  %3290 = vrot.lane.b32.xlu0 %v2911, 107
  %v3291 = vpop.permute.xlu0 %3290
  %3292 = vrot.lane.b32.xlu0 %v2919, 107
  %v3293 = vpop.permute.xlu0 %3292
  %v3294 = vsel %vm512, %v3287, %v3291
  %v3295 = vsel %vm512, %v3289, %v3293
  %v3296 = vsel %vm512, %v3283, %v3287
  %v3297 = vsel %vm512, %v3285, %v3289
  %v3298 = vsel %vm512, %v3279, %v3283
  %v3299 = vsel %vm512, %v3281, %v3285
  %v3300 = vsel %vm512, %v3275, %v3279
  %v3301 = vsel %vm512, %v3277, %v3281
  %v3302 = vsel %vm512, %v3271, %v3275
  %v3303 = vsel %vm512, %v3273, %v3277
  %v3304 = vsel %vm512, %v3267, %v3271
  %v3305 = vsel %vm512, %v3269, %v3273
  %v3306 = vsel %vm512, %v3263, %v3267
  %v3307 = vsel %vm512, %v3265, %v3269
  %v3308 = vsel %vm512, %v3291, %v3263
  %v3309 = vsel %vm512, %v3293, %v3265
  %v3310 = vpack.c.bf16 %v2973, %v2972
  %v3311 = vpack.c.bf16 %v2971, %v2970
  %v3312 = vpack.c.bf16 %v2969, %v2968
  %v3313 = vpack.c.bf16 %v2967, %v2966
  %v3314 = vpack.c.bf16 %v2965, %v2964
  %v3315 = vpack.c.bf16 %v2963, %v2962
  %v3316 = vpack.c.bf16 %v2961, %v2960
  %v3317 = vpack.c.bf16 %v2959, %v2958
  %v3318 = vpack.c.bf16 %v3021, %v3020
  %v3319 = vpack.c.bf16 %v3019, %v3018
  %v3320 = vpack.c.bf16 %v3017, %v3016
  %v3321 = vpack.c.bf16 %v3015, %v3014
  %v3322 = vpack.c.bf16 %v3013, %v3012
  %v3323 = vpack.c.bf16 %v3011, %v3010
  %v3324 = vpack.c.bf16 %v3009, %v3008
  %v3325 = vpack.c.bf16 %v3007, %v3006
  %v3326 = vpack.c.bf16 %v3069, %v3068
  %v3327 = vpack.c.bf16 %v3067, %v3066
  %v3328 = vpack.c.bf16 %v3065, %v3064
  %v3329 = vpack.c.bf16 %v3063, %v3062
  %v3330 = vpack.c.bf16 %v3061, %v3060
  %v3331 = vpack.c.bf16 %v3059, %v3058
  %v3332 = vpack.c.bf16 %v3057, %v3056
  %v3333 = vpack.c.bf16 %v3055, %v3054
  %v3334 = vpack.c.bf16 %v3117, %v3116
  %v3335 = vpack.c.bf16 %v3115, %v3114
  %v3336 = vpack.c.bf16 %v3113, %v3112
  %v3337 = vpack.c.bf16 %v3111, %v3110
  %v3338 = vpack.c.bf16 %v3109, %v3108
  %v3339 = vpack.c.bf16 %v3107, %v3106
  %v3340 = vpack.c.bf16 %v3105, %v3104
  %v3341 = vpack.c.bf16 %v3103, %v3102
  %v3342 = vpack.c.bf16 %v2912, %v2904
  %v3343 = vpack.c.bf16 %v2913, %v2905
  %v3344 = vpack.c.bf16 %v2914, %v2906
  %v3345 = vpack.c.bf16 %v2915, %v2907
  %v3346 = vpack.c.bf16 %v2916, %v2908
  %v3347 = vpack.c.bf16 %v2917, %v2909
  %v3348 = vpack.c.bf16 %v2918, %v2910
  %v3349 = vpack.c.bf16 %v2919, %v2911
  %v3350 = vpack.c.bf16 %v3163, %v3162
  %v3351 = vpack.c.bf16 %v3161, %v3160
  %v3352 = vpack.c.bf16 %v3159, %v3158
  %v3353 = vpack.c.bf16 %v3157, %v3156
  %v3354 = vpack.c.bf16 %v3155, %v3154
  %v3355 = vpack.c.bf16 %v3153, %v3152
  %v3356 = vpack.c.bf16 %v3151, %v3150
  %v3357 = vpack.c.bf16 %v3165, %v3164
  %v3358 = vpack.c.bf16 %v3211, %v3210
  %v3359 = vpack.c.bf16 %v3209, %v3208
  %v3360 = vpack.c.bf16 %v3207, %v3206
  %v3361 = vpack.c.bf16 %v3205, %v3204
  %v3362 = vpack.c.bf16 %v3203, %v3202
  %v3363 = vpack.c.bf16 %v3201, %v3200
  %v3364 = vpack.c.bf16 %v3199, %v3198
  %v3365 = vpack.c.bf16 %v3213, %v3212
  %v3366 = vpack.c.bf16 %v3259, %v3258
  %v3367 = vpack.c.bf16 %v3257, %v3256
  %v3368 = vpack.c.bf16 %v3255, %v3254
  %v3369 = vpack.c.bf16 %v3253, %v3252
  %v3370 = vpack.c.bf16 %v3251, %v3250
  %v3371 = vpack.c.bf16 %v3249, %v3248
  %v3372 = vpack.c.bf16 %v3247, %v3246
  %v3373 = vpack.c.bf16 %v3261, %v3260
  %v3374 = vpack.c.bf16 %v3307, %v3306
  %v3375 = vpack.c.bf16 %v3305, %v3304
  %v3376 = vpack.c.bf16 %v3303, %v3302
  %v3377 = vpack.c.bf16 %v3301, %v3300
  %v3378 = vpack.c.bf16 %v3299, %v3298
  %v3379 = vpack.c.bf16 %v3297, %v3296
  %v3380 = vpack.c.bf16 %v3295, %v3294
  %v3381 = vpack.c.bf16 %v3309, %v3308
  %3383 = vset.pattern.permute.xlu0 0
  %3384 = vperm.xlu0 %3383, %v2924
  %v3385 = vpop.permute.xlu0 %3384
  %3388 = vset.pattern.permute.xlu0 0
  %3389 = vperm.xlu0 %3388, %v2925
  %v3390 = vpop.permute.xlu0 %3389
  %v3394 = vunpack.c.l.b16 %v2921
  %v3395 = vunpack.c.h.b16 %v2921
  %v3396 = vunpack.c.l.b16 %v2922
  %v3397 = vunpack.c.h.b16 %v2922
  %v3398 = vpack.c.b16 %v3396, %v3394
  %v3399 = vpack.c.b16 %v3397, %v3395
  %v3402 = vsel %vm2024, %v3399, 0
  %3404 = vmatprep.subr.bf16.mxu0 %v3367
  %3405 = vmatpush1.bf16.msra.mxu0 %v3366
  %3406 = vmatprep.subr.bf16.mxu0 %v3359
  %3407 = vmatpush1.bf16.msra.mxu0 %v3358
  %3408 = vmatprep.subr.bf16.mxu0 %v3351
  %3409 = vmatpush1.bf16.msra.mxu0 %v3350
  %3410 = vmatprep.subr.bf16.mxu0 %v3343
  %3411 = vmatpush1.bf16.msra.mxu0 %v3342
  %3412 = vmatprep.subr.bf16.mxu0 %v3335
  %3413 = vmatpush1.bf16.msra.mxu0 %v3334
  %3414 = vmatprep.subr.bf16.mxu0 %v3327
  %3415 = vmatpush1.bf16.msra.mxu0 %v3326
  %3416 = vmatprep.subr.bf16.mxu0 %v3319
  %3417 = vmatpush1.bf16.msra.mxu0 %v3318
  %3418 = vmatprep.subr.bf16.mxu0 %v3311
  %3419 = vmatpush1.bf16.msra.mxu0 %v3310
  %3420 = vmatprep.subr.bf16.mxu0 0
  %3421 = vmatpush2.bf16.msra.mxu0 0
  %3422 = vmatprep.subr.bf16.mxu0 0
  %3423 = vmatpush2.bf16.msra.mxu0 0
  %3424 = vmatprep.subr.bf16.mxu0 0
  %3425 = vmatpush2.bf16.msra.mxu0 0
  %3426 = vmatprep.subr.bf16.mxu0 0
  %3427 = vmatpush2.bf16.msra.mxu0 0
  %3428 = vmatprep.subr.bf16.mxu0 0
  %3429 = vmatpush2.bf16.msra.mxu0 0
  %3430 = vmatprep.subr.bf16.mxu0 0
  %3431 = vmatpush2.bf16.msra.mxu0 0
  %3432 = vmatprep.subr.bf16.mxu0 0
  %3433 = vmatpush2.bf16.msra.mxu0 0
  %3434 = vmatprep.subr.bf16.mxu0 %v3375
  %3435 = vmatpush2.bf16.msra.mxu0 %v3374
  %3436 = vmatprep.mubr.bf16.mxu0 %v3402
  %3437 = vmatmul.mubr.bf16.gmra.mxu0 %v3398
  %v3438 = vpop.f32.mrf.mxu0
  %v3439 = vadd.f32 %v3385, %v3438
  %v3440 = vpop.f32.mrf.mxu0
  %v3441 = vadd.f32 %v3385, %v3440
  %v3442 = vpop.f32.mrf.mxu0
  %v3443 = vadd.f32 %v3390, %v3442
  %v3444 = vpop.f32.mrf.mxu0
  %v3445 = vadd.f32 %v3390, %v3444
  %3446 = vdwg.mxu0
  %3447 = vmatprep.subr.bf16.mxu0 %v3369
  %3448 = vmatpush1.bf16.msra.mxu0 %v3368
  %3449 = vmatprep.subr.bf16.mxu0 %v3361
  %3450 = vmatpush1.bf16.msra.mxu0 %v3360
  %3451 = vmatprep.subr.bf16.mxu0 %v3353
  %3452 = vmatpush1.bf16.msra.mxu0 %v3352
  %3453 = vmatprep.subr.bf16.mxu0 %v3345
  %3454 = vmatpush1.bf16.msra.mxu0 %v3344
  %3455 = vmatprep.subr.bf16.mxu0 %v3337
  %3456 = vmatpush1.bf16.msra.mxu0 %v3336
  %3457 = vmatprep.subr.bf16.mxu0 %v3329
  %3458 = vmatpush1.bf16.msra.mxu0 %v3328
  %3459 = vmatprep.subr.bf16.mxu0 %v3321
  %3460 = vmatpush1.bf16.msra.mxu0 %v3320
  %3461 = vmatprep.subr.bf16.mxu0 %v3313
  %3462 = vmatpush1.bf16.msra.mxu0 %v3312
  %3463 = vmatprep.subr.bf16.mxu0 0
  %3464 = vmatpush2.bf16.msra.mxu0 0
  %3465 = vmatprep.subr.bf16.mxu0 0
  %3466 = vmatpush2.bf16.msra.mxu0 0
  %3467 = vmatprep.subr.bf16.mxu0 0
  %3468 = vmatpush2.bf16.msra.mxu0 0
  %3469 = vmatprep.subr.bf16.mxu0 0
  %3470 = vmatpush2.bf16.msra.mxu0 0
  %3471 = vmatprep.subr.bf16.mxu0 0
  %3472 = vmatpush2.bf16.msra.mxu0 0
  %3473 = vmatprep.subr.bf16.mxu0 0
  %3474 = vmatpush2.bf16.msra.mxu0 0
  %3475 = vmatprep.subr.bf16.mxu0 0
  %3476 = vmatpush2.bf16.msra.mxu0 0
  %3477 = vmatprep.subr.bf16.mxu0 %v3377
  %3478 = vmatpush2.bf16.msra.mxu0 %v3376
  %3479 = vmatprep.mubr.bf16.mxu0 %v3402
  %3480 = vmatmul.mubr.bf16.gmra.mxu0 %v3398
  %v3481 = vpop.f32.mrf.mxu0
  %v3482 = vadd.f32 %v3385, %v3481
  %v3483 = vpop.f32.mrf.mxu0
  %v3484 = vadd.f32 %v3385, %v3483
  %v3485 = vpop.f32.mrf.mxu0
  %v3486 = vadd.f32 %v3390, %v3485
  %v3487 = vpop.f32.mrf.mxu0
  %v3488 = vadd.f32 %v3390, %v3487
  %3489 = vdwg.mxu0
  %3490 = vmatprep.subr.bf16.mxu0 %v3371
  %3491 = vmatpush1.bf16.msra.mxu0 %v3370
  %3492 = vmatprep.subr.bf16.mxu0 %v3363
  %3493 = vmatpush1.bf16.msra.mxu0 %v3362
  %3494 = vmatprep.subr.bf16.mxu0 %v3355
  %3495 = vmatpush1.bf16.msra.mxu0 %v3354
  %3496 = vmatprep.subr.bf16.mxu0 %v3347
  %3497 = vmatpush1.bf16.msra.mxu0 %v3346
  %3498 = vmatprep.subr.bf16.mxu0 %v3339
  %3499 = vmatpush1.bf16.msra.mxu0 %v3338
  %3500 = vmatprep.subr.bf16.mxu0 %v3331
  %3501 = vmatpush1.bf16.msra.mxu0 %v3330
  %3502 = vmatprep.subr.bf16.mxu0 %v3323
  %3503 = vmatpush1.bf16.msra.mxu0 %v3322
  %3504 = vmatprep.subr.bf16.mxu0 %v3315
  %3505 = vmatpush1.bf16.msra.mxu0 %v3314
  %3506 = vmatprep.subr.bf16.mxu0 0
  %3507 = vmatpush2.bf16.msra.mxu0 0
  %3508 = vmatprep.subr.bf16.mxu0 0
  %3509 = vmatpush2.bf16.msra.mxu0 0
  %3510 = vmatprep.subr.bf16.mxu0 0
  %3511 = vmatpush2.bf16.msra.mxu0 0
  %3512 = vmatprep.subr.bf16.mxu0 0
  %3513 = vmatpush2.bf16.msra.mxu0 0
  %3514 = vmatprep.subr.bf16.mxu0 0
  %3515 = vmatpush2.bf16.msra.mxu0 0
  %3516 = vmatprep.subr.bf16.mxu0 0
  %3517 = vmatpush2.bf16.msra.mxu0 0
  %3518 = vmatprep.subr.bf16.mxu0 0
  %3519 = vmatpush2.bf16.msra.mxu0 0
  %3520 = vmatprep.subr.bf16.mxu0 %v3379
  %3521 = vmatpush2.bf16.msra.mxu0 %v3378
  %3522 = vmatprep.mubr.bf16.mxu0 %v3402
  %3523 = vmatmul.mubr.bf16.gmra.mxu0 %v3398
  %v3524 = vpop.f32.mrf.mxu0
  %v3525 = vadd.f32 %v3385, %v3524
  %v3526 = vpop.f32.mrf.mxu0
  %v3527 = vadd.f32 %v3385, %v3526
  %v3528 = vpop.f32.mrf.mxu0
  %v3529 = vadd.f32 %v3390, %v3528
  %v3530 = vpop.f32.mrf.mxu0
  %v3531 = vadd.f32 %v3390, %v3530
  %3532 = vdwg.mxu0
  %3533 = vmatprep.subr.bf16.mxu0 %v3373
  %3534 = vmatpush1.bf16.msra.mxu0 %v3372
  %3535 = vmatprep.subr.bf16.mxu0 %v3365
  %3536 = vmatpush1.bf16.msra.mxu0 %v3364
  %3537 = vmatprep.subr.bf16.mxu0 %v3357
  %3538 = vmatpush1.bf16.msra.mxu0 %v3356
  %3539 = vmatprep.subr.bf16.mxu0 %v3349
  %3540 = vmatpush1.bf16.msra.mxu0 %v3348
  %3541 = vmatprep.subr.bf16.mxu0 %v3341
  %3542 = vmatpush1.bf16.msra.mxu0 %v3340
  %3543 = vmatprep.subr.bf16.mxu0 %v3333
  %3544 = vmatpush1.bf16.msra.mxu0 %v3332
  %3545 = vmatprep.subr.bf16.mxu0 %v3325
  %3546 = vmatpush1.bf16.msra.mxu0 %v3324
  %3547 = vmatprep.subr.bf16.mxu0 %v3317
  %3548 = vmatpush1.bf16.msra.mxu0 %v3316
  %3549 = vmatprep.subr.bf16.mxu0 0
  %3550 = vmatpush2.bf16.msra.mxu0 0
  %3551 = vmatprep.subr.bf16.mxu0 0
  %3552 = vmatpush2.bf16.msra.mxu0 0
  %3553 = vmatprep.subr.bf16.mxu0 0
  %3554 = vmatpush2.bf16.msra.mxu0 0
  %3555 = vmatprep.subr.bf16.mxu0 0
  %3556 = vmatpush2.bf16.msra.mxu0 0
  %3557 = vmatprep.subr.bf16.mxu0 0
  %3558 = vmatpush2.bf16.msra.mxu0 0
  %3559 = vmatprep.subr.bf16.mxu0 0
  %3560 = vmatpush2.bf16.msra.mxu0 0
  %3561 = vmatprep.subr.bf16.mxu0 0
  %3562 = vmatpush2.bf16.msra.mxu0 0
  %3563 = vmatprep.subr.bf16.mxu0 %v3381
  %3564 = vmatpush2.bf16.msra.mxu0 %v3380
  %3565 = vmatprep.mubr.bf16.mxu0 %v3402
  %3566 = vmatmul.mubr.bf16.gmra.mxu0 %v3398
  %v3567 = vpop.f32.mrf.mxu0
  %v3568 = vadd.f32 %v3385, %v3567
  %v3569 = vpop.f32.mrf.mxu0
  %v3570 = vadd.f32 %v3385, %v3569
  %v3571 = vpop.f32.mrf.mxu0
  %v3572 = vadd.f32 %v3390, %v3571
  %v3573 = vpop.f32.mrf.mxu0
  %v3574 = vadd.f32 %v3390, %v3573
  %3575 = vdwg.mxu0
  %v3576 = vmax.f32 %v3439, 0.0
  %v3577 = vmax.f32 %v3441, 0.0
  %v3578 = vmax.f32 %v3482, 0.0
  %v3579 = vmax.f32 %v3484, 0.0
  %v3580 = vmax.f32 %v3525, 0.0
  %v3581 = vmax.f32 %v3527, 0.0
  %v3582 = vmax.f32 %v3568, 0.0
  %v3583 = vmax.f32 %v3570, 0.0
  %v3584 = vmax.f32 %v3443, 0.0
  %v3585 = vmax.f32 %v3445, 0.0
  %v3586 = vmax.f32 %v3486, 0.0
  %v3587 = vmax.f32 %v3488, 0.0
  %v3588 = vmax.f32 %v3529, 0.0
  %v3589 = vmax.f32 %v3531, 0.0
  %v3590 = vmax.f32 %v3572, 0.0
  %v3591 = vmax.f32 %v3574, 0.0
  %v3592 = vmul.f32 %v3576, %v1492
  %v3593 = vmul.f32 %v3577, %v1496
  %v3594 = vmul.f32 %v3578, %v1500
  %v3595 = vmul.f32 %v3579, %v1504
  %v3596 = vmul.f32 %v3580, %v1508
  %v3597 = vmul.f32 %v3581, %v1512
  %v3598 = vmul.f32 %v3582, %v1516
  %v3599 = vmul.f32 %v3583, %v1520
  %v3600 = vmul.f32 %v3584, %v1492
  %v3601 = vmul.f32 %v3585, %v1496
  %v3602 = vmul.f32 %v3586, %v1500
  %v3603 = vmul.f32 %v3587, %v1504
  %v3604 = vmul.f32 %v3588, %v1508
  %v3605 = vmul.f32 %v3589, %v1512
  %v3606 = vmul.f32 %v3590, %v1516
  %v3607 = vmul.f32 %v3591, %v1520
  %s3608 = scalar_lea.vmem %s6, 48
  %v3609 = vld [vmem:[%s3608] sm:$0xff]
  %v3610 = vld [vmem:[%s3608 + $0x8] sm:$0xff]
  %s3611 = scalar_lea.vmem %s7, 48
  %v3612 = vld [vmem:[%s3611] sm:$0xff]
  %v3613 = vld [vmem:[%s3611 + $0x8] sm:$0xff]
  %3614 = vrot.lane.b32.xlu0 %v3592, 21
  %v3615 = vpop.permute.xlu0 %3614
  %3616 = vrot.lane.b32.xlu0 %v3600, 21
  %v3617 = vpop.permute.xlu0 %3616
  %3618 = vrot.lane.b32.xlu0 %v3593, 21
  %v3619 = vpop.permute.xlu0 %3618
  %3620 = vrot.lane.b32.xlu0 %v3601, 21
  %v3621 = vpop.permute.xlu0 %3620
  %3622 = vrot.lane.b32.xlu0 %v3594, 21
  %v3623 = vpop.permute.xlu0 %3622
  %3624 = vrot.lane.b32.xlu0 %v3602, 21
  %v3625 = vpop.permute.xlu0 %3624
  %3626 = vrot.lane.b32.xlu0 %v3595, 21
  %v3627 = vpop.permute.xlu0 %3626
  %3628 = vrot.lane.b32.xlu0 %v3603, 21
  %v3629 = vpop.permute.xlu0 %3628
  %3630 = vrot.lane.b32.xlu0 %v3596, 21
  %v3631 = vpop.permute.xlu0 %3630
  %3632 = vrot.lane.b32.xlu0 %v3604, 21
  %v3633 = vpop.permute.xlu0 %3632
  %3634 = vrot.lane.b32.xlu0 %v3597, 21
  %v3635 = vpop.permute.xlu0 %3634
  %3636 = vrot.lane.b32.xlu0 %v3605, 21
  %v3637 = vpop.permute.xlu0 %3636
  %3638 = vrot.lane.b32.xlu0 %v3598, 21
  %v3639 = vpop.permute.xlu0 %3638
  %3640 = vrot.lane.b32.xlu0 %v3606, 21
  %v3641 = vpop.permute.xlu0 %3640
  %3642 = vrot.lane.b32.xlu0 %v3599, 21
  %v3643 = vpop.permute.xlu0 %3642
  %3644 = vrot.lane.b32.xlu0 %v3607, 21
  %v3645 = vpop.permute.xlu0 %3644
  %v3646 = vsel %vm237, %v3639, %v3643
  %v3647 = vsel %vm237, %v3641, %v3645
  %v3648 = vsel %vm237, %v3635, %v3639
  %v3649 = vsel %vm237, %v3637, %v3641
  %v3650 = vsel %vm237, %v3631, %v3635
  %v3651 = vsel %vm237, %v3633, %v3637
  %v3652 = vsel %vm237, %v3627, %v3631
  %v3653 = vsel %vm237, %v3629, %v3633
  %v3654 = vsel %vm237, %v3623, %v3627
  %v3655 = vsel %vm237, %v3625, %v3629
  %v3656 = vsel %vm237, %v3619, %v3623
  %v3657 = vsel %vm237, %v3621, %v3625
  %v3658 = vsel %vm237, %v3615, %v3619
  %v3659 = vsel %vm237, %v3617, %v3621
  %v3660 = vsel %vm237, %v3643, %v3615
  %v3661 = vsel %vm237, %v3645, %v3617
  %3662 = vrot.lane.b32.xlu0 %v3592, 20
  %v3663 = vpop.permute.xlu0 %3662
  %3664 = vrot.lane.b32.xlu0 %v3600, 20
  %v3665 = vpop.permute.xlu0 %3664
  %3666 = vrot.lane.b32.xlu0 %v3593, 20
  %v3667 = vpop.permute.xlu0 %3666
  %3668 = vrot.lane.b32.xlu0 %v3601, 20
  %v3669 = vpop.permute.xlu0 %3668
  %3670 = vrot.lane.b32.xlu0 %v3594, 20
  %v3671 = vpop.permute.xlu0 %3670
  %3672 = vrot.lane.b32.xlu0 %v3602, 20
  %v3673 = vpop.permute.xlu0 %3672
  %3674 = vrot.lane.b32.xlu0 %v3595, 20
  %v3675 = vpop.permute.xlu0 %3674
  %3676 = vrot.lane.b32.xlu0 %v3603, 20
  %v3677 = vpop.permute.xlu0 %3676
  %3678 = vrot.lane.b32.xlu0 %v3596, 20
  %v3679 = vpop.permute.xlu0 %3678
  %3680 = vrot.lane.b32.xlu0 %v3604, 20
  %v3681 = vpop.permute.xlu0 %3680
  %3682 = vrot.lane.b32.xlu0 %v3597, 20
  %v3683 = vpop.permute.xlu0 %3682
  %3684 = vrot.lane.b32.xlu0 %v3605, 20
  %v3685 = vpop.permute.xlu0 %3684
  %3686 = vrot.lane.b32.xlu0 %v3598, 20
  %v3687 = vpop.permute.xlu0 %3686
  %3688 = vrot.lane.b32.xlu0 %v3606, 20
  %v3689 = vpop.permute.xlu0 %3688
  %3690 = vrot.lane.b32.xlu0 %v3599, 20
  %v3691 = vpop.permute.xlu0 %3690
  %3692 = vrot.lane.b32.xlu0 %v3607, 20
  %v3693 = vpop.permute.xlu0 %3692
  %v3694 = vsel %vm262, %v3687, %v3691
  %v3695 = vsel %vm262, %v3689, %v3693
  %v3696 = vsel %vm262, %v3683, %v3687
  %v3697 = vsel %vm262, %v3685, %v3689
  %v3698 = vsel %vm262, %v3679, %v3683
  %v3699 = vsel %vm262, %v3681, %v3685
  %v3700 = vsel %vm262, %v3675, %v3679
  %v3701 = vsel %vm262, %v3677, %v3681
  %v3702 = vsel %vm262, %v3671, %v3675
  %v3703 = vsel %vm262, %v3673, %v3677
  %v3704 = vsel %vm262, %v3667, %v3671
  %v3705 = vsel %vm262, %v3669, %v3673
  %v3706 = vsel %vm262, %v3663, %v3667
  %v3707 = vsel %vm262, %v3665, %v3669
  %v3708 = vsel %vm262, %v3691, %v3663
  %v3709 = vsel %vm262, %v3693, %v3665
  %3710 = vrot.lane.b32.xlu0 %v3592, 19
  %v3711 = vpop.permute.xlu0 %3710
  %3712 = vrot.lane.b32.xlu0 %v3600, 19
  %v3713 = vpop.permute.xlu0 %3712
  %3714 = vrot.lane.b32.xlu0 %v3593, 19
  %v3715 = vpop.permute.xlu0 %3714
  %3716 = vrot.lane.b32.xlu0 %v3601, 19
  %v3717 = vpop.permute.xlu0 %3716
  %3718 = vrot.lane.b32.xlu0 %v3594, 19
  %v3719 = vpop.permute.xlu0 %3718
  %3720 = vrot.lane.b32.xlu0 %v3602, 19
  %v3721 = vpop.permute.xlu0 %3720
  %3722 = vrot.lane.b32.xlu0 %v3595, 19
  %v3723 = vpop.permute.xlu0 %3722
  %3724 = vrot.lane.b32.xlu0 %v3603, 19
  %v3725 = vpop.permute.xlu0 %3724
  %3726 = vrot.lane.b32.xlu0 %v3596, 19
  %v3727 = vpop.permute.xlu0 %3726
  %3728 = vrot.lane.b32.xlu0 %v3604, 19
  %v3729 = vpop.permute.xlu0 %3728
  %3730 = vrot.lane.b32.xlu0 %v3597, 19
  %v3731 = vpop.permute.xlu0 %3730
  %3732 = vrot.lane.b32.xlu0 %v3605, 19
  %v3733 = vpop.permute.xlu0 %3732
  %3734 = vrot.lane.b32.xlu0 %v3598, 19
  %v3735 = vpop.permute.xlu0 %3734
  %3736 = vrot.lane.b32.xlu0 %v3606, 19
  %v3737 = vpop.permute.xlu0 %3736
  %3738 = vrot.lane.b32.xlu0 %v3599, 19
  %v3739 = vpop.permute.xlu0 %3738
  %3740 = vrot.lane.b32.xlu0 %v3607, 19
  %v3741 = vpop.permute.xlu0 %3740
  %v3742 = vsel %vm287, %v3735, %v3739
  %v3743 = vsel %vm287, %v3737, %v3741
  %v3744 = vsel %vm287, %v3731, %v3735
  %v3745 = vsel %vm287, %v3733, %v3737
  %v3746 = vsel %vm287, %v3727, %v3731
  %v3747 = vsel %vm287, %v3729, %v3733
  %v3748 = vsel %vm287, %v3723, %v3727
  %v3749 = vsel %vm287, %v3725, %v3729
  %v3750 = vsel %vm287, %v3719, %v3723
  %v3751 = vsel %vm287, %v3721, %v3725
  %v3752 = vsel %vm287, %v3715, %v3719
  %v3753 = vsel %vm287, %v3717, %v3721
  %v3754 = vsel %vm287, %v3711, %v3715
  %v3755 = vsel %vm287, %v3713, %v3717
  %v3756 = vsel %vm287, %v3739, %v3711
  %v3757 = vsel %vm287, %v3741, %v3713
  %3758 = vrot.lane.b32.xlu0 %v3592, 1
  %v3759 = vpop.permute.xlu0 %3758
  %3760 = vrot.lane.b32.xlu0 %v3600, 1
  %v3761 = vpop.permute.xlu0 %3760
  %3762 = vrot.lane.b32.xlu0 %v3593, 1
  %v3763 = vpop.permute.xlu0 %3762
  %3764 = vrot.lane.b32.xlu0 %v3601, 1
  %v3765 = vpop.permute.xlu0 %3764
  %3766 = vrot.lane.b32.xlu0 %v3594, 1
  %v3767 = vpop.permute.xlu0 %3766
  %3768 = vrot.lane.b32.xlu0 %v3602, 1
  %v3769 = vpop.permute.xlu0 %3768
  %3770 = vrot.lane.b32.xlu0 %v3595, 1
  %v3771 = vpop.permute.xlu0 %3770
  %3772 = vrot.lane.b32.xlu0 %v3603, 1
  %v3773 = vpop.permute.xlu0 %3772
  %3774 = vrot.lane.b32.xlu0 %v3596, 1
  %v3775 = vpop.permute.xlu0 %3774
  %3776 = vrot.lane.b32.xlu0 %v3604, 1
  %v3777 = vpop.permute.xlu0 %3776
  %3778 = vrot.lane.b32.xlu0 %v3597, 1
  %v3779 = vpop.permute.xlu0 %3778
  %3780 = vrot.lane.b32.xlu0 %v3605, 1
  %v3781 = vpop.permute.xlu0 %3780
  %3782 = vrot.lane.b32.xlu0 %v3598, 1
  %v3783 = vpop.permute.xlu0 %3782
  %3784 = vrot.lane.b32.xlu0 %v3606, 1
  %v3785 = vpop.permute.xlu0 %3784
  %3786 = vrot.lane.b32.xlu0 %v3599, 1
  %v3787 = vpop.permute.xlu0 %3786
  %3788 = vrot.lane.b32.xlu0 %v3607, 1
  %v3789 = vpop.permute.xlu0 %3788
  %v3790 = vsel %vm362, %v3783, %v3787
  %v3791 = vsel %vm362, %v3785, %v3789
  %v3792 = vsel %vm362, %v3779, %v3783
  %v3793 = vsel %vm362, %v3781, %v3785
  %v3794 = vsel %vm362, %v3775, %v3779
  %v3795 = vsel %vm362, %v3777, %v3781
  %v3796 = vsel %vm362, %v3771, %v3775
  %v3797 = vsel %vm362, %v3773, %v3777
  %v3798 = vsel %vm362, %v3767, %v3771
  %v3799 = vsel %vm362, %v3769, %v3773
  %v3800 = vsel %vm362, %v3763, %v3767
  %v3801 = vsel %vm362, %v3765, %v3769
  %v3802 = vsel %vm362, %v3759, %v3763
  %v3803 = vsel %vm362, %v3761, %v3765
  %v3804 = vsel %vm362, %v3787, %v3759
  %v3805 = vsel %vm362, %v3789, %v3761
  %3806 = vrot.lane.b32.xlu0 %v3592, 127
  %v3807 = vpop.permute.xlu0 %3806
  %3808 = vrot.lane.b32.xlu0 %v3600, 127
  %v3809 = vpop.permute.xlu0 %3808
  %3810 = vrot.lane.b32.xlu0 %v3593, 127
  %v3811 = vpop.permute.xlu0 %3810
  %3812 = vrot.lane.b32.xlu0 %v3601, 127
  %v3813 = vpop.permute.xlu0 %3812
  %3814 = vrot.lane.b32.xlu0 %v3594, 127
  %v3815 = vpop.permute.xlu0 %3814
  %3816 = vrot.lane.b32.xlu0 %v3602, 127
  %v3817 = vpop.permute.xlu0 %3816
  %3818 = vrot.lane.b32.xlu0 %v3595, 127
  %v3819 = vpop.permute.xlu0 %3818
  %3820 = vrot.lane.b32.xlu0 %v3603, 127
  %v3821 = vpop.permute.xlu0 %3820
  %3822 = vrot.lane.b32.xlu0 %v3596, 127
  %v3823 = vpop.permute.xlu0 %3822
  %3824 = vrot.lane.b32.xlu0 %v3604, 127
  %v3825 = vpop.permute.xlu0 %3824
  %3826 = vrot.lane.b32.xlu0 %v3597, 127
  %v3827 = vpop.permute.xlu0 %3826
  %3828 = vrot.lane.b32.xlu0 %v3605, 127
  %v3829 = vpop.permute.xlu0 %3828
  %3830 = vrot.lane.b32.xlu0 %v3598, 127
  %v3831 = vpop.permute.xlu0 %3830
  %3832 = vrot.lane.b32.xlu0 %v3606, 127
  %v3833 = vpop.permute.xlu0 %3832
  %3834 = vrot.lane.b32.xlu0 %v3599, 127
  %v3835 = vpop.permute.xlu0 %3834
  %3836 = vrot.lane.b32.xlu0 %v3607, 127
  %v3837 = vpop.permute.xlu0 %3836
  %v3838 = vsel %vm387, %v3831, %v3835
  %v3839 = vsel %vm387, %v3833, %v3837
  %v3840 = vsel %vm387, %v3827, %v3831
  %v3841 = vsel %vm387, %v3829, %v3833
  %v3842 = vsel %vm387, %v3823, %v3827
  %v3843 = vsel %vm387, %v3825, %v3829
  %v3844 = vsel %vm387, %v3819, %v3823
  %v3845 = vsel %vm387, %v3821, %v3825
  %v3846 = vsel %vm387, %v3815, %v3819
  %v3847 = vsel %vm387, %v3817, %v3821
  %v3848 = vsel %vm387, %v3811, %v3815
  %v3849 = vsel %vm387, %v3813, %v3817
  %v3850 = vsel %vm387, %v3807, %v3811
  %v3851 = vsel %vm387, %v3809, %v3813
  %v3852 = vsel %vm387, %v3835, %v3807
  %v3853 = vsel %vm387, %v3837, %v3809
  %3854 = vrot.lane.b32.xlu0 %v3592, 109
  %v3855 = vpop.permute.xlu0 %3854
  %3856 = vrot.lane.b32.xlu0 %v3600, 109
  %v3857 = vpop.permute.xlu0 %3856
  %3858 = vrot.lane.b32.xlu0 %v3593, 109
  %v3859 = vpop.permute.xlu0 %3858
  %3860 = vrot.lane.b32.xlu0 %v3601, 109
  %v3861 = vpop.permute.xlu0 %3860
  %3862 = vrot.lane.b32.xlu0 %v3594, 109
  %v3863 = vpop.permute.xlu0 %3862
  %3864 = vrot.lane.b32.xlu0 %v3602, 109
  %v3865 = vpop.permute.xlu0 %3864
  %3866 = vrot.lane.b32.xlu0 %v3595, 109
  %v3867 = vpop.permute.xlu0 %3866
  %3868 = vrot.lane.b32.xlu0 %v3603, 109
  %v3869 = vpop.permute.xlu0 %3868
  %3870 = vrot.lane.b32.xlu0 %v3596, 109
  %v3871 = vpop.permute.xlu0 %3870
  %3872 = vrot.lane.b32.xlu0 %v3604, 109
  %v3873 = vpop.permute.xlu0 %3872
  %3874 = vrot.lane.b32.xlu0 %v3597, 109
  %v3875 = vpop.permute.xlu0 %3874
  %3876 = vrot.lane.b32.xlu0 %v3605, 109
  %v3877 = vpop.permute.xlu0 %3876
  %3878 = vrot.lane.b32.xlu0 %v3598, 109
  %v3879 = vpop.permute.xlu0 %3878
  %3880 = vrot.lane.b32.xlu0 %v3606, 109
  %v3881 = vpop.permute.xlu0 %3880
  %3882 = vrot.lane.b32.xlu0 %v3599, 109
  %v3883 = vpop.permute.xlu0 %3882
  %3884 = vrot.lane.b32.xlu0 %v3607, 109
  %v3885 = vpop.permute.xlu0 %3884
  %v3886 = vsel %vm462, %v3879, %v3883
  %v3887 = vsel %vm462, %v3881, %v3885
  %v3888 = vsel %vm462, %v3875, %v3879
  %v3889 = vsel %vm462, %v3877, %v3881
  %v3890 = vsel %vm462, %v3871, %v3875
  %v3891 = vsel %vm462, %v3873, %v3877
  %v3892 = vsel %vm462, %v3867, %v3871
  %v3893 = vsel %vm462, %v3869, %v3873
  %v3894 = vsel %vm462, %v3863, %v3867
  %v3895 = vsel %vm462, %v3865, %v3869
  %v3896 = vsel %vm462, %v3859, %v3863
  %v3897 = vsel %vm462, %v3861, %v3865
  %v3898 = vsel %vm462, %v3855, %v3859
  %v3899 = vsel %vm462, %v3857, %v3861
  %v3900 = vsel %vm462, %v3883, %v3855
  %v3901 = vsel %vm462, %v3885, %v3857
  %3902 = vrot.lane.b32.xlu0 %v3592, 108
  %v3903 = vpop.permute.xlu0 %3902
  %3904 = vrot.lane.b32.xlu0 %v3600, 108
  %v3905 = vpop.permute.xlu0 %3904
  %3906 = vrot.lane.b32.xlu0 %v3593, 108
  %v3907 = vpop.permute.xlu0 %3906
  %3908 = vrot.lane.b32.xlu0 %v3601, 108
  %v3909 = vpop.permute.xlu0 %3908
  %3910 = vrot.lane.b32.xlu0 %v3594, 108
  %v3911 = vpop.permute.xlu0 %3910
  %3912 = vrot.lane.b32.xlu0 %v3602, 108
  %v3913 = vpop.permute.xlu0 %3912
  %3914 = vrot.lane.b32.xlu0 %v3595, 108
  %v3915 = vpop.permute.xlu0 %3914
  %3916 = vrot.lane.b32.xlu0 %v3603, 108
  %v3917 = vpop.permute.xlu0 %3916
  %3918 = vrot.lane.b32.xlu0 %v3596, 108
  %v3919 = vpop.permute.xlu0 %3918
  %3920 = vrot.lane.b32.xlu0 %v3604, 108
  %v3921 = vpop.permute.xlu0 %3920
  %3922 = vrot.lane.b32.xlu0 %v3597, 108
  %v3923 = vpop.permute.xlu0 %3922
  %3924 = vrot.lane.b32.xlu0 %v3605, 108
  %v3925 = vpop.permute.xlu0 %3924
  %3926 = vrot.lane.b32.xlu0 %v3598, 108
  %v3927 = vpop.permute.xlu0 %3926
  %3928 = vrot.lane.b32.xlu0 %v3606, 108
  %v3929 = vpop.permute.xlu0 %3928
  %3930 = vrot.lane.b32.xlu0 %v3599, 108
  %v3931 = vpop.permute.xlu0 %3930
  %3932 = vrot.lane.b32.xlu0 %v3607, 108
  %v3933 = vpop.permute.xlu0 %3932
  %v3934 = vsel %vm487, %v3927, %v3931
  %v3935 = vsel %vm487, %v3929, %v3933
  %v3936 = vsel %vm487, %v3923, %v3927
  %v3937 = vsel %vm487, %v3925, %v3929
  %v3938 = vsel %vm487, %v3919, %v3923
  %v3939 = vsel %vm487, %v3921, %v3925
  %v3940 = vsel %vm487, %v3915, %v3919
  %v3941 = vsel %vm487, %v3917, %v3921
  %v3942 = vsel %vm487, %v3911, %v3915
  %v3943 = vsel %vm487, %v3913, %v3917
  %v3944 = vsel %vm487, %v3907, %v3911
  %v3945 = vsel %vm487, %v3909, %v3913
  %v3946 = vsel %vm487, %v3903, %v3907
  %v3947 = vsel %vm487, %v3905, %v3909
  %v3948 = vsel %vm487, %v3931, %v3903
  %v3949 = vsel %vm487, %v3933, %v3905
  %3950 = vrot.lane.b32.xlu0 %v3592, 107
  %v3951 = vpop.permute.xlu0 %3950
  %3952 = vrot.lane.b32.xlu0 %v3600, 107
  %v3953 = vpop.permute.xlu0 %3952
  %3954 = vrot.lane.b32.xlu0 %v3593, 107
  %v3955 = vpop.permute.xlu0 %3954
  %3956 = vrot.lane.b32.xlu0 %v3601, 107
  %v3957 = vpop.permute.xlu0 %3956
  %3958 = vrot.lane.b32.xlu0 %v3594, 107
  %v3959 = vpop.permute.xlu0 %3958
  %3960 = vrot.lane.b32.xlu0 %v3602, 107
  %v3961 = vpop.permute.xlu0 %3960
  %3962 = vrot.lane.b32.xlu0 %v3595, 107
  %v3963 = vpop.permute.xlu0 %3962
  %3964 = vrot.lane.b32.xlu0 %v3603, 107
  %v3965 = vpop.permute.xlu0 %3964
  %3966 = vrot.lane.b32.xlu0 %v3596, 107
  %v3967 = vpop.permute.xlu0 %3966
  %3968 = vrot.lane.b32.xlu0 %v3604, 107
  %v3969 = vpop.permute.xlu0 %3968
  %3970 = vrot.lane.b32.xlu0 %v3597, 107
  %v3971 = vpop.permute.xlu0 %3970
  %3972 = vrot.lane.b32.xlu0 %v3605, 107
  %v3973 = vpop.permute.xlu0 %3972
  %3974 = vrot.lane.b32.xlu0 %v3598, 107
  %v3975 = vpop.permute.xlu0 %3974
  %3976 = vrot.lane.b32.xlu0 %v3606, 107
  %v3977 = vpop.permute.xlu0 %3976
  %3978 = vrot.lane.b32.xlu0 %v3599, 107
  %v3979 = vpop.permute.xlu0 %3978
  %3980 = vrot.lane.b32.xlu0 %v3607, 107
  %v3981 = vpop.permute.xlu0 %3980
  %v3982 = vsel %vm512, %v3975, %v3979
  %v3983 = vsel %vm512, %v3977, %v3981
  %v3984 = vsel %vm512, %v3971, %v3975
  %v3985 = vsel %vm512, %v3973, %v3977
  %v3986 = vsel %vm512, %v3967, %v3971
  %v3987 = vsel %vm512, %v3969, %v3973
  %v3988 = vsel %vm512, %v3963, %v3967
  %v3989 = vsel %vm512, %v3965, %v3969
  %v3990 = vsel %vm512, %v3959, %v3963
  %v3991 = vsel %vm512, %v3961, %v3965
  %v3992 = vsel %vm512, %v3955, %v3959
  %v3993 = vsel %vm512, %v3957, %v3961
  %v3994 = vsel %vm512, %v3951, %v3955
  %v3995 = vsel %vm512, %v3953, %v3957
  %v3996 = vsel %vm512, %v3979, %v3951
  %v3997 = vsel %vm512, %v3981, %v3953
  %v3998 = vpack.c.bf16 %v3661, %v3660
  %v3999 = vpack.c.bf16 %v3659, %v3658
  %v4000 = vpack.c.bf16 %v3657, %v3656
  %v4001 = vpack.c.bf16 %v3655, %v3654
  %v4002 = vpack.c.bf16 %v3653, %v3652
  %v4003 = vpack.c.bf16 %v3651, %v3650
  %v4004 = vpack.c.bf16 %v3649, %v3648
  %v4005 = vpack.c.bf16 %v3647, %v3646
  %v4006 = vpack.c.bf16 %v3709, %v3708
  %v4007 = vpack.c.bf16 %v3707, %v3706
  %v4008 = vpack.c.bf16 %v3705, %v3704
  %v4009 = vpack.c.bf16 %v3703, %v3702
  %v4010 = vpack.c.bf16 %v3701, %v3700
  %v4011 = vpack.c.bf16 %v3699, %v3698
  %v4012 = vpack.c.bf16 %v3697, %v3696
  %v4013 = vpack.c.bf16 %v3695, %v3694
  %v4014 = vpack.c.bf16 %v3757, %v3756
  %v4015 = vpack.c.bf16 %v3755, %v3754
  %v4016 = vpack.c.bf16 %v3753, %v3752
  %v4017 = vpack.c.bf16 %v3751, %v3750
  %v4018 = vpack.c.bf16 %v3749, %v3748
  %v4019 = vpack.c.bf16 %v3747, %v3746
  %v4020 = vpack.c.bf16 %v3745, %v3744
  %v4021 = vpack.c.bf16 %v3743, %v3742
  %v4022 = vpack.c.bf16 %v3805, %v3804
  %v4023 = vpack.c.bf16 %v3803, %v3802
  %v4024 = vpack.c.bf16 %v3801, %v3800
  %v4025 = vpack.c.bf16 %v3799, %v3798
  %v4026 = vpack.c.bf16 %v3797, %v3796
  %v4027 = vpack.c.bf16 %v3795, %v3794
  %v4028 = vpack.c.bf16 %v3793, %v3792
  %v4029 = vpack.c.bf16 %v3791, %v3790
  %v4030 = vpack.c.bf16 %v3600, %v3592
  %v4031 = vpack.c.bf16 %v3601, %v3593
  %v4032 = vpack.c.bf16 %v3602, %v3594
  %v4033 = vpack.c.bf16 %v3603, %v3595
  %v4034 = vpack.c.bf16 %v3604, %v3596
  %v4035 = vpack.c.bf16 %v3605, %v3597
  %v4036 = vpack.c.bf16 %v3606, %v3598
  %v4037 = vpack.c.bf16 %v3607, %v3599
  %v4038 = vpack.c.bf16 %v3851, %v3850
  %v4039 = vpack.c.bf16 %v3849, %v3848
  %v4040 = vpack.c.bf16 %v3847, %v3846
  %v4041 = vpack.c.bf16 %v3845, %v3844
  %v4042 = vpack.c.bf16 %v3843, %v3842
  %v4043 = vpack.c.bf16 %v3841, %v3840
  %v4044 = vpack.c.bf16 %v3839, %v3838
  %v4045 = vpack.c.bf16 %v3853, %v3852
  %v4046 = vpack.c.bf16 %v3899, %v3898
  %v4047 = vpack.c.bf16 %v3897, %v3896
  %v4048 = vpack.c.bf16 %v3895, %v3894
  %v4049 = vpack.c.bf16 %v3893, %v3892
  %v4050 = vpack.c.bf16 %v3891, %v3890
  %v4051 = vpack.c.bf16 %v3889, %v3888
  %v4052 = vpack.c.bf16 %v3887, %v3886
  %v4053 = vpack.c.bf16 %v3901, %v3900
  %v4054 = vpack.c.bf16 %v3947, %v3946
  %v4055 = vpack.c.bf16 %v3945, %v3944
  %v4056 = vpack.c.bf16 %v3943, %v3942
  %v4057 = vpack.c.bf16 %v3941, %v3940
  %v4058 = vpack.c.bf16 %v3939, %v3938
  %v4059 = vpack.c.bf16 %v3937, %v3936
  %v4060 = vpack.c.bf16 %v3935, %v3934
  %v4061 = vpack.c.bf16 %v3949, %v3948
  %v4062 = vpack.c.bf16 %v3995, %v3994
  %v4063 = vpack.c.bf16 %v3993, %v3992
  %v4064 = vpack.c.bf16 %v3991, %v3990
  %v4065 = vpack.c.bf16 %v3989, %v3988
  %v4066 = vpack.c.bf16 %v3987, %v3986
  %v4067 = vpack.c.bf16 %v3985, %v3984
  %v4068 = vpack.c.bf16 %v3983, %v3982
  %v4069 = vpack.c.bf16 %v3997, %v3996
  %4071 = vset.pattern.permute.xlu0 0
  %4072 = vperm.xlu0 %4071, %v3612
  %v4073 = vpop.permute.xlu0 %4072
  %4076 = vset.pattern.permute.xlu0 0
  %4077 = vperm.xlu0 %4076, %v3613
  %v4078 = vpop.permute.xlu0 %4077
  %v4082 = vunpack.c.l.b16 %v3609
  %v4083 = vunpack.c.h.b16 %v3609
  %v4084 = vunpack.c.l.b16 %v3610
  %v4085 = vunpack.c.h.b16 %v3610
  %v4086 = vpack.c.b16 %v4084, %v4082
  %v4087 = vpack.c.b16 %v4085, %v4083
  %v4090 = vsel %vm2024, %v4087, 0
  %4092 = vmatprep.subr.bf16.mxu0 %v4055
  %4093 = vmatpush1.bf16.msra.mxu0 %v4054
  %4094 = vmatprep.subr.bf16.mxu0 %v4047
  %4095 = vmatpush1.bf16.msra.mxu0 %v4046
  %4096 = vmatprep.subr.bf16.mxu0 %v4039
  %4097 = vmatpush1.bf16.msra.mxu0 %v4038
  %4098 = vmatprep.subr.bf16.mxu0 %v4031
  %4099 = vmatpush1.bf16.msra.mxu0 %v4030
  %4100 = vmatprep.subr.bf16.mxu0 %v4023
  %4101 = vmatpush1.bf16.msra.mxu0 %v4022
  %4102 = vmatprep.subr.bf16.mxu0 %v4015
  %4103 = vmatpush1.bf16.msra.mxu0 %v4014
  %4104 = vmatprep.subr.bf16.mxu0 %v4007
  %4105 = vmatpush1.bf16.msra.mxu0 %v4006
  %4106 = vmatprep.subr.bf16.mxu0 %v3999
  %4107 = vmatpush1.bf16.msra.mxu0 %v3998
  %4108 = vmatprep.subr.bf16.mxu0 0
  %4109 = vmatpush2.bf16.msra.mxu0 0
  %4110 = vmatprep.subr.bf16.mxu0 0
  %4111 = vmatpush2.bf16.msra.mxu0 0
  %4112 = vmatprep.subr.bf16.mxu0 0
  %4113 = vmatpush2.bf16.msra.mxu0 0
  %4114 = vmatprep.subr.bf16.mxu0 0
  %4115 = vmatpush2.bf16.msra.mxu0 0
  %4116 = vmatprep.subr.bf16.mxu0 0
  %4117 = vmatpush2.bf16.msra.mxu0 0
  %4118 = vmatprep.subr.bf16.mxu0 0
  %4119 = vmatpush2.bf16.msra.mxu0 0
  %4120 = vmatprep.subr.bf16.mxu0 0
  %4121 = vmatpush2.bf16.msra.mxu0 0
  %4122 = vmatprep.subr.bf16.mxu0 %v4063
  %4123 = vmatpush2.bf16.msra.mxu0 %v4062
  %4124 = vmatprep.mubr.bf16.mxu0 %v4090
  %4125 = vmatmul.mubr.bf16.gmra.mxu0 %v4086
  %v4126 = vpop.f32.mrf.mxu0
  %v4127 = vadd.f32 %v4073, %v4126
  %v4128 = vpop.f32.mrf.mxu0
  %v4129 = vadd.f32 %v4073, %v4128
  %v4130 = vpop.f32.mrf.mxu0
  %v4131 = vadd.f32 %v4078, %v4130
  %v4132 = vpop.f32.mrf.mxu0
  %v4133 = vadd.f32 %v4078, %v4132
  %4134 = vdwg.mxu0
  %4135 = vmatprep.subr.bf16.mxu0 %v4057
  %4136 = vmatpush1.bf16.msra.mxu0 %v4056
  %4137 = vmatprep.subr.bf16.mxu0 %v4049
  %4138 = vmatpush1.bf16.msra.mxu0 %v4048
  %4139 = vmatprep.subr.bf16.mxu0 %v4041
  %4140 = vmatpush1.bf16.msra.mxu0 %v4040
  %4141 = vmatprep.subr.bf16.mxu0 %v4033
  %4142 = vmatpush1.bf16.msra.mxu0 %v4032
  %4143 = vmatprep.subr.bf16.mxu0 %v4025
  %4144 = vmatpush1.bf16.msra.mxu0 %v4024
  %4145 = vmatprep.subr.bf16.mxu0 %v4017
  %4146 = vmatpush1.bf16.msra.mxu0 %v4016
  %4147 = vmatprep.subr.bf16.mxu0 %v4009
  %4148 = vmatpush1.bf16.msra.mxu0 %v4008
  %4149 = vmatprep.subr.bf16.mxu0 %v4001
  %4150 = vmatpush1.bf16.msra.mxu0 %v4000
  %4151 = vmatprep.subr.bf16.mxu0 0
  %4152 = vmatpush2.bf16.msra.mxu0 0
  %4153 = vmatprep.subr.bf16.mxu0 0
  %4154 = vmatpush2.bf16.msra.mxu0 0
  %4155 = vmatprep.subr.bf16.mxu0 0
  %4156 = vmatpush2.bf16.msra.mxu0 0
  %4157 = vmatprep.subr.bf16.mxu0 0
  %4158 = vmatpush2.bf16.msra.mxu0 0
  %4159 = vmatprep.subr.bf16.mxu0 0
  %4160 = vmatpush2.bf16.msra.mxu0 0
  %4161 = vmatprep.subr.bf16.mxu0 0
  %4162 = vmatpush2.bf16.msra.mxu0 0
  %4163 = vmatprep.subr.bf16.mxu0 0
  %4164 = vmatpush2.bf16.msra.mxu0 0
  %4165 = vmatprep.subr.bf16.mxu0 %v4065
  %4166 = vmatpush2.bf16.msra.mxu0 %v4064
  %4167 = vmatprep.mubr.bf16.mxu0 %v4090
  %4168 = vmatmul.mubr.bf16.gmra.mxu0 %v4086
  %v4169 = vpop.f32.mrf.mxu0
  %v4170 = vadd.f32 %v4073, %v4169
  %v4171 = vpop.f32.mrf.mxu0
  %v4172 = vadd.f32 %v4073, %v4171
  %v4173 = vpop.f32.mrf.mxu0
  %v4174 = vadd.f32 %v4078, %v4173
  %v4175 = vpop.f32.mrf.mxu0
  %v4176 = vadd.f32 %v4078, %v4175
  %4177 = vdwg.mxu0
  %4178 = vmatprep.subr.bf16.mxu0 %v4059
  %4179 = vmatpush1.bf16.msra.mxu0 %v4058
  %4180 = vmatprep.subr.bf16.mxu0 %v4051
  %4181 = vmatpush1.bf16.msra.mxu0 %v4050
  %4182 = vmatprep.subr.bf16.mxu0 %v4043
  %4183 = vmatpush1.bf16.msra.mxu0 %v4042
  %4184 = vmatprep.subr.bf16.mxu0 %v4035
  %4185 = vmatpush1.bf16.msra.mxu0 %v4034
  %4186 = vmatprep.subr.bf16.mxu0 %v4027
  %4187 = vmatpush1.bf16.msra.mxu0 %v4026
  %4188 = vmatprep.subr.bf16.mxu0 %v4019
  %4189 = vmatpush1.bf16.msra.mxu0 %v4018
  %4190 = vmatprep.subr.bf16.mxu0 %v4011
  %4191 = vmatpush1.bf16.msra.mxu0 %v4010
  %4192 = vmatprep.subr.bf16.mxu0 %v4003
  %4193 = vmatpush1.bf16.msra.mxu0 %v4002
  %4194 = vmatprep.subr.bf16.mxu0 0
  %4195 = vmatpush2.bf16.msra.mxu0 0
  %4196 = vmatprep.subr.bf16.mxu0 0
  %4197 = vmatpush2.bf16.msra.mxu0 0
  %4198 = vmatprep.subr.bf16.mxu0 0
  %4199 = vmatpush2.bf16.msra.mxu0 0
  %4200 = vmatprep.subr.bf16.mxu0 0
  %4201 = vmatpush2.bf16.msra.mxu0 0
  %4202 = vmatprep.subr.bf16.mxu0 0
  %4203 = vmatpush2.bf16.msra.mxu0 0
  %4204 = vmatprep.subr.bf16.mxu0 0
  %4205 = vmatpush2.bf16.msra.mxu0 0
  %4206 = vmatprep.subr.bf16.mxu0 0
  %4207 = vmatpush2.bf16.msra.mxu0 0
  %4208 = vmatprep.subr.bf16.mxu0 %v4067
  %4209 = vmatpush2.bf16.msra.mxu0 %v4066
  %4210 = vmatprep.mubr.bf16.mxu0 %v4090
  %4211 = vmatmul.mubr.bf16.gmra.mxu0 %v4086
  %v4212 = vpop.f32.mrf.mxu0
  %v4213 = vadd.f32 %v4073, %v4212
  %v4214 = vpop.f32.mrf.mxu0
  %v4215 = vadd.f32 %v4073, %v4214
  %v4216 = vpop.f32.mrf.mxu0
  %v4217 = vadd.f32 %v4078, %v4216
  %v4218 = vpop.f32.mrf.mxu0
  %v4219 = vadd.f32 %v4078, %v4218
  %4220 = vdwg.mxu0
  %4221 = vmatprep.subr.bf16.mxu0 %v4061
  %4222 = vmatpush1.bf16.msra.mxu0 %v4060
  %4223 = vmatprep.subr.bf16.mxu0 %v4053
  %4224 = vmatpush1.bf16.msra.mxu0 %v4052
  %4225 = vmatprep.subr.bf16.mxu0 %v4045
  %4226 = vmatpush1.bf16.msra.mxu0 %v4044
  %4227 = vmatprep.subr.bf16.mxu0 %v4037
  %4228 = vmatpush1.bf16.msra.mxu0 %v4036
  %4229 = vmatprep.subr.bf16.mxu0 %v4029
  %4230 = vmatpush1.bf16.msra.mxu0 %v4028
  %4231 = vmatprep.subr.bf16.mxu0 %v4021
  %4232 = vmatpush1.bf16.msra.mxu0 %v4020
  %4233 = vmatprep.subr.bf16.mxu0 %v4013
  %4234 = vmatpush1.bf16.msra.mxu0 %v4012
  %4235 = vmatprep.subr.bf16.mxu0 %v4005
  %4236 = vmatpush1.bf16.msra.mxu0 %v4004
  %4237 = vmatprep.subr.bf16.mxu0 0
  %4238 = vmatpush2.bf16.msra.mxu0 0
  %4239 = vmatprep.subr.bf16.mxu0 0
  %4240 = vmatpush2.bf16.msra.mxu0 0
  %4241 = vmatprep.subr.bf16.mxu0 0
  %4242 = vmatpush2.bf16.msra.mxu0 0
  %4243 = vmatprep.subr.bf16.mxu0 0
  %4244 = vmatpush2.bf16.msra.mxu0 0
  %4245 = vmatprep.subr.bf16.mxu0 0
  %4246 = vmatpush2.bf16.msra.mxu0 0
  %4247 = vmatprep.subr.bf16.mxu0 0
  %4248 = vmatpush2.bf16.msra.mxu0 0
  %4249 = vmatprep.subr.bf16.mxu0 0
  %4250 = vmatpush2.bf16.msra.mxu0 0
  %4251 = vmatprep.subr.bf16.mxu0 %v4069
  %4252 = vmatpush2.bf16.msra.mxu0 %v4068
  %4253 = vmatprep.mubr.bf16.mxu0 %v4090
  %4254 = vmatmul.mubr.bf16.gmra.mxu0 %v4086
  %v4255 = vpop.f32.mrf.mxu0
  %v4256 = vadd.f32 %v4073, %v4255
  %v4257 = vpop.f32.mrf.mxu0
  %v4258 = vadd.f32 %v4073, %v4257
  %v4259 = vpop.f32.mrf.mxu0
  %v4260 = vadd.f32 %v4078, %v4259
  %v4261 = vpop.f32.mrf.mxu0
  %v4262 = vadd.f32 %v4078, %v4261
  %4263 = vdwg.mxu0
  %v4264 = vmax.f32 %v4127, 0.0
  %v4265 = vmax.f32 %v4129, 0.0
  %v4266 = vmax.f32 %v4170, 0.0
  %v4267 = vmax.f32 %v4172, 0.0
  %v4268 = vmax.f32 %v4213, 0.0
  %v4269 = vmax.f32 %v4215, 0.0
  %v4270 = vmax.f32 %v4256, 0.0
  %v4271 = vmax.f32 %v4258, 0.0
  %v4272 = vmax.f32 %v4131, 0.0
  %v4273 = vmax.f32 %v4133, 0.0
  %v4274 = vmax.f32 %v4174, 0.0
  %v4275 = vmax.f32 %v4176, 0.0
  %v4276 = vmax.f32 %v4217, 0.0
  %v4277 = vmax.f32 %v4219, 0.0
  %v4278 = vmax.f32 %v4260, 0.0
  %v4279 = vmax.f32 %v4262, 0.0
  %v4280 = vld [vmem:[%s8] sm:$0xf]
  %v4281 = vld [vmem:[%s8 + $0x4] sm:$0xf]
  %v4282 = vld [vmem:[%s8 + $0x8] sm:$0xf]
  %v4283 = vld [vmem:[%s8 + $0xc] sm:$0xf]
  %v4284 = vld [vmem:[%s8 + $0x10] sm:$0xf]
  %v4285 = vld [vmem:[%s8 + $0x14] sm:$0xf]
  %v4286 = vld [vmem:[%s8 + $0x18] sm:$0xf]
  %v4287 = vld [vmem:[%s9] sm:$0xff]
  %v4288 = vld [vmem:[%s9 + $0x8] sm:$0xff]
  %v4289 = vld [vmem:[%s9 + $0x10] sm:$0xff]
  %v4290 = vld [vmem:[%s9 + $0x18] sm:$0xff]
  %v4291 = vld [vmem:[%s9 + $0x20] sm:$0xff]
  %v4292 = vld [vmem:[%s9 + $0x28] sm:$0xff]
  %v4293 = vld [vmem:[%s9 + $0x30] sm:$0xff]
  %v4294 = vpack.c.bf16 %v4272, %v4264
  %v4295 = vpack.c.bf16 %v4273, %v4265
  %v4296 = vpack.c.bf16 %v4274, %v4266
  %v4297 = vpack.c.bf16 %v4275, %v4267
  %v4298 = vpack.c.bf16 %v4276, %v4268
  %v4299 = vpack.c.bf16 %v4277, %v4269
  %v4300 = vpack.c.bf16 %v4278, %v4270
  %v4301 = vpack.c.bf16 %v4279, %v4271
  %4303 = vset.pattern.permute.xlu0 0
  %4304 = vperm.xlu0 %4303, %v4287
  %v4305 = vpop.permute.xlu0 %4304
  %4308 = vset.pattern.permute.xlu0 0
  %4309 = vperm.xlu0 %4308, %v4288
  %v4310 = vpop.permute.xlu0 %4309
  %4313 = vset.pattern.permute.xlu0 0
  %4314 = vperm.xlu0 %4313, %v4289
  %v4315 = vpop.permute.xlu0 %4314
  %4318 = vset.pattern.permute.xlu0 0
  %4319 = vperm.xlu0 %4318, %v4290
  %v4320 = vpop.permute.xlu0 %4319
  %4323 = vset.pattern.permute.xlu0 0
  %4324 = vperm.xlu0 %4323, %v4291
  %v4325 = vpop.permute.xlu0 %4324
  %4328 = vset.pattern.permute.xlu0 0
  %4329 = vperm.xlu0 %4328, %v4292
  %v4330 = vpop.permute.xlu0 %4329
  %4333 = vset.pattern.permute.xlu0 0
  %4334 = vperm.xlu0 %4333, %v4293
  %v4335 = vpop.permute.xlu0 %4334
  %v4344 = vunpack.c.l.b16 %v4280
  %v4345 = vunpack.c.l.b16 %v4281
  %v4346 = vunpack.c.l.b16 %v4282
  %v4347 = vunpack.c.l.b16 %v4283
  %v4348 = vunpack.c.l.b16 %v4284
  %v4349 = vunpack.c.l.b16 %v4285
  %v4350 = vunpack.c.l.b16 %v4286
  %v4351 = vpack.c.b16 %v4345, %v4344
  %v4352 = vpack.c.b16 %v4347, %v4346
  %v4353 = vpack.c.b16 %v4349, %v4348
  %v4354 = vpack.c.b16 %v4350, %v4350
  %v4356 = vsel %vm2024, %v4351, 0
  %v4359 = vsel %vm2024, %v4352, 0
  %v4362 = vsel %vm2024, %v4353, 0
  %v4365 = vsel %vm2024, %v4354, 0
  %4367 = vmatprep.subr.bf16.mxu0 0
  %4368 = vmatpush1.bf16.msra.mxu0 0
  %4369 = vmatprep.subr.bf16.mxu0 0
  %4370 = vmatpush1.bf16.msra.mxu0 0
  %4371 = vmatprep.subr.bf16.mxu0 0
  %4372 = vmatpush1.bf16.msra.mxu0 0
  %4373 = vmatprep.subr.bf16.mxu0 0
  %4374 = vmatpush1.bf16.msra.mxu0 0
  %4375 = vmatprep.subr.bf16.mxu0 0
  %4376 = vmatpush1.bf16.msra.mxu0 0
  %4377 = vmatprep.subr.bf16.mxu0 0
  %4378 = vmatpush1.bf16.msra.mxu0 0
  %4379 = vmatprep.subr.bf16.mxu0 0
  %4380 = vmatpush1.bf16.msra.mxu0 0
  %4381 = vmatprep.subr.bf16.mxu0 %v4295
  %4382 = vmatpush1.bf16.msra.mxu0 %v4294
  %4383 = vmatprep.subr.bf16.mxu0 0
  %4384 = vmatpush2.bf16.msra.mxu0 0
  %4385 = vmatprep.subr.bf16.mxu0 0
  %4386 = vmatpush2.bf16.msra.mxu0 0
  %4387 = vmatprep.subr.bf16.mxu0 0
  %4388 = vmatpush2.bf16.msra.mxu0 0
  %4389 = vmatprep.subr.bf16.mxu0 0
  %4390 = vmatpush2.bf16.msra.mxu0 0
  %4391 = vmatprep.subr.bf16.mxu0 0
  %4392 = vmatpush2.bf16.msra.mxu0 0
  %4393 = vmatprep.subr.bf16.mxu0 0
  %4394 = vmatpush2.bf16.msra.mxu0 0
  %4395 = vmatprep.subr.bf16.mxu0 0
  %4396 = vmatpush2.bf16.msra.mxu0 0
  %4397 = vmatprep.subr.bf16.mxu0 0
  %4398 = vmatpush2.bf16.msra.mxu0 0
  %4399 = vmatprep.mubr.bf16.mxu0 0
  %4400 = vmatmul.mubr.bf16.gmra.mxu0 %v4356
  %v4401 = vpop.f32.mrf.mxu0
  %v4402 = vadd.f32 %v4305, %v4401
  %v4403 = vpop.f32.mrf.mxu0
  %v4404 = vadd.f32 %v4305, %v4403
  %v4405 = vpop.f32.mrf.mxu0
  %v4406 = vadd.f32 %v4310, %v4405
  %v4407 = vpop.f32.mrf.mxu0
  %v4408 = vadd.f32 %v4310, %v4407
  %4409 = vmatprep.mubr.bf16.mxu0 0
  %4410 = vmatmul.mubr.bf16.gmra.mxu0 %v4359
  %v4411 = vpop.f32.mrf.mxu0
  %v4412 = vadd.f32 %v4315, %v4411
  %v4413 = vpop.f32.mrf.mxu0
  %v4414 = vadd.f32 %v4315, %v4413
  %v4415 = vpop.f32.mrf.mxu0
  %v4416 = vadd.f32 %v4320, %v4415
  %v4417 = vpop.f32.mrf.mxu0
  %v4418 = vadd.f32 %v4320, %v4417
  %4419 = vmatprep.mubr.bf16.mxu0 0
  %4420 = vmatmul.mubr.bf16.gmra.mxu0 %v4362
  %v4421 = vpop.f32.mrf.mxu0
  %v4422 = vadd.f32 %v4325, %v4421
  %v4423 = vpop.f32.mrf.mxu0
  %v4424 = vadd.f32 %v4325, %v4423
  %v4425 = vpop.f32.mrf.mxu0
  %v4426 = vadd.f32 %v4330, %v4425
  %v4427 = vpop.f32.mrf.mxu0
  %v4428 = vadd.f32 %v4330, %v4427
  %4429 = vmatprep.mubr.bf16.mxu0 0
  %4430 = vmatmul.mubr.bf16.gmra.mxu0 %v4365
  %v4431 = vpop.f32.mrf.mxu0
  %v4432 = vadd.f32 %v4335, %v4431
  %v4433 = vpop.f32.mrf.mxu0
  %v4434 = vadd.f32 %v4335, %v4433
  %v4435 = vpop.f32.mrf.mxu0
  %v4436 = vpop.f32.mrf.mxu0
  %4437 = vdwg.mxu0
  %4438 = vmatprep.subr.bf16.mxu0 0
  %4439 = vmatpush1.bf16.msra.mxu0 0
  %4440 = vmatprep.subr.bf16.mxu0 0
  %4441 = vmatpush1.bf16.msra.mxu0 0
  %4442 = vmatprep.subr.bf16.mxu0 0
  %4443 = vmatpush1.bf16.msra.mxu0 0
  %4444 = vmatprep.subr.bf16.mxu0 0
  %4445 = vmatpush1.bf16.msra.mxu0 0
  %4446 = vmatprep.subr.bf16.mxu0 0
  %4447 = vmatpush1.bf16.msra.mxu0 0
  %4448 = vmatprep.subr.bf16.mxu0 0
  %4449 = vmatpush1.bf16.msra.mxu0 0
  %4450 = vmatprep.subr.bf16.mxu0 0
  %4451 = vmatpush1.bf16.msra.mxu0 0
  %4452 = vmatprep.subr.bf16.mxu0 %v4297
  %4453 = vmatpush1.bf16.msra.mxu0 %v4296
  %4454 = vmatprep.subr.bf16.mxu0 0
  %4455 = vmatpush2.bf16.msra.mxu0 0
  %4456 = vmatprep.subr.bf16.mxu0 0
  %4457 = vmatpush2.bf16.msra.mxu0 0
  %4458 = vmatprep.subr.bf16.mxu0 0
  %4459 = vmatpush2.bf16.msra.mxu0 0
  %4460 = vmatprep.subr.bf16.mxu0 0
  %4461 = vmatpush2.bf16.msra.mxu0 0
  %4462 = vmatprep.subr.bf16.mxu0 0
  %4463 = vmatpush2.bf16.msra.mxu0 0
  %4464 = vmatprep.subr.bf16.mxu0 0
  %4465 = vmatpush2.bf16.msra.mxu0 0
  %4466 = vmatprep.subr.bf16.mxu0 0
  %4467 = vmatpush2.bf16.msra.mxu0 0
  %4468 = vmatprep.subr.bf16.mxu0 0
  %4469 = vmatpush2.bf16.msra.mxu0 0
  %4470 = vmatprep.mubr.bf16.mxu0 0
  %4471 = vmatmul.mubr.bf16.gmra.mxu0 %v4356
  %v4472 = vpop.f32.mrf.mxu0
  %v4473 = vadd.f32 %v4305, %v4472
  %v4474 = vpop.f32.mrf.mxu0
  %v4475 = vadd.f32 %v4305, %v4474
  %v4476 = vpop.f32.mrf.mxu0
  %v4477 = vadd.f32 %v4310, %v4476
  %v4478 = vpop.f32.mrf.mxu0
  %v4479 = vadd.f32 %v4310, %v4478
  %4480 = vmatprep.mubr.bf16.mxu0 0
  %4481 = vmatmul.mubr.bf16.gmra.mxu0 %v4359
  %v4482 = vpop.f32.mrf.mxu0
  %v4483 = vadd.f32 %v4315, %v4482
  %v4484 = vpop.f32.mrf.mxu0
  %v4485 = vadd.f32 %v4315, %v4484
  %v4486 = vpop.f32.mrf.mxu0
  %v4487 = vadd.f32 %v4320, %v4486
  %v4488 = vpop.f32.mrf.mxu0
  %v4489 = vadd.f32 %v4320, %v4488
  %4490 = vmatprep.mubr.bf16.mxu0 0
  %4491 = vmatmul.mubr.bf16.gmra.mxu0 %v4362
  %v4492 = vpop.f32.mrf.mxu0
  %v4493 = vadd.f32 %v4325, %v4492
  %v4494 = vpop.f32.mrf.mxu0
  %v4495 = vadd.f32 %v4325, %v4494
  %v4496 = vpop.f32.mrf.mxu0
  %v4497 = vadd.f32 %v4330, %v4496
  %v4498 = vpop.f32.mrf.mxu0
  %v4499 = vadd.f32 %v4330, %v4498
  %4500 = vmatprep.mubr.bf16.mxu0 0
  %4501 = vmatmul.mubr.bf16.gmra.mxu0 %v4365
  %v4502 = vpop.f32.mrf.mxu0
  %v4503 = vadd.f32 %v4335, %v4502
  %v4504 = vpop.f32.mrf.mxu0
  %v4505 = vadd.f32 %v4335, %v4504
  %v4506 = vpop.f32.mrf.mxu0
  %v4507 = vpop.f32.mrf.mxu0
  %4508 = vdwg.mxu0
  %4509 = vmatprep.subr.bf16.mxu0 0
  %4510 = vmatpush1.bf16.msra.mxu0 0
  %4511 = vmatprep.subr.bf16.mxu0 0
  %4512 = vmatpush1.bf16.msra.mxu0 0
  %4513 = vmatprep.subr.bf16.mxu0 0
  %4514 = vmatpush1.bf16.msra.mxu0 0
  %4515 = vmatprep.subr.bf16.mxu0 0
  %4516 = vmatpush1.bf16.msra.mxu0 0
  %4517 = vmatprep.subr.bf16.mxu0 0
  %4518 = vmatpush1.bf16.msra.mxu0 0
  %4519 = vmatprep.subr.bf16.mxu0 0
  %4520 = vmatpush1.bf16.msra.mxu0 0
  %4521 = vmatprep.subr.bf16.mxu0 0
  %4522 = vmatpush1.bf16.msra.mxu0 0
  %4523 = vmatprep.subr.bf16.mxu0 %v4299
  %4524 = vmatpush1.bf16.msra.mxu0 %v4298
  %4525 = vmatprep.subr.bf16.mxu0 0
  %4526 = vmatpush2.bf16.msra.mxu0 0
  %4527 = vmatprep.subr.bf16.mxu0 0
  %4528 = vmatpush2.bf16.msra.mxu0 0
  %4529 = vmatprep.subr.bf16.mxu0 0
  %4530 = vmatpush2.bf16.msra.mxu0 0
  %4531 = vmatprep.subr.bf16.mxu0 0
  %4532 = vmatpush2.bf16.msra.mxu0 0
  %4533 = vmatprep.subr.bf16.mxu0 0
  %4534 = vmatpush2.bf16.msra.mxu0 0
  %4535 = vmatprep.subr.bf16.mxu0 0
  %4536 = vmatpush2.bf16.msra.mxu0 0
  %4537 = vmatprep.subr.bf16.mxu0 0
  %4538 = vmatpush2.bf16.msra.mxu0 0
  %4539 = vmatprep.subr.bf16.mxu0 0
  %4540 = vmatpush2.bf16.msra.mxu0 0
  %4541 = vmatprep.mubr.bf16.mxu0 0
  %4542 = vmatmul.mubr.bf16.gmra.mxu0 %v4356
  %v4543 = vpop.f32.mrf.mxu0
  %v4544 = vadd.f32 %v4305, %v4543
  %v4545 = vpop.f32.mrf.mxu0
  %v4546 = vadd.f32 %v4305, %v4545
  %v4547 = vpop.f32.mrf.mxu0
  %v4548 = vadd.f32 %v4310, %v4547
  %v4549 = vpop.f32.mrf.mxu0
  %v4550 = vadd.f32 %v4310, %v4549
  %4551 = vmatprep.mubr.bf16.mxu0 0
  %4552 = vmatmul.mubr.bf16.gmra.mxu0 %v4359
  %v4553 = vpop.f32.mrf.mxu0
  %v4554 = vadd.f32 %v4315, %v4553
  %v4555 = vpop.f32.mrf.mxu0
  %v4556 = vadd.f32 %v4315, %v4555
  %v4557 = vpop.f32.mrf.mxu0
  %v4558 = vadd.f32 %v4320, %v4557
  %v4559 = vpop.f32.mrf.mxu0
  %v4560 = vadd.f32 %v4320, %v4559
  %4561 = vmatprep.mubr.bf16.mxu0 0
  %4562 = vmatmul.mubr.bf16.gmra.mxu0 %v4362
  %v4563 = vpop.f32.mrf.mxu0
  %v4564 = vadd.f32 %v4325, %v4563
  %v4565 = vpop.f32.mrf.mxu0
  %v4566 = vadd.f32 %v4325, %v4565
  %v4567 = vpop.f32.mrf.mxu0
  %v4568 = vadd.f32 %v4330, %v4567
  %v4569 = vpop.f32.mrf.mxu0
  %v4570 = vadd.f32 %v4330, %v4569
  %4571 = vmatprep.mubr.bf16.mxu0 0
  %4572 = vmatmul.mubr.bf16.gmra.mxu0 %v4365
  %v4573 = vpop.f32.mrf.mxu0
  %v4574 = vadd.f32 %v4335, %v4573
  %v4575 = vpop.f32.mrf.mxu0
  %v4576 = vadd.f32 %v4335, %v4575
  %v4577 = vpop.f32.mrf.mxu0
  %v4578 = vpop.f32.mrf.mxu0
  %4579 = vdwg.mxu0
  %4580 = vmatprep.subr.bf16.mxu0 0
  %4581 = vmatpush1.bf16.msra.mxu0 0
  %4582 = vmatprep.subr.bf16.mxu0 0
  %4583 = vmatpush1.bf16.msra.mxu0 0
  %4584 = vmatprep.subr.bf16.mxu0 0
  %4585 = vmatpush1.bf16.msra.mxu0 0
  %4586 = vmatprep.subr.bf16.mxu0 0
  %4587 = vmatpush1.bf16.msra.mxu0 0
  %4588 = vmatprep.subr.bf16.mxu0 0
  %4589 = vmatpush1.bf16.msra.mxu0 0
  %4590 = vmatprep.subr.bf16.mxu0 0
  %4591 = vmatpush1.bf16.msra.mxu0 0
  %4592 = vmatprep.subr.bf16.mxu0 0
  %4593 = vmatpush1.bf16.msra.mxu0 0
  %4594 = vmatprep.subr.bf16.mxu0 %v4301
  %4595 = vmatpush1.bf16.msra.mxu0 %v4300
  %4596 = vmatprep.subr.bf16.mxu0 0
  %4597 = vmatpush2.bf16.msra.mxu0 0
  %4598 = vmatprep.subr.bf16.mxu0 0
  %4599 = vmatpush2.bf16.msra.mxu0 0
  %4600 = vmatprep.subr.bf16.mxu0 0
  %4601 = vmatpush2.bf16.msra.mxu0 0
  %4602 = vmatprep.subr.bf16.mxu0 0
  %4603 = vmatpush2.bf16.msra.mxu0 0
  %4604 = vmatprep.subr.bf16.mxu0 0
  %4605 = vmatpush2.bf16.msra.mxu0 0
  %4606 = vmatprep.subr.bf16.mxu0 0
  %4607 = vmatpush2.bf16.msra.mxu0 0
  %4608 = vmatprep.subr.bf16.mxu0 0
  %4609 = vmatpush2.bf16.msra.mxu0 0
  %4610 = vmatprep.subr.bf16.mxu0 0
  %4611 = vmatpush2.bf16.msra.mxu0 0
  %4612 = vmatprep.mubr.bf16.mxu0 0
  %4613 = vmatmul.mubr.bf16.gmra.mxu0 %v4356
  %v4614 = vpop.f32.mrf.mxu0
  %v4615 = vadd.f32 %v4305, %v4614
  %v4616 = vpop.f32.mrf.mxu0
  %v4617 = vadd.f32 %v4305, %v4616
  %v4618 = vpop.f32.mrf.mxu0
  %v4619 = vadd.f32 %v4310, %v4618
  %v4620 = vpop.f32.mrf.mxu0
  %v4621 = vadd.f32 %v4310, %v4620
  %4622 = vmatprep.mubr.bf16.mxu0 0
  %4623 = vmatmul.mubr.bf16.gmra.mxu0 %v4359
  %v4624 = vpop.f32.mrf.mxu0
  %v4625 = vadd.f32 %v4315, %v4624
  %v4626 = vpop.f32.mrf.mxu0
  %v4627 = vadd.f32 %v4315, %v4626
  %v4628 = vpop.f32.mrf.mxu0
  %v4629 = vadd.f32 %v4320, %v4628
  %v4630 = vpop.f32.mrf.mxu0
  %v4631 = vadd.f32 %v4320, %v4630
  %4632 = vmatprep.mubr.bf16.mxu0 0
  %4633 = vmatmul.mubr.bf16.gmra.mxu0 %v4362
  %v4634 = vpop.f32.mrf.mxu0
  %v4635 = vadd.f32 %v4325, %v4634
  %v4636 = vpop.f32.mrf.mxu0
  %v4637 = vadd.f32 %v4325, %v4636
  %v4638 = vpop.f32.mrf.mxu0
  %v4639 = vadd.f32 %v4330, %v4638
  %v4640 = vpop.f32.mrf.mxu0
  %v4641 = vadd.f32 %v4330, %v4640
  %4642 = vmatprep.mubr.bf16.mxu0 0
  %4643 = vmatmul.mubr.bf16.gmra.mxu0 %v4365
  %v4644 = vpop.f32.mrf.mxu0
  %v4645 = vadd.f32 %v4335, %v4644
  %v4646 = vpop.f32.mrf.mxu0
  %v4647 = vadd.f32 %v4335, %v4646
  %v4648 = vpop.f32.mrf.mxu0
  %v4649 = vpop.f32.mrf.mxu0
  %4650 = vdwg.mxu0
  %v4651 = vmax.f32 %v4402, 0.0
  %v4652 = vmax.f32 %v4404, 0.0
  %v4653 = vmax.f32 %v4473, 0.0
  %v4654 = vmax.f32 %v4475, 0.0
  %v4655 = vmax.f32 %v4544, 0.0
  %v4656 = vmax.f32 %v4546, 0.0
  %v4657 = vmax.f32 %v4615, 0.0
  %v4658 = vmax.f32 %v4617, 0.0
  %v4659 = vmax.f32 %v4406, 0.0
  %v4660 = vmax.f32 %v4408, 0.0
  %v4661 = vmax.f32 %v4477, 0.0
  %v4662 = vmax.f32 %v4479, 0.0
  %v4663 = vmax.f32 %v4548, 0.0
  %v4664 = vmax.f32 %v4550, 0.0
  %v4665 = vmax.f32 %v4619, 0.0
  %v4666 = vmax.f32 %v4621, 0.0
  %v4667 = vmax.f32 %v4412, 0.0
  %v4668 = vmax.f32 %v4414, 0.0
  %v4669 = vmax.f32 %v4483, 0.0
  %v4670 = vmax.f32 %v4485, 0.0
  %v4671 = vmax.f32 %v4554, 0.0
  %v4672 = vmax.f32 %v4556, 0.0
  %v4673 = vmax.f32 %v4625, 0.0
  %v4674 = vmax.f32 %v4627, 0.0
  %v4675 = vmax.f32 %v4416, 0.0
  %v4676 = vmax.f32 %v4418, 0.0
  %v4677 = vmax.f32 %v4487, 0.0
  %v4678 = vmax.f32 %v4489, 0.0
  %v4679 = vmax.f32 %v4558, 0.0
  %v4680 = vmax.f32 %v4560, 0.0
  %v4681 = vmax.f32 %v4629, 0.0
  %v4682 = vmax.f32 %v4631, 0.0
  %v4683 = vmax.f32 %v4422, 0.0
  %v4684 = vmax.f32 %v4424, 0.0
  %v4685 = vmax.f32 %v4493, 0.0
  %v4686 = vmax.f32 %v4495, 0.0
  %v4687 = vmax.f32 %v4564, 0.0
  %v4688 = vmax.f32 %v4566, 0.0
  %v4689 = vmax.f32 %v4635, 0.0
  %v4690 = vmax.f32 %v4637, 0.0
  %v4691 = vmax.f32 %v4426, 0.0
  %v4692 = vmax.f32 %v4428, 0.0
  %v4693 = vmax.f32 %v4497, 0.0
  %v4694 = vmax.f32 %v4499, 0.0
  %v4695 = vmax.f32 %v4568, 0.0
  %v4696 = vmax.f32 %v4570, 0.0
  %v4697 = vmax.f32 %v4639, 0.0
  %v4698 = vmax.f32 %v4641, 0.0
  %v4699 = vmax.f32 %v4432, 0.0
  %v4700 = vmax.f32 %v4434, 0.0
  %v4701 = vmax.f32 %v4503, 0.0
  %v4702 = vmax.f32 %v4505, 0.0
  %v4703 = vmax.f32 %v4574, 0.0
  %v4704 = vmax.f32 %v4576, 0.0
  %v4705 = vmax.f32 %v4645, 0.0
  %v4706 = vmax.f32 %v4647, 0.0
  %v4707 = vmul.f32 %v4651, %v1492
  %v4708 = vmul.f32 %v4652, %v1496
  %v4709 = vmul.f32 %v4653, %v1500
  %v4710 = vmul.f32 %v4654, %v1504
  %v4711 = vmul.f32 %v4655, %v1508
  %v4712 = vmul.f32 %v4656, %v1512
  %v4713 = vmul.f32 %v4657, %v1516
  %v4714 = vmul.f32 %v4658, %v1520
  %v4715 = vmul.f32 %v4659, %v1492
  %v4716 = vmul.f32 %v4660, %v1496
  %v4717 = vmul.f32 %v4661, %v1500
  %v4718 = vmul.f32 %v4662, %v1504
  %v4719 = vmul.f32 %v4663, %v1508
  %v4720 = vmul.f32 %v4664, %v1512
  %v4721 = vmul.f32 %v4665, %v1516
  %v4722 = vmul.f32 %v4666, %v1520
  %v4723 = vmul.f32 %v4667, %v1492
  %v4724 = vmul.f32 %v4668, %v1496
  %v4725 = vmul.f32 %v4669, %v1500
  %v4726 = vmul.f32 %v4670, %v1504
  %v4727 = vmul.f32 %v4671, %v1508
  %v4728 = vmul.f32 %v4672, %v1512
  %v4729 = vmul.f32 %v4673, %v1516
  %v4730 = vmul.f32 %v4674, %v1520
  %v4731 = vmul.f32 %v4675, %v1492
  %v4732 = vmul.f32 %v4676, %v1496
  %v4733 = vmul.f32 %v4677, %v1500
  %v4734 = vmul.f32 %v4678, %v1504
  %v4735 = vmul.f32 %v4679, %v1508
  %v4736 = vmul.f32 %v4680, %v1512
  %v4737 = vmul.f32 %v4681, %v1516
  %v4738 = vmul.f32 %v4682, %v1520
  %v4739 = vmul.f32 %v4683, %v1492
  %v4740 = vmul.f32 %v4684, %v1496
  %v4741 = vmul.f32 %v4685, %v1500
  %v4742 = vmul.f32 %v4686, %v1504
  %v4743 = vmul.f32 %v4687, %v1508
  %v4744 = vmul.f32 %v4688, %v1512
  %v4745 = vmul.f32 %v4689, %v1516
  %v4746 = vmul.f32 %v4690, %v1520
  %v4747 = vmul.f32 %v4691, %v1492
  %v4748 = vmul.f32 %v4692, %v1496
  %v4749 = vmul.f32 %v4693, %v1500
  %v4750 = vmul.f32 %v4694, %v1504
  %v4751 = vmul.f32 %v4695, %v1508
  %v4752 = vmul.f32 %v4696, %v1512
  %v4753 = vmul.f32 %v4697, %v1516
  %v4754 = vmul.f32 %v4698, %v1520
  %v4755 = vmul.f32 %v4699, %v1492
  %v4756 = vmul.f32 %v4700, %v1496
  %v4757 = vmul.f32 %v4701, %v1500
  %v4758 = vmul.f32 %v4702, %v1504
  %v4759 = vmul.f32 %v4703, %v1508
  %v4760 = vmul.f32 %v4704, %v1512
  %v4761 = vmul.f32 %v4705, %v1516
  %v4762 = vmul.f32 %v4706, %v1520
  %v4763 = vld [vmem:[%s10] sm:$0xff]
  %v4764 = vld [vmem:[%s10 + $0x8] sm:$0xff]
  %v4765 = vld [vmem:[%s10 + $0x10] sm:$0x33]
  %v4766 = vld [vmem:[%s10 + $0x18] sm:$0x33]
  %v4767 = vld [vmem:[%s11] sm:$0xff]
  %v4768 = vld [vmem:[%s11 + $0x8] sm:$0xf]
  %4769 = vrot.lane.b32.xlu0 %v4707, 21
  %v4770 = vpop.permute.xlu0 %4769
  %4771 = vrot.lane.b32.xlu0 %v4715, 21
  %v4772 = vpop.permute.xlu0 %4771
  %4773 = vrot.lane.b32.xlu0 %v4723, 21
  %v4774 = vpop.permute.xlu0 %4773
  %4775 = vrot.lane.b32.xlu0 %v4731, 21
  %v4776 = vpop.permute.xlu0 %4775
  %4777 = vrot.lane.b32.xlu0 %v4739, 21
  %v4778 = vpop.permute.xlu0 %4777
  %4779 = vrot.lane.b32.xlu0 %v4747, 21
  %v4780 = vpop.permute.xlu0 %4779
  %4781 = vrot.lane.b32.xlu0 %v4755, 21
  %v4782 = vpop.permute.xlu0 %4781
  %4783 = vrot.lane.b32.xlu0 %v4708, 21
  %v4784 = vpop.permute.xlu0 %4783
  %4785 = vrot.lane.b32.xlu0 %v4716, 21
  %v4786 = vpop.permute.xlu0 %4785
  %4787 = vrot.lane.b32.xlu0 %v4724, 21
  %v4788 = vpop.permute.xlu0 %4787
  %4789 = vrot.lane.b32.xlu0 %v4732, 21
  %v4790 = vpop.permute.xlu0 %4789
  %4791 = vrot.lane.b32.xlu0 %v4740, 21
  %v4792 = vpop.permute.xlu0 %4791
  %4793 = vrot.lane.b32.xlu0 %v4748, 21
  %v4794 = vpop.permute.xlu0 %4793
  %4795 = vrot.lane.b32.xlu0 %v4756, 21
  %v4796 = vpop.permute.xlu0 %4795
  %4797 = vrot.lane.b32.xlu0 %v4709, 21
  %v4798 = vpop.permute.xlu0 %4797
  %4799 = vrot.lane.b32.xlu0 %v4717, 21
  %v4800 = vpop.permute.xlu0 %4799
  %4801 = vrot.lane.b32.xlu0 %v4725, 21
  %v4802 = vpop.permute.xlu0 %4801
  %4803 = vrot.lane.b32.xlu0 %v4733, 21
  %v4804 = vpop.permute.xlu0 %4803
  %4805 = vrot.lane.b32.xlu0 %v4741, 21
  %v4806 = vpop.permute.xlu0 %4805
  %4807 = vrot.lane.b32.xlu0 %v4749, 21
  %v4808 = vpop.permute.xlu0 %4807
  %4809 = vrot.lane.b32.xlu0 %v4757, 21
  %v4810 = vpop.permute.xlu0 %4809
  %4811 = vrot.lane.b32.xlu0 %v4710, 21
  %v4812 = vpop.permute.xlu0 %4811
  %4813 = vrot.lane.b32.xlu0 %v4718, 21
  %v4814 = vpop.permute.xlu0 %4813
  %4815 = vrot.lane.b32.xlu0 %v4726, 21
  %v4816 = vpop.permute.xlu0 %4815
  %4817 = vrot.lane.b32.xlu0 %v4734, 21
  %v4818 = vpop.permute.xlu0 %4817
  %4819 = vrot.lane.b32.xlu0 %v4742, 21
  %v4820 = vpop.permute.xlu0 %4819
  %4821 = vrot.lane.b32.xlu0 %v4750, 21
  %v4822 = vpop.permute.xlu0 %4821
  %4823 = vrot.lane.b32.xlu0 %v4758, 21
  %v4824 = vpop.permute.xlu0 %4823
  %4825 = vrot.lane.b32.xlu0 %v4711, 21
  %v4826 = vpop.permute.xlu0 %4825
  %4827 = vrot.lane.b32.xlu0 %v4719, 21
  %v4828 = vpop.permute.xlu0 %4827
  %4829 = vrot.lane.b32.xlu0 %v4727, 21
  %v4830 = vpop.permute.xlu0 %4829
  %4831 = vrot.lane.b32.xlu0 %v4735, 21
  %v4832 = vpop.permute.xlu0 %4831
  %4833 = vrot.lane.b32.xlu0 %v4743, 21
  %v4834 = vpop.permute.xlu0 %4833
  %4835 = vrot.lane.b32.xlu0 %v4751, 21
  %v4836 = vpop.permute.xlu0 %4835
  %4837 = vrot.lane.b32.xlu0 %v4759, 21
  %v4838 = vpop.permute.xlu0 %4837
  %4839 = vrot.lane.b32.xlu0 %v4712, 21
  %v4840 = vpop.permute.xlu0 %4839
  %4841 = vrot.lane.b32.xlu0 %v4720, 21
  %v4842 = vpop.permute.xlu0 %4841
  %4843 = vrot.lane.b32.xlu0 %v4728, 21
  %v4844 = vpop.permute.xlu0 %4843
  %4845 = vrot.lane.b32.xlu0 %v4736, 21
  %v4846 = vpop.permute.xlu0 %4845
  %4847 = vrot.lane.b32.xlu0 %v4744, 21
  %v4848 = vpop.permute.xlu0 %4847
  %4849 = vrot.lane.b32.xlu0 %v4752, 21
  %v4850 = vpop.permute.xlu0 %4849
  %4851 = vrot.lane.b32.xlu0 %v4760, 21
  %v4852 = vpop.permute.xlu0 %4851
  %4853 = vrot.lane.b32.xlu0 %v4713, 21
  %v4854 = vpop.permute.xlu0 %4853
  %4855 = vrot.lane.b32.xlu0 %v4721, 21
  %v4856 = vpop.permute.xlu0 %4855
  %4857 = vrot.lane.b32.xlu0 %v4729, 21
  %v4858 = vpop.permute.xlu0 %4857
  %4859 = vrot.lane.b32.xlu0 %v4737, 21
  %v4860 = vpop.permute.xlu0 %4859
  %4861 = vrot.lane.b32.xlu0 %v4745, 21
  %v4862 = vpop.permute.xlu0 %4861
  %4863 = vrot.lane.b32.xlu0 %v4753, 21
  %v4864 = vpop.permute.xlu0 %4863
  %4865 = vrot.lane.b32.xlu0 %v4761, 21
  %v4866 = vpop.permute.xlu0 %4865
  %4867 = vrot.lane.b32.xlu0 %v4714, 21
  %v4868 = vpop.permute.xlu0 %4867
  %4869 = vrot.lane.b32.xlu0 %v4722, 21
  %v4870 = vpop.permute.xlu0 %4869
  %4871 = vrot.lane.b32.xlu0 %v4730, 21
  %v4872 = vpop.permute.xlu0 %4871
  %4873 = vrot.lane.b32.xlu0 %v4738, 21
  %v4874 = vpop.permute.xlu0 %4873
  %4875 = vrot.lane.b32.xlu0 %v4746, 21
  %v4876 = vpop.permute.xlu0 %4875
  %4877 = vrot.lane.b32.xlu0 %v4754, 21
  %v4878 = vpop.permute.xlu0 %4877
  %4879 = vrot.lane.b32.xlu0 %v4762, 21
  %v4880 = vpop.permute.xlu0 %4879
  %v4881 = vsel %vm237, %v4854, %v4868
  %v4882 = vsel %vm237, %v4856, %v4870
  %v4883 = vsel %vm237, %v4858, %v4872
  %v4884 = vsel %vm237, %v4860, %v4874
  %v4885 = vsel %vm237, %v4862, %v4876
  %v4886 = vsel %vm237, %v4864, %v4878
  %v4887 = vsel %vm237, %v4866, %v4880
  %v4888 = vsel %vm237, %v4840, %v4854
  %v4889 = vsel %vm237, %v4842, %v4856
  %v4890 = vsel %vm237, %v4844, %v4858
  %v4891 = vsel %vm237, %v4846, %v4860
  %v4892 = vsel %vm237, %v4848, %v4862
  %v4893 = vsel %vm237, %v4850, %v4864
  %v4894 = vsel %vm237, %v4852, %v4866
  %v4895 = vsel %vm237, %v4826, %v4840
  %v4896 = vsel %vm237, %v4828, %v4842
  %v4897 = vsel %vm237, %v4830, %v4844
  %v4898 = vsel %vm237, %v4832, %v4846
  %v4899 = vsel %vm237, %v4834, %v4848
  %v4900 = vsel %vm237, %v4836, %v4850
  %v4901 = vsel %vm237, %v4838, %v4852
  %v4902 = vsel %vm237, %v4812, %v4826
  %v4903 = vsel %vm237, %v4814, %v4828
  %v4904 = vsel %vm237, %v4816, %v4830
  %v4905 = vsel %vm237, %v4818, %v4832
  %v4906 = vsel %vm237, %v4820, %v4834
  %v4907 = vsel %vm237, %v4822, %v4836
  %v4908 = vsel %vm237, %v4824, %v4838
  %v4909 = vsel %vm237, %v4798, %v4812
  %v4910 = vsel %vm237, %v4800, %v4814
  %v4911 = vsel %vm237, %v4802, %v4816
  %v4912 = vsel %vm237, %v4804, %v4818
  %v4913 = vsel %vm237, %v4806, %v4820
  %v4914 = vsel %vm237, %v4808, %v4822
  %v4915 = vsel %vm237, %v4810, %v4824
  %v4916 = vsel %vm237, %v4784, %v4798
  %v4917 = vsel %vm237, %v4786, %v4800
  %v4918 = vsel %vm237, %v4788, %v4802
  %v4919 = vsel %vm237, %v4790, %v4804
  %v4920 = vsel %vm237, %v4792, %v4806
  %v4921 = vsel %vm237, %v4794, %v4808
  %v4922 = vsel %vm237, %v4796, %v4810
  %v4923 = vsel %vm237, %v4770, %v4784
  %v4924 = vsel %vm237, %v4772, %v4786
  %v4925 = vsel %vm237, %v4774, %v4788
  %v4926 = vsel %vm237, %v4776, %v4790
  %v4927 = vsel %vm237, %v4778, %v4792
  %v4928 = vsel %vm237, %v4780, %v4794
  %v4929 = vsel %vm237, %v4782, %v4796
  %v4930 = vsel %vm237, %v4868, %v4770
  %v4931 = vsel %vm237, %v4870, %v4772
  %v4932 = vsel %vm237, %v4872, %v4774
  %v4933 = vsel %vm237, %v4874, %v4776
  %v4934 = vsel %vm237, %v4876, %v4778
  %v4935 = vsel %vm237, %v4878, %v4780
  %v4936 = vsel %vm237, %v4880, %v4782
  %4937 = vrot.lane.b32.xlu0 %v4707, 20
  %v4938 = vpop.permute.xlu0 %4937
  %4939 = vrot.lane.b32.xlu0 %v4715, 20
  %v4940 = vpop.permute.xlu0 %4939
  %4941 = vrot.lane.b32.xlu0 %v4723, 20
  %v4942 = vpop.permute.xlu0 %4941
  %4943 = vrot.lane.b32.xlu0 %v4731, 20
  %v4944 = vpop.permute.xlu0 %4943
  %4945 = vrot.lane.b32.xlu0 %v4739, 20
  %v4946 = vpop.permute.xlu0 %4945
  %4947 = vrot.lane.b32.xlu0 %v4747, 20
  %v4948 = vpop.permute.xlu0 %4947
  %4949 = vrot.lane.b32.xlu0 %v4755, 20
  %v4950 = vpop.permute.xlu0 %4949
  %4951 = vrot.lane.b32.xlu0 %v4708, 20
  %v4952 = vpop.permute.xlu0 %4951
  %4953 = vrot.lane.b32.xlu0 %v4716, 20
  %v4954 = vpop.permute.xlu0 %4953
  %4955 = vrot.lane.b32.xlu0 %v4724, 20
  %v4956 = vpop.permute.xlu0 %4955
  %4957 = vrot.lane.b32.xlu0 %v4732, 20
  %v4958 = vpop.permute.xlu0 %4957
  %4959 = vrot.lane.b32.xlu0 %v4740, 20
  %v4960 = vpop.permute.xlu0 %4959
  %4961 = vrot.lane.b32.xlu0 %v4748, 20
  %v4962 = vpop.permute.xlu0 %4961
  %4963 = vrot.lane.b32.xlu0 %v4756, 20
  %v4964 = vpop.permute.xlu0 %4963
  %4965 = vrot.lane.b32.xlu0 %v4709, 20
  %v4966 = vpop.permute.xlu0 %4965
  %4967 = vrot.lane.b32.xlu0 %v4717, 20
  %v4968 = vpop.permute.xlu0 %4967
  %4969 = vrot.lane.b32.xlu0 %v4725, 20
  %v4970 = vpop.permute.xlu0 %4969
  %4971 = vrot.lane.b32.xlu0 %v4733, 20
  %v4972 = vpop.permute.xlu0 %4971
  %4973 = vrot.lane.b32.xlu0 %v4741, 20
  %v4974 = vpop.permute.xlu0 %4973
  %4975 = vrot.lane.b32.xlu0 %v4749, 20
  %v4976 = vpop.permute.xlu0 %4975
  %4977 = vrot.lane.b32.xlu0 %v4757, 20
  %v4978 = vpop.permute.xlu0 %4977
  %4979 = vrot.lane.b32.xlu0 %v4710, 20
  %v4980 = vpop.permute.xlu0 %4979
  %4981 = vrot.lane.b32.xlu0 %v4718, 20
  %v4982 = vpop.permute.xlu0 %4981
  %4983 = vrot.lane.b32.xlu0 %v4726, 20
  %v4984 = vpop.permute.xlu0 %4983
  %4985 = vrot.lane.b32.xlu0 %v4734, 20
  %v4986 = vpop.permute.xlu0 %4985
  %4987 = vrot.lane.b32.xlu0 %v4742, 20
  %v4988 = vpop.permute.xlu0 %4987
  %4989 = vrot.lane.b32.xlu0 %v4750, 20
  %v4990 = vpop.permute.xlu0 %4989
  %4991 = vrot.lane.b32.xlu0 %v4758, 20
  %v4992 = vpop.permute.xlu0 %4991
  %4993 = vrot.lane.b32.xlu0 %v4711, 20
  %v4994 = vpop.permute.xlu0 %4993
  %4995 = vrot.lane.b32.xlu0 %v4719, 20
  %v4996 = vpop.permute.xlu0 %4995
  %4997 = vrot.lane.b32.xlu0 %v4727, 20
  %v4998 = vpop.permute.xlu0 %4997
  %4999 = vrot.lane.b32.xlu0 %v4735, 20
  %v5000 = vpop.permute.xlu0 %4999
  %5001 = vrot.lane.b32.xlu0 %v4743, 20
  %v5002 = vpop.permute.xlu0 %5001
  %5003 = vrot.lane.b32.xlu0 %v4751, 20
  %v5004 = vpop.permute.xlu0 %5003
  %5005 = vrot.lane.b32.xlu0 %v4759, 20
  %v5006 = vpop.permute.xlu0 %5005
  %5007 = vrot.lane.b32.xlu0 %v4712, 20
  %v5008 = vpop.permute.xlu0 %5007
  %5009 = vrot.lane.b32.xlu0 %v4720, 20
  %v5010 = vpop.permute.xlu0 %5009
  %5011 = vrot.lane.b32.xlu0 %v4728, 20
  %v5012 = vpop.permute.xlu0 %5011
  %5013 = vrot.lane.b32.xlu0 %v4736, 20
  %v5014 = vpop.permute.xlu0 %5013
  %5015 = vrot.lane.b32.xlu0 %v4744, 20
  %v5016 = vpop.permute.xlu0 %5015
  %5017 = vrot.lane.b32.xlu0 %v4752, 20
  %v5018 = vpop.permute.xlu0 %5017
  %5019 = vrot.lane.b32.xlu0 %v4760, 20
  %v5020 = vpop.permute.xlu0 %5019
  %5021 = vrot.lane.b32.xlu0 %v4713, 20
  %v5022 = vpop.permute.xlu0 %5021
  %5023 = vrot.lane.b32.xlu0 %v4721, 20
  %v5024 = vpop.permute.xlu0 %5023
  %5025 = vrot.lane.b32.xlu0 %v4729, 20
  %v5026 = vpop.permute.xlu0 %5025
  %5027 = vrot.lane.b32.xlu0 %v4737, 20
  %v5028 = vpop.permute.xlu0 %5027
  %5029 = vrot.lane.b32.xlu0 %v4745, 20
  %v5030 = vpop.permute.xlu0 %5029
  %5031 = vrot.lane.b32.xlu0 %v4753, 20
  %v5032 = vpop.permute.xlu0 %5031
  %5033 = vrot.lane.b32.xlu0 %v4761, 20
  %v5034 = vpop.permute.xlu0 %5033
  %5035 = vrot.lane.b32.xlu0 %v4714, 20
  %v5036 = vpop.permute.xlu0 %5035
  %5037 = vrot.lane.b32.xlu0 %v4722, 20
  %v5038 = vpop.permute.xlu0 %5037
  %5039 = vrot.lane.b32.xlu0 %v4730, 20
  %v5040 = vpop.permute.xlu0 %5039
  %5041 = vrot.lane.b32.xlu0 %v4738, 20
  %v5042 = vpop.permute.xlu0 %5041
  %5043 = vrot.lane.b32.xlu0 %v4746, 20
  %v5044 = vpop.permute.xlu0 %5043
  %5045 = vrot.lane.b32.xlu0 %v4754, 20
  %v5046 = vpop.permute.xlu0 %5045
  %5047 = vrot.lane.b32.xlu0 %v4762, 20
  %v5048 = vpop.permute.xlu0 %5047
  %v5049 = vsel %vm262, %v5022, %v5036
  %v5050 = vsel %vm262, %v5024, %v5038
  %v5051 = vsel %vm262, %v5026, %v5040
  %v5052 = vsel %vm262, %v5028, %v5042
  %v5053 = vsel %vm262, %v5030, %v5044
  %v5054 = vsel %vm262, %v5032, %v5046
  %v5055 = vsel %vm262, %v5034, %v5048
  %v5056 = vsel %vm262, %v5008, %v5022
  %v5057 = vsel %vm262, %v5010, %v5024
  %v5058 = vsel %vm262, %v5012, %v5026
  %v5059 = vsel %vm262, %v5014, %v5028
  %v5060 = vsel %vm262, %v5016, %v5030
  %v5061 = vsel %vm262, %v5018, %v5032
  %v5062 = vsel %vm262, %v5020, %v5034
  %v5063 = vsel %vm262, %v4994, %v5008
  %v5064 = vsel %vm262, %v4996, %v5010
  %v5065 = vsel %vm262, %v4998, %v5012
  %v5066 = vsel %vm262, %v5000, %v5014
  %v5067 = vsel %vm262, %v5002, %v5016
  %v5068 = vsel %vm262, %v5004, %v5018
  %v5069 = vsel %vm262, %v5006, %v5020
  %v5070 = vsel %vm262, %v4980, %v4994
  %v5071 = vsel %vm262, %v4982, %v4996
  %v5072 = vsel %vm262, %v4984, %v4998
  %v5073 = vsel %vm262, %v4986, %v5000
  %v5074 = vsel %vm262, %v4988, %v5002
  %v5075 = vsel %vm262, %v4990, %v5004
  %v5076 = vsel %vm262, %v4992, %v5006
  %v5077 = vsel %vm262, %v4966, %v4980
  %v5078 = vsel %vm262, %v4968, %v4982
  %v5079 = vsel %vm262, %v4970, %v4984
  %v5080 = vsel %vm262, %v4972, %v4986
  %v5081 = vsel %vm262, %v4974, %v4988
  %v5082 = vsel %vm262, %v4976, %v4990
  %v5083 = vsel %vm262, %v4978, %v4992
  %v5084 = vsel %vm262, %v4952, %v4966
  %v5085 = vsel %vm262, %v4954, %v4968
  %v5086 = vsel %vm262, %v4956, %v4970
  %v5087 = vsel %vm262, %v4958, %v4972
  %v5088 = vsel %vm262, %v4960, %v4974
  %v5089 = vsel %vm262, %v4962, %v4976
  %v5090 = vsel %vm262, %v4964, %v4978
  %v5091 = vsel %vm262, %v4938, %v4952
  %v5092 = vsel %vm262, %v4940, %v4954
  %v5093 = vsel %vm262, %v4942, %v4956
  %v5094 = vsel %vm262, %v4944, %v4958
  %v5095 = vsel %vm262, %v4946, %v4960
  %v5096 = vsel %vm262, %v4948, %v4962
  %v5097 = vsel %vm262, %v4950, %v4964
  %v5098 = vsel %vm262, %v5036, %v4938
  %v5099 = vsel %vm262, %v5038, %v4940
  %v5100 = vsel %vm262, %v5040, %v4942
  %v5101 = vsel %vm262, %v5042, %v4944
  %v5102 = vsel %vm262, %v5044, %v4946
  %v5103 = vsel %vm262, %v5046, %v4948
  %v5104 = vsel %vm262, %v5048, %v4950
  %5105 = vrot.lane.b32.xlu0 %v4707, 19
  %v5106 = vpop.permute.xlu0 %5105
  %5107 = vrot.lane.b32.xlu0 %v4715, 19
  %v5108 = vpop.permute.xlu0 %5107
  %5109 = vrot.lane.b32.xlu0 %v4723, 19
  %v5110 = vpop.permute.xlu0 %5109
  %5111 = vrot.lane.b32.xlu0 %v4731, 19
  %v5112 = vpop.permute.xlu0 %5111
  %5113 = vrot.lane.b32.xlu0 %v4739, 19
  %v5114 = vpop.permute.xlu0 %5113
  %5115 = vrot.lane.b32.xlu0 %v4747, 19
  %v5116 = vpop.permute.xlu0 %5115
  %5117 = vrot.lane.b32.xlu0 %v4755, 19
  %v5118 = vpop.permute.xlu0 %5117
  %5119 = vrot.lane.b32.xlu0 %v4708, 19
  %v5120 = vpop.permute.xlu0 %5119
  %5121 = vrot.lane.b32.xlu0 %v4716, 19
  %v5122 = vpop.permute.xlu0 %5121
  %5123 = vrot.lane.b32.xlu0 %v4724, 19
  %v5124 = vpop.permute.xlu0 %5123
  %5125 = vrot.lane.b32.xlu0 %v4732, 19
  %v5126 = vpop.permute.xlu0 %5125
  %5127 = vrot.lane.b32.xlu0 %v4740, 19
  %v5128 = vpop.permute.xlu0 %5127
  %5129 = vrot.lane.b32.xlu0 %v4748, 19
  %v5130 = vpop.permute.xlu0 %5129
  %5131 = vrot.lane.b32.xlu0 %v4756, 19
  %v5132 = vpop.permute.xlu0 %5131
  %5133 = vrot.lane.b32.xlu0 %v4709, 19
  %v5134 = vpop.permute.xlu0 %5133
  %5135 = vrot.lane.b32.xlu0 %v4717, 19
  %v5136 = vpop.permute.xlu0 %5135
  %5137 = vrot.lane.b32.xlu0 %v4725, 19
  %v5138 = vpop.permute.xlu0 %5137
  %5139 = vrot.lane.b32.xlu0 %v4733, 19
  %v5140 = vpop.permute.xlu0 %5139
  %5141 = vrot.lane.b32.xlu0 %v4741, 19
  %v5142 = vpop.permute.xlu0 %5141
  %5143 = vrot.lane.b32.xlu0 %v4749, 19
  %v5144 = vpop.permute.xlu0 %5143
  %5145 = vrot.lane.b32.xlu0 %v4757, 19
  %v5146 = vpop.permute.xlu0 %5145
  %5147 = vrot.lane.b32.xlu0 %v4710, 19
  %v5148 = vpop.permute.xlu0 %5147
  %5149 = vrot.lane.b32.xlu0 %v4718, 19
  %v5150 = vpop.permute.xlu0 %5149
  %5151 = vrot.lane.b32.xlu0 %v4726, 19
  %v5152 = vpop.permute.xlu0 %5151
  %5153 = vrot.lane.b32.xlu0 %v4734, 19
  %v5154 = vpop.permute.xlu0 %5153
  %5155 = vrot.lane.b32.xlu0 %v4742, 19
  %v5156 = vpop.permute.xlu0 %5155
  %5157 = vrot.lane.b32.xlu0 %v4750, 19
  %v5158 = vpop.permute.xlu0 %5157
  %5159 = vrot.lane.b32.xlu0 %v4758, 19
  %v5160 = vpop.permute.xlu0 %5159
  %5161 = vrot.lane.b32.xlu0 %v4711, 19
  %v5162 = vpop.permute.xlu0 %5161
  %5163 = vrot.lane.b32.xlu0 %v4719, 19
  %v5164 = vpop.permute.xlu0 %5163
  %5165 = vrot.lane.b32.xlu0 %v4727, 19
  %v5166 = vpop.permute.xlu0 %5165
  %5167 = vrot.lane.b32.xlu0 %v4735, 19
  %v5168 = vpop.permute.xlu0 %5167
  %5169 = vrot.lane.b32.xlu0 %v4743, 19
  %v5170 = vpop.permute.xlu0 %5169
  %5171 = vrot.lane.b32.xlu0 %v4751, 19
  %v5172 = vpop.permute.xlu0 %5171
  %5173 = vrot.lane.b32.xlu0 %v4759, 19
  %v5174 = vpop.permute.xlu0 %5173
  %5175 = vrot.lane.b32.xlu0 %v4712, 19
  %v5176 = vpop.permute.xlu0 %5175
  %5177 = vrot.lane.b32.xlu0 %v4720, 19
  %v5178 = vpop.permute.xlu0 %5177
  %5179 = vrot.lane.b32.xlu0 %v4728, 19
  %v5180 = vpop.permute.xlu0 %5179
  %5181 = vrot.lane.b32.xlu0 %v4736, 19
  %v5182 = vpop.permute.xlu0 %5181
  %5183 = vrot.lane.b32.xlu0 %v4744, 19
  %v5184 = vpop.permute.xlu0 %5183
  %5185 = vrot.lane.b32.xlu0 %v4752, 19
  %v5186 = vpop.permute.xlu0 %5185
  %5187 = vrot.lane.b32.xlu0 %v4760, 19
  %v5188 = vpop.permute.xlu0 %5187
  %5189 = vrot.lane.b32.xlu0 %v4713, 19
  %v5190 = vpop.permute.xlu0 %5189
  %5191 = vrot.lane.b32.xlu0 %v4721, 19
  %v5192 = vpop.permute.xlu0 %5191
  %5193 = vrot.lane.b32.xlu0 %v4729, 19
  %v5194 = vpop.permute.xlu0 %5193
  %5195 = vrot.lane.b32.xlu0 %v4737, 19
  %v5196 = vpop.permute.xlu0 %5195
  %5197 = vrot.lane.b32.xlu0 %v4745, 19
  %v5198 = vpop.permute.xlu0 %5197
  %5199 = vrot.lane.b32.xlu0 %v4753, 19
  %v5200 = vpop.permute.xlu0 %5199
  %5201 = vrot.lane.b32.xlu0 %v4761, 19
  %v5202 = vpop.permute.xlu0 %5201
  %5203 = vrot.lane.b32.xlu0 %v4714, 19
  %v5204 = vpop.permute.xlu0 %5203
  %5205 = vrot.lane.b32.xlu0 %v4722, 19
  %v5206 = vpop.permute.xlu0 %5205
  %5207 = vrot.lane.b32.xlu0 %v4730, 19
  %v5208 = vpop.permute.xlu0 %5207
  %5209 = vrot.lane.b32.xlu0 %v4738, 19
  %v5210 = vpop.permute.xlu0 %5209
  %5211 = vrot.lane.b32.xlu0 %v4746, 19
  %v5212 = vpop.permute.xlu0 %5211
  %5213 = vrot.lane.b32.xlu0 %v4754, 19
  %v5214 = vpop.permute.xlu0 %5213
  %5215 = vrot.lane.b32.xlu0 %v4762, 19
  %v5216 = vpop.permute.xlu0 %5215
  %v5217 = vsel %vm287, %v5190, %v5204
  %v5218 = vsel %vm287, %v5192, %v5206
  %v5219 = vsel %vm287, %v5194, %v5208
  %v5220 = vsel %vm287, %v5196, %v5210
  %v5221 = vsel %vm287, %v5198, %v5212
  %v5222 = vsel %vm287, %v5200, %v5214
  %v5223 = vsel %vm287, %v5202, %v5216
  %v5224 = vsel %vm287, %v5176, %v5190
  %v5225 = vsel %vm287, %v5178, %v5192
  %v5226 = vsel %vm287, %v5180, %v5194
  %v5227 = vsel %vm287, %v5182, %v5196
  %v5228 = vsel %vm287, %v5184, %v5198
  %v5229 = vsel %vm287, %v5186, %v5200
  %v5230 = vsel %vm287, %v5188, %v5202
  %v5231 = vsel %vm287, %v5162, %v5176
  %v5232 = vsel %vm287, %v5164, %v5178
  %v5233 = vsel %vm287, %v5166, %v5180
  %v5234 = vsel %vm287, %v5168, %v5182
  %v5235 = vsel %vm287, %v5170, %v5184
  %v5236 = vsel %vm287, %v5172, %v5186
  %v5237 = vsel %vm287, %v5174, %v5188
  %v5238 = vsel %vm287, %v5148, %v5162
  %v5239 = vsel %vm287, %v5150, %v5164
  %v5240 = vsel %vm287, %v5152, %v5166
  %v5241 = vsel %vm287, %v5154, %v5168
  %v5242 = vsel %vm287, %v5156, %v5170
  %v5243 = vsel %vm287, %v5158, %v5172
  %v5244 = vsel %vm287, %v5160, %v5174
  %v5245 = vsel %vm287, %v5134, %v5148
  %v5246 = vsel %vm287, %v5136, %v5150
  %v5247 = vsel %vm287, %v5138, %v5152
  %v5248 = vsel %vm287, %v5140, %v5154
  %v5249 = vsel %vm287, %v5142, %v5156
  %v5250 = vsel %vm287, %v5144, %v5158
  %v5251 = vsel %vm287, %v5146, %v5160
  %v5252 = vsel %vm287, %v5120, %v5134
  %v5253 = vsel %vm287, %v5122, %v5136
  %v5254 = vsel %vm287, %v5124, %v5138
  %v5255 = vsel %vm287, %v5126, %v5140
  %v5256 = vsel %vm287, %v5128, %v5142
  %v5257 = vsel %vm287, %v5130, %v5144
  %v5258 = vsel %vm287, %v5132, %v5146
  %v5259 = vsel %vm287, %v5106, %v5120
  %v5260 = vsel %vm287, %v5108, %v5122
  %v5261 = vsel %vm287, %v5110, %v5124
  %v5262 = vsel %vm287, %v5112, %v5126
  %v5263 = vsel %vm287, %v5114, %v5128
  %v5264 = vsel %vm287, %v5116, %v5130
  %v5265 = vsel %vm287, %v5118, %v5132
  %v5266 = vsel %vm287, %v5204, %v5106
  %v5267 = vsel %vm287, %v5206, %v5108
  %v5268 = vsel %vm287, %v5208, %v5110
  %v5269 = vsel %vm287, %v5210, %v5112
  %v5270 = vsel %vm287, %v5212, %v5114
  %v5271 = vsel %vm287, %v5214, %v5116
  %v5272 = vsel %vm287, %v5216, %v5118
  %5273 = vrot.lane.b32.xlu0 %v4707, 1
  %v5274 = vpop.permute.xlu0 %5273
  %5275 = vrot.lane.b32.xlu0 %v4715, 1
  %v5276 = vpop.permute.xlu0 %5275
  %5277 = vrot.lane.b32.xlu0 %v4723, 1
  %v5278 = vpop.permute.xlu0 %5277
  %5279 = vrot.lane.b32.xlu0 %v4731, 1
  %v5280 = vpop.permute.xlu0 %5279
  %5281 = vrot.lane.b32.xlu0 %v4739, 1
  %v5282 = vpop.permute.xlu0 %5281
  %5283 = vrot.lane.b32.xlu0 %v4747, 1
  %v5284 = vpop.permute.xlu0 %5283
  %5285 = vrot.lane.b32.xlu0 %v4755, 1
  %v5286 = vpop.permute.xlu0 %5285
  %5287 = vrot.lane.b32.xlu0 %v4708, 1
  %v5288 = vpop.permute.xlu0 %5287
  %5289 = vrot.lane.b32.xlu0 %v4716, 1
  %v5290 = vpop.permute.xlu0 %5289
  %5291 = vrot.lane.b32.xlu0 %v4724, 1
  %v5292 = vpop.permute.xlu0 %5291
  %5293 = vrot.lane.b32.xlu0 %v4732, 1
  %v5294 = vpop.permute.xlu0 %5293
  %5295 = vrot.lane.b32.xlu0 %v4740, 1
  %v5296 = vpop.permute.xlu0 %5295
  %5297 = vrot.lane.b32.xlu0 %v4748, 1
  %v5298 = vpop.permute.xlu0 %5297
  %5299 = vrot.lane.b32.xlu0 %v4756, 1
  %v5300 = vpop.permute.xlu0 %5299
  %5301 = vrot.lane.b32.xlu0 %v4709, 1
  %v5302 = vpop.permute.xlu0 %5301
  %5303 = vrot.lane.b32.xlu0 %v4717, 1
  %v5304 = vpop.permute.xlu0 %5303
  %5305 = vrot.lane.b32.xlu0 %v4725, 1
  %v5306 = vpop.permute.xlu0 %5305
  %5307 = vrot.lane.b32.xlu0 %v4733, 1
  %v5308 = vpop.permute.xlu0 %5307
  %5309 = vrot.lane.b32.xlu0 %v4741, 1
  %v5310 = vpop.permute.xlu0 %5309
  %5311 = vrot.lane.b32.xlu0 %v4749, 1
  %v5312 = vpop.permute.xlu0 %5311
  %5313 = vrot.lane.b32.xlu0 %v4757, 1
  %v5314 = vpop.permute.xlu0 %5313
  %5315 = vrot.lane.b32.xlu0 %v4710, 1
  %v5316 = vpop.permute.xlu0 %5315
  %5317 = vrot.lane.b32.xlu0 %v4718, 1
  %v5318 = vpop.permute.xlu0 %5317
  %5319 = vrot.lane.b32.xlu0 %v4726, 1
  %v5320 = vpop.permute.xlu0 %5319
  %5321 = vrot.lane.b32.xlu0 %v4734, 1
  %v5322 = vpop.permute.xlu0 %5321
  %5323 = vrot.lane.b32.xlu0 %v4742, 1
  %v5324 = vpop.permute.xlu0 %5323
  %5325 = vrot.lane.b32.xlu0 %v4750, 1
  %v5326 = vpop.permute.xlu0 %5325
  %5327 = vrot.lane.b32.xlu0 %v4758, 1
  %v5328 = vpop.permute.xlu0 %5327
  %5329 = vrot.lane.b32.xlu0 %v4711, 1
  %v5330 = vpop.permute.xlu0 %5329
  %5331 = vrot.lane.b32.xlu0 %v4719, 1
  %v5332 = vpop.permute.xlu0 %5331
  %5333 = vrot.lane.b32.xlu0 %v4727, 1
  %v5334 = vpop.permute.xlu0 %5333
  %5335 = vrot.lane.b32.xlu0 %v4735, 1
  %v5336 = vpop.permute.xlu0 %5335
  %5337 = vrot.lane.b32.xlu0 %v4743, 1
  %v5338 = vpop.permute.xlu0 %5337
  %5339 = vrot.lane.b32.xlu0 %v4751, 1
  %v5340 = vpop.permute.xlu0 %5339
  %5341 = vrot.lane.b32.xlu0 %v4759, 1
  %v5342 = vpop.permute.xlu0 %5341
  %5343 = vrot.lane.b32.xlu0 %v4712, 1
  %v5344 = vpop.permute.xlu0 %5343
  %5345 = vrot.lane.b32.xlu0 %v4720, 1
  %v5346 = vpop.permute.xlu0 %5345
  %5347 = vrot.lane.b32.xlu0 %v4728, 1
  %v5348 = vpop.permute.xlu0 %5347
  %5349 = vrot.lane.b32.xlu0 %v4736, 1
  %v5350 = vpop.permute.xlu0 %5349
  %5351 = vrot.lane.b32.xlu0 %v4744, 1
  %v5352 = vpop.permute.xlu0 %5351
  %5353 = vrot.lane.b32.xlu0 %v4752, 1
  %v5354 = vpop.permute.xlu0 %5353
  %5355 = vrot.lane.b32.xlu0 %v4760, 1
  %v5356 = vpop.permute.xlu0 %5355
  %5357 = vrot.lane.b32.xlu0 %v4713, 1
  %v5358 = vpop.permute.xlu0 %5357
  %5359 = vrot.lane.b32.xlu0 %v4721, 1
  %v5360 = vpop.permute.xlu0 %5359
  %5361 = vrot.lane.b32.xlu0 %v4729, 1
  %v5362 = vpop.permute.xlu0 %5361
  %5363 = vrot.lane.b32.xlu0 %v4737, 1
  %v5364 = vpop.permute.xlu0 %5363
  %5365 = vrot.lane.b32.xlu0 %v4745, 1
  %v5366 = vpop.permute.xlu0 %5365
  %5367 = vrot.lane.b32.xlu0 %v4753, 1
  %v5368 = vpop.permute.xlu0 %5367
  %5369 = vrot.lane.b32.xlu0 %v4761, 1
  %v5370 = vpop.permute.xlu0 %5369
  %5371 = vrot.lane.b32.xlu0 %v4714, 1
  %v5372 = vpop.permute.xlu0 %5371
  %5373 = vrot.lane.b32.xlu0 %v4722, 1
  %v5374 = vpop.permute.xlu0 %5373
  %5375 = vrot.lane.b32.xlu0 %v4730, 1
  %v5376 = vpop.permute.xlu0 %5375
  %5377 = vrot.lane.b32.xlu0 %v4738, 1
  %v5378 = vpop.permute.xlu0 %5377
  %5379 = vrot.lane.b32.xlu0 %v4746, 1
  %v5380 = vpop.permute.xlu0 %5379
  %5381 = vrot.lane.b32.xlu0 %v4754, 1
  %v5382 = vpop.permute.xlu0 %5381
  %5383 = vrot.lane.b32.xlu0 %v4762, 1
  %v5384 = vpop.permute.xlu0 %5383
  %v5385 = vsel %vm362, %v5358, %v5372
  %v5386 = vsel %vm362, %v5360, %v5374
  %v5387 = vsel %vm362, %v5362, %v5376
  %v5388 = vsel %vm362, %v5364, %v5378
  %v5389 = vsel %vm362, %v5366, %v5380
  %v5390 = vsel %vm362, %v5368, %v5382
  %v5391 = vsel %vm362, %v5370, %v5384
  %v5392 = vsel %vm362, %v5344, %v5358
  %v5393 = vsel %vm362, %v5346, %v5360
  %v5394 = vsel %vm362, %v5348, %v5362
  %v5395 = vsel %vm362, %v5350, %v5364
  %v5396 = vsel %vm362, %v5352, %v5366
  %v5397 = vsel %vm362, %v5354, %v5368
  %v5398 = vsel %vm362, %v5356, %v5370
  %v5399 = vsel %vm362, %v5330, %v5344
  %v5400 = vsel %vm362, %v5332, %v5346
  %v5401 = vsel %vm362, %v5334, %v5348
  %v5402 = vsel %vm362, %v5336, %v5350
  %v5403 = vsel %vm362, %v5338, %v5352
  %v5404 = vsel %vm362, %v5340, %v5354
  %v5405 = vsel %vm362, %v5342, %v5356
  %v5406 = vsel %vm362, %v5316, %v5330
  %v5407 = vsel %vm362, %v5318, %v5332
  %v5408 = vsel %vm362, %v5320, %v5334
  %v5409 = vsel %vm362, %v5322, %v5336
  %v5410 = vsel %vm362, %v5324, %v5338
  %v5411 = vsel %vm362, %v5326, %v5340
  %v5412 = vsel %vm362, %v5328, %v5342
  %v5413 = vsel %vm362, %v5302, %v5316
  %v5414 = vsel %vm362, %v5304, %v5318
  %v5415 = vsel %vm362, %v5306, %v5320
  %v5416 = vsel %vm362, %v5308, %v5322
  %v5417 = vsel %vm362, %v5310, %v5324
  %v5418 = vsel %vm362, %v5312, %v5326
  %v5419 = vsel %vm362, %v5314, %v5328
  %v5420 = vsel %vm362, %v5288, %v5302
  %v5421 = vsel %vm362, %v5290, %v5304
  %v5422 = vsel %vm362, %v5292, %v5306
  %v5423 = vsel %vm362, %v5294, %v5308
  %v5424 = vsel %vm362, %v5296, %v5310
  %v5425 = vsel %vm362, %v5298, %v5312
  %v5426 = vsel %vm362, %v5300, %v5314
  %v5427 = vsel %vm362, %v5274, %v5288
  %v5428 = vsel %vm362, %v5276, %v5290
  %v5429 = vsel %vm362, %v5278, %v5292
  %v5430 = vsel %vm362, %v5280, %v5294
  %v5431 = vsel %vm362, %v5282, %v5296
  %v5432 = vsel %vm362, %v5284, %v5298
  %v5433 = vsel %vm362, %v5286, %v5300
  %v5434 = vsel %vm362, %v5372, %v5274
  %v5435 = vsel %vm362, %v5374, %v5276
  %v5436 = vsel %vm362, %v5376, %v5278
  %v5437 = vsel %vm362, %v5378, %v5280
  %v5438 = vsel %vm362, %v5380, %v5282
  %v5439 = vsel %vm362, %v5382, %v5284
  %v5440 = vsel %vm362, %v5384, %v5286
  %5441 = vrot.lane.b32.xlu0 %v4707, 127
  %v5442 = vpop.permute.xlu0 %5441
  %5443 = vrot.lane.b32.xlu0 %v4715, 127
  %v5444 = vpop.permute.xlu0 %5443
  %5445 = vrot.lane.b32.xlu0 %v4723, 127
  %v5446 = vpop.permute.xlu0 %5445
  %5447 = vrot.lane.b32.xlu0 %v4731, 127
  %v5448 = vpop.permute.xlu0 %5447
  %5449 = vrot.lane.b32.xlu0 %v4739, 127
  %v5450 = vpop.permute.xlu0 %5449
  %5451 = vrot.lane.b32.xlu0 %v4747, 127
  %v5452 = vpop.permute.xlu0 %5451
  %5453 = vrot.lane.b32.xlu0 %v4755, 127
  %v5454 = vpop.permute.xlu0 %5453
  %5455 = vrot.lane.b32.xlu0 %v4708, 127
  %v5456 = vpop.permute.xlu0 %5455
  %5457 = vrot.lane.b32.xlu0 %v4716, 127
  %v5458 = vpop.permute.xlu0 %5457
  %5459 = vrot.lane.b32.xlu0 %v4724, 127
  %v5460 = vpop.permute.xlu0 %5459
  %5461 = vrot.lane.b32.xlu0 %v4732, 127
  %v5462 = vpop.permute.xlu0 %5461
  %5463 = vrot.lane.b32.xlu0 %v4740, 127
  %v5464 = vpop.permute.xlu0 %5463
  %5465 = vrot.lane.b32.xlu0 %v4748, 127
  %v5466 = vpop.permute.xlu0 %5465
  %5467 = vrot.lane.b32.xlu0 %v4756, 127
  %v5468 = vpop.permute.xlu0 %5467
  %5469 = vrot.lane.b32.xlu0 %v4709, 127
  %v5470 = vpop.permute.xlu0 %5469
  %5471 = vrot.lane.b32.xlu0 %v4717, 127
  %v5472 = vpop.permute.xlu0 %5471
  %5473 = vrot.lane.b32.xlu0 %v4725, 127
  %v5474 = vpop.permute.xlu0 %5473
  %5475 = vrot.lane.b32.xlu0 %v4733, 127
  %v5476 = vpop.permute.xlu0 %5475
  %5477 = vrot.lane.b32.xlu0 %v4741, 127
  %v5478 = vpop.permute.xlu0 %5477
  %5479 = vrot.lane.b32.xlu0 %v4749, 127
  %v5480 = vpop.permute.xlu0 %5479
  %5481 = vrot.lane.b32.xlu0 %v4757, 127
  %v5482 = vpop.permute.xlu0 %5481
  %5483 = vrot.lane.b32.xlu0 %v4710, 127
  %v5484 = vpop.permute.xlu0 %5483
  %5485 = vrot.lane.b32.xlu0 %v4718, 127
  %v5486 = vpop.permute.xlu0 %5485
  %5487 = vrot.lane.b32.xlu0 %v4726, 127
  %v5488 = vpop.permute.xlu0 %5487
  %5489 = vrot.lane.b32.xlu0 %v4734, 127
  %v5490 = vpop.permute.xlu0 %5489
  %5491 = vrot.lane.b32.xlu0 %v4742, 127
  %v5492 = vpop.permute.xlu0 %5491
  %5493 = vrot.lane.b32.xlu0 %v4750, 127
  %v5494 = vpop.permute.xlu0 %5493
  %5495 = vrot.lane.b32.xlu0 %v4758, 127
  %v5496 = vpop.permute.xlu0 %5495
  %5497 = vrot.lane.b32.xlu0 %v4711, 127
  %v5498 = vpop.permute.xlu0 %5497
  %5499 = vrot.lane.b32.xlu0 %v4719, 127
  %v5500 = vpop.permute.xlu0 %5499
  %5501 = vrot.lane.b32.xlu0 %v4727, 127
  %v5502 = vpop.permute.xlu0 %5501
  %5503 = vrot.lane.b32.xlu0 %v4735, 127
  %v5504 = vpop.permute.xlu0 %5503
  %5505 = vrot.lane.b32.xlu0 %v4743, 127
  %v5506 = vpop.permute.xlu0 %5505
  %5507 = vrot.lane.b32.xlu0 %v4751, 127
  %v5508 = vpop.permute.xlu0 %5507
  %5509 = vrot.lane.b32.xlu0 %v4759, 127
  %v5510 = vpop.permute.xlu0 %5509
  %5511 = vrot.lane.b32.xlu0 %v4712, 127
  %v5512 = vpop.permute.xlu0 %5511
  %5513 = vrot.lane.b32.xlu0 %v4720, 127
  %v5514 = vpop.permute.xlu0 %5513
  %5515 = vrot.lane.b32.xlu0 %v4728, 127
  %v5516 = vpop.permute.xlu0 %5515
  %5517 = vrot.lane.b32.xlu0 %v4736, 127
  %v5518 = vpop.permute.xlu0 %5517
  %5519 = vrot.lane.b32.xlu0 %v4744, 127
  %v5520 = vpop.permute.xlu0 %5519
  %5521 = vrot.lane.b32.xlu0 %v4752, 127
  %v5522 = vpop.permute.xlu0 %5521
  %5523 = vrot.lane.b32.xlu0 %v4760, 127
  %v5524 = vpop.permute.xlu0 %5523
  %5525 = vrot.lane.b32.xlu0 %v4713, 127
  %v5526 = vpop.permute.xlu0 %5525
  %5527 = vrot.lane.b32.xlu0 %v4721, 127
  %v5528 = vpop.permute.xlu0 %5527
  %5529 = vrot.lane.b32.xlu0 %v4729, 127
  %v5530 = vpop.permute.xlu0 %5529
  %5531 = vrot.lane.b32.xlu0 %v4737, 127
  %v5532 = vpop.permute.xlu0 %5531
  %5533 = vrot.lane.b32.xlu0 %v4745, 127
  %v5534 = vpop.permute.xlu0 %5533
  %5535 = vrot.lane.b32.xlu0 %v4753, 127
  %v5536 = vpop.permute.xlu0 %5535
  %5537 = vrot.lane.b32.xlu0 %v4761, 127
  %v5538 = vpop.permute.xlu0 %5537
  %5539 = vrot.lane.b32.xlu0 %v4714, 127
  %v5540 = vpop.permute.xlu0 %5539
  %5541 = vrot.lane.b32.xlu0 %v4722, 127
  %v5542 = vpop.permute.xlu0 %5541
  %5543 = vrot.lane.b32.xlu0 %v4730, 127
  %v5544 = vpop.permute.xlu0 %5543
  %5545 = vrot.lane.b32.xlu0 %v4738, 127
  %v5546 = vpop.permute.xlu0 %5545
  %5547 = vrot.lane.b32.xlu0 %v4746, 127
  %v5548 = vpop.permute.xlu0 %5547
  %5549 = vrot.lane.b32.xlu0 %v4754, 127
  %v5550 = vpop.permute.xlu0 %5549
  %5551 = vrot.lane.b32.xlu0 %v4762, 127
  %v5552 = vpop.permute.xlu0 %5551
  %v5553 = vsel %vm387, %v5526, %v5540
  %v5554 = vsel %vm387, %v5528, %v5542
  %v5555 = vsel %vm387, %v5530, %v5544
  %v5556 = vsel %vm387, %v5532, %v5546
  %v5557 = vsel %vm387, %v5534, %v5548
  %v5558 = vsel %vm387, %v5536, %v5550
  %v5559 = vsel %vm387, %v5538, %v5552
  %v5560 = vsel %vm387, %v5512, %v5526
  %v5561 = vsel %vm387, %v5514, %v5528
  %v5562 = vsel %vm387, %v5516, %v5530
  %v5563 = vsel %vm387, %v5518, %v5532
  %v5564 = vsel %vm387, %v5520, %v5534
  %v5565 = vsel %vm387, %v5522, %v5536
  %v5566 = vsel %vm387, %v5524, %v5538
  %v5567 = vsel %vm387, %v5498, %v5512
  %v5568 = vsel %vm387, %v5500, %v5514
  %v5569 = vsel %vm387, %v5502, %v5516
  %v5570 = vsel %vm387, %v5504, %v5518
  %v5571 = vsel %vm387, %v5506, %v5520
  %v5572 = vsel %vm387, %v5508, %v5522
  %v5573 = vsel %vm387, %v5510, %v5524
  %v5574 = vsel %vm387, %v5484, %v5498
  %v5575 = vsel %vm387, %v5486, %v5500
  %v5576 = vsel %vm387, %v5488, %v5502
  %v5577 = vsel %vm387, %v5490, %v5504
  %v5578 = vsel %vm387, %v5492, %v5506
  %v5579 = vsel %vm387, %v5494, %v5508
  %v5580 = vsel %vm387, %v5496, %v5510
  %v5581 = vsel %vm387, %v5470, %v5484
  %v5582 = vsel %vm387, %v5472, %v5486
  %v5583 = vsel %vm387, %v5474, %v5488
  %v5584 = vsel %vm387, %v5476, %v5490
  %v5585 = vsel %vm387, %v5478, %v5492
  %v5586 = vsel %vm387, %v5480, %v5494
  %v5587 = vsel %vm387, %v5482, %v5496
  %v5588 = vsel %vm387, %v5456, %v5470
  %v5589 = vsel %vm387, %v5458, %v5472
  %v5590 = vsel %vm387, %v5460, %v5474
  %v5591 = vsel %vm387, %v5462, %v5476
  %v5592 = vsel %vm387, %v5464, %v5478
  %v5593 = vsel %vm387, %v5466, %v5480
  %v5594 = vsel %vm387, %v5468, %v5482
  %v5595 = vsel %vm387, %v5442, %v5456
  %v5596 = vsel %vm387, %v5444, %v5458
  %v5597 = vsel %vm387, %v5446, %v5460
  %v5598 = vsel %vm387, %v5448, %v5462
  %v5599 = vsel %vm387, %v5450, %v5464
  %v5600 = vsel %vm387, %v5452, %v5466
  %v5601 = vsel %vm387, %v5454, %v5468
  %v5602 = vsel %vm387, %v5540, %v5442
  %v5603 = vsel %vm387, %v5542, %v5444
  %v5604 = vsel %vm387, %v5544, %v5446
  %v5605 = vsel %vm387, %v5546, %v5448
  %v5606 = vsel %vm387, %v5548, %v5450
  %v5607 = vsel %vm387, %v5550, %v5452
  %v5608 = vsel %vm387, %v5552, %v5454
  %5609 = vrot.lane.b32.xlu0 %v4707, 109
  %v5610 = vpop.permute.xlu0 %5609
  %5611 = vrot.lane.b32.xlu0 %v4715, 109
  %v5612 = vpop.permute.xlu0 %5611
  %5613 = vrot.lane.b32.xlu0 %v4723, 109
  %v5614 = vpop.permute.xlu0 %5613
  %5615 = vrot.lane.b32.xlu0 %v4731, 109
  %v5616 = vpop.permute.xlu0 %5615
  %5617 = vrot.lane.b32.xlu0 %v4739, 109
  %v5618 = vpop.permute.xlu0 %5617
  %5619 = vrot.lane.b32.xlu0 %v4747, 109
  %v5620 = vpop.permute.xlu0 %5619
  %5621 = vrot.lane.b32.xlu0 %v4755, 109
  %v5622 = vpop.permute.xlu0 %5621
  %5623 = vrot.lane.b32.xlu0 %v4708, 109
  %v5624 = vpop.permute.xlu0 %5623
  %5625 = vrot.lane.b32.xlu0 %v4716, 109
  %v5626 = vpop.permute.xlu0 %5625
  %5627 = vrot.lane.b32.xlu0 %v4724, 109
  %v5628 = vpop.permute.xlu0 %5627
  %5629 = vrot.lane.b32.xlu0 %v4732, 109
  %v5630 = vpop.permute.xlu0 %5629
  %5631 = vrot.lane.b32.xlu0 %v4740, 109
  %v5632 = vpop.permute.xlu0 %5631
  %5633 = vrot.lane.b32.xlu0 %v4748, 109
  %v5634 = vpop.permute.xlu0 %5633
  %5635 = vrot.lane.b32.xlu0 %v4756, 109
  %v5636 = vpop.permute.xlu0 %5635
  %5637 = vrot.lane.b32.xlu0 %v4709, 109
  %v5638 = vpop.permute.xlu0 %5637
  %5639 = vrot.lane.b32.xlu0 %v4717, 109
  %v5640 = vpop.permute.xlu0 %5639
  %5641 = vrot.lane.b32.xlu0 %v4725, 109
  %v5642 = vpop.permute.xlu0 %5641
  %5643 = vrot.lane.b32.xlu0 %v4733, 109
  %v5644 = vpop.permute.xlu0 %5643
  %5645 = vrot.lane.b32.xlu0 %v4741, 109
  %v5646 = vpop.permute.xlu0 %5645
  %5647 = vrot.lane.b32.xlu0 %v4749, 109
  %v5648 = vpop.permute.xlu0 %5647
  %5649 = vrot.lane.b32.xlu0 %v4757, 109
  %v5650 = vpop.permute.xlu0 %5649
  %5651 = vrot.lane.b32.xlu0 %v4710, 109
  %v5652 = vpop.permute.xlu0 %5651
  %5653 = vrot.lane.b32.xlu0 %v4718, 109
  %v5654 = vpop.permute.xlu0 %5653
  %5655 = vrot.lane.b32.xlu0 %v4726, 109
  %v5656 = vpop.permute.xlu0 %5655
  %5657 = vrot.lane.b32.xlu0 %v4734, 109
  %v5658 = vpop.permute.xlu0 %5657
  %5659 = vrot.lane.b32.xlu0 %v4742, 109
  %v5660 = vpop.permute.xlu0 %5659
  %5661 = vrot.lane.b32.xlu0 %v4750, 109
  %v5662 = vpop.permute.xlu0 %5661
  %5663 = vrot.lane.b32.xlu0 %v4758, 109
  %v5664 = vpop.permute.xlu0 %5663
  %5665 = vrot.lane.b32.xlu0 %v4711, 109
  %v5666 = vpop.permute.xlu0 %5665
  %5667 = vrot.lane.b32.xlu0 %v4719, 109
  %v5668 = vpop.permute.xlu0 %5667
  %5669 = vrot.lane.b32.xlu0 %v4727, 109
  %v5670 = vpop.permute.xlu0 %5669
  %5671 = vrot.lane.b32.xlu0 %v4735, 109
  %v5672 = vpop.permute.xlu0 %5671
  %5673 = vrot.lane.b32.xlu0 %v4743, 109
  %v5674 = vpop.permute.xlu0 %5673
  %5675 = vrot.lane.b32.xlu0 %v4751, 109
  %v5676 = vpop.permute.xlu0 %5675
  %5677 = vrot.lane.b32.xlu0 %v4759, 109
  %v5678 = vpop.permute.xlu0 %5677
  %5679 = vrot.lane.b32.xlu0 %v4712, 109
  %v5680 = vpop.permute.xlu0 %5679
  %5681 = vrot.lane.b32.xlu0 %v4720, 109
  %v5682 = vpop.permute.xlu0 %5681
  %5683 = vrot.lane.b32.xlu0 %v4728, 109
  %v5684 = vpop.permute.xlu0 %5683
  %5685 = vrot.lane.b32.xlu0 %v4736, 109
  %v5686 = vpop.permute.xlu0 %5685
  %5687 = vrot.lane.b32.xlu0 %v4744, 109
  %v5688 = vpop.permute.xlu0 %5687
  %5689 = vrot.lane.b32.xlu0 %v4752, 109
  %v5690 = vpop.permute.xlu0 %5689
  %5691 = vrot.lane.b32.xlu0 %v4760, 109
  %v5692 = vpop.permute.xlu0 %5691
  %5693 = vrot.lane.b32.xlu0 %v4713, 109
  %v5694 = vpop.permute.xlu0 %5693
  %5695 = vrot.lane.b32.xlu0 %v4721, 109
  %v5696 = vpop.permute.xlu0 %5695
  %5697 = vrot.lane.b32.xlu0 %v4729, 109
  %v5698 = vpop.permute.xlu0 %5697
  %5699 = vrot.lane.b32.xlu0 %v4737, 109
  %v5700 = vpop.permute.xlu0 %5699
  %5701 = vrot.lane.b32.xlu0 %v4745, 109
  %v5702 = vpop.permute.xlu0 %5701
  %5703 = vrot.lane.b32.xlu0 %v4753, 109
  %v5704 = vpop.permute.xlu0 %5703
  %5705 = vrot.lane.b32.xlu0 %v4761, 109
  %v5706 = vpop.permute.xlu0 %5705
  %5707 = vrot.lane.b32.xlu0 %v4714, 109
  %v5708 = vpop.permute.xlu0 %5707
  %5709 = vrot.lane.b32.xlu0 %v4722, 109
  %v5710 = vpop.permute.xlu0 %5709
  %5711 = vrot.lane.b32.xlu0 %v4730, 109
  %v5712 = vpop.permute.xlu0 %5711
  %5713 = vrot.lane.b32.xlu0 %v4738, 109
  %v5714 = vpop.permute.xlu0 %5713
  %5715 = vrot.lane.b32.xlu0 %v4746, 109
  %v5716 = vpop.permute.xlu0 %5715
  %5717 = vrot.lane.b32.xlu0 %v4754, 109
  %v5718 = vpop.permute.xlu0 %5717
  %5719 = vrot.lane.b32.xlu0 %v4762, 109
  %v5720 = vpop.permute.xlu0 %5719
  %v5721 = vsel %vm462, %v5694, %v5708
  %v5722 = vsel %vm462, %v5696, %v5710
  %v5723 = vsel %vm462, %v5698, %v5712
  %v5724 = vsel %vm462, %v5700, %v5714
  %v5725 = vsel %vm462, %v5702, %v5716
  %v5726 = vsel %vm462, %v5704, %v5718
  %v5727 = vsel %vm462, %v5706, %v5720
  %v5728 = vsel %vm462, %v5680, %v5694
  %v5729 = vsel %vm462, %v5682, %v5696
  %v5730 = vsel %vm462, %v5684, %v5698
  %v5731 = vsel %vm462, %v5686, %v5700
  %v5732 = vsel %vm462, %v5688, %v5702
  %v5733 = vsel %vm462, %v5690, %v5704
  %v5734 = vsel %vm462, %v5692, %v5706
  %v5735 = vsel %vm462, %v5666, %v5680
  %v5736 = vsel %vm462, %v5668, %v5682
  %v5737 = vsel %vm462, %v5670, %v5684
  %v5738 = vsel %vm462, %v5672, %v5686
  %v5739 = vsel %vm462, %v5674, %v5688
  %v5740 = vsel %vm462, %v5676, %v5690
  %v5741 = vsel %vm462, %v5678, %v5692
  %v5742 = vsel %vm462, %v5652, %v5666
  %v5743 = vsel %vm462, %v5654, %v5668
  %v5744 = vsel %vm462, %v5656, %v5670
  %v5745 = vsel %vm462, %v5658, %v5672
  %v5746 = vsel %vm462, %v5660, %v5674
  %v5747 = vsel %vm462, %v5662, %v5676
  %v5748 = vsel %vm462, %v5664, %v5678
  %v5749 = vsel %vm462, %v5638, %v5652
  %v5750 = vsel %vm462, %v5640, %v5654
  %v5751 = vsel %vm462, %v5642, %v5656
  %v5752 = vsel %vm462, %v5644, %v5658
  %v5753 = vsel %vm462, %v5646, %v5660
  %v5754 = vsel %vm462, %v5648, %v5662
  %v5755 = vsel %vm462, %v5650, %v5664
  %v5756 = vsel %vm462, %v5624, %v5638
  %v5757 = vsel %vm462, %v5626, %v5640
  %v5758 = vsel %vm462, %v5628, %v5642
  %v5759 = vsel %vm462, %v5630, %v5644
  %v5760 = vsel %vm462, %v5632, %v5646
  %v5761 = vsel %vm462, %v5634, %v5648
  %v5762 = vsel %vm462, %v5636, %v5650
  %v5763 = vsel %vm462, %v5610, %v5624
  %v5764 = vsel %vm462, %v5612, %v5626
  %v5765 = vsel %vm462, %v5614, %v5628
  %v5766 = vsel %vm462, %v5616, %v5630
  %v5767 = vsel %vm462, %v5618, %v5632
  %v5768 = vsel %vm462, %v5620, %v5634
  %v5769 = vsel %vm462, %v5622, %v5636
  %v5770 = vsel %vm462, %v5708, %v5610
  %v5771 = vsel %vm462, %v5710, %v5612
  %v5772 = vsel %vm462, %v5712, %v5614
  %v5773 = vsel %vm462, %v5714, %v5616
  %v5774 = vsel %vm462, %v5716, %v5618
  %v5775 = vsel %vm462, %v5718, %v5620
  %v5776 = vsel %vm462, %v5720, %v5622
  %5777 = vrot.lane.b32.xlu0 %v4707, 108
  %v5778 = vpop.permute.xlu0 %5777
  %5779 = vrot.lane.b32.xlu0 %v4715, 108
  %v5780 = vpop.permute.xlu0 %5779
  %5781 = vrot.lane.b32.xlu0 %v4723, 108
  %v5782 = vpop.permute.xlu0 %5781
  %5783 = vrot.lane.b32.xlu0 %v4731, 108
  %v5784 = vpop.permute.xlu0 %5783
  %5785 = vrot.lane.b32.xlu0 %v4739, 108
  %v5786 = vpop.permute.xlu0 %5785
  %5787 = vrot.lane.b32.xlu0 %v4747, 108
  %v5788 = vpop.permute.xlu0 %5787
  %5789 = vrot.lane.b32.xlu0 %v4755, 108
  %v5790 = vpop.permute.xlu0 %5789
  %5791 = vrot.lane.b32.xlu0 %v4708, 108
  %v5792 = vpop.permute.xlu0 %5791
  %5793 = vrot.lane.b32.xlu0 %v4716, 108
  %v5794 = vpop.permute.xlu0 %5793
  %5795 = vrot.lane.b32.xlu0 %v4724, 108
  %v5796 = vpop.permute.xlu0 %5795
  %5797 = vrot.lane.b32.xlu0 %v4732, 108
  %v5798 = vpop.permute.xlu0 %5797
  %5799 = vrot.lane.b32.xlu0 %v4740, 108
  %v5800 = vpop.permute.xlu0 %5799
  %5801 = vrot.lane.b32.xlu0 %v4748, 108
  %v5802 = vpop.permute.xlu0 %5801
  %5803 = vrot.lane.b32.xlu0 %v4756, 108
  %v5804 = vpop.permute.xlu0 %5803
  %5805 = vrot.lane.b32.xlu0 %v4709, 108
  %v5806 = vpop.permute.xlu0 %5805
  %5807 = vrot.lane.b32.xlu0 %v4717, 108
  %v5808 = vpop.permute.xlu0 %5807
  %5809 = vrot.lane.b32.xlu0 %v4725, 108
  %v5810 = vpop.permute.xlu0 %5809
  %5811 = vrot.lane.b32.xlu0 %v4733, 108
  %v5812 = vpop.permute.xlu0 %5811
  %5813 = vrot.lane.b32.xlu0 %v4741, 108
  %v5814 = vpop.permute.xlu0 %5813
  %5815 = vrot.lane.b32.xlu0 %v4749, 108
  %v5816 = vpop.permute.xlu0 %5815
  %5817 = vrot.lane.b32.xlu0 %v4757, 108
  %v5818 = vpop.permute.xlu0 %5817
  %5819 = vrot.lane.b32.xlu0 %v4710, 108
  %v5820 = vpop.permute.xlu0 %5819
  %5821 = vrot.lane.b32.xlu0 %v4718, 108
  %v5822 = vpop.permute.xlu0 %5821
  %5823 = vrot.lane.b32.xlu0 %v4726, 108
  %v5824 = vpop.permute.xlu0 %5823
  %5825 = vrot.lane.b32.xlu0 %v4734, 108
  %v5826 = vpop.permute.xlu0 %5825
  %5827 = vrot.lane.b32.xlu0 %v4742, 108
  %v5828 = vpop.permute.xlu0 %5827
  %5829 = vrot.lane.b32.xlu0 %v4750, 108
  %v5830 = vpop.permute.xlu0 %5829
  %5831 = vrot.lane.b32.xlu0 %v4758, 108
  %v5832 = vpop.permute.xlu0 %5831
  %5833 = vrot.lane.b32.xlu0 %v4711, 108
  %v5834 = vpop.permute.xlu0 %5833
  %5835 = vrot.lane.b32.xlu0 %v4719, 108
  %v5836 = vpop.permute.xlu0 %5835
  %5837 = vrot.lane.b32.xlu0 %v4727, 108
  %v5838 = vpop.permute.xlu0 %5837
  %5839 = vrot.lane.b32.xlu0 %v4735, 108
  %v5840 = vpop.permute.xlu0 %5839
  %5841 = vrot.lane.b32.xlu0 %v4743, 108
  %v5842 = vpop.permute.xlu0 %5841
  %5843 = vrot.lane.b32.xlu0 %v4751, 108
  %v5844 = vpop.permute.xlu0 %5843
  %5845 = vrot.lane.b32.xlu0 %v4759, 108
  %v5846 = vpop.permute.xlu0 %5845
  %5847 = vrot.lane.b32.xlu0 %v4712, 108
  %v5848 = vpop.permute.xlu0 %5847
  %5849 = vrot.lane.b32.xlu0 %v4720, 108
  %v5850 = vpop.permute.xlu0 %5849
  %5851 = vrot.lane.b32.xlu0 %v4728, 108
  %v5852 = vpop.permute.xlu0 %5851
  %5853 = vrot.lane.b32.xlu0 %v4736, 108
  %v5854 = vpop.permute.xlu0 %5853
  %5855 = vrot.lane.b32.xlu0 %v4744, 108
  %v5856 = vpop.permute.xlu0 %5855
  %5857 = vrot.lane.b32.xlu0 %v4752, 108
  %v5858 = vpop.permute.xlu0 %5857
  %5859 = vrot.lane.b32.xlu0 %v4760, 108
  %v5860 = vpop.permute.xlu0 %5859
  %5861 = vrot.lane.b32.xlu0 %v4713, 108
  %v5862 = vpop.permute.xlu0 %5861
  %5863 = vrot.lane.b32.xlu0 %v4721, 108
  %v5864 = vpop.permute.xlu0 %5863
  %5865 = vrot.lane.b32.xlu0 %v4729, 108
  %v5866 = vpop.permute.xlu0 %5865
  %5867 = vrot.lane.b32.xlu0 %v4737, 108
  %v5868 = vpop.permute.xlu0 %5867
  %5869 = vrot.lane.b32.xlu0 %v4745, 108
  %v5870 = vpop.permute.xlu0 %5869
  %5871 = vrot.lane.b32.xlu0 %v4753, 108
  %v5872 = vpop.permute.xlu0 %5871
  %5873 = vrot.lane.b32.xlu0 %v4761, 108
  %v5874 = vpop.permute.xlu0 %5873
  %5875 = vrot.lane.b32.xlu0 %v4714, 108
  %v5876 = vpop.permute.xlu0 %5875
  %5877 = vrot.lane.b32.xlu0 %v4722, 108
  %v5878 = vpop.permute.xlu0 %5877
  %5879 = vrot.lane.b32.xlu0 %v4730, 108
  %v5880 = vpop.permute.xlu0 %5879
  %5881 = vrot.lane.b32.xlu0 %v4738, 108
  %v5882 = vpop.permute.xlu0 %5881
  %5883 = vrot.lane.b32.xlu0 %v4746, 108
  %v5884 = vpop.permute.xlu0 %5883
  %5885 = vrot.lane.b32.xlu0 %v4754, 108
  %v5886 = vpop.permute.xlu0 %5885
  %5887 = vrot.lane.b32.xlu0 %v4762, 108
  %v5888 = vpop.permute.xlu0 %5887
  %v5889 = vsel %vm487, %v5862, %v5876
  %v5890 = vsel %vm487, %v5864, %v5878
  %v5891 = vsel %vm487, %v5866, %v5880
  %v5892 = vsel %vm487, %v5868, %v5882
  %v5893 = vsel %vm487, %v5870, %v5884
  %v5894 = vsel %vm487, %v5872, %v5886
  %v5895 = vsel %vm487, %v5874, %v5888
  %v5896 = vsel %vm487, %v5848, %v5862
  %v5897 = vsel %vm487, %v5850, %v5864
  %v5898 = vsel %vm487, %v5852, %v5866
  %v5899 = vsel %vm487, %v5854, %v5868
  %v5900 = vsel %vm487, %v5856, %v5870
  %v5901 = vsel %vm487, %v5858, %v5872
  %v5902 = vsel %vm487, %v5860, %v5874
  %v5903 = vsel %vm487, %v5834, %v5848
  %v5904 = vsel %vm487, %v5836, %v5850
  %v5905 = vsel %vm487, %v5838, %v5852
  %v5906 = vsel %vm487, %v5840, %v5854
  %v5907 = vsel %vm487, %v5842, %v5856
  %v5908 = vsel %vm487, %v5844, %v5858
  %v5909 = vsel %vm487, %v5846, %v5860
  %v5910 = vsel %vm487, %v5820, %v5834
  %v5911 = vsel %vm487, %v5822, %v5836
  %v5912 = vsel %vm487, %v5824, %v5838
  %v5913 = vsel %vm487, %v5826, %v5840
  %v5914 = vsel %vm487, %v5828, %v5842
  %v5915 = vsel %vm487, %v5830, %v5844
  %v5916 = vsel %vm487, %v5832, %v5846
  %v5917 = vsel %vm487, %v5806, %v5820
  %v5918 = vsel %vm487, %v5808, %v5822
  %v5919 = vsel %vm487, %v5810, %v5824
  %v5920 = vsel %vm487, %v5812, %v5826
  %v5921 = vsel %vm487, %v5814, %v5828
  %v5922 = vsel %vm487, %v5816, %v5830
  %v5923 = vsel %vm487, %v5818, %v5832
  %v5924 = vsel %vm487, %v5792, %v5806
  %v5925 = vsel %vm487, %v5794, %v5808
  %v5926 = vsel %vm487, %v5796, %v5810
  %v5927 = vsel %vm487, %v5798, %v5812
  %v5928 = vsel %vm487, %v5800, %v5814
  %v5929 = vsel %vm487, %v5802, %v5816
  %v5930 = vsel %vm487, %v5804, %v5818
  %v5931 = vsel %vm487, %v5778, %v5792
  %v5932 = vsel %vm487, %v5780, %v5794
  %v5933 = vsel %vm487, %v5782, %v5796
  %v5934 = vsel %vm487, %v5784, %v5798
  %v5935 = vsel %vm487, %v5786, %v5800
  %v5936 = vsel %vm487, %v5788, %v5802
  %v5937 = vsel %vm487, %v5790, %v5804
  %v5938 = vsel %vm487, %v5876, %v5778
  %v5939 = vsel %vm487, %v5878, %v5780
  %v5940 = vsel %vm487, %v5880, %v5782
  %v5941 = vsel %vm487, %v5882, %v5784
  %v5942 = vsel %vm487, %v5884, %v5786
  %v5943 = vsel %vm487, %v5886, %v5788
  %v5944 = vsel %vm487, %v5888, %v5790
  %5945 = vrot.lane.b32.xlu0 %v4707, 107
  %v5946 = vpop.permute.xlu0 %5945
  %5947 = vrot.lane.b32.xlu0 %v4715, 107
  %v5948 = vpop.permute.xlu0 %5947
  %5949 = vrot.lane.b32.xlu0 %v4723, 107
  %v5950 = vpop.permute.xlu0 %5949
  %5951 = vrot.lane.b32.xlu0 %v4731, 107
  %v5952 = vpop.permute.xlu0 %5951
  %5953 = vrot.lane.b32.xlu0 %v4739, 107
  %v5954 = vpop.permute.xlu0 %5953
  %5955 = vrot.lane.b32.xlu0 %v4747, 107
  %v5956 = vpop.permute.xlu0 %5955
  %5957 = vrot.lane.b32.xlu0 %v4755, 107
  %v5958 = vpop.permute.xlu0 %5957
  %5959 = vrot.lane.b32.xlu0 %v4708, 107
  %v5960 = vpop.permute.xlu0 %5959
  %5961 = vrot.lane.b32.xlu0 %v4716, 107
  %v5962 = vpop.permute.xlu0 %5961
  %5963 = vrot.lane.b32.xlu0 %v4724, 107
  %v5964 = vpop.permute.xlu0 %5963
  %5965 = vrot.lane.b32.xlu0 %v4732, 107
  %v5966 = vpop.permute.xlu0 %5965
  %5967 = vrot.lane.b32.xlu0 %v4740, 107
  %v5968 = vpop.permute.xlu0 %5967
  %5969 = vrot.lane.b32.xlu0 %v4748, 107
  %v5970 = vpop.permute.xlu0 %5969
  %5971 = vrot.lane.b32.xlu0 %v4756, 107
  %v5972 = vpop.permute.xlu0 %5971
  %5973 = vrot.lane.b32.xlu0 %v4709, 107
  %v5974 = vpop.permute.xlu0 %5973
  %5975 = vrot.lane.b32.xlu0 %v4717, 107
  %v5976 = vpop.permute.xlu0 %5975
  %5977 = vrot.lane.b32.xlu0 %v4725, 107
  %v5978 = vpop.permute.xlu0 %5977
  %5979 = vrot.lane.b32.xlu0 %v4733, 107
  %v5980 = vpop.permute.xlu0 %5979
  %5981 = vrot.lane.b32.xlu0 %v4741, 107
  %v5982 = vpop.permute.xlu0 %5981
  %5983 = vrot.lane.b32.xlu0 %v4749, 107
  %v5984 = vpop.permute.xlu0 %5983
  %5985 = vrot.lane.b32.xlu0 %v4757, 107
  %v5986 = vpop.permute.xlu0 %5985
  %5987 = vrot.lane.b32.xlu0 %v4710, 107
  %v5988 = vpop.permute.xlu0 %5987
  %5989 = vrot.lane.b32.xlu0 %v4718, 107
  %v5990 = vpop.permute.xlu0 %5989
  %5991 = vrot.lane.b32.xlu0 %v4726, 107
  %v5992 = vpop.permute.xlu0 %5991
  %5993 = vrot.lane.b32.xlu0 %v4734, 107
  %v5994 = vpop.permute.xlu0 %5993
  %5995 = vrot.lane.b32.xlu0 %v4742, 107
  %v5996 = vpop.permute.xlu0 %5995
  %5997 = vrot.lane.b32.xlu0 %v4750, 107
  %v5998 = vpop.permute.xlu0 %5997
  %5999 = vrot.lane.b32.xlu0 %v4758, 107
  %v6000 = vpop.permute.xlu0 %5999
  %6001 = vrot.lane.b32.xlu0 %v4711, 107
  %v6002 = vpop.permute.xlu0 %6001
  %6003 = vrot.lane.b32.xlu0 %v4719, 107
  %v6004 = vpop.permute.xlu0 %6003
  %6005 = vrot.lane.b32.xlu0 %v4727, 107
  %v6006 = vpop.permute.xlu0 %6005
  %6007 = vrot.lane.b32.xlu0 %v4735, 107
  %v6008 = vpop.permute.xlu0 %6007
  %6009 = vrot.lane.b32.xlu0 %v4743, 107
  %v6010 = vpop.permute.xlu0 %6009
  %6011 = vrot.lane.b32.xlu0 %v4751, 107
  %v6012 = vpop.permute.xlu0 %6011
  %6013 = vrot.lane.b32.xlu0 %v4759, 107
  %v6014 = vpop.permute.xlu0 %6013
  %6015 = vrot.lane.b32.xlu0 %v4712, 107
  %v6016 = vpop.permute.xlu0 %6015
  %6017 = vrot.lane.b32.xlu0 %v4720, 107
  %v6018 = vpop.permute.xlu0 %6017
  %6019 = vrot.lane.b32.xlu0 %v4728, 107
  %v6020 = vpop.permute.xlu0 %6019
  %6021 = vrot.lane.b32.xlu0 %v4736, 107
  %v6022 = vpop.permute.xlu0 %6021
  %6023 = vrot.lane.b32.xlu0 %v4744, 107
  %v6024 = vpop.permute.xlu0 %6023
  %6025 = vrot.lane.b32.xlu0 %v4752, 107
  %v6026 = vpop.permute.xlu0 %6025
  %6027 = vrot.lane.b32.xlu0 %v4760, 107
  %v6028 = vpop.permute.xlu0 %6027
  %6029 = vrot.lane.b32.xlu0 %v4713, 107
  %v6030 = vpop.permute.xlu0 %6029
  %6031 = vrot.lane.b32.xlu0 %v4721, 107
  %v6032 = vpop.permute.xlu0 %6031
  %6033 = vrot.lane.b32.xlu0 %v4729, 107
  %v6034 = vpop.permute.xlu0 %6033
  %6035 = vrot.lane.b32.xlu0 %v4737, 107
  %v6036 = vpop.permute.xlu0 %6035
  %6037 = vrot.lane.b32.xlu0 %v4745, 107
  %v6038 = vpop.permute.xlu0 %6037
  %6039 = vrot.lane.b32.xlu0 %v4753, 107
  %v6040 = vpop.permute.xlu0 %6039
  %6041 = vrot.lane.b32.xlu0 %v4761, 107
  %v6042 = vpop.permute.xlu0 %6041
  %6043 = vrot.lane.b32.xlu0 %v4714, 107
  %v6044 = vpop.permute.xlu0 %6043
  %6045 = vrot.lane.b32.xlu0 %v4722, 107
  %v6046 = vpop.permute.xlu0 %6045
  %6047 = vrot.lane.b32.xlu0 %v4730, 107
  %v6048 = vpop.permute.xlu0 %6047
  %6049 = vrot.lane.b32.xlu0 %v4738, 107
  %v6050 = vpop.permute.xlu0 %6049
  %6051 = vrot.lane.b32.xlu0 %v4746, 107
  %v6052 = vpop.permute.xlu0 %6051
  %6053 = vrot.lane.b32.xlu0 %v4754, 107
  %v6054 = vpop.permute.xlu0 %6053
  %6055 = vrot.lane.b32.xlu0 %v4762, 107
  %v6056 = vpop.permute.xlu0 %6055
  %v6057 = vsel %vm512, %v6030, %v6044
  %v6058 = vsel %vm512, %v6032, %v6046
  %v6059 = vsel %vm512, %v6034, %v6048
  %v6060 = vsel %vm512, %v6036, %v6050
  %v6061 = vsel %vm512, %v6038, %v6052
  %v6062 = vsel %vm512, %v6040, %v6054
  %v6063 = vsel %vm512, %v6042, %v6056
  %v6064 = vsel %vm512, %v6016, %v6030
  %v6065 = vsel %vm512, %v6018, %v6032
  %v6066 = vsel %vm512, %v6020, %v6034
  %v6067 = vsel %vm512, %v6022, %v6036
  %v6068 = vsel %vm512, %v6024, %v6038
  %v6069 = vsel %vm512, %v6026, %v6040
  %v6070 = vsel %vm512, %v6028, %v6042
  %v6071 = vsel %vm512, %v6002, %v6016
  %v6072 = vsel %vm512, %v6004, %v6018
  %v6073 = vsel %vm512, %v6006, %v6020
  %v6074 = vsel %vm512, %v6008, %v6022
  %v6075 = vsel %vm512, %v6010, %v6024
  %v6076 = vsel %vm512, %v6012, %v6026
  %v6077 = vsel %vm512, %v6014, %v6028
  %v6078 = vsel %vm512, %v5988, %v6002
  %v6079 = vsel %vm512, %v5990, %v6004
  %v6080 = vsel %vm512, %v5992, %v6006
  %v6081 = vsel %vm512, %v5994, %v6008
  %v6082 = vsel %vm512, %v5996, %v6010
  %v6083 = vsel %vm512, %v5998, %v6012
  %v6084 = vsel %vm512, %v6000, %v6014
  %v6085 = vsel %vm512, %v5974, %v5988
  %v6086 = vsel %vm512, %v5976, %v5990
  %v6087 = vsel %vm512, %v5978, %v5992
  %v6088 = vsel %vm512, %v5980, %v5994
  %v6089 = vsel %vm512, %v5982, %v5996
  %v6090 = vsel %vm512, %v5984, %v5998
  %v6091 = vsel %vm512, %v5986, %v6000
  %v6092 = vsel %vm512, %v5960, %v5974
  %v6093 = vsel %vm512, %v5962, %v5976
  %v6094 = vsel %vm512, %v5964, %v5978
  %v6095 = vsel %vm512, %v5966, %v5980
  %v6096 = vsel %vm512, %v5968, %v5982
  %v6097 = vsel %vm512, %v5970, %v5984
  %v6098 = vsel %vm512, %v5972, %v5986
  %v6099 = vsel %vm512, %v5946, %v5960
  %v6100 = vsel %vm512, %v5948, %v5962
  %v6101 = vsel %vm512, %v5950, %v5964
  %v6102 = vsel %vm512, %v5952, %v5966
  %v6103 = vsel %vm512, %v5954, %v5968
  %v6104 = vsel %vm512, %v5956, %v5970
  %v6105 = vsel %vm512, %v5958, %v5972
  %v6106 = vsel %vm512, %v6044, %v5946
  %v6107 = vsel %vm512, %v6046, %v5948
  %v6108 = vsel %vm512, %v6048, %v5950
  %v6109 = vsel %vm512, %v6050, %v5952
  %v6110 = vsel %vm512, %v6052, %v5954
  %v6111 = vsel %vm512, %v6054, %v5956
  %v6112 = vsel %vm512, %v6056, %v5958
  %v6113 = vpack.c.bf16 %v4931, %v4930
  %v6114 = vpack.c.bf16 %v4924, %v4923
  %v6115 = vpack.c.bf16 %v4917, %v4916
  %v6116 = vpack.c.bf16 %v4910, %v4909
  %v6117 = vpack.c.bf16 %v4903, %v4902
  %v6118 = vpack.c.bf16 %v4896, %v4895
  %v6119 = vpack.c.bf16 %v4889, %v4888
  %v6120 = vpack.c.bf16 %v4882, %v4881
  %v6121 = vpack.c.bf16 %v4933, %v4932
  %v6122 = vpack.c.bf16 %v4926, %v4925
  %v6123 = vpack.c.bf16 %v4919, %v4918
  %v6124 = vpack.c.bf16 %v4912, %v4911
  %v6125 = vpack.c.bf16 %v4905, %v4904
  %v6126 = vpack.c.bf16 %v4898, %v4897
  %v6127 = vpack.c.bf16 %v4891, %v4890
  %v6128 = vpack.c.bf16 %v4884, %v4883
  %v6129 = vpack.c.bf16 %v4935, %v4934
  %v6130 = vpack.c.bf16 %v4928, %v4927
  %v6131 = vpack.c.bf16 %v4921, %v4920
  %v6132 = vpack.c.bf16 %v4914, %v4913
  %v6133 = vpack.c.bf16 %v4907, %v4906
  %v6134 = vpack.c.bf16 %v4900, %v4899
  %v6135 = vpack.c.bf16 %v4893, %v4892
  %v6136 = vpack.c.bf16 %v4886, %v4885
  %v6137 = vpack.c.bf16 %v5098, %v4936
  %v6138 = vpack.c.bf16 %v5091, %v4929
  %v6139 = vpack.c.bf16 %v5084, %v4922
  %v6140 = vpack.c.bf16 %v5077, %v4915
  %v6141 = vpack.c.bf16 %v5070, %v4908
  %v6142 = vpack.c.bf16 %v5063, %v4901
  %v6143 = vpack.c.bf16 %v5056, %v4894
  %v6144 = vpack.c.bf16 %v5049, %v4887
  %v6145 = vpack.c.bf16 %v5100, %v5099
  %v6146 = vpack.c.bf16 %v5093, %v5092
  %v6147 = vpack.c.bf16 %v5086, %v5085
  %v6148 = vpack.c.bf16 %v5079, %v5078
  %v6149 = vpack.c.bf16 %v5072, %v5071
  %v6150 = vpack.c.bf16 %v5065, %v5064
  %v6151 = vpack.c.bf16 %v5058, %v5057
  %v6152 = vpack.c.bf16 %v5051, %v5050
  %v6153 = vpack.c.bf16 %v5102, %v5101
  %v6154 = vpack.c.bf16 %v5095, %v5094
  %v6155 = vpack.c.bf16 %v5088, %v5087
  %v6156 = vpack.c.bf16 %v5081, %v5080
  %v6157 = vpack.c.bf16 %v5074, %v5073
  %v6158 = vpack.c.bf16 %v5067, %v5066
  %v6159 = vpack.c.bf16 %v5060, %v5059
  %v6160 = vpack.c.bf16 %v5053, %v5052
  %v6161 = vpack.c.bf16 %v5104, %v5103
  %v6162 = vpack.c.bf16 %v5097, %v5096
  %v6163 = vpack.c.bf16 %v5090, %v5089
  %v6164 = vpack.c.bf16 %v5083, %v5082
  %v6165 = vpack.c.bf16 %v5076, %v5075
  %v6166 = vpack.c.bf16 %v5069, %v5068
  %v6167 = vpack.c.bf16 %v5062, %v5061
  %v6168 = vpack.c.bf16 %v5055, %v5054
  %v6169 = vpack.c.bf16 %v5267, %v5266
  %v6170 = vpack.c.bf16 %v5260, %v5259
  %v6171 = vpack.c.bf16 %v5253, %v5252
  %v6172 = vpack.c.bf16 %v5246, %v5245
  %v6173 = vpack.c.bf16 %v5239, %v5238
  %v6174 = vpack.c.bf16 %v5232, %v5231
  %v6175 = vpack.c.bf16 %v5225, %v5224
  %v6176 = vpack.c.bf16 %v5218, %v5217
  %v6177 = vpack.c.bf16 %v5269, %v5268
  %v6178 = vpack.c.bf16 %v5262, %v5261
  %v6179 = vpack.c.bf16 %v5255, %v5254
  %v6180 = vpack.c.bf16 %v5248, %v5247
  %v6181 = vpack.c.bf16 %v5241, %v5240
  %v6182 = vpack.c.bf16 %v5234, %v5233
  %v6183 = vpack.c.bf16 %v5227, %v5226
  %v6184 = vpack.c.bf16 %v5220, %v5219
  %v6185 = vpack.c.bf16 %v5271, %v5270
  %v6186 = vpack.c.bf16 %v5264, %v5263
  %v6187 = vpack.c.bf16 %v5257, %v5256
  %v6188 = vpack.c.bf16 %v5250, %v5249
  %v6189 = vpack.c.bf16 %v5243, %v5242
  %v6190 = vpack.c.bf16 %v5236, %v5235
  %v6191 = vpack.c.bf16 %v5229, %v5228
  %v6192 = vpack.c.bf16 %v5222, %v5221
  %v6193 = vpack.c.bf16 %v5434, %v5272
  %v6194 = vpack.c.bf16 %v5427, %v5265
  %v6195 = vpack.c.bf16 %v5420, %v5258
  %v6196 = vpack.c.bf16 %v5413, %v5251
  %v6197 = vpack.c.bf16 %v5406, %v5244
  %v6198 = vpack.c.bf16 %v5399, %v5237
  %v6199 = vpack.c.bf16 %v5392, %v5230
  %v6200 = vpack.c.bf16 %v5385, %v5223
  %v6201 = vpack.c.bf16 %v5436, %v5435
  %v6202 = vpack.c.bf16 %v5429, %v5428
  %v6203 = vpack.c.bf16 %v5422, %v5421
  %v6204 = vpack.c.bf16 %v5415, %v5414
  %v6205 = vpack.c.bf16 %v5408, %v5407
  %v6206 = vpack.c.bf16 %v5401, %v5400
  %v6207 = vpack.c.bf16 %v5394, %v5393
  %v6208 = vpack.c.bf16 %v5387, %v5386
  %v6209 = vpack.c.bf16 %v5438, %v5437
  %v6210 = vpack.c.bf16 %v5431, %v5430
  %v6211 = vpack.c.bf16 %v5424, %v5423
  %v6212 = vpack.c.bf16 %v5417, %v5416
  %v6213 = vpack.c.bf16 %v5410, %v5409
  %v6214 = vpack.c.bf16 %v5403, %v5402
  %v6215 = vpack.c.bf16 %v5396, %v5395
  %v6216 = vpack.c.bf16 %v5389, %v5388
  %v6217 = vpack.c.bf16 %v5440, %v5439
  %v6218 = vpack.c.bf16 %v5433, %v5432
  %v6219 = vpack.c.bf16 %v5426, %v5425
  %v6220 = vpack.c.bf16 %v5419, %v5418
  %v6221 = vpack.c.bf16 %v5412, %v5411
  %v6222 = vpack.c.bf16 %v5405, %v5404
  %v6223 = vpack.c.bf16 %v5398, %v5397
  %v6224 = vpack.c.bf16 %v5391, %v5390
  %v6225 = vpack.c.bf16 %v4715, %v4707
  %v6226 = vpack.c.bf16 %v4716, %v4708
  %v6227 = vpack.c.bf16 %v4717, %v4709
  %v6228 = vpack.c.bf16 %v4718, %v4710
  %v6229 = vpack.c.bf16 %v4719, %v4711
  %v6230 = vpack.c.bf16 %v4720, %v4712
  %v6231 = vpack.c.bf16 %v4721, %v4713
  %v6232 = vpack.c.bf16 %v4722, %v4714
  %v6233 = vpack.c.bf16 %v4731, %v4723
  %v6234 = vpack.c.bf16 %v4732, %v4724
  %v6235 = vpack.c.bf16 %v4733, %v4725
  %v6236 = vpack.c.bf16 %v4734, %v4726
  %v6237 = vpack.c.bf16 %v4735, %v4727
  %v6238 = vpack.c.bf16 %v4736, %v4728
  %v6239 = vpack.c.bf16 %v4737, %v4729
  %v6240 = vpack.c.bf16 %v4738, %v4730
  %v6241 = vpack.c.bf16 %v4747, %v4739
  %v6242 = vpack.c.bf16 %v4748, %v4740
  %v6243 = vpack.c.bf16 %v4749, %v4741
  %v6244 = vpack.c.bf16 %v4750, %v4742
  %v6245 = vpack.c.bf16 %v4751, %v4743
  %v6246 = vpack.c.bf16 %v4752, %v4744
  %v6247 = vpack.c.bf16 %v4753, %v4745
  %v6248 = vpack.c.bf16 %v4754, %v4746
  %v6249 = vpack.c.bf16 %v5595, %v4755
  %v6250 = vpack.c.bf16 %v5588, %v4756
  %v6251 = vpack.c.bf16 %v5581, %v4757
  %v6252 = vpack.c.bf16 %v5574, %v4758
  %v6253 = vpack.c.bf16 %v5567, %v4759
  %v6254 = vpack.c.bf16 %v5560, %v4760
  %v6255 = vpack.c.bf16 %v5553, %v4761
  %v6256 = vpack.c.bf16 %v5602, %v4762
  %v6257 = vpack.c.bf16 %v5597, %v5596
  %v6258 = vpack.c.bf16 %v5590, %v5589
  %v6259 = vpack.c.bf16 %v5583, %v5582
  %v6260 = vpack.c.bf16 %v5576, %v5575
  %v6261 = vpack.c.bf16 %v5569, %v5568
  %v6262 = vpack.c.bf16 %v5562, %v5561
  %v6263 = vpack.c.bf16 %v5555, %v5554
  %v6264 = vpack.c.bf16 %v5604, %v5603
  %v6265 = vpack.c.bf16 %v5599, %v5598
  %v6266 = vpack.c.bf16 %v5592, %v5591
  %v6267 = vpack.c.bf16 %v5585, %v5584
  %v6268 = vpack.c.bf16 %v5578, %v5577
  %v6269 = vpack.c.bf16 %v5571, %v5570
  %v6270 = vpack.c.bf16 %v5564, %v5563
  %v6271 = vpack.c.bf16 %v5557, %v5556
  %v6272 = vpack.c.bf16 %v5606, %v5605
  %v6273 = vpack.c.bf16 %v5601, %v5600
  %v6274 = vpack.c.bf16 %v5594, %v5593
  %v6275 = vpack.c.bf16 %v5587, %v5586
  %v6276 = vpack.c.bf16 %v5580, %v5579
  %v6277 = vpack.c.bf16 %v5573, %v5572
  %v6278 = vpack.c.bf16 %v5566, %v5565
  %v6279 = vpack.c.bf16 %v5559, %v5558
  %v6280 = vpack.c.bf16 %v5608, %v5607
  %v6281 = vpack.c.bf16 %v5764, %v5763
  %v6282 = vpack.c.bf16 %v5757, %v5756
  %v6283 = vpack.c.bf16 %v5750, %v5749
  %v6284 = vpack.c.bf16 %v5743, %v5742
  %v6285 = vpack.c.bf16 %v5736, %v5735
  %v6286 = vpack.c.bf16 %v5729, %v5728
  %v6287 = vpack.c.bf16 %v5722, %v5721
  %v6288 = vpack.c.bf16 %v5771, %v5770
  %v6289 = vpack.c.bf16 %v5766, %v5765
  %v6290 = vpack.c.bf16 %v5759, %v5758
  %v6291 = vpack.c.bf16 %v5752, %v5751
  %v6292 = vpack.c.bf16 %v5745, %v5744
  %v6293 = vpack.c.bf16 %v5738, %v5737
  %v6294 = vpack.c.bf16 %v5731, %v5730
  %v6295 = vpack.c.bf16 %v5724, %v5723
  %v6296 = vpack.c.bf16 %v5773, %v5772
  %v6297 = vpack.c.bf16 %v5768, %v5767
  %v6298 = vpack.c.bf16 %v5761, %v5760
  %v6299 = vpack.c.bf16 %v5754, %v5753
  %v6300 = vpack.c.bf16 %v5747, %v5746
  %v6301 = vpack.c.bf16 %v5740, %v5739
  %v6302 = vpack.c.bf16 %v5733, %v5732
  %v6303 = vpack.c.bf16 %v5726, %v5725
  %v6304 = vpack.c.bf16 %v5775, %v5774
  %v6305 = vpack.c.bf16 %v5931, %v5769
  %v6306 = vpack.c.bf16 %v5924, %v5762
  %v6307 = vpack.c.bf16 %v5917, %v5755
  %v6308 = vpack.c.bf16 %v5910, %v5748
  %v6309 = vpack.c.bf16 %v5903, %v5741
  %v6310 = vpack.c.bf16 %v5896, %v5734
  %v6311 = vpack.c.bf16 %v5889, %v5727
  %v6312 = vpack.c.bf16 %v5938, %v5776
  %v6313 = vpack.c.bf16 %v5933, %v5932
  %v6314 = vpack.c.bf16 %v5926, %v5925
  %v6315 = vpack.c.bf16 %v5919, %v5918
  %v6316 = vpack.c.bf16 %v5912, %v5911
  %v6317 = vpack.c.bf16 %v5905, %v5904
  %v6318 = vpack.c.bf16 %v5898, %v5897
  %v6319 = vpack.c.bf16 %v5891, %v5890
  %v6320 = vpack.c.bf16 %v5940, %v5939
  %v6321 = vpack.c.bf16 %v5935, %v5934
  %v6322 = vpack.c.bf16 %v5928, %v5927
  %v6323 = vpack.c.bf16 %v5921, %v5920
  %v6324 = vpack.c.bf16 %v5914, %v5913
  %v6325 = vpack.c.bf16 %v5907, %v5906
  %v6326 = vpack.c.bf16 %v5900, %v5899
  %v6327 = vpack.c.bf16 %v5893, %v5892
  %v6328 = vpack.c.bf16 %v5942, %v5941
  %v6329 = vpack.c.bf16 %v5937, %v5936
  %v6330 = vpack.c.bf16 %v5930, %v5929
  %v6331 = vpack.c.bf16 %v5923, %v5922
  %v6332 = vpack.c.bf16 %v5916, %v5915
  %v6333 = vpack.c.bf16 %v5909, %v5908
  %v6334 = vpack.c.bf16 %v5902, %v5901
  %v6335 = vpack.c.bf16 %v5895, %v5894
  %v6336 = vpack.c.bf16 %v5944, %v5943
  %v6337 = vpack.c.bf16 %v6100, %v6099
  %v6338 = vpack.c.bf16 %v6093, %v6092
  %v6339 = vpack.c.bf16 %v6086, %v6085
  %v6340 = vpack.c.bf16 %v6079, %v6078
  %v6341 = vpack.c.bf16 %v6072, %v6071
  %v6342 = vpack.c.bf16 %v6065, %v6064
  %v6343 = vpack.c.bf16 %v6058, %v6057
  %v6344 = vpack.c.bf16 %v6107, %v6106
  %v6345 = vpack.c.bf16 %v6102, %v6101
  %v6346 = vpack.c.bf16 %v6095, %v6094
  %v6347 = vpack.c.bf16 %v6088, %v6087
  %v6348 = vpack.c.bf16 %v6081, %v6080
  %v6349 = vpack.c.bf16 %v6074, %v6073
  %v6350 = vpack.c.bf16 %v6067, %v6066
  %v6351 = vpack.c.bf16 %v6060, %v6059
  %v6352 = vpack.c.bf16 %v6109, %v6108
  %v6353 = vpack.c.bf16 %v6104, %v6103
  %v6354 = vpack.c.bf16 %v6097, %v6096
  %v6355 = vpack.c.bf16 %v6090, %v6089
  %v6356 = vpack.c.bf16 %v6083, %v6082
  %v6357 = vpack.c.bf16 %v6076, %v6075
  %v6358 = vpack.c.bf16 %v6069, %v6068
  %v6359 = vpack.c.bf16 %v6062, %v6061
  %v6360 = vpack.c.bf16 %v6111, %v6110
  %v6361 = vpack.c.bf16 %v6105, %v6105
  %v6362 = vpack.c.bf16 %v6098, %v6098
  %v6363 = vpack.c.bf16 %v6091, %v6091
  %v6364 = vpack.c.bf16 %v6084, %v6084
  %v6365 = vpack.c.bf16 %v6077, %v6077
  %v6366 = vpack.c.bf16 %v6070, %v6070
  %v6367 = vpack.c.bf16 %v6063, %v6063
  %v6368 = vpack.c.bf16 %v6112, %v6112
  %6370 = vset.pattern.permute.xlu0 0
  %6371 = vperm.xlu0 %6370, %v4767
  %v6372 = vpop.permute.xlu0 %6371
  %6375 = vset.pattern.permute.xlu0 0
  %6376 = vperm.xlu0 %6375, %v4768
  %v6377 = vpop.permute.xlu0 %6376
  %v6383 = vunpack.c.l.b16 %v4763
  %v6384 = vunpack.c.h.b16 %v4763
  %v6385 = vunpack.c.l.b16 %v4764
  %v6386 = vunpack.c.h.b16 %v4764
  %v6387 = vunpack.c.l.b16 %v4765
  %v6388 = vunpack.c.h.b16 %v4765
  %v6389 = vunpack.c.l.b16 %v4766
  %v6390 = vunpack.c.h.b16 %v4766
  %v6391 = vpack.c.b16 %v6387, %v6383
  %v6392 = vpack.c.b16 %v6388, %v6384
  %v6393 = vpack.c.b16 %v6389, %v6385
  %v6394 = vpack.c.b16 %v6390, %v6386
  %vm6398 = vcmask 982016
  %v6400 = vsel %vm6398, %v6394, 0
  %v6403 = vsel %vm856, %v6361, 0
  %v6406 = vsel %vm856, %v6362, 0
  %v6409 = vsel %vm856, %v6363, 0
  %v6412 = vsel %vm856, %v6364, 0
  %v6415 = vsel %vm856, %v6365, 0
  %v6418 = vsel %vm856, %v6366, 0
  %v6421 = vsel %vm856, %v6367, 0
  %v6424 = vsel %vm856, %v6368, 0
  %6426 = vmatprep.subr.bf16.mxu0 %v6170
  %6427 = vmatpush1.bf16.msra.mxu0 %v6169
  %6428 = vmatprep.subr.bf16.mxu0 %v6162
  %6429 = vmatpush1.bf16.msra.mxu0 %v6161
  %6430 = vmatprep.subr.bf16.mxu0 %v6154
  %6431 = vmatpush1.bf16.msra.mxu0 %v6153
  %6432 = vmatprep.subr.bf16.mxu0 %v6146
  %6433 = vmatpush1.bf16.msra.mxu0 %v6145
  %6434 = vmatprep.subr.bf16.mxu0 %v6138
  %6435 = vmatpush1.bf16.msra.mxu0 %v6137
  %6436 = vmatprep.subr.bf16.mxu0 %v6130
  %6437 = vmatpush1.bf16.msra.mxu0 %v6129
  %6438 = vmatprep.subr.bf16.mxu0 %v6122
  %6439 = vmatpush1.bf16.msra.mxu0 %v6121
  %6440 = vmatprep.subr.bf16.mxu0 %v6114
  %6441 = vmatpush1.bf16.msra.mxu0 %v6113
  %6442 = vmatprep.subr.bf16.mxu0 %v6234
  %6443 = vmatpush2.bf16.msra.mxu0 %v6233
  %6444 = vmatprep.subr.bf16.mxu0 %v6226
  %6445 = vmatpush2.bf16.msra.mxu0 %v6225
  %6446 = vmatprep.subr.bf16.mxu0 %v6218
  %6447 = vmatpush2.bf16.msra.mxu0 %v6217
  %6448 = vmatprep.subr.bf16.mxu0 %v6210
  %6449 = vmatpush2.bf16.msra.mxu0 %v6209
  %6450 = vmatprep.subr.bf16.mxu0 %v6202
  %6451 = vmatpush2.bf16.msra.mxu0 %v6201
  %6452 = vmatprep.subr.bf16.mxu0 %v6194
  %6453 = vmatpush2.bf16.msra.mxu0 %v6193
  %6454 = vmatprep.subr.bf16.mxu0 %v6186
  %6455 = vmatpush2.bf16.msra.mxu0 %v6185
  %6456 = vmatprep.subr.bf16.mxu0 %v6178
  %6457 = vmatpush2.bf16.msra.mxu0 %v6177
  %6458 = vmatprep.mubr.bf16.mxu0 %v6392
  %6459 = vmatmul.mubr.bf16.gmra.mxu0 %v6391
  %v6460 = vpop.f32.mrf.mxu0
  %v6461 = vadd.f32 %v6372, %v6460
  %v6462 = vpop.f32.mrf.mxu0
  %v6463 = vadd.f32 %v6372, %v6462
  %v6464 = vpop.f32.mrf.mxu0
  %v6465 = vadd.f32 %v6377, %v6464
  %v6466 = vpop.f32.mrf.mxu0
  %v6467 = vadd.f32 %v6377, %v6466
  %6468 = vdwg.mxu0
  %6469 = vmatprep.subr.bf16.mxu0 %v6298
  %6470 = vmatpush1.bf16.msra.mxu0 %v6297
  %6471 = vmatprep.subr.bf16.mxu0 %v6290
  %6472 = vmatpush1.bf16.msra.mxu0 %v6289
  %6473 = vmatprep.subr.bf16.mxu0 %v6282
  %6474 = vmatpush1.bf16.msra.mxu0 %v6281
  %6475 = vmatprep.subr.bf16.mxu0 %v6274
  %6476 = vmatpush1.bf16.msra.mxu0 %v6273
  %6477 = vmatprep.subr.bf16.mxu0 %v6266
  %6478 = vmatpush1.bf16.msra.mxu0 %v6265
  %6479 = vmatprep.subr.bf16.mxu0 %v6258
  %6480 = vmatpush1.bf16.msra.mxu0 %v6257
  %6481 = vmatprep.subr.bf16.mxu0 %v6250
  %6482 = vmatpush1.bf16.msra.mxu0 %v6249
  %6483 = vmatprep.subr.bf16.mxu0 %v6242
  %6484 = vmatpush1.bf16.msra.mxu0 %v6241
  %6485 = vmatprep.subr.bf16.mxu0 %v6406
  %6486 = vmatpush2.bf16.msra.mxu0 %v6403
  %6487 = vmatprep.subr.bf16.mxu0 %v6354
  %6488 = vmatpush2.bf16.msra.mxu0 %v6353
  %6489 = vmatprep.subr.bf16.mxu0 %v6346
  %6490 = vmatpush2.bf16.msra.mxu0 %v6345
  %6491 = vmatprep.subr.bf16.mxu0 %v6338
  %6492 = vmatpush2.bf16.msra.mxu0 %v6337
  %6493 = vmatprep.subr.bf16.mxu0 %v6330
  %6494 = vmatpush2.bf16.msra.mxu0 %v6329
  %6495 = vmatprep.subr.bf16.mxu0 %v6322
  %6496 = vmatpush2.bf16.msra.mxu0 %v6321
  %6497 = vmatprep.subr.bf16.mxu0 %v6314
  %6498 = vmatpush2.bf16.msra.mxu0 %v6313
  %6499 = vmatprep.subr.bf16.mxu0 %v6306
  %6500 = vmatpush2.bf16.msra.mxu0 %v6305
  %6501 = vmatprep.mubr.bf16.mxu0 %v6400
  %6502 = vmatmul.mubr.bf16.gmra.mxu0 %v6393
  %v6503 = vpop.f32.mrf.mxu0
  %v6504 = vadd.f32 %v6461, %v6503
  %v6505 = vpop.f32.mrf.mxu0
  %v6506 = vadd.f32 %v6463, %v6505
  %v6507 = vpop.f32.mrf.mxu0
  %v6508 = vadd.f32 %v6465, %v6507
  %v6509 = vpop.f32.mrf.mxu0
  %v6510 = vadd.f32 %v6467, %v6509
  %6511 = vdwg.mxu0
  %6512 = vmatprep.subr.bf16.mxu0 %v6172
  %6513 = vmatpush1.bf16.msra.mxu0 %v6171
  %6514 = vmatprep.subr.bf16.mxu0 %v6164
  %6515 = vmatpush1.bf16.msra.mxu0 %v6163
  %6516 = vmatprep.subr.bf16.mxu0 %v6156
  %6517 = vmatpush1.bf16.msra.mxu0 %v6155
  %6518 = vmatprep.subr.bf16.mxu0 %v6148
  %6519 = vmatpush1.bf16.msra.mxu0 %v6147
  %6520 = vmatprep.subr.bf16.mxu0 %v6140
  %6521 = vmatpush1.bf16.msra.mxu0 %v6139
  %6522 = vmatprep.subr.bf16.mxu0 %v6132
  %6523 = vmatpush1.bf16.msra.mxu0 %v6131
  %6524 = vmatprep.subr.bf16.mxu0 %v6124
  %6525 = vmatpush1.bf16.msra.mxu0 %v6123
  %6526 = vmatprep.subr.bf16.mxu0 %v6116
  %6527 = vmatpush1.bf16.msra.mxu0 %v6115
  %6528 = vmatprep.subr.bf16.mxu0 %v6236
  %6529 = vmatpush2.bf16.msra.mxu0 %v6235
  %6530 = vmatprep.subr.bf16.mxu0 %v6228
  %6531 = vmatpush2.bf16.msra.mxu0 %v6227
  %6532 = vmatprep.subr.bf16.mxu0 %v6220
  %6533 = vmatpush2.bf16.msra.mxu0 %v6219
  %6534 = vmatprep.subr.bf16.mxu0 %v6212
  %6535 = vmatpush2.bf16.msra.mxu0 %v6211
  %6536 = vmatprep.subr.bf16.mxu0 %v6204
  %6537 = vmatpush2.bf16.msra.mxu0 %v6203
  %6538 = vmatprep.subr.bf16.mxu0 %v6196
  %6539 = vmatpush2.bf16.msra.mxu0 %v6195
  %6540 = vmatprep.subr.bf16.mxu0 %v6188
  %6541 = vmatpush2.bf16.msra.mxu0 %v6187
  %6542 = vmatprep.subr.bf16.mxu0 %v6180
  %6543 = vmatpush2.bf16.msra.mxu0 %v6179
  %6544 = vmatprep.mubr.bf16.mxu0 %v6392
  %6545 = vmatmul.mubr.bf16.gmra.mxu0 %v6391
  %v6546 = vpop.f32.mrf.mxu0
  %v6547 = vadd.f32 %v6372, %v6546
  %v6548 = vpop.f32.mrf.mxu0
  %v6549 = vadd.f32 %v6372, %v6548
  %v6550 = vpop.f32.mrf.mxu0
  %v6551 = vadd.f32 %v6377, %v6550
  %v6552 = vpop.f32.mrf.mxu0
  %v6553 = vadd.f32 %v6377, %v6552
  %6554 = vdwg.mxu0
  %6555 = vmatprep.subr.bf16.mxu0 %v6300
  %6556 = vmatpush1.bf16.msra.mxu0 %v6299
  %6557 = vmatprep.subr.bf16.mxu0 %v6292
  %6558 = vmatpush1.bf16.msra.mxu0 %v6291
  %6559 = vmatprep.subr.bf16.mxu0 %v6284
  %6560 = vmatpush1.bf16.msra.mxu0 %v6283
  %6561 = vmatprep.subr.bf16.mxu0 %v6276
  %6562 = vmatpush1.bf16.msra.mxu0 %v6275
  %6563 = vmatprep.subr.bf16.mxu0 %v6268
  %6564 = vmatpush1.bf16.msra.mxu0 %v6267
  %6565 = vmatprep.subr.bf16.mxu0 %v6260
  %6566 = vmatpush1.bf16.msra.mxu0 %v6259
  %6567 = vmatprep.subr.bf16.mxu0 %v6252
  %6568 = vmatpush1.bf16.msra.mxu0 %v6251
  %6569 = vmatprep.subr.bf16.mxu0 %v6244
  %6570 = vmatpush1.bf16.msra.mxu0 %v6243
  %6571 = vmatprep.subr.bf16.mxu0 %v6412
  %6572 = vmatpush2.bf16.msra.mxu0 %v6409
  %6573 = vmatprep.subr.bf16.mxu0 %v6356
  %6574 = vmatpush2.bf16.msra.mxu0 %v6355
  %6575 = vmatprep.subr.bf16.mxu0 %v6348
  %6576 = vmatpush2.bf16.msra.mxu0 %v6347
  %6577 = vmatprep.subr.bf16.mxu0 %v6340
  %6578 = vmatpush2.bf16.msra.mxu0 %v6339
  %6579 = vmatprep.subr.bf16.mxu0 %v6332
  %6580 = vmatpush2.bf16.msra.mxu0 %v6331
  %6581 = vmatprep.subr.bf16.mxu0 %v6324
  %6582 = vmatpush2.bf16.msra.mxu0 %v6323
  %6583 = vmatprep.subr.bf16.mxu0 %v6316
  %6584 = vmatpush2.bf16.msra.mxu0 %v6315
  %6585 = vmatprep.subr.bf16.mxu0 %v6308
  %6586 = vmatpush2.bf16.msra.mxu0 %v6307
  %6587 = vmatprep.mubr.bf16.mxu0 %v6400
  %6588 = vmatmul.mubr.bf16.gmra.mxu0 %v6393
  %v6589 = vpop.f32.mrf.mxu0
  %v6590 = vadd.f32 %v6547, %v6589
  %v6591 = vpop.f32.mrf.mxu0
  %v6592 = vadd.f32 %v6549, %v6591
  %v6593 = vpop.f32.mrf.mxu0
  %v6594 = vadd.f32 %v6551, %v6593
  %v6595 = vpop.f32.mrf.mxu0
  %v6596 = vadd.f32 %v6553, %v6595
  %6597 = vdwg.mxu0
  %6598 = vmatprep.subr.bf16.mxu0 %v6174
  %6599 = vmatpush1.bf16.msra.mxu0 %v6173
  %6600 = vmatprep.subr.bf16.mxu0 %v6166
  %6601 = vmatpush1.bf16.msra.mxu0 %v6165
  %6602 = vmatprep.subr.bf16.mxu0 %v6158
  %6603 = vmatpush1.bf16.msra.mxu0 %v6157
  %6604 = vmatprep.subr.bf16.mxu0 %v6150
  %6605 = vmatpush1.bf16.msra.mxu0 %v6149
  %6606 = vmatprep.subr.bf16.mxu0 %v6142
  %6607 = vmatpush1.bf16.msra.mxu0 %v6141
  %6608 = vmatprep.subr.bf16.mxu0 %v6134
  %6609 = vmatpush1.bf16.msra.mxu0 %v6133
  %6610 = vmatprep.subr.bf16.mxu0 %v6126
  %6611 = vmatpush1.bf16.msra.mxu0 %v6125
  %6612 = vmatprep.subr.bf16.mxu0 %v6118
  %6613 = vmatpush1.bf16.msra.mxu0 %v6117
  %6614 = vmatprep.subr.bf16.mxu0 %v6238
  %6615 = vmatpush2.bf16.msra.mxu0 %v6237
  %6616 = vmatprep.subr.bf16.mxu0 %v6230
  %6617 = vmatpush2.bf16.msra.mxu0 %v6229
  %6618 = vmatprep.subr.bf16.mxu0 %v6222
  %6619 = vmatpush2.bf16.msra.mxu0 %v6221
  %6620 = vmatprep.subr.bf16.mxu0 %v6214
  %6621 = vmatpush2.bf16.msra.mxu0 %v6213
  %6622 = vmatprep.subr.bf16.mxu0 %v6206
  %6623 = vmatpush2.bf16.msra.mxu0 %v6205
  %6624 = vmatprep.subr.bf16.mxu0 %v6198
  %6625 = vmatpush2.bf16.msra.mxu0 %v6197
  %6626 = vmatprep.subr.bf16.mxu0 %v6190
  %6627 = vmatpush2.bf16.msra.mxu0 %v6189
  %6628 = vmatprep.subr.bf16.mxu0 %v6182
  %6629 = vmatpush2.bf16.msra.mxu0 %v6181
  %6630 = vmatprep.mubr.bf16.mxu0 %v6392
  %6631 = vmatmul.mubr.bf16.gmra.mxu0 %v6391
  %v6632 = vpop.f32.mrf.mxu0
  %v6633 = vadd.f32 %v6372, %v6632
  %v6634 = vpop.f32.mrf.mxu0
  %v6635 = vadd.f32 %v6372, %v6634
  %v6636 = vpop.f32.mrf.mxu0
  %v6637 = vadd.f32 %v6377, %v6636
  %v6638 = vpop.f32.mrf.mxu0
  %v6639 = vadd.f32 %v6377, %v6638
  %6640 = vdwg.mxu0
  %6641 = vmatprep.subr.bf16.mxu0 %v6302
  %6642 = vmatpush1.bf16.msra.mxu0 %v6301
  %6643 = vmatprep.subr.bf16.mxu0 %v6294
  %6644 = vmatpush1.bf16.msra.mxu0 %v6293
  %6645 = vmatprep.subr.bf16.mxu0 %v6286
  %6646 = vmatpush1.bf16.msra.mxu0 %v6285
  %6647 = vmatprep.subr.bf16.mxu0 %v6278
  %6648 = vmatpush1.bf16.msra.mxu0 %v6277
  %6649 = vmatprep.subr.bf16.mxu0 %v6270
  %6650 = vmatpush1.bf16.msra.mxu0 %v6269
  %6651 = vmatprep.subr.bf16.mxu0 %v6262
  %6652 = vmatpush1.bf16.msra.mxu0 %v6261
  %6653 = vmatprep.subr.bf16.mxu0 %v6254
  %6654 = vmatpush1.bf16.msra.mxu0 %v6253
  %6655 = vmatprep.subr.bf16.mxu0 %v6246
  %6656 = vmatpush1.bf16.msra.mxu0 %v6245
  %6657 = vmatprep.subr.bf16.mxu0 %v6418
  %6658 = vmatpush2.bf16.msra.mxu0 %v6415
  %6659 = vmatprep.subr.bf16.mxu0 %v6358
  %6660 = vmatpush2.bf16.msra.mxu0 %v6357
  %6661 = vmatprep.subr.bf16.mxu0 %v6350
  %6662 = vmatpush2.bf16.msra.mxu0 %v6349
  %6663 = vmatprep.subr.bf16.mxu0 %v6342
  %6664 = vmatpush2.bf16.msra.mxu0 %v6341
  %6665 = vmatprep.subr.bf16.mxu0 %v6334
  %6666 = vmatpush2.bf16.msra.mxu0 %v6333
  %6667 = vmatprep.subr.bf16.mxu0 %v6326
  %6668 = vmatpush2.bf16.msra.mxu0 %v6325
  %6669 = vmatprep.subr.bf16.mxu0 %v6318
  %6670 = vmatpush2.bf16.msra.mxu0 %v6317
  %6671 = vmatprep.subr.bf16.mxu0 %v6310
  %6672 = vmatpush2.bf16.msra.mxu0 %v6309
  %6673 = vmatprep.mubr.bf16.mxu0 %v6400
  %6674 = vmatmul.mubr.bf16.gmra.mxu0 %v6393
  %v6675 = vpop.f32.mrf.mxu0
  %v6676 = vadd.f32 %v6633, %v6675
  %v6677 = vpop.f32.mrf.mxu0
  %v6678 = vadd.f32 %v6635, %v6677
  %v6679 = vpop.f32.mrf.mxu0
  %v6680 = vadd.f32 %v6637, %v6679
  %v6681 = vpop.f32.mrf.mxu0
  %v6682 = vadd.f32 %v6639, %v6681
  %6683 = vdwg.mxu0
  %6684 = vmatprep.subr.bf16.mxu0 %v6176
  %6685 = vmatpush1.bf16.msra.mxu0 %v6175
  %6686 = vmatprep.subr.bf16.mxu0 %v6168
  %6687 = vmatpush1.bf16.msra.mxu0 %v6167
  %6688 = vmatprep.subr.bf16.mxu0 %v6160
  %6689 = vmatpush1.bf16.msra.mxu0 %v6159
  %6690 = vmatprep.subr.bf16.mxu0 %v6152
  %6691 = vmatpush1.bf16.msra.mxu0 %v6151
  %6692 = vmatprep.subr.bf16.mxu0 %v6144
  %6693 = vmatpush1.bf16.msra.mxu0 %v6143
  %6694 = vmatprep.subr.bf16.mxu0 %v6136
  %6695 = vmatpush1.bf16.msra.mxu0 %v6135
  %6696 = vmatprep.subr.bf16.mxu0 %v6128
  %6697 = vmatpush1.bf16.msra.mxu0 %v6127
  %6698 = vmatprep.subr.bf16.mxu0 %v6120
  %6699 = vmatpush1.bf16.msra.mxu0 %v6119
  %6700 = vmatprep.subr.bf16.mxu0 %v6240
  %6701 = vmatpush2.bf16.msra.mxu0 %v6239
  %6702 = vmatprep.subr.bf16.mxu0 %v6232
  %6703 = vmatpush2.bf16.msra.mxu0 %v6231
  %6704 = vmatprep.subr.bf16.mxu0 %v6224
  %6705 = vmatpush2.bf16.msra.mxu0 %v6223
  %6706 = vmatprep.subr.bf16.mxu0 %v6216
  %6707 = vmatpush2.bf16.msra.mxu0 %v6215
  %6708 = vmatprep.subr.bf16.mxu0 %v6208
  %6709 = vmatpush2.bf16.msra.mxu0 %v6207
  %6710 = vmatprep.subr.bf16.mxu0 %v6200
  %6711 = vmatpush2.bf16.msra.mxu0 %v6199
  %6712 = vmatprep.subr.bf16.mxu0 %v6192
  %6713 = vmatpush2.bf16.msra.mxu0 %v6191
  %6714 = vmatprep.subr.bf16.mxu0 %v6184
  %6715 = vmatpush2.bf16.msra.mxu0 %v6183
  %6716 = vmatprep.mubr.bf16.mxu0 %v6392
  %6717 = vmatmul.mubr.bf16.gmra.mxu0 %v6391
  %v6718 = vpop.f32.mrf.mxu0
  %v6719 = vadd.f32 %v6372, %v6718
  %v6720 = vpop.f32.mrf.mxu0
  %v6721 = vadd.f32 %v6372, %v6720
  %v6722 = vpop.f32.mrf.mxu0
  %v6723 = vadd.f32 %v6377, %v6722
  %v6724 = vpop.f32.mrf.mxu0
  %v6725 = vadd.f32 %v6377, %v6724
  %6726 = vdwg.mxu0
  %6727 = vmatprep.subr.bf16.mxu0 %v6304
  %6728 = vmatpush1.bf16.msra.mxu0 %v6303
  %6729 = vmatprep.subr.bf16.mxu0 %v6296
  %6730 = vmatpush1.bf16.msra.mxu0 %v6295
  %6731 = vmatprep.subr.bf16.mxu0 %v6288
  %6732 = vmatpush1.bf16.msra.mxu0 %v6287
  %6733 = vmatprep.subr.bf16.mxu0 %v6280
  %6734 = vmatpush1.bf16.msra.mxu0 %v6279
  %6735 = vmatprep.subr.bf16.mxu0 %v6272
  %6736 = vmatpush1.bf16.msra.mxu0 %v6271
  %6737 = vmatprep.subr.bf16.mxu0 %v6264
  %6738 = vmatpush1.bf16.msra.mxu0 %v6263
  %6739 = vmatprep.subr.bf16.mxu0 %v6256
  %6740 = vmatpush1.bf16.msra.mxu0 %v6255
  %6741 = vmatprep.subr.bf16.mxu0 %v6248
  %6742 = vmatpush1.bf16.msra.mxu0 %v6247
  %6743 = vmatprep.subr.bf16.mxu0 %v6424
  %6744 = vmatpush2.bf16.msra.mxu0 %v6421
  %6745 = vmatprep.subr.bf16.mxu0 %v6360
  %6746 = vmatpush2.bf16.msra.mxu0 %v6359
  %6747 = vmatprep.subr.bf16.mxu0 %v6352
  %6748 = vmatpush2.bf16.msra.mxu0 %v6351
  %6749 = vmatprep.subr.bf16.mxu0 %v6344
  %6750 = vmatpush2.bf16.msra.mxu0 %v6343
  %6751 = vmatprep.subr.bf16.mxu0 %v6336
  %6752 = vmatpush2.bf16.msra.mxu0 %v6335
  %6753 = vmatprep.subr.bf16.mxu0 %v6328
  %6754 = vmatpush2.bf16.msra.mxu0 %v6327
  %6755 = vmatprep.subr.bf16.mxu0 %v6320
  %6756 = vmatpush2.bf16.msra.mxu0 %v6319
  %6757 = vmatprep.subr.bf16.mxu0 %v6312
  %6758 = vmatpush2.bf16.msra.mxu0 %v6311
  %6759 = vmatprep.mubr.bf16.mxu0 %v6400
  %6760 = vmatmul.mubr.bf16.gmra.mxu0 %v6393
  %v6761 = vpop.f32.mrf.mxu0
  %v6762 = vadd.f32 %v6719, %v6761
  %v6763 = vpop.f32.mrf.mxu0
  %v6764 = vadd.f32 %v6721, %v6763
  %v6765 = vpop.f32.mrf.mxu0
  %v6766 = vadd.f32 %v6723, %v6765
  %v6767 = vpop.f32.mrf.mxu0
  %v6768 = vadd.f32 %v6725, %v6767
  %6769 = vdwg.mxu0
  %6770 = vst [vmem:[%s12] sm:$0xff] %v6504
  %6771 = vst [vmem:[%s12 + $0x8] sm:$0xff] %v6506
  %6772 = vst [vmem:[%s12 + $0x10] sm:$0xff] %v6590
  %6773 = vst [vmem:[%s12 + $0x18] sm:$0xff] %v6592
  %6774 = vst [vmem:[%s12 + $0x20] sm:$0xff] %v6676
  %6775 = vst [vmem:[%s12 + $0x28] sm:$0xff] %v6678
  %6776 = vst [vmem:[%s12 + $0x30] sm:$0xff] %v6762
  %6777 = vst [vmem:[%s12 + $0x38] sm:$0xff] %v6764
  %6778 = vst [vmem:[%s12 + $0x40] sm:$0xf] %v6508
  %6779 = vst [vmem:[%s12 + $0x48] sm:$0xf] %v6510
  %6780 = vst [vmem:[%s12 + $0x50] sm:$0xf] %v6594
  %6781 = vst [vmem:[%s12 + $0x58] sm:$0xf] %v6596
  %6782 = vst [vmem:[%s12 + $0x60] sm:$0xf] %v6680
  %6783 = vst [vmem:[%s12 + $0x68] sm:$0xf] %v6682
  %6784 = vst [vmem:[%s12 + $0x70] sm:$0xf] %v6766
  %6785 = vst [vmem:[%s12 + $0x78] sm:$0xf] %v6768
  // Predicated region
  $region50: #{fsrcnn_forward.1} parent=0 // pred_check
    _
  $region51: #{fsrcnn_forward.1} parent=0 // pred_check_branch
    %6787 = sbr.rel (0) target = $region53
  $region52: #{fsrcnn_forward.1} parent=0 // pred_region
    _
  $region53: #{fsrcnn_forward.1} parent=0 // pred_fallthru
    _
  // Predicated region
  $region54: #{fsrcnn_forward.1} parent=0 // pred_check
    _
  $region55: #{fsrcnn_forward.1} parent=0 // pred_check_branch
    %6789 = sbr.rel (0) target = $region57
  $region56: #{fsrcnn_forward.1} parent=0 // pred_region
    _
  $region57: #{fsrcnn_forward.1} parent=0 // pred_fallthru
    _

</llo_original>
